<compile_context>
chip_gen: v7x
topology: tpu7x:2x2x1
jax: 0.10.0
libtpu: 0.0.40
codegen_flags: <defaults>
</compile_context>

<pallas_src>
import functools

import jax
import jax.numpy as jnp
from jax import lax
from jax.experimental import pallas as pl
from jax.experimental.pallas import tpu as pltpu


# ----------------------------------------------------------------------------
# in-kernel helpers (activations are channels-first flat: (C, H*W))
# ----------------------------------------------------------------------------
def _gelu(x):
    # tanh approximation of GELU (EUP tanh).  torch nn.GELU() default is the
    # exact erf formulation; max abs deviation ~3e-4, fine for f32 training.
    c = 0.7978845608028654  # sqrt(2/pi)
    return 0.5 * x * (1.0 + jnp.tanh(c * (x + 0.044715 * x * x * x)))


def _group_norm(x, gamma, beta, eps=1e-5):
    # nn.GroupNorm(1, C) on (C, HW): normalize over ALL elements of the sample,
    # per-channel affine.  One-pass statistics: sum(x), sum(x*x).
    n = float(x.shape[0] * x.shape[1])
    s1 = jnp.sum(x)
    s2 = jnp.sum(x * x)
    mean = s1 / n
    var = s2 / n - mean * mean
    inv = lax.rsqrt(var + eps)
    return (x - mean) * inv * gamma + beta       # gamma/beta: (C, 1)


def _mm(w, x):
    # 1x1 conv: w (Cout, Cin) bf16, x (Cin, HW) f32 -> (Cout, HW) f32
    return jnp.dot(w, x.astype(w.dtype), preferred_element_type=jnp.float32)


def _shift_h(x, sh, W):
    # ys[:, i*W + j] = x[:, ((i + sh) % H) * W + j]
    # An H shift is an exact circular roll of the flat H*W lane axis by sh*W.
    if sh == 0:
        return x
    HW = x.shape[-1]
    return pltpu.roll(x, (-sh * W) % HW, axis=1)


def _shift_w(x, sw, W, col):
    # ys[:, i*W + j] = x[:, i*W + (j + sw) % W]
    # Done as two lane rolls (wrap / no-wrap versions) + a per-column select.
    if sw == 0:
        return x
    HW = x.shape[-1]
    main = pltpu.roll(x, (-sw) % HW, axis=1)           # correct where j does not wrap
    alt_sw = sw - W if sw > 0 else sw + W
    alt = pltpu.roll(x, (-alt_sw) % HW, axis=1)        # correct where j wraps around W
    if sw > 0:
        wrap = col >= (W - sw)
    else:
        wrap = col < (-sw)
    return jnp.where(wrap, alt, main)


def _conv3x3_circ(w9, bias, x, dil, W, col):
    # torch Conv2d(k=3, padding=dil, dilation=dil, padding_mode='circular') as a
    # single MXU matmul (im2col along K):
    #   x:    (Cin, HW) f32
    #   w9:   (Cout, 9*Cin) bf16, column order (kh, kw, cin)
    #         (== torch weight.permute(0, 2, 3, 1).reshape(Cout, 9*Cin))
    #   bias: (Cout, 1) f32
    xw = jnp.concatenate(
        [_shift_w(x, -dil, W, col), x, _shift_w(x, dil, W, col)], axis=0)    # (3Cin, HW)
    xcat = jnp.concatenate(
        [_shift_h(xw, -dil, W), xw, _shift_h(xw, dil, W)], axis=0)           # (9Cin, HW)
    y = jnp.dot(w9, xcat.astype(w9.dtype), preferred_element_type=jnp.float32)
    return y + bias


# ----------------------------------------------------------------------------
# fused rollout + MSE kernel: grid = (B, T); latent carried in VMEM scratch
# ----------------------------------------------------------------------------
def _rollout_kernel(z_in_ref, z_out_ref, col_ref,
                    inw_ref, inb_ref,
                    g1_ref, b1_ref, c1w_ref, c1b_ref,
                    c2w_ref, c2b_ref, c3w_ref, c3b_ref,
                    g2_ref, b2_ref, f1_ref, f2_ref,
                    og_ref, ob_ref, ow_ref, owb_ref,
                    loss_ref, z_scr,
                    *, n_block, dilation, W):
    t = pl.program_id(1)

    @pl.when(t == 0)
    def _init():
        z_scr[...] = z_in_ref[0]                       # start of the rollout for batch b
        loss_ref[...] = jnp.zeros_like(loss_ref)

    E = inw_ref.shape[0]
    HW = z_scr.shape[1]
    # column-in-W index, hoisted once (used by every W-shift select)
    col = jnp.broadcast_to(col_ref[...], (E, HW))

    z = z_scr[...]                                     # (latent_dim, HW) f32, carried state

    # ---------------- propagator (SimpleCNN) ----------------
    h = _mm(inw_ref[...], z) + inb_ref[...]            # in_proj: 1x1 conv

    def block_body(i, h):                              # DilatedResidualBlock
        # conv path: GN -> conv3x3 -> GELU -> conv3x3(dil) -> GELU -> conv3x3
        y = _group_norm(h, g1_ref[i], b1_ref[i])
        y = _conv3x3_circ(c1w_ref[i], c1b_ref[i], y, 1, W, col)
        y = _gelu(y)
        y = _conv3x3_circ(c2w_ref[i], c2b_ref[i], y, dilation, W, col)
        y = _gelu(y)
        y = _conv3x3_circ(c3w_ref[i], c3b_ref[i], y, 1, W, col)
        h = h + y
        # ffn path: GN -> 1x1 (no bias) -> GELU -> 1x1 (no bias)
        y = _group_norm(h, g2_ref[i], b2_ref[i])
        y = _mm(f2_ref[i], _gelu(_mm(f1_ref[i], y)))
        return h + y

    h = lax.fori_loop(0, n_block, block_body, h, unroll=(n_block <= 4))

    # out_proj: GroupNorm(1, dim) + 1x1 conv
    y = _group_norm(h, og_ref[...], ob_ref[...])
    z_new = _mm(ow_ref[...], y) + owb_ref[...]         # (latent_dim, HW)

    z_scr[...] = z_new                                 # carry to step t+1

    # fused MSE accumulation (sum of squared errors for this (b, t))
    d = z_new - z_out_ref[0, 0]
    loss_ref[...] = loss_ref[...] + jnp.sum(d * d)


PARAM_ORDER = ["in_w", "in_b", "g1", "b1", "c1w", "c1b", "c2w", "c2b",
               "c3w", "c3b", "g2", "b2", "f1", "f2", "og", "obeta", "ow", "owb"]


def rollout_mse(z_in_f, z_out_f, params, *, n_block, dilation, H, W):
    # z_in_f: (B, latent_dim, H*W) f32,  z_out_f: (B, T, latent_dim, H*W) f32
    B, Clat, HW = z_in_f.shape
    T = z_out_f.shape[1]
    assert 0 < dilation < min(H, W)
    col = (jnp.arange(HW, dtype=jnp.int32) % W).reshape(1, HW)
    plist = [params[k] for k in PARAM_ORDER]

    in_specs = [
        pl.BlockSpec((1, Clat, HW), lambda b, t: (b, 0, 0)),        # z_in (read at t==0)
        pl.BlockSpec((1, 1, Clat, HW), lambda b, t: (b, t, 0, 0)),  # z_out[b, t]
        pl.BlockSpec((1, HW), lambda b, t: (0, 0)),                 # column index
    ]
    # weights: constant block index -> DMA'd once, resident across the whole grid
    for p in plist:
        in_specs.append(pl.BlockSpec(p.shape, lambda b, t, nd=p.ndim: (0,) * nd))

    kernel = functools.partial(_rollout_kernel, n_block=n_block,
                               dilation=dilation, W=W)
    sse = pl.pallas_call(
        kernel,
        out_shape=jax.ShapeDtypeStruct((B, 1, 1), jnp.float32),     # per-batch SSE
        grid=(B, T),
        in_specs=in_specs,
        out_specs=pl.BlockSpec((1, 1, 1), lambda b, t: (b, 0, 0)),
        scratch_shapes=[pltpu.VMEM((Clat, HW), jnp.float32)],       # carried latent
        compiler_params=pltpu.CompilerParams(
            dimension_semantics=("parallel", "arbitrary"),          # B parallel, T sequential
            vmem_limit_bytes=32 * 1024 * 1024,
        ),
    )(z_in_f, z_out_f, col, *plist)
    return jnp.sum(sse) / (B * T * Clat * HW)


# ----------------------------------------------------------------------------
# LatentDynamics.forward  (loss_fn == MSE, fused in-kernel)
# ----------------------------------------------------------------------------
def latent_dynamics_forward(z_in, z_out, params, *, n_block, dilation):
    # z_in: (B, 1, C, H, W) NCHW,  z_out: (B, T, C, H, W) NCHW
    B, t_in, C, H, W = z_in.shape
    assert t_in == 1
    T = z_out.shape[1]
    # channels-first flat layout: NCHW -> (B, C, H*W) is a pure reshape (no transpose)
    z_in_f = z_in[:, 0].reshape(B, C, H * W)      # torch .squeeze() with B > 1
    z_out_f = z_out.reshape(B, T, C, H * W)
    return rollout_mse(z_in_f, z_out_f, params,
                       n_block=n_block, dilation=dilation, H=H, W=W)

# TODO(synk): vq_ae (SimpleAutoencoder) encode/decode is frozen/pretrained and not
# defined in the provided source; forward() never uses it, so it is omitted.
# TODO(synk): forward() accepts an arbitrary loss_fn; only the standard MSE loss is
# fused into the kernel here.


# ----------------------------------------------------------------------------
# deterministic parameter init (shapes per SimpleCNN __init__, kernel layout)
# ----------------------------------------------------------------------------
def init_params(key, latent_dim, n_embd, n_block):
    ks = jax.random.split(key, 12)
    f32, bf16 = jnp.float32, jnp.bfloat16

    def nrm(k, shape, scale, dtype=f32):
        return (scale * jax.random.normal(k, shape)).astype(dtype)

    # Kernel weight layouts (channels-first):
    #   1x1 conv : (Cout, Cin)        == torch weight[:, :, 0, 0]
    #   3x3 conv : (Cout, 9*Cin)      == torch weight.permute(0, 2, 3, 1).reshape(Cout, 9*Cin)
    #   biases / GroupNorm affine : (C, 1)
    return dict(
        in_w=nrm(ks[0], (n_embd, latent_dim), 0.3, bf16),
        in_b=nrm(ks[1], (n_embd, 1), 0.1),
        g1=jnp.ones((n_block, n_embd, 1), f32),
        b1=jnp.zeros((n_block, n_embd, 1), f32),
        c1w=nrm(ks[2], (n_block, n_embd, 9 * n_embd), 0.05, bf16),
        c1b=nrm(ks[3], (n_block, n_embd, 1), 0.02),
        c2w=nrm(ks[4], (n_block, n_embd, 9 * n_embd), 0.05, bf16),
        c2b=nrm(ks[5], (n_block, n_embd, 1), 0.02),
        c3w=nrm(ks[6], (n_block, n_embd, 9 * n_embd), 0.05, bf16),
        c3b=nrm(ks[7], (n_block, n_embd, 1), 0.02),
        g2=jnp.ones((n_block, n_embd, 1), f32),
        b2=jnp.zeros((n_block, n_embd, 1), f32),
        f1=nrm(ks[8], (n_block, n_embd, n_embd), 0.1, bf16),
        f2=nrm(ks[9], (n_block, n_embd, n_embd), 0.1, bf16),
        og=jnp.ones((n_embd, 1), f32),
        obeta=jnp.zeros((n_embd, 1), f32),
        ow=nrm(ks[10], (latent_dim, n_embd), 0.1, bf16),
        owb=nrm(ks[11], (latent_dim, 1), 0.02),
    )


if __name__ == "__main__":
    B, T_OUT = 2, 3
    LATENT_DIM, H, W = 4, 16, 16
    PROP_N_EMBD, PROP_N_BLOCK, DILATION = 32, 2, 2

    key = jax.random.PRNGKey(0)
    kz, kt, kp = jax.random.split(key, 3)
    z_in = jax.random.normal(kz, (B, 1, LATENT_DIM, H, W), jnp.float32)
    z_out = jax.random.normal(kt, (B, T_OUT, LATENT_DIM, H, W), jnp.float32)
    params = init_params(kp, LATENT_DIM, PROP_N_EMBD, PROP_N_BLOCK)

    fwd = jax.jit(functools.partial(latent_dynamics_forward,
                                    n_block=PROP_N_BLOCK, dilation=DILATION))
    loss = fwd(z_in, z_out, params)
    jax.block_until_ready(loss)
    assert loss.shape == () and bool(jnp.isfinite(loss))
    print("KERNEL_OK")
</pallas_src>

<mosaic_0001>
module attributes {stable_mosaic.version = 11 : i64} {
  func.func @_rollout_kernel(%arg0: i32, %arg1: i32, %arg2: memref<1x4x256xf32, #tpu.memory_space<vmem>>, %arg3: memref<1x1x4x256xf32, #tpu.memory_space<vmem>>, %arg4: memref<1x256xi32, #tpu.memory_space<vmem>>, %arg5: memref<32x4xbf16, #tpu.memory_space<vmem>>, %arg6: memref<32x1xf32, #tpu.memory_space<vmem>>, %arg7: memref<2x32x1xf32, #tpu.memory_space<vmem>>, %arg8: memref<2x32x1xf32, #tpu.memory_space<vmem>>, %arg9: memref<2x32x288xbf16, #tpu.memory_space<vmem>>, %arg10: memref<2x32x1xf32, #tpu.memory_space<vmem>>, %arg11: memref<2x32x288xbf16, #tpu.memory_space<vmem>>, %arg12: memref<2x32x1xf32, #tpu.memory_space<vmem>>, %arg13: memref<2x32x288xbf16, #tpu.memory_space<vmem>>, %arg14: memref<2x32x1xf32, #tpu.memory_space<vmem>>, %arg15: memref<2x32x1xf32, #tpu.memory_space<vmem>>, %arg16: memref<2x32x1xf32, #tpu.memory_space<vmem>>, %arg17: memref<2x32x32xbf16, #tpu.memory_space<vmem>>, %arg18: memref<2x32x32xbf16, #tpu.memory_space<vmem>>, %arg19: memref<32x1xf32, #tpu.memory_space<vmem>>, %arg20: memref<32x1xf32, #tpu.memory_space<vmem>>, %arg21: memref<4x32xbf16, #tpu.memory_space<vmem>>, %arg22: memref<4x1xf32, #tpu.memory_space<vmem>>, %arg23: memref<1x1x1xf32, #tpu.memory_space<vmem>>, %arg24: memref<4x256xf32, #tpu.memory_space<vmem>>) attributes {dimension_semantics = [#tpu.dimension_semantics<parallel>, #tpu.dimension_semantics<arbitrary>], iteration_bounds = array<i64: 2, 3>, scalar_prefetch = 0 : i64, scratch_operands = 1 : i64, tpu.core_type = #tpu.core_type<tc>, window_params = [{transform_indices = @transform_0, window_bounds = array<i64: 1, 4, 256>}, {transform_indices = @transform_1, window_bounds = array<i64: 1, 1, 4, 256>}, {pipeline_mode = #tpu.pipeline_mode<synchronous>, transform_indices = @transform_2, window_bounds = array<i64: 1, 256>}, {pipeline_mode = #tpu.pipeline_mode<synchronous>, transform_indices = @transform_3, window_bounds = array<i64: 32, 4>}, {pipeline_mode = #tpu.pipeline_mode<synchronous>, transform_indices = @transform_4, window_bounds = array<i64: 32, 1>}, {pipeline_mode = #tpu.pipeline_mode<synchronous>, transform_indices = @transform_5, window_bounds = array<i64: 2, 32, 1>}, {pipeline_mode = #tpu.pipeline_mode<synchronous>, transform_indices = @transform_6, window_bounds = array<i64: 2, 32, 1>}, {pipeline_mode = #tpu.pipeline_mode<synchronous>, transform_indices = @transform_7, window_bounds = array<i64: 2, 32, 288>}, {pipeline_mode = #tpu.pipeline_mode<synchronous>, transform_indices = @transform_8, window_bounds = array<i64: 2, 32, 1>}, {pipeline_mode = #tpu.pipeline_mode<synchronous>, transform_indices = @transform_9, window_bounds = array<i64: 2, 32, 288>}, {pipeline_mode = #tpu.pipeline_mode<synchronous>, transform_indices = @transform_10, window_bounds = array<i64: 2, 32, 1>}, {pipeline_mode = #tpu.pipeline_mode<synchronous>, transform_indices = @transform_11, window_bounds = array<i64: 2, 32, 288>}, {pipeline_mode = #tpu.pipeline_mode<synchronous>, transform_indices = @transform_12, window_bounds = array<i64: 2, 32, 1>}, {pipeline_mode = #tpu.pipeline_mode<synchronous>, transform_indices = @transform_13, window_bounds = array<i64: 2, 32, 1>}, {pipeline_mode = #tpu.pipeline_mode<synchronous>, transform_indices = @transform_14, window_bounds = array<i64: 2, 32, 1>}, {pipeline_mode = #tpu.pipeline_mode<synchronous>, transform_indices = @transform_15, window_bounds = array<i64: 2, 32, 32>}, {pipeline_mode = #tpu.pipeline_mode<synchronous>, transform_indices = @transform_16, window_bounds = array<i64: 2, 32, 32>}, {pipeline_mode = #tpu.pipeline_mode<synchronous>, transform_indices = @transform_17, window_bounds = array<i64: 32, 1>}, {pipeline_mode = #tpu.pipeline_mode<synchronous>, transform_indices = @transform_18, window_bounds = array<i64: 32, 1>}, {pipeline_mode = #tpu.pipeline_mode<synchronous>, transform_indices = @transform_19, window_bounds = array<i64: 4, 32>}, {pipeline_mode = #tpu.pipeline_mode<synchronous>, transform_indices = @transform_20, window_bounds = array<i64: 4, 1>}, {transform_indices = @transform_21, window_bounds = array<i64: 1, 1, 1>}]} {
    %c0_i32 = arith.constant 0 : i32
    %0 = arith.cmpi eq, %arg1, %c0_i32 : i32
    %1 = arith.extui %0 : i1 to i32
    %c0_i32_0 = arith.constant 0 : i32
    %2 = arith.cmpi ne, %1, %c0_i32_0 : i32
    scf.if %2 {
      %c0_176 = arith.constant 0 : index
      %c0_177 = arith.constant 0 : index
      %c0_178 = arith.constant 0 : index
      %419 = vector.load %arg2[%c0_176, %c0_177, %c0_178] : memref<1x4x256xf32, #tpu.memory_space<vmem>>, vector<1x4x256xf32>
      %420 = vector.shape_cast %419 : vector<1x4x256xf32> to vector<4x256xf32>
      %c0_179 = arith.constant 0 : index
      %c0_180 = arith.constant 0 : index
      %421 = vector.load %arg24[%c0_179, %c0_180] : memref<4x256xf32, #tpu.memory_space<vmem>>, vector<4x256xf32>
      tpu.vector_store %arg24[%c0_179, %c0_180], %420 {strides = array<i32>} : memref<4x256xf32, #tpu.memory_space<vmem>>, vector<4x256xf32>,
      %cst_181 = arith.constant 0.000000e+00 : f32
      %422 = vector.broadcast %cst_181 : f32 to vector<1x1x1xf32>
      %c0_182 = arith.constant 0 : index
      %c0_183 = arith.constant 0 : index
      %c0_184 = arith.constant 0 : index
      %423 = vector.load %arg23[%c0_182, %c0_183, %c0_184] : memref<1x1x1xf32, #tpu.memory_space<vmem>>, vector<1x1x1xf32>
      tpu.vector_store %arg23[%c0_182, %c0_183, %c0_184], %422 {strides = array<i32>} : memref<1x1x1xf32, #tpu.memory_space<vmem>>, vector<1x1x1xf32>,
    } else {
    }
    %c0 = arith.constant 0 : index
    %c0_1 = arith.constant 0 : index
    %3 = vector.load %arg4[%c0, %c0_1] : memref<1x256xi32, #tpu.memory_space<vmem>>, vector<1x256xi32>
    %4 = vector.shape_cast %3 : vector<1x256xi32> to vector<1x256xi32>
    %5 = vector.broadcast %4 : vector<1x256xi32> to vector<32x256xi32>
    %c0_2 = arith.constant 0 : index
    %c0_3 = arith.constant 0 : index
    %6 = vector.load %arg24[%c0_2, %c0_3] : memref<4x256xf32, #tpu.memory_space<vmem>>, vector<4x256xf32>
    %c0_4 = arith.constant 0 : index
    %c0_5 = arith.constant 0 : index
    %7 = vector.load %arg5[%c0_4, %c0_5] : memref<32x4xbf16, #tpu.memory_space<vmem>>, vector<32x4xbf16>
    %8 = arith.truncf %6 : vector<4x256xf32> to vector<4x256xbf16>
    %cst = arith.constant dense<0.000000e+00> : vector<32x256xf32>
    %9 = tpu.matmul %7, %8, %cst {dimension_numbers = #tpu.dot_dimension_numbers<[1], [0], [0], [1], [0, 0, 1, 1], [], []>} : vector<32x4xbf16>, vector<4x256xbf16>, vector<32x256xf32> -> vector<32x256xf32>
    %c0_6 = arith.constant 0 : index
    %c0_7 = arith.constant 0 : index
    %10 = vector.load %arg6[%c0_6, %c0_7] : memref<32x1xf32, #tpu.memory_space<vmem>>, vector<32x1xf32>
    %11 = vector.broadcast %10 : vector<32x1xf32> to vector<32x256xf32>
    %12 = arith.addf %9, %11 : vector<32x256xf32>
    %c0_i32_8 = arith.constant 0 : i32
    %13 = arith.index_cast %c0_i32_8 : i32 to index
    %c0_9 = arith.constant 0 : index
    %c0_10 = arith.constant 0 : index
    %14 = vector.load %arg7[%13, %c0_9, %c0_10] : memref<2x32x1xf32, #tpu.memory_space<vmem>>, vector<1x32x1xf32>
    %15 = vector.shape_cast %14 : vector<1x32x1xf32> to vector<32x1xf32>
    %16 = arith.index_cast %c0_i32_8 : i32 to index
    %c0_11 = arith.constant 0 : index
    %c0_12 = arith.constant 0 : index
    %17 = vector.load %arg8[%16, %c0_11, %c0_12] : memref<2x32x1xf32, #tpu.memory_space<vmem>>, vector<1x32x1xf32>
    %18 = vector.shape_cast %17 : vector<1x32x1xf32> to vector<32x1xf32>
    %19 = vector.shape_cast %12 : vector<32x256xf32> to vector<1x32x256xf32>
    %cst_13 = arith.constant dense<0.000000e+00> : vector<1xf32>
    %20 = vector.multi_reduction <add>, %19, %cst_13 [1, 2] : vector<1x32x256xf32> to vector<1xf32>
    %21 = vector.shape_cast %20 : vector<1xf32> to vector<1x1x1xf32>
    %22 = vector.extract %21[0, 0, 0] : f32 from vector<1x1x1xf32>
    %23 = arith.mulf %12, %12 : vector<32x256xf32>
    %24 = vector.shape_cast %23 : vector<32x256xf32> to vector<1x32x256xf32>
    %cst_14 = arith.constant dense<0.000000e+00> : vector<1xf32>
    %25 = vector.multi_reduction <add>, %24, %cst_14 [1, 2] : vector<1x32x256xf32> to vector<1xf32>
    %26 = vector.shape_cast %25 : vector<1xf32> to vector<1x1x1xf32>
    %27 = vector.extract %26[0, 0, 0] : f32 from vector<1x1x1xf32>
    %cst_15 = arith.constant 8.192000e+03 : f32
    %28 = arith.divf %22, %cst_15 : f32
    %cst_16 = arith.constant 8.192000e+03 : f32
    %29 = arith.divf %27, %cst_16 : f32
    %30 = arith.mulf %28, %28 : f32
    %31 = arith.subf %29, %30 : f32
    %cst_17 = arith.constant 9.99999974E-6 : f32
    %32 = arith.addf %31, %cst_17 : f32
    %33 = math.rsqrt %32 : f32
    %34 = vector.broadcast %28 : f32 to vector<32x256xf32>
    %35 = arith.subf %12, %34 : vector<32x256xf32>
    %36 = vector.broadcast %33 : f32 to vector<32x256xf32>
    %37 = arith.mulf %35, %36 : vector<32x256xf32>
    %38 = vector.broadcast %15 : vector<32x1xf32> to vector<32x256xf32>
    %39 = arith.mulf %37, %38 : vector<32x256xf32>
    %40 = vector.broadcast %18 : vector<32x1xf32> to vector<32x256xf32>
    %41 = arith.addf %39, %40 : vector<32x256xf32>
    %42 = arith.index_cast %c0_i32_8 : i32 to index
    %c0_18 = arith.constant 0 : index
    %c0_19 = arith.constant 0 : index
    %43 = vector.load %arg9[%42, %c0_18, %c0_19] : memref<2x32x288xbf16, #tpu.memory_space<vmem>>, vector<1x32x288xbf16>
    %44 = vector.shape_cast %43 : vector<1x32x288xbf16> to vector<32x288xbf16>
    %45 = arith.index_cast %c0_i32_8 : i32 to index
    %c0_20 = arith.constant 0 : index
    %c0_21 = arith.constant 0 : index
    %46 = vector.load %arg10[%45, %c0_20, %c0_21] : memref<2x32x1xf32, #tpu.memory_space<vmem>>, vector<1x32x1xf32>
    %47 = vector.shape_cast %46 : vector<1x32x1xf32> to vector<32x1xf32>
    %c1_i32 = arith.constant 1 : i32
    %48 = tpu.dynamic_rotate %41 by %c1_i32 dim 1 : vector<32x256xf32>, i32 -> vector<32x256xf32>
    %c241_i32 = arith.constant 241 : i32
    %49 = tpu.dynamic_rotate %41 by %c241_i32 dim 1 : vector<32x256xf32>, i32 -> vector<32x256xf32>
    %c1_i32_22 = arith.constant 1 : i32
    %50 = vector.broadcast %c1_i32_22 : i32 to vector<32x256xi32>
    %51 = arith.cmpi slt, %5, %50 : vector<32x256xi32>
    %52 = arith.select %51, %49, %48 : vector<32x256xi1>, vector<32x256xf32>
    %c255_i32 = arith.constant 255 : i32
    %53 = tpu.dynamic_rotate %41 by %c255_i32 dim 1 : vector<32x256xf32>, i32 -> vector<32x256xf32>
    %c15_i32 = arith.constant 15 : i32
    %54 = tpu.dynamic_rotate %41 by %c15_i32 dim 1 : vector<32x256xf32>, i32 -> vector<32x256xf32>
    %c15_i32_23 = arith.constant 15 : i32
    %55 = vector.broadcast %c15_i32_23 : i32 to vector<32x256xi32>
    %56 = arith.cmpi sge, %5, %55 : vector<32x256xi32>
    %57 = arith.select %56, %54, %53 : vector<32x256xi1>, vector<32x256xf32>
    %58 = tpu.concatenate %52, %41, %57 in 0 : vector<32x256xf32>, vector<32x256xf32>, vector<32x256xf32> -> vector<96x256xf32>
    %c16_i32 = arith.constant 16 : i32
    %59 = tpu.dynamic_rotate %58 by %c16_i32 dim 1 : vector<96x256xf32>, i32 -> vector<96x256xf32>
    %c240_i32 = arith.constant 240 : i32
    %60 = tpu.dynamic_rotate %58 by %c240_i32 dim 1 : vector<96x256xf32>, i32 -> vector<96x256xf32>
    %61 = tpu.concatenate %59, %58, %60 in 0 : vector<96x256xf32>, vector<96x256xf32>, vector<96x256xf32> -> vector<288x256xf32>
    %62 = arith.truncf %61 : vector<288x256xf32> to vector<288x256xbf16>
    %cst_24 = arith.constant dense<0.000000e+00> : vector<32x256xf32>
    %63 = tpu.matmul %44, %62, %cst_24 {dimension_numbers = #tpu.dot_dimension_numbers<[1], [0], [0], [1], [0, 0, 1, 1], [], []>} : vector<32x288xbf16>, vector<288x256xbf16>, vector<32x256xf32> -> vector<32x256xf32>
    %64 = vector.broadcast %47 : vector<32x1xf32> to vector<32x256xf32>
    %65 = arith.addf %63, %64 : vector<32x256xf32>
    %cst_25 = arith.constant 5.000000e-01 : f32
    %66 = vector.broadcast %cst_25 : f32 to vector<32x256xf32>
    %67 = arith.mulf %66, %65 : vector<32x256xf32>
    %cst_26 = arith.constant 4.471500e-02 : f32
    %68 = vector.broadcast %cst_26 : f32 to vector<32x256xf32>
    %69 = arith.mulf %68, %65 : vector<32x256xf32>
    %70 = arith.mulf %69, %65 : vector<32x256xf32>
    %71 = arith.mulf %70, %65 : vector<32x256xf32>
    %72 = arith.addf %65, %71 : vector<32x256xf32>
    %cst_27 = arith.constant 0.797884583 : f32
    %73 = vector.broadcast %cst_27 : f32 to vector<32x256xf32>
    %74 = arith.mulf %73, %72 : vector<32x256xf32>
    %75 = math.tanh %74 : vector<32x256xf32>
    %cst_28 = arith.constant 1.000000e+00 : f32
    %76 = vector.broadcast %cst_28 : f32 to vector<32x256xf32>
    %77 = arith.addf %76, %75 : vector<32x256xf32>
    %78 = arith.mulf %67, %77 : vector<32x256xf32>
    %79 = arith.index_cast %c0_i32_8 : i32 to index
    %c0_29 = arith.constant 0 : index
    %c0_30 = arith.constant 0 : index
    %80 = vector.load %arg11[%79, %c0_29, %c0_30] : memref<2x32x288xbf16, #tpu.memory_space<vmem>>, vector<1x32x288xbf16>
    %81 = vector.shape_cast %80 : vector<1x32x288xbf16> to vector<32x288xbf16>
    %82 = arith.index_cast %c0_i32_8 : i32 to index
    %c0_31 = arith.constant 0 : index
    %c0_32 = arith.constant 0 : index
    %83 = vector.load %arg12[%82, %c0_31, %c0_32] : memref<2x32x1xf32, #tpu.memory_space<vmem>>, vector<1x32x1xf32>
    %84 = vector.shape_cast %83 : vector<1x32x1xf32> to vector<32x1xf32>
    %c2_i32 = arith.constant 2 : i32
    %85 = tpu.dynamic_rotate %78 by %c2_i32 dim 1 : vector<32x256xf32>, i32 -> vector<32x256xf32>
    %c242_i32 = arith.constant 242 : i32
    %86 = tpu.dynamic_rotate %78 by %c242_i32 dim 1 : vector<32x256xf32>, i32 -> vector<32x256xf32>
    %c2_i32_33 = arith.constant 2 : i32
    %87 = vector.broadcast %c2_i32_33 : i32 to vector<32x256xi32>
    %88 = arith.cmpi slt, %5, %87 : vector<32x256xi32>
    %89 = arith.select %88, %86, %85 : vector<32x256xi1>, vector<32x256xf32>
    %c254_i32 = arith.constant 254 : i32
    %90 = tpu.dynamic_rotate %78 by %c254_i32 dim 1 : vector<32x256xf32>, i32 -> vector<32x256xf32>
    %c14_i32 = arith.constant 14 : i32
    %91 = tpu.dynamic_rotate %78 by %c14_i32 dim 1 : vector<32x256xf32>, i32 -> vector<32x256xf32>
    %c14_i32_34 = arith.constant 14 : i32
    %92 = vector.broadcast %c14_i32_34 : i32 to vector<32x256xi32>
    %93 = arith.cmpi sge, %5, %92 : vector<32x256xi32>
    %94 = arith.select %93, %91, %90 : vector<32x256xi1>, vector<32x256xf32>
    %95 = tpu.concatenate %89, %78, %94 in 0 : vector<32x256xf32>, vector<32x256xf32>, vector<32x256xf32> -> vector<96x256xf32>
    %c32_i32 = arith.constant 32 : i32
    %96 = tpu.dynamic_rotate %95 by %c32_i32 dim 1 : vector<96x256xf32>, i32 -> vector<96x256xf32>
    %c224_i32 = arith.constant 224 : i32
    %97 = tpu.dynamic_rotate %95 by %c224_i32 dim 1 : vector<96x256xf32>, i32 -> vector<96x256xf32>
    %98 = tpu.concatenate %96, %95, %97 in 0 : vector<96x256xf32>, vector<96x256xf32>, vector<96x256xf32> -> vector<288x256xf32>
    %99 = arith.truncf %98 : vector<288x256xf32> to vector<288x256xbf16>
    %cst_35 = arith.constant dense<0.000000e+00> : vector<32x256xf32>
    %100 = tpu.matmul %81, %99, %cst_35 {dimension_numbers = #tpu.dot_dimension_numbers<[1], [0], [0], [1], [0, 0, 1, 1], [], []>} : vector<32x288xbf16>, vector<288x256xbf16>, vector<32x256xf32> -> vector<32x256xf32>
    %101 = vector.broadcast %84 : vector<32x1xf32> to vector<32x256xf32>
    %102 = arith.addf %100, %101 : vector<32x256xf32>
    %cst_36 = arith.constant 5.000000e-01 : f32
    %103 = vector.broadcast %cst_36 : f32 to vector<32x256xf32>
    %104 = arith.mulf %103, %102 : vector<32x256xf32>
    %cst_37 = arith.constant 4.471500e-02 : f32
    %105 = vector.broadcast %cst_37 : f32 to vector<32x256xf32>
    %106 = arith.mulf %105, %102 : vector<32x256xf32>
    %107 = arith.mulf %106, %102 : vector<32x256xf32>
    %108 = arith.mulf %107, %102 : vector<32x256xf32>
    %109 = arith.addf %102, %108 : vector<32x256xf32>
    %cst_38 = arith.constant 0.797884583 : f32
    %110 = vector.broadcast %cst_38 : f32 to vector<32x256xf32>
    %111 = arith.mulf %110, %109 : vector<32x256xf32>
    %112 = math.tanh %111 : vector<32x256xf32>
    %cst_39 = arith.constant 1.000000e+00 : f32
    %113 = vector.broadcast %cst_39 : f32 to vector<32x256xf32>
    %114 = arith.addf %113, %112 : vector<32x256xf32>
    %115 = arith.mulf %104, %114 : vector<32x256xf32>
    %116 = arith.index_cast %c0_i32_8 : i32 to index
    %c0_40 = arith.constant 0 : index
    %c0_41 = arith.constant 0 : index
    %117 = vector.load %arg13[%116, %c0_40, %c0_41] : memref<2x32x288xbf16, #tpu.memory_space<vmem>>, vector<1x32x288xbf16>
    %118 = vector.shape_cast %117 : vector<1x32x288xbf16> to vector<32x288xbf16>
    %119 = arith.index_cast %c0_i32_8 : i32 to index
    %c0_42 = arith.constant 0 : index
    %c0_43 = arith.constant 0 : index
    %120 = vector.load %arg14[%119, %c0_42, %c0_43] : memref<2x32x1xf32, #tpu.memory_space<vmem>>, vector<1x32x1xf32>
    %121 = vector.shape_cast %120 : vector<1x32x1xf32> to vector<32x1xf32>
    %c1_i32_44 = arith.constant 1 : i32
    %122 = tpu.dynamic_rotate %115 by %c1_i32_44 dim 1 : vector<32x256xf32>, i32 -> vector<32x256xf32>
    %c241_i32_45 = arith.constant 241 : i32
    %123 = tpu.dynamic_rotate %115 by %c241_i32_45 dim 1 : vector<32x256xf32>, i32 -> vector<32x256xf32>
    %c1_i32_46 = arith.constant 1 : i32
    %124 = vector.broadcast %c1_i32_46 : i32 to vector<32x256xi32>
    %125 = arith.cmpi slt, %5, %124 : vector<32x256xi32>
    %126 = arith.select %125, %123, %122 : vector<32x256xi1>, vector<32x256xf32>
    %c255_i32_47 = arith.constant 255 : i32
    %127 = tpu.dynamic_rotate %115 by %c255_i32_47 dim 1 : vector<32x256xf32>, i32 -> vector<32x256xf32>
    %c15_i32_48 = arith.constant 15 : i32
    %128 = tpu.dynamic_rotate %115 by %c15_i32_48 dim 1 : vector<32x256xf32>, i32 -> vector<32x256xf32>
    %c15_i32_49 = arith.constant 15 : i32
    %129 = vector.broadcast %c15_i32_49 : i32 to vector<32x256xi32>
    %130 = arith.cmpi sge, %5, %129 : vector<32x256xi32>
    %131 = arith.select %130, %128, %127 : vector<32x256xi1>, vector<32x256xf32>
    %132 = tpu.concatenate %126, %115, %131 in 0 : vector<32x256xf32>, vector<32x256xf32>, vector<32x256xf32> -> vector<96x256xf32>
    %c16_i32_50 = arith.constant 16 : i32
    %133 = tpu.dynamic_rotate %132 by %c16_i32_50 dim 1 : vector<96x256xf32>, i32 -> vector<96x256xf32>
    %c240_i32_51 = arith.constant 240 : i32
    %134 = tpu.dynamic_rotate %132 by %c240_i32_51 dim 1 : vector<96x256xf32>, i32 -> vector<96x256xf32>
    %135 = tpu.concatenate %133, %132, %134 in 0 : vector<96x256xf32>, vector<96x256xf32>, vector<96x256xf32> -> vector<288x256xf32>
    %136 = arith.truncf %135 : vector<288x256xf32> to vector<288x256xbf16>
    %cst_52 = arith.constant dense<0.000000e+00> : vector<32x256xf32>
    %137 = tpu.matmul %118, %136, %cst_52 {dimension_numbers = #tpu.dot_dimension_numbers<[1], [0], [0], [1], [0, 0, 1, 1], [], []>} : vector<32x288xbf16>, vector<288x256xbf16>, vector<32x256xf32> -> vector<32x256xf32>
    %138 = vector.broadcast %121 : vector<32x1xf32> to vector<32x256xf32>
    %139 = arith.addf %137, %138 : vector<32x256xf32>
    %140 = arith.addf %12, %139 : vector<32x256xf32>
    %141 = arith.index_cast %c0_i32_8 : i32 to index
    %c0_53 = arith.constant 0 : index
    %c0_54 = arith.constant 0 : index
    %142 = vector.load %arg15[%141, %c0_53, %c0_54] : memref<2x32x1xf32, #tpu.memory_space<vmem>>, vector<1x32x1xf32>
    %143 = vector.shape_cast %142 : vector<1x32x1xf32> to vector<32x1xf32>
    %144 = arith.index_cast %c0_i32_8 : i32 to index
    %c0_55 = arith.constant 0 : index
    %c0_56 = arith.constant 0 : index
    %145 = vector.load %arg16[%144, %c0_55, %c0_56] : memref<2x32x1xf32, #tpu.memory_space<vmem>>, vector<1x32x1xf32>
    %146 = vector.shape_cast %145 : vector<1x32x1xf32> to vector<32x1xf32>
    %147 = vector.shape_cast %140 : vector<32x256xf32> to vector<1x32x256xf32>
    %cst_57 = arith.constant dense<0.000000e+00> : vector<1xf32>
    %148 = vector.multi_reduction <add>, %147, %cst_57 [1, 2] : vector<1x32x256xf32> to vector<1xf32>
    %149 = vector.shape_cast %148 : vector<1xf32> to vector<1x1x1xf32>
    %150 = vector.extract %149[0, 0, 0] : f32 from vector<1x1x1xf32>
    %151 = arith.mulf %140, %140 : vector<32x256xf32>
    %152 = vector.shape_cast %151 : vector<32x256xf32> to vector<1x32x256xf32>
    %cst_58 = arith.constant dense<0.000000e+00> : vector<1xf32>
    %153 = vector.multi_reduction <add>, %152, %cst_58 [1, 2] : vector<1x32x256xf32> to vector<1xf32>
    %154 = vector.shape_cast %153 : vector<1xf32> to vector<1x1x1xf32>
    %155 = vector.extract %154[0, 0, 0] : f32 from vector<1x1x1xf32>
    %cst_59 = arith.constant 8.192000e+03 : f32
    %156 = arith.divf %150, %cst_59 : f32
    %cst_60 = arith.constant 8.192000e+03 : f32
    %157 = arith.divf %155, %cst_60 : f32
    %158 = arith.mulf %156, %156 : f32
    %159 = arith.subf %157, %158 : f32
    %cst_61 = arith.constant 9.99999974E-6 : f32
    %160 = arith.addf %159, %cst_61 : f32
    %161 = math.rsqrt %160 : f32
    %162 = vector.broadcast %156 : f32 to vector<32x256xf32>
    %163 = arith.subf %140, %162 : vector<32x256xf32>
    %164 = vector.broadcast %161 : f32 to vector<32x256xf32>
    %165 = arith.mulf %163, %164 : vector<32x256xf32>
    %166 = vector.broadcast %143 : vector<32x1xf32> to vector<32x256xf32>
    %167 = arith.mulf %165, %166 : vector<32x256xf32>
    %168 = vector.broadcast %146 : vector<32x1xf32> to vector<32x256xf32>
    %169 = arith.addf %167, %168 : vector<32x256xf32>
    %170 = arith.index_cast %c0_i32_8 : i32 to index
    %c0_62 = arith.constant 0 : index
    %c0_63 = arith.constant 0 : index
    %171 = vector.load %arg18[%170, %c0_62, %c0_63] : memref<2x32x32xbf16, #tpu.memory_space<vmem>>, vector<1x32x32xbf16>
    %172 = vector.shape_cast %171 : vector<1x32x32xbf16> to vector<32x32xbf16>
    %173 = arith.index_cast %c0_i32_8 : i32 to index
    %c0_64 = arith.constant 0 : index
    %c0_65 = arith.constant 0 : index
    %174 = vector.load %arg17[%173, %c0_64, %c0_65] : memref<2x32x32xbf16, #tpu.memory_space<vmem>>, vector<1x32x32xbf16>
    %175 = vector.shape_cast %174 : vector<1x32x32xbf16> to vector<32x32xbf16>
    %176 = arith.truncf %169 : vector<32x256xf32> to vector<32x256xbf16>
    %cst_66 = arith.constant dense<0.000000e+00> : vector<32x256xf32>
    %177 = tpu.matmul %175, %176, %cst_66 {dimension_numbers = #tpu.dot_dimension_numbers<[1], [0], [0], [1], [0, 0, 1, 1], [], []>} : vector<32x32xbf16>, vector<32x256xbf16>, vector<32x256xf32> -> vector<32x256xf32>
    %cst_67 = arith.constant 5.000000e-01 : f32
    %178 = vector.broadcast %cst_67 : f32 to vector<32x256xf32>
    %179 = arith.mulf %178, %177 : vector<32x256xf32>
    %cst_68 = arith.constant 4.471500e-02 : f32
    %180 = vector.broadcast %cst_68 : f32 to vector<32x256xf32>
    %181 = arith.mulf %180, %177 : vector<32x256xf32>
    %182 = arith.mulf %181, %177 : vector<32x256xf32>
    %183 = arith.mulf %182, %177 : vector<32x256xf32>
    %184 = arith.addf %177, %183 : vector<32x256xf32>
    %cst_69 = arith.constant 0.797884583 : f32
    %185 = vector.broadcast %cst_69 : f32 to vector<32x256xf32>
    %186 = arith.mulf %185, %184 : vector<32x256xf32>
    %187 = math.tanh %186 : vector<32x256xf32>
    %cst_70 = arith.constant 1.000000e+00 : f32
    %188 = vector.broadcast %cst_70 : f32 to vector<32x256xf32>
    %189 = arith.addf %188, %187 : vector<32x256xf32>
    %190 = arith.mulf %179, %189 : vector<32x256xf32>
    %191 = arith.truncf %190 : vector<32x256xf32> to vector<32x256xbf16>
    %cst_71 = arith.constant dense<0.000000e+00> : vector<32x256xf32>
    %192 = tpu.matmul %172, %191, %cst_71 {dimension_numbers = #tpu.dot_dimension_numbers<[1], [0], [0], [1], [0, 0, 1, 1], [], []>} : vector<32x32xbf16>, vector<32x256xbf16>, vector<32x256xf32> -> vector<32x256xf32>
    %193 = arith.addf %140, %192 : vector<32x256xf32>
    %c1_i32_72 = arith.constant 1 : i32
    %194 = arith.index_cast %c1_i32_72 : i32 to index
    %c0_73 = arith.constant 0 : index
    %c0_74 = arith.constant 0 : index
    %195 = vector.load %arg7[%194, %c0_73, %c0_74] : memref<2x32x1xf32, #tpu.memory_space<vmem>>, vector<1x32x1xf32>
    %196 = vector.shape_cast %195 : vector<1x32x1xf32> to vector<32x1xf32>
    %197 = arith.index_cast %c1_i32_72 : i32 to index
    %c0_75 = arith.constant 0 : index
    %c0_76 = arith.constant 0 : index
    %198 = vector.load %arg8[%197, %c0_75, %c0_76] : memref<2x32x1xf32, #tpu.memory_space<vmem>>, vector<1x32x1xf32>
    %199 = vector.shape_cast %198 : vector<1x32x1xf32> to vector<32x1xf32>
    %200 = vector.shape_cast %193 : vector<32x256xf32> to vector<1x32x256xf32>
    %cst_77 = arith.constant dense<0.000000e+00> : vector<1xf32>
    %201 = vector.multi_reduction <add>, %200, %cst_77 [1, 2] : vector<1x32x256xf32> to vector<1xf32>
    %202 = vector.shape_cast %201 : vector<1xf32> to vector<1x1x1xf32>
    %203 = vector.extract %202[0, 0, 0] : f32 from vector<1x1x1xf32>
    %204 = arith.mulf %193, %193 : vector<32x256xf32>
    %205 = vector.shape_cast %204 : vector<32x256xf32> to vector<1x32x256xf32>
    %cst_78 = arith.constant dense<0.000000e+00> : vector<1xf32>
    %206 = vector.multi_reduction <add>, %205, %cst_78 [1, 2] : vector<1x32x256xf32> to vector<1xf32>
    %207 = vector.shape_cast %206 : vector<1xf32> to vector<1x1x1xf32>
    %208 = vector.extract %207[0, 0, 0] : f32 from vector<1x1x1xf32>
    %cst_79 = arith.constant 8.192000e+03 : f32
    %209 = arith.divf %203, %cst_79 : f32
    %cst_80 = arith.constant 8.192000e+03 : f32
    %210 = arith.divf %208, %cst_80 : f32
    %211 = arith.mulf %209, %209 : f32
    %212 = arith.subf %210, %211 : f32
    %cst_81 = arith.constant 9.99999974E-6 : f32
    %213 = arith.addf %212, %cst_81 : f32
    %214 = math.rsqrt %213 : f32
    %215 = vector.broadcast %209 : f32 to vector<32x256xf32>
    %216 = arith.subf %193, %215 : vector<32x256xf32>
    %217 = vector.broadcast %214 : f32 to vector<32x256xf32>
    %218 = arith.mulf %216, %217 : vector<32x256xf32>
    %219 = vector.broadcast %196 : vector<32x1xf32> to vector<32x256xf32>
    %220 = arith.mulf %218, %219 : vector<32x256xf32>
    %221 = vector.broadcast %199 : vector<32x1xf32> to vector<32x256xf32>
    %222 = arith.addf %220, %221 : vector<32x256xf32>
    %223 = arith.index_cast %c1_i32_72 : i32 to index
    %c0_82 = arith.constant 0 : index
    %c0_83 = arith.constant 0 : index
    %224 = vector.load %arg9[%223, %c0_82, %c0_83] : memref<2x32x288xbf16, #tpu.memory_space<vmem>>, vector<1x32x288xbf16>
    %225 = vector.shape_cast %224 : vector<1x32x288xbf16> to vector<32x288xbf16>
    %226 = arith.index_cast %c1_i32_72 : i32 to index
    %c0_84 = arith.constant 0 : index
    %c0_85 = arith.constant 0 : index
    %227 = vector.load %arg10[%226, %c0_84, %c0_85] : memref<2x32x1xf32, #tpu.memory_space<vmem>>, vector<1x32x1xf32>
    %228 = vector.shape_cast %227 : vector<1x32x1xf32> to vector<32x1xf32>
    %c1_i32_86 = arith.constant 1 : i32
    %229 = tpu.dynamic_rotate %222 by %c1_i32_86 dim 1 : vector<32x256xf32>, i32 -> vector<32x256xf32>
    %c241_i32_87 = arith.constant 241 : i32
    %230 = tpu.dynamic_rotate %222 by %c241_i32_87 dim 1 : vector<32x256xf32>, i32 -> vector<32x256xf32>
    %c1_i32_88 = arith.constant 1 : i32
    %231 = vector.broadcast %c1_i32_88 : i32 to vector<32x256xi32>
    %232 = arith.cmpi slt, %5, %231 : vector<32x256xi32>
    %233 = arith.select %232, %230, %229 : vector<32x256xi1>, vector<32x256xf32>
    %c255_i32_89 = arith.constant 255 : i32
    %234 = tpu.dynamic_rotate %222 by %c255_i32_89 dim 1 : vector<32x256xf32>, i32 -> vector<32x256xf32>
    %c15_i32_90 = arith.constant 15 : i32
    %235 = tpu.dynamic_rotate %222 by %c15_i32_90 dim 1 : vector<32x256xf32>, i32 -> vector<32x256xf32>
    %c15_i32_91 = arith.constant 15 : i32
    %236 = vector.broadcast %c15_i32_91 : i32 to vector<32x256xi32>
    %237 = arith.cmpi sge, %5, %236 : vector<32x256xi32>
    %238 = arith.select %237, %235, %234 : vector<32x256xi1>, vector<32x256xf32>
    %239 = tpu.concatenate %233, %222, %238 in 0 : vector<32x256xf32>, vector<32x256xf32>, vector<32x256xf32> -> vector<96x256xf32>
    %c16_i32_92 = arith.constant 16 : i32
    %240 = tpu.dynamic_rotate %239 by %c16_i32_92 dim 1 : vector<96x256xf32>, i32 -> vector<96x256xf32>
    %c240_i32_93 = arith.constant 240 : i32
    %241 = tpu.dynamic_rotate %239 by %c240_i32_93 dim 1 : vector<96x256xf32>, i32 -> vector<96x256xf32>
    %242 = tpu.concatenate %240, %239, %241 in 0 : vector<96x256xf32>, vector<96x256xf32>, vector<96x256xf32> -> vector<288x256xf32>
    %243 = arith.truncf %242 : vector<288x256xf32> to vector<288x256xbf16>
    %cst_94 = arith.constant dense<0.000000e+00> : vector<32x256xf32>
    %244 = tpu.matmul %225, %243, %cst_94 {dimension_numbers = #tpu.dot_dimension_numbers<[1], [0], [0], [1], [0, 0, 1, 1], [], []>} : vector<32x288xbf16>, vector<288x256xbf16>, vector<32x256xf32> -> vector<32x256xf32>
    %245 = vector.broadcast %228 : vector<32x1xf32> to vector<32x256xf32>
    %246 = arith.addf %244, %245 : vector<32x256xf32>
    %cst_95 = arith.constant 5.000000e-01 : f32
    %247 = vector.broadcast %cst_95 : f32 to vector<32x256xf32>
    %248 = arith.mulf %247, %246 : vector<32x256xf32>
    %cst_96 = arith.constant 4.471500e-02 : f32
    %249 = vector.broadcast %cst_96 : f32 to vector<32x256xf32>
    %250 = arith.mulf %249, %246 : vector<32x256xf32>
    %251 = arith.mulf %250, %246 : vector<32x256xf32>
    %252 = arith.mulf %251, %246 : vector<32x256xf32>
    %253 = arith.addf %246, %252 : vector<32x256xf32>
    %cst_97 = arith.constant 0.797884583 : f32
    %254 = vector.broadcast %cst_97 : f32 to vector<32x256xf32>
    %255 = arith.mulf %254, %253 : vector<32x256xf32>
    %256 = math.tanh %255 : vector<32x256xf32>
    %cst_98 = arith.constant 1.000000e+00 : f32
    %257 = vector.broadcast %cst_98 : f32 to vector<32x256xf32>
    %258 = arith.addf %257, %256 : vector<32x256xf32>
    %259 = arith.mulf %248, %258 : vector<32x256xf32>
    %260 = arith.index_cast %c1_i32_72 : i32 to index
    %c0_99 = arith.constant 0 : index
    %c0_100 = arith.constant 0 : index
    %261 = vector.load %arg11[%260, %c0_99, %c0_100] : memref<2x32x288xbf16, #tpu.memory_space<vmem>>, vector<1x32x288xbf16>
    %262 = vector.shape_cast %261 : vector<1x32x288xbf16> to vector<32x288xbf16>
    %263 = arith.index_cast %c1_i32_72 : i32 to index
    %c0_101 = arith.constant 0 : index
    %c0_102 = arith.constant 0 : index
    %264 = vector.load %arg12[%263, %c0_101, %c0_102] : memref<2x32x1xf32, #tpu.memory_space<vmem>>, vector<1x32x1xf32>
    %265 = vector.shape_cast %264 : vector<1x32x1xf32> to vector<32x1xf32>
    %c2_i32_103 = arith.constant 2 : i32
    %266 = tpu.dynamic_rotate %259 by %c2_i32_103 dim 1 : vector<32x256xf32>, i32 -> vector<32x256xf32>
    %c242_i32_104 = arith.constant 242 : i32
    %267 = tpu.dynamic_rotate %259 by %c242_i32_104 dim 1 : vector<32x256xf32>, i32 -> vector<32x256xf32>
    %c2_i32_105 = arith.constant 2 : i32
    %268 = vector.broadcast %c2_i32_105 : i32 to vector<32x256xi32>
    %269 = arith.cmpi slt, %5, %268 : vector<32x256xi32>
    %270 = arith.select %269, %267, %266 : vector<32x256xi1>, vector<32x256xf32>
    %c254_i32_106 = arith.constant 254 : i32
    %271 = tpu.dynamic_rotate %259 by %c254_i32_106 dim 1 : vector<32x256xf32>, i32 -> vector<32x256xf32>
    %c14_i32_107 = arith.constant 14 : i32
    %272 = tpu.dynamic_rotate %259 by %c14_i32_107 dim 1 : vector<32x256xf32>, i32 -> vector<32x256xf32>
    %c14_i32_108 = arith.constant 14 : i32
    %273 = vector.broadcast %c14_i32_108 : i32 to vector<32x256xi32>
    %274 = arith.cmpi sge, %5, %273 : vector<32x256xi32>
    %275 = arith.select %274, %272, %271 : vector<32x256xi1>, vector<32x256xf32>
    %276 = tpu.concatenate %270, %259, %275 in 0 : vector<32x256xf32>, vector<32x256xf32>, vector<32x256xf32> -> vector<96x256xf32>
    %c32_i32_109 = arith.constant 32 : i32
    %277 = tpu.dynamic_rotate %276 by %c32_i32_109 dim 1 : vector<96x256xf32>, i32 -> vector<96x256xf32>
    %c224_i32_110 = arith.constant 224 : i32
    %278 = tpu.dynamic_rotate %276 by %c224_i32_110 dim 1 : vector<96x256xf32>, i32 -> vector<96x256xf32>
    %279 = tpu.concatenate %277, %276, %278 in 0 : vector<96x256xf32>, vector<96x256xf32>, vector<96x256xf32> -> vector<288x256xf32>
    %280 = arith.truncf %279 : vector<288x256xf32> to vector<288x256xbf16>
    %cst_111 = arith.constant dense<0.000000e+00> : vector<32x256xf32>
    %281 = tpu.matmul %262, %280, %cst_111 {dimension_numbers = #tpu.dot_dimension_numbers<[1], [0], [0], [1], [0, 0, 1, 1], [], []>} : vector<32x288xbf16>, vector<288x256xbf16>, vector<32x256xf32> -> vector<32x256xf32>
    %282 = vector.broadcast %265 : vector<32x1xf32> to vector<32x256xf32>
    %283 = arith.addf %281, %282 : vector<32x256xf32>
    %cst_112 = arith.constant 5.000000e-01 : f32
    %284 = vector.broadcast %cst_112 : f32 to vector<32x256xf32>
    %285 = arith.mulf %284, %283 : vector<32x256xf32>
    %cst_113 = arith.constant 4.471500e-02 : f32
    %286 = vector.broadcast %cst_113 : f32 to vector<32x256xf32>
    %287 = arith.mulf %286, %283 : vector<32x256xf32>
    %288 = arith.mulf %287, %283 : vector<32x256xf32>
    %289 = arith.mulf %288, %283 : vector<32x256xf32>
    %290 = arith.addf %283, %289 : vector<32x256xf32>
    %cst_114 = arith.constant 0.797884583 : f32
    %291 = vector.broadcast %cst_114 : f32 to vector<32x256xf32>
    %292 = arith.mulf %291, %290 : vector<32x256xf32>
    %293 = math.tanh %292 : vector<32x256xf32>
    %cst_115 = arith.constant 1.000000e+00 : f32
    %294 = vector.broadcast %cst_115 : f32 to vector<32x256xf32>
    %295 = arith.addf %294, %293 : vector<32x256xf32>
    %296 = arith.mulf %285, %295 : vector<32x256xf32>
    %297 = arith.index_cast %c1_i32_72 : i32 to index
    %c0_116 = arith.constant 0 : index
    %c0_117 = arith.constant 0 : index
    %298 = vector.load %arg13[%297, %c0_116, %c0_117] : memref<2x32x288xbf16, #tpu.memory_space<vmem>>, vector<1x32x288xbf16>
    %299 = vector.shape_cast %298 : vector<1x32x288xbf16> to vector<32x288xbf16>
    %300 = arith.index_cast %c1_i32_72 : i32 to index
    %c0_118 = arith.constant 0 : index
    %c0_119 = arith.constant 0 : index
    %301 = vector.load %arg14[%300, %c0_118, %c0_119] : memref<2x32x1xf32, #tpu.memory_space<vmem>>, vector<1x32x1xf32>
    %302 = vector.shape_cast %301 : vector<1x32x1xf32> to vector<32x1xf32>
    %c1_i32_120 = arith.constant 1 : i32
    %303 = tpu.dynamic_rotate %296 by %c1_i32_120 dim 1 : vector<32x256xf32>, i32 -> vector<32x256xf32>
    %c241_i32_121 = arith.constant 241 : i32
    %304 = tpu.dynamic_rotate %296 by %c241_i32_121 dim 1 : vector<32x256xf32>, i32 -> vector<32x256xf32>
    %c1_i32_122 = arith.constant 1 : i32
    %305 = vector.broadcast %c1_i32_122 : i32 to vector<32x256xi32>
    %306 = arith.cmpi slt, %5, %305 : vector<32x256xi32>
    %307 = arith.select %306, %304, %303 : vector<32x256xi1>, vector<32x256xf32>
    %c255_i32_123 = arith.constant 255 : i32
    %308 = tpu.dynamic_rotate %296 by %c255_i32_123 dim 1 : vector<32x256xf32>, i32 -> vector<32x256xf32>
    %c15_i32_124 = arith.constant 15 : i32
    %309 = tpu.dynamic_rotate %296 by %c15_i32_124 dim 1 : vector<32x256xf32>, i32 -> vector<32x256xf32>
    %c15_i32_125 = arith.constant 15 : i32
    %310 = vector.broadcast %c15_i32_125 : i32 to vector<32x256xi32>
    %311 = arith.cmpi sge, %5, %310 : vector<32x256xi32>
    %312 = arith.select %311, %309, %308 : vector<32x256xi1>, vector<32x256xf32>
    %313 = tpu.concatenate %307, %296, %312 in 0 : vector<32x256xf32>, vector<32x256xf32>, vector<32x256xf32> -> vector<96x256xf32>
    %c16_i32_126 = arith.constant 16 : i32
    %314 = tpu.dynamic_rotate %313 by %c16_i32_126 dim 1 : vector<96x256xf32>, i32 -> vector<96x256xf32>
    %c240_i32_127 = arith.constant 240 : i32
    %315 = tpu.dynamic_rotate %313 by %c240_i32_127 dim 1 : vector<96x256xf32>, i32 -> vector<96x256xf32>
    %316 = tpu.concatenate %314, %313, %315 in 0 : vector<96x256xf32>, vector<96x256xf32>, vector<96x256xf32> -> vector<288x256xf32>
    %317 = arith.truncf %316 : vector<288x256xf32> to vector<288x256xbf16>
    %cst_128 = arith.constant dense<0.000000e+00> : vector<32x256xf32>
    %318 = tpu.matmul %299, %317, %cst_128 {dimension_numbers = #tpu.dot_dimension_numbers<[1], [0], [0], [1], [0, 0, 1, 1], [], []>} : vector<32x288xbf16>, vector<288x256xbf16>, vector<32x256xf32> -> vector<32x256xf32>
    %319 = vector.broadcast %302 : vector<32x1xf32> to vector<32x256xf32>
    %320 = arith.addf %318, %319 : vector<32x256xf32>
    %321 = arith.addf %193, %320 : vector<32x256xf32>
    %322 = arith.index_cast %c1_i32_72 : i32 to index
    %c0_129 = arith.constant 0 : index
    %c0_130 = arith.constant 0 : index
    %323 = vector.load %arg15[%322, %c0_129, %c0_130] : memref<2x32x1xf32, #tpu.memory_space<vmem>>, vector<1x32x1xf32>
    %324 = vector.shape_cast %323 : vector<1x32x1xf32> to vector<32x1xf32>
    %325 = arith.index_cast %c1_i32_72 : i32 to index
    %c0_131 = arith.constant 0 : index
    %c0_132 = arith.constant 0 : index
    %326 = vector.load %arg16[%325, %c0_131, %c0_132] : memref<2x32x1xf32, #tpu.memory_space<vmem>>, vector<1x32x1xf32>
    %327 = vector.shape_cast %326 : vector<1x32x1xf32> to vector<32x1xf32>
    %328 = vector.shape_cast %321 : vector<32x256xf32> to vector<1x32x256xf32>
    %cst_133 = arith.constant dense<0.000000e+00> : vector<1xf32>
    %329 = vector.multi_reduction <add>, %328, %cst_133 [1, 2] : vector<1x32x256xf32> to vector<1xf32>
    %330 = vector.shape_cast %329 : vector<1xf32> to vector<1x1x1xf32>
    %331 = vector.extract %330[0, 0, 0] : f32 from vector<1x1x1xf32>
    %332 = arith.mulf %321, %321 : vector<32x256xf32>
    %333 = vector.shape_cast %332 : vector<32x256xf32> to vector<1x32x256xf32>
    %cst_134 = arith.constant dense<0.000000e+00> : vector<1xf32>
    %334 = vector.multi_reduction <add>, %333, %cst_134 [1, 2] : vector<1x32x256xf32> to vector<1xf32>
    %335 = vector.shape_cast %334 : vector<1xf32> to vector<1x1x1xf32>
    %336 = vector.extract %335[0, 0, 0] : f32 from vector<1x1x1xf32>
    %cst_135 = arith.constant 8.192000e+03 : f32
    %337 = arith.divf %331, %cst_135 : f32
    %cst_136 = arith.constant 8.192000e+03 : f32
    %338 = arith.divf %336, %cst_136 : f32
    %339 = arith.mulf %337, %337 : f32
    %340 = arith.subf %338, %339 : f32
    %cst_137 = arith.constant 9.99999974E-6 : f32
    %341 = arith.addf %340, %cst_137 : f32
    %342 = math.rsqrt %341 : f32
    %343 = vector.broadcast %337 : f32 to vector<32x256xf32>
    %344 = arith.subf %321, %343 : vector<32x256xf32>
    %345 = vector.broadcast %342 : f32 to vector<32x256xf32>
    %346 = arith.mulf %344, %345 : vector<32x256xf32>
    %347 = vector.broadcast %324 : vector<32x1xf32> to vector<32x256xf32>
    %348 = arith.mulf %346, %347 : vector<32x256xf32>
    %349 = vector.broadcast %327 : vector<32x1xf32> to vector<32x256xf32>
    %350 = arith.addf %348, %349 : vector<32x256xf32>
    %351 = arith.index_cast %c1_i32_72 : i32 to index
    %c0_138 = arith.constant 0 : index
    %c0_139 = arith.constant 0 : index
    %352 = vector.load %arg18[%351, %c0_138, %c0_139] : memref<2x32x32xbf16, #tpu.memory_space<vmem>>, vector<1x32x32xbf16>
    %353 = vector.shape_cast %352 : vector<1x32x32xbf16> to vector<32x32xbf16>
    %354 = arith.index_cast %c1_i32_72 : i32 to index
    %c0_140 = arith.constant 0 : index
    %c0_141 = arith.constant 0 : index
    %355 = vector.load %arg17[%354, %c0_140, %c0_141] : memref<2x32x32xbf16, #tpu.memory_space<vmem>>, vector<1x32x32xbf16>
    %356 = vector.shape_cast %355 : vector<1x32x32xbf16> to vector<32x32xbf16>
    %357 = arith.truncf %350 : vector<32x256xf32> to vector<32x256xbf16>
    %cst_142 = arith.constant dense<0.000000e+00> : vector<32x256xf32>
    %358 = tpu.matmul %356, %357, %cst_142 {dimension_numbers = #tpu.dot_dimension_numbers<[1], [0], [0], [1], [0, 0, 1, 1], [], []>} : vector<32x32xbf16>, vector<32x256xbf16>, vector<32x256xf32> -> vector<32x256xf32>
    %cst_143 = arith.constant 5.000000e-01 : f32
    %359 = vector.broadcast %cst_143 : f32 to vector<32x256xf32>
    %360 = arith.mulf %359, %358 : vector<32x256xf32>
    %cst_144 = arith.constant 4.471500e-02 : f32
    %361 = vector.broadcast %cst_144 : f32 to vector<32x256xf32>
    %362 = arith.mulf %361, %358 : vector<32x256xf32>
    %363 = arith.mulf %362, %358 : vector<32x256xf32>
    %364 = arith.mulf %363, %358 : vector<32x256xf32>
    %365 = arith.addf %358, %364 : vector<32x256xf32>
    %cst_145 = arith.constant 0.797884583 : f32
    %366 = vector.broadcast %cst_145 : f32 to vector<32x256xf32>
    %367 = arith.mulf %366, %365 : vector<32x256xf32>
    %368 = math.tanh %367 : vector<32x256xf32>
    %cst_146 = arith.constant 1.000000e+00 : f32
    %369 = vector.broadcast %cst_146 : f32 to vector<32x256xf32>
    %370 = arith.addf %369, %368 : vector<32x256xf32>
    %371 = arith.mulf %360, %370 : vector<32x256xf32>
    %372 = arith.truncf %371 : vector<32x256xf32> to vector<32x256xbf16>
    %cst_147 = arith.constant dense<0.000000e+00> : vector<32x256xf32>
    %373 = tpu.matmul %353, %372, %cst_147 {dimension_numbers = #tpu.dot_dimension_numbers<[1], [0], [0], [1], [0, 0, 1, 1], [], []>} : vector<32x32xbf16>, vector<32x256xbf16>, vector<32x256xf32> -> vector<32x256xf32>
    %374 = arith.addf %321, %373 : vector<32x256xf32>
    %c2_i32_148 = arith.constant 2 : i32
    %c0_149 = arith.constant 0 : index
    %c0_150 = arith.constant 0 : index
    %375 = vector.load %arg19[%c0_149, %c0_150] : memref<32x1xf32, #tpu.memory_space<vmem>>, vector<32x1xf32>
    %c0_151 = arith.constant 0 : index
    %c0_152 = arith.constant 0 : index
    %376 = vector.load %arg20[%c0_151, %c0_152] : memref<32x1xf32, #tpu.memory_space<vmem>>, vector<32x1xf32>
    %377 = vector.shape_cast %374 : vector<32x256xf32> to vector<1x32x256xf32>
    %cst_153 = arith.constant dense<0.000000e+00> : vector<1xf32>
    %378 = vector.multi_reduction <add>, %377, %cst_153 [1, 2] : vector<1x32x256xf32> to vector<1xf32>
    %379 = vector.shape_cast %378 : vector<1xf32> to vector<1x1x1xf32>
    %380 = vector.extract %379[0, 0, 0] : f32 from vector<1x1x1xf32>
    %381 = arith.mulf %374, %374 : vector<32x256xf32>
    %382 = vector.shape_cast %381 : vector<32x256xf32> to vector<1x32x256xf32>
    %cst_154 = arith.constant dense<0.000000e+00> : vector<1xf32>
    %383 = vector.multi_reduction <add>, %382, %cst_154 [1, 2] : vector<1x32x256xf32> to vector<1xf32>
    %384 = vector.shape_cast %383 : vector<1xf32> to vector<1x1x1xf32>
    %385 = vector.extract %384[0, 0, 0] : f32 from vector<1x1x1xf32>
    %cst_155 = arith.constant 8.192000e+03 : f32
    %386 = arith.divf %380, %cst_155 : f32
    %cst_156 = arith.constant 8.192000e+03 : f32
    %387 = arith.divf %385, %cst_156 : f32
    %388 = arith.mulf %386, %386 : f32
    %389 = arith.subf %387, %388 : f32
    %cst_157 = arith.constant 9.99999974E-6 : f32
    %390 = arith.addf %389, %cst_157 : f32
    %391 = math.rsqrt %390 : f32
    %392 = vector.broadcast %386 : f32 to vector<32x256xf32>
    %393 = arith.subf %374, %392 : vector<32x256xf32>
    %394 = vector.broadcast %391 : f32 to vector<32x256xf32>
    %395 = arith.mulf %393, %394 : vector<32x256xf32>
    %396 = vector.broadcast %375 : vector<32x1xf32> to vector<32x256xf32>
    %397 = arith.mulf %395, %396 : vector<32x256xf32>
    %398 = vector.broadcast %376 : vector<32x1xf32> to vector<32x256xf32>
    %399 = arith.addf %397, %398 : vector<32x256xf32>
    %c0_158 = arith.constant 0 : index
    %c0_159 = arith.constant 0 : index
    %400 = vector.load %arg21[%c0_158, %c0_159] : memref<4x32xbf16, #tpu.memory_space<vmem>>, vector<4x32xbf16>
    %401 = arith.truncf %399 : vector<32x256xf32> to vector<32x256xbf16>
    %cst_160 = arith.constant dense<0.000000e+00> : vector<4x256xf32>
    %402 = tpu.matmul %400, %401, %cst_160 {dimension_numbers = #tpu.dot_dimension_numbers<[1], [0], [0], [1], [0, 0, 1, 1], [], []>} : vector<4x32xbf16>, vector<32x256xbf16>, vector<4x256xf32> -> vector<4x256xf32>
    %c0_161 = arith.constant 0 : index
    %c0_162 = arith.constant 0 : index
    %403 = vector.load %arg22[%c0_161, %c0_162] : memref<4x1xf32, #tpu.memory_space<vmem>>, vector<4x1xf32>
    %404 = vector.broadcast %403 : vector<4x1xf32> to vector<4x256xf32>
    %405 = arith.addf %402, %404 : vector<4x256xf32>
    %c0_163 = arith.constant 0 : index
    %c0_164 = arith.constant 0 : index
    %406 = vector.load %arg24[%c0_163, %c0_164] : memref<4x256xf32, #tpu.memory_space<vmem>>, vector<4x256xf32>
    tpu.vector_store %arg24[%c0_163, %c0_164], %405 {strides = array<i32>} : memref<4x256xf32, #tpu.memory_space<vmem>>, vector<4x256xf32>,
    %c0_165 = arith.constant 0 : index
    %c0_166 = arith.constant 0 : index
    %c0_167 = arith.constant 0 : index
    %c0_168 = arith.constant 0 : index
    %407 = vector.load %arg3[%c0_165, %c0_166, %c0_167, %c0_168] : memref<1x1x4x256xf32, #tpu.memory_space<vmem>>, vector<1x1x4x256xf32>
    %408 = vector.shape_cast %407 : vector<1x1x4x256xf32> to vector<4x256xf32>
    %409 = arith.subf %405, %408 : vector<4x256xf32>
    %c0_169 = arith.constant 0 : index
    %c0_170 = arith.constant 0 : index
    %c0_171 = arith.constant 0 : index
    %410 = vector.load %arg23[%c0_169, %c0_170, %c0_171] : memref<1x1x1xf32, #tpu.memory_space<vmem>>, vector<1x1x1xf32>
    %411 = arith.mulf %409, %409 : vector<4x256xf32>
    %412 = vector.shape_cast %411 : vector<4x256xf32> to vector<1x4x256xf32>
    %cst_172 = arith.constant dense<0.000000e+00> : vector<1xf32>
    %413 = vector.multi_reduction <add>, %412, %cst_172 [1, 2] : vector<1x4x256xf32> to vector<1xf32>
    %414 = vector.shape_cast %413 : vector<1xf32> to vector<1x1x1xf32>
    %415 = vector.extract %414[0, 0, 0] : f32 from vector<1x1x1xf32>
    %416 = vector.broadcast %415 : f32 to vector<1x1x1xf32>
    %417 = arith.addf %410, %416 : vector<1x1x1xf32>
    %c0_173 = arith.constant 0 : index
    %c0_174 = arith.constant 0 : index
    %c0_175 = arith.constant 0 : index
    %418 = vector.load %arg23[%c0_173, %c0_174, %c0_175] : memref<1x1x1xf32, #tpu.memory_space<vmem>>, vector<1x1x1xf32>
    tpu.vector_store %arg23[%c0_173, %c0_174, %c0_175], %417 {strides = array<i32>} : memref<1x1x1xf32, #tpu.memory_space<vmem>>, vector<1x1x1xf32>,
    return
  }
  func.func @transform_0(%arg0: i32, %arg1: i32) -> (i32, i32, i32) {
    %c0_i32 = arith.constant 0 : i32
    %c0_i32_0 = arith.constant 0 : i32
    %c0_i32_1 = arith.constant 0 : i32
    return %arg0, %c0_i32, %c0_i32_0 : i32, i32, i32
  }
  func.func @transform_1(%arg0: i32, %arg1: i32) -> (i32, i32, i32, i32) {
    %c0_i32 = arith.constant 0 : i32
    %c0_i32_0 = arith.constant 0 : i32
    %c0_i32_1 = arith.constant 0 : i32
    return %arg0, %arg1, %c0_i32, %c0_i32_0 : i32, i32, i32, i32
  }
  func.func @transform_2(%arg0: i32, %arg1: i32) -> (i32, i32) {
    %c0_i32 = arith.constant 0 : i32
    %c0_i32_0 = arith.constant 0 : i32
    %c0_i32_1 = arith.constant 0 : i32
    return %c0_i32, %c0_i32_0 : i32, i32
  }
  func.func @transform_3(%arg0: i32, %arg1: i32) -> (i32, i32) {
    %c0_i32 = arith.constant 0 : i32
    %c0_i32_0 = arith.constant 0 : i32
    %c0_i32_1 = arith.constant 0 : i32
    return %c0_i32, %c0_i32_0 : i32, i32
  }
  func.func @transform_4(%arg0: i32, %arg1: i32) -> (i32, i32) {
    %c0_i32 = arith.constant 0 : i32
    %c0_i32_0 = arith.constant 0 : i32
    %c0_i32_1 = arith.constant 0 : i32
    return %c0_i32, %c0_i32_0 : i32, i32
  }
  func.func @transform_5(%arg0: i32, %arg1: i32) -> (i32, i32, i32) {
    %c0_i32 = arith.constant 0 : i32
    %c0_i32_0 = arith.constant 0 : i32
    %c0_i32_1 = arith.constant 0 : i32
    %c0_i32_2 = arith.constant 0 : i32
    return %c0_i32, %c0_i32_0, %c0_i32_1 : i32, i32, i32
  }
  func.func @transform_6(%arg0: i32, %arg1: i32) -> (i32, i32, i32) {
    %c0_i32 = arith.constant 0 : i32
    %c0_i32_0 = arith.constant 0 : i32
    %c0_i32_1 = arith.constant 0 : i32
    %c0_i32_2 = arith.constant 0 : i32
    return %c0_i32, %c0_i32_0, %c0_i32_1 : i32, i32, i32
  }
  func.func @transform_7(%arg0: i32, %arg1: i32) -> (i32, i32, i32) {
    %c0_i32 = arith.constant 0 : i32
    %c0_i32_0 = arith.constant 0 : i32
    %c0_i32_1 = arith.constant 0 : i32
    %c0_i32_2 = arith.constant 0 : i32
    return %c0_i32, %c0_i32_0, %c0_i32_1 : i32, i32, i32
  }
  func.func @transform_8(%arg0: i32, %arg1: i32) -> (i32, i32, i32) {
    %c0_i32 = arith.constant 0 : i32
    %c0_i32_0 = arith.constant 0 : i32
    %c0_i32_1 = arith.constant 0 : i32
    %c0_i32_2 = arith.constant 0 : i32
    return %c0_i32, %c0_i32_0, %c0_i32_1 : i32, i32, i32
  }
  func.func @transform_9(%arg0: i32, %arg1: i32) -> (i32, i32, i32) {
    %c0_i32 = arith.constant 0 : i32
    %c0_i32_0 = arith.constant 0 : i32
    %c0_i32_1 = arith.constant 0 : i32
    %c0_i32_2 = arith.constant 0 : i32
    return %c0_i32, %c0_i32_0, %c0_i32_1 : i32, i32, i32
  }
  func.func @transform_10(%arg0: i32, %arg1: i32) -> (i32, i32, i32) {
    %c0_i32 = arith.constant 0 : i32
    %c0_i32_0 = arith.constant 0 : i32
    %c0_i32_1 = arith.constant 0 : i32
    %c0_i32_2 = arith.constant 0 : i32
    return %c0_i32, %c0_i32_0, %c0_i32_1 : i32, i32, i32
  }
  func.func @transform_11(%arg0: i32, %arg1: i32) -> (i32, i32, i32) {
    %c0_i32 = arith.constant 0 : i32
    %c0_i32_0 = arith.constant 0 : i32
    %c0_i32_1 = arith.constant 0 : i32
    %c0_i32_2 = arith.constant 0 : i32
    return %c0_i32, %c0_i32_0, %c0_i32_1 : i32, i32, i32
  }
  func.func @transform_12(%arg0: i32, %arg1: i32) -> (i32, i32, i32) {
    %c0_i32 = arith.constant 0 : i32
    %c0_i32_0 = arith.constant 0 : i32
    %c0_i32_1 = arith.constant 0 : i32
    %c0_i32_2 = arith.constant 0 : i32
    return %c0_i32, %c0_i32_0, %c0_i32_1 : i32, i32, i32
  }
  func.func @transform_13(%arg0: i32, %arg1: i32) -> (i32, i32, i32) {
    %c0_i32 = arith.constant 0 : i32
    %c0_i32_0 = arith.constant 0 : i32
    %c0_i32_1 = arith.constant 0 : i32
    %c0_i32_2 = arith.constant 0 : i32
    return %c0_i32, %c0_i32_0, %c0_i32_1 : i32, i32, i32
  }
  func.func @transform_14(%arg0: i32, %arg1: i32) -> (i32, i32, i32) {
    %c0_i32 = arith.constant 0 : i32
    %c0_i32_0 = arith.constant 0 : i32
    %c0_i32_1 = arith.constant 0 : i32
    %c0_i32_2 = arith.constant 0 : i32
    return %c0_i32, %c0_i32_0, %c0_i32_1 : i32, i32, i32
  }
  func.func @transform_15(%arg0: i32, %arg1: i32) -> (i32, i32, i32) {
    %c0_i32 = arith.constant 0 : i32
    %c0_i32_0 = arith.constant 0 : i32
    %c0_i32_1 = arith.constant 0 : i32
    %c0_i32_2 = arith.constant 0 : i32
    return %c0_i32, %c0_i32_0, %c0_i32_1 : i32, i32, i32
  }
  func.func @transform_16(%arg0: i32, %arg1: i32) -> (i32, i32, i32) {
    %c0_i32 = arith.constant 0 : i32
    %c0_i32_0 = arith.constant 0 : i32
    %c0_i32_1 = arith.constant 0 : i32
    %c0_i32_2 = arith.constant 0 : i32
    return %c0_i32, %c0_i32_0, %c0_i32_1 : i32, i32, i32
  }
  func.func @transform_17(%arg0: i32, %arg1: i32) -> (i32, i32) {
    %c0_i32 = arith.constant 0 : i32
    %c0_i32_0 = arith.constant 0 : i32
    %c0_i32_1 = arith.constant 0 : i32
    return %c0_i32, %c0_i32_0 : i32, i32
  }
  func.func @transform_18(%arg0: i32, %arg1: i32) -> (i32, i32) {
    %c0_i32 = arith.constant 0 : i32
    %c0_i32_0 = arith.constant 0 : i32
    %c0_i32_1 = arith.constant 0 : i32
    return %c0_i32, %c0_i32_0 : i32, i32
  }
  func.func @transform_19(%arg0: i32, %arg1: i32) -> (i32, i32) {
    %c0_i32 = arith.constant 0 : i32
    %c0_i32_0 = arith.constant 0 : i32
    %c0_i32_1 = arith.constant 0 : i32
    return %c0_i32, %c0_i32_0 : i32, i32
  }
  func.func @transform_20(%arg0: i32, %arg1: i32) -> (i32, i32) {
    %c0_i32 = arith.constant 0 : i32
    %c0_i32_0 = arith.constant 0 : i32
    %c0_i32_1 = arith.constant 0 : i32
    return %c0_i32, %c0_i32_0 : i32, i32
  }
  func.func @transform_21(%arg0: i32, %arg1: i32) -> (i32, i32, i32) {
    %c0_i32 = arith.constant 0 : i32
    %c0_i32_0 = arith.constant 0 : i32
    %c0_i32_1 = arith.constant 0 : i32
    return %arg0, %c0_i32, %c0_i32_0 : i32, i32, i32
  }
}

</mosaic_0001>

<llo_original>
// kernel: squeeze.1
$region0: #{squeeze.1}
  %s0 = inlined_call_operand.hbm [shape: f32[2,1,4,16,16], index: 0, kind: input, shape index: {}]
  %s1 = inlined_call_operand.vmem [shape: f32[2,4,256], index: 1, kind: output, shape index: {}]
  $region1: #{squeeze.1} parent=0
    #allocation0 [shape = 'u8[65536]{0}', space=vmem, size = 0x10000, scoped, tag = 'operand span for operand 0']
    #allocation1 [shape = 's32[1]{0}', space=sflag, size = 0x4, scoped, tag = 'scoped memory for squeeze.1']
    #allocation2 [shape = 'u8[16384]{0}', space=vmem, size = 0x4000, scoped, tag = 'scoped mem for output reshape']
    %2 = vsyncpa [#allocation1], 0
    %s4 = ssub.s32 2048, 2048
    %5 = vsyncadd [#allocation1], %s4
    %s7 = sshll.u32 [#allocation0], 4
    %s8 = int_to_ptr.vmem [resolvable:$true] %s7
    %10 = dma.hbm_to_vmem [thread:$0]  %s0, 2048, %s8, [#allocation1]
    %11 = dma.done [#allocation1], 2048
    %v12 = vld [vmem:[#allocation0] ss:$8 sm:$0xf]
    %v13 = vld [vmem:[#allocation0] ss:$8 sm:$0xf0]
    %vm14 = vcmask 1047556
    %v15 = vsel %vm14, %v13, %v12
    %vm16 = vcmask 130048
    %17 = vst.msk [vmem:[#allocation2] ss:$8 sm:$0x3] %vm16, %v15
    %s18 = scalar_lea.vmem [#allocation2], 4294967281
    %19 = vst.msk [vmem:[%s18] ss:$8 sm:$0xc] %vm16, %v15
    %s20 = scalar_lea.vmem [#allocation2], 4294967266
    %21 = vst.msk [vmem:[%s20] ss:$8 sm:$0x30] %vm16, %v15
    %s22 = scalar_lea.vmem [#allocation2], 4294967251
    %23 = vst.msk [vmem:[%s22] ss:$8 sm:$0xc0] %vm16, %v15
    %s24 = scalar_lea.vmem [#allocation0], 64
    %v25 = vld [vmem:[%s24] ss:$8 sm:$0xf]
    %s26 = scalar_lea.vmem [#allocation0], 64
    %v27 = vld [vmem:[%s26] ss:$8 sm:$0xf0]
    %vm28 = vcmask 1047556
    %v29 = vsel %vm28, %v27, %v25
    %vm30 = vcmask 130048
    %s31 = scalar_lea.vmem [#allocation2], 16
    %32 = vst.msk [vmem:[%s31] ss:$8 sm:$0x3] %vm30, %v29
    %s33 = scalar_lea.vmem [#allocation2], 1
    %34 = vst.msk [vmem:[%s33] ss:$8 sm:$0xc] %vm30, %v29
    %s35 = scalar_lea.vmem [#allocation2], 4294967282
    %36 = vst.msk [vmem:[%s35] ss:$8 sm:$0x30] %vm30, %v29
    %s37 = scalar_lea.vmem [#allocation2], 4294967267
    %38 = vst.msk [vmem:[%s37] ss:$8 sm:$0xc0] %vm30, %v29
    %s39 = scalar_lea.vmem [#allocation0], 7
    %s40 = smov 3
    %v41 = vld [vmem:[%s39] ss:$16 sm:%s40]
    %s42 = scalar_lea.vmem [#allocation0], 7
    %s43 = smov 12
    %v44 = vld [vmem:[%s42] ss:$16 sm:%s43]
    %vm45 = vcmask 1043458
    %v46 = vsel %vm45, %v44, %v41
    %s47 = scalar_lea.vmem [#allocation0], 4294967247
    %s48 = smov 48
    %v49 = vld [vmem:[%s47] ss:$16 sm:%s48]
    %vm50 = vcmask 1045508
    %v51 = vsel %vm50, %v49, %v46
    %s52 = scalar_lea.vmem [#allocation0], 4294967247
    %s53 = smov 192
    %v54 = vld [vmem:[%s52] ss:$16 sm:%s53]
    %vm55 = vcmask 1047558
    %v56 = vsel %vm55, %v54, %v51
    %57 = vrot.lane.b32.xlu0 %v56, 112
    %v58 = vpop.permute.xlu0 %57
    %vm59 = vcmask 1048448
    %60 = vst.msk [vmem:[#allocation2] sm:$0xf] %vm59, %v58
    %s61 = scalar_lea.vmem [#allocation2], 4
    %62 = vst.msk [vmem:[%s61] sm:$0xf0] %vm59, %v58
    %s63 = scalar_lea.vmem [#allocation0], 71
    %s64 = smov 3
    %v65 = vld [vmem:[%s63] ss:$16 sm:%s64]
    %s66 = scalar_lea.vmem [#allocation0], 71
    %s67 = smov 12
    %v68 = vld [vmem:[%s66] ss:$16 sm:%s67]
    %vm69 = vcmask 1043458
    %v70 = vsel %vm69, %v68, %v65
    %s71 = scalar_lea.vmem [#allocation0], 15
    %s72 = smov 48
    %v73 = vld [vmem:[%s71] ss:$16 sm:%s72]
    %vm74 = vcmask 1045508
    %v75 = vsel %vm74, %v73, %v70
    %s76 = scalar_lea.vmem [#allocation0], 15
    %s77 = smov 192
    %v78 = vld [vmem:[%s76] ss:$16 sm:%s77]
    %vm79 = vcmask 1047558
    %v80 = vsel %vm79, %v78, %v75
    %81 = vrot.lane.b32.xlu0 %v80, 112
    %v82 = vpop.permute.xlu0 %81
    %vm83 = vcmask 1048448
    %s84 = scalar_lea.vmem [#allocation2], 16
    %85 = vst.msk [vmem:[%s84] sm:$0xf] %vm83, %v82
    %s86 = scalar_lea.vmem [#allocation2], 20
    %87 = vst.msk [vmem:[%s86] sm:$0xf0] %vm83, %v82
    %s88 = scalar_lea.vmem [#allocation0], 6
    %s89 = smov 3
    %v90 = vld [vmem:[%s88] ss:$16 sm:%s89]
    %s91 = scalar_lea.vmem [#allocation0], 6
    %s92 = smov 12
    %v93 = vld [vmem:[%s91] ss:$16 sm:%s92]
    %vm94 = vcmask 1043458
    %v95 = vsel %vm94, %v93, %v90
    %s96 = scalar_lea.vmem [#allocation0], 4294967246
    %s97 = smov 48
    %v98 = vld [vmem:[%s96] ss:$16 sm:%s97]
    %vm99 = vcmask 1045508
    %v100 = vsel %vm99, %v98, %v95
    %s101 = scalar_lea.vmem [#allocation0], 4294967246
    %s102 = smov 192
    %v103 = vld [vmem:[%s101] ss:$16 sm:%s102]
    %vm104 = vcmask 1047558
    %v105 = vsel %vm104, %v103, %v100
    %106 = vrot.lane.b32.xlu0 %v105, 96
    %v107 = vpop.permute.xlu0 %106
    %vm108 = vcmask 917248
    %109 = vst.msk [vmem:[#allocation2] sm:$0xf] %vm108, %v107
    %s110 = scalar_lea.vmem [#allocation2], 4
    %111 = vst.msk [vmem:[%s110] sm:$0xf0] %vm108, %v107
    %s112 = scalar_lea.vmem [#allocation0], 70
    %s113 = smov 3
    %v114 = vld [vmem:[%s112] ss:$16 sm:%s113]
    %s115 = scalar_lea.vmem [#allocation0], 70
    %s116 = smov 12
    %v117 = vld [vmem:[%s115] ss:$16 sm:%s116]
    %vm118 = vcmask 1043458
    %v119 = vsel %vm118, %v117, %v114
    %s120 = scalar_lea.vmem [#allocation0], 14
    %s121 = smov 48
    %v122 = vld [vmem:[%s120] ss:$16 sm:%s121]
    %vm123 = vcmask 1045508
    %v124 = vsel %vm123, %v122, %v119
    %s125 = scalar_lea.vmem [#allocation0], 14
    %s126 = smov 192
    %v127 = vld [vmem:[%s125] ss:$16 sm:%s126]
    %vm128 = vcmask 1047558
    %v129 = vsel %vm128, %v127, %v124
    %130 = vrot.lane.b32.xlu0 %v129, 96
    %v131 = vpop.permute.xlu0 %130
    %vm132 = vcmask 917248
    %s133 = scalar_lea.vmem [#allocation2], 16
    %134 = vst.msk [vmem:[%s133] sm:$0xf] %vm132, %v131
    %s135 = scalar_lea.vmem [#allocation2], 20
    %136 = vst.msk [vmem:[%s135] sm:$0xf0] %vm132, %v131
    %s137 = scalar_lea.vmem [#allocation0], 5
    %s138 = smov 3
    %v139 = vld [vmem:[%s137] ss:$16 sm:%s138]
    %s140 = scalar_lea.vmem [#allocation0], 5
    %s141 = smov 12
    %v142 = vld [vmem:[%s140] ss:$16 sm:%s141]
    %vm143 = vcmask 1043458
    %v144 = vsel %vm143, %v142, %v139
    %s145 = scalar_lea.vmem [#allocation0], 4294967245
    %s146 = smov 48
    %v147 = vld [vmem:[%s145] ss:$16 sm:%s146]
    %vm148 = vcmask 1045508
    %v149 = vsel %vm148, %v147, %v144
    %s150 = scalar_lea.vmem [#allocation0], 4294967245
    %s151 = smov 192
    %v152 = vld [vmem:[%s150] ss:$16 sm:%s151]
    %vm153 = vcmask 1047558
    %v154 = vsel %vm153, %v152, %v149
    %155 = vrot.lane.b32.xlu0 %v154, 80
    %v156 = vpop.permute.xlu0 %155
    %vm157 = vcmask 786048
    %158 = vst.msk [vmem:[#allocation2] sm:$0xf] %vm157, %v156
    %s159 = scalar_lea.vmem [#allocation2], 4
    %160 = vst.msk [vmem:[%s159] sm:$0xf0] %vm157, %v156
    %s161 = scalar_lea.vmem [#allocation0], 69
    %s162 = smov 3
    %v163 = vld [vmem:[%s161] ss:$16 sm:%s162]
    %s164 = scalar_lea.vmem [#allocation0], 69
    %s165 = smov 12
    %v166 = vld [vmem:[%s164] ss:$16 sm:%s165]
    %vm167 = vcmask 1043458
    %v168 = vsel %vm167, %v166, %v163
    %s169 = scalar_lea.vmem [#allocation0], 13
    %s170 = smov 48
    %v171 = vld [vmem:[%s169] ss:$16 sm:%s170]
    %vm172 = vcmask 1045508
    %v173 = vsel %vm172, %v171, %v168
    %s174 = scalar_lea.vmem [#allocation0], 13
    %s175 = smov 192
    %v176 = vld [vmem:[%s174] ss:$16 sm:%s175]
    %vm177 = vcmask 1047558
    %v178 = vsel %vm177, %v176, %v173
    %179 = vrot.lane.b32.xlu0 %v178, 80
    %v180 = vpop.permute.xlu0 %179
    %vm181 = vcmask 786048
    %s182 = scalar_lea.vmem [#allocation2], 16
    %183 = vst.msk [vmem:[%s182] sm:$0xf] %vm181, %v180
    %s184 = scalar_lea.vmem [#allocation2], 20
    %185 = vst.msk [vmem:[%s184] sm:$0xf0] %vm181, %v180
    %s186 = scalar_lea.vmem [#allocation0], 4
    %s187 = smov 3
    %v188 = vld [vmem:[%s186] ss:$16 sm:%s187]
    %s189 = scalar_lea.vmem [#allocation0], 4
    %s190 = smov 12
    %v191 = vld [vmem:[%s189] ss:$16 sm:%s190]
    %vm192 = vcmask 1043458
    %v193 = vsel %vm192, %v191, %v188
    %s194 = scalar_lea.vmem [#allocation0], 4294967244
    %s195 = smov 48
    %v196 = vld [vmem:[%s194] ss:$16 sm:%s195]
    %vm197 = vcmask 1045508
    %v198 = vsel %vm197, %v196, %v193
    %s199 = scalar_lea.vmem [#allocation0], 4294967244
    %s200 = smov 192
    %v201 = vld [vmem:[%s199] ss:$16 sm:%s200]
    %vm202 = vcmask 1047558
    %v203 = vsel %vm202, %v201, %v198
    %204 = vrot.lane.b32.xlu0 %v203, 64
    %v205 = vpop.permute.xlu0 %204
    %vm206 = vcmask 654848
    %207 = vst.msk [vmem:[#allocation2] sm:$0xf] %vm206, %v205
    %s208 = scalar_lea.vmem [#allocation2], 4
    %209 = vst.msk [vmem:[%s208] sm:$0xf0] %vm206, %v205
    %s210 = scalar_lea.vmem [#allocation0], 68
    %s211 = smov 3
    %v212 = vld [vmem:[%s210] ss:$16 sm:%s211]
    %s213 = scalar_lea.vmem [#allocation0], 68
    %s214 = smov 12
    %v215 = vld [vmem:[%s213] ss:$16 sm:%s214]
    %vm216 = vcmask 1043458
    %v217 = vsel %vm216, %v215, %v212
    %s218 = scalar_lea.vmem [#allocation0], 12
    %s219 = smov 48
    %v220 = vld [vmem:[%s218] ss:$16 sm:%s219]
    %vm221 = vcmask 1045508
    %v222 = vsel %vm221, %v220, %v217
    %s223 = scalar_lea.vmem [#allocation0], 12
    %s224 = smov 192
    %v225 = vld [vmem:[%s223] ss:$16 sm:%s224]
    %vm226 = vcmask 1047558
    %v227 = vsel %vm226, %v225, %v222
    %228 = vrot.lane.b32.xlu0 %v227, 64
    %v229 = vpop.permute.xlu0 %228
    %vm230 = vcmask 654848
    %s231 = scalar_lea.vmem [#allocation2], 16
    %232 = vst.msk [vmem:[%s231] sm:$0xf] %vm230, %v229
    %s233 = scalar_lea.vmem [#allocation2], 20
    %234 = vst.msk [vmem:[%s233] sm:$0xf0] %vm230, %v229
    %s235 = scalar_lea.vmem [#allocation0], 3
    %s236 = smov 3
    %v237 = vld [vmem:[%s235] ss:$16 sm:%s236]
    %s238 = scalar_lea.vmem [#allocation0], 3
    %s239 = smov 12
    %v240 = vld [vmem:[%s238] ss:$16 sm:%s239]
    %vm241 = vcmask 1043458
    %v242 = vsel %vm241, %v240, %v237
    %s243 = scalar_lea.vmem [#allocation0], 4294967243
    %s244 = smov 48
    %v245 = vld [vmem:[%s243] ss:$16 sm:%s244]
    %vm246 = vcmask 1045508
    %v247 = vsel %vm246, %v245, %v242
    %s248 = scalar_lea.vmem [#allocation0], 4294967243
    %s249 = smov 192
    %v250 = vld [vmem:[%s248] ss:$16 sm:%s249]
    %vm251 = vcmask 1047558
    %v252 = vsel %vm251, %v250, %v247
    %253 = vrot.lane.b32.xlu0 %v252, 48
    %v254 = vpop.permute.xlu0 %253
    %vm255 = vcmask 523648
    %256 = vst.msk [vmem:[#allocation2] sm:$0xf] %vm255, %v254
    %s257 = scalar_lea.vmem [#allocation2], 4
    %258 = vst.msk [vmem:[%s257] sm:$0xf0] %vm255, %v254
    %s259 = scalar_lea.vmem [#allocation0], 67
    %s260 = smov 3
    %v261 = vld [vmem:[%s259] ss:$16 sm:%s260]
    %s262 = scalar_lea.vmem [#allocation0], 67
    %s263 = smov 12
    %v264 = vld [vmem:[%s262] ss:$16 sm:%s263]
    %vm265 = vcmask 1043458
    %v266 = vsel %vm265, %v264, %v261
    %s267 = scalar_lea.vmem [#allocation0], 11
    %s268 = smov 48
    %v269 = vld [vmem:[%s267] ss:$16 sm:%s268]
    %vm270 = vcmask 1045508
    %v271 = vsel %vm270, %v269, %v266
    %s272 = scalar_lea.vmem [#allocation0], 11
    %s273 = smov 192
    %v274 = vld [vmem:[%s272] ss:$16 sm:%s273]
    %vm275 = vcmask 1047558
    %v276 = vsel %vm275, %v274, %v271
    %277 = vrot.lane.b32.xlu0 %v276, 48
    %v278 = vpop.permute.xlu0 %277
    %vm279 = vcmask 523648
    %s280 = scalar_lea.vmem [#allocation2], 16
    %281 = vst.msk [vmem:[%s280] sm:$0xf] %vm279, %v278
    %s282 = scalar_lea.vmem [#allocation2], 20
    %283 = vst.msk [vmem:[%s282] sm:$0xf0] %vm279, %v278
    %s284 = scalar_lea.vmem [#allocation0], 2
    %s285 = smov 3
    %v286 = vld [vmem:[%s284] ss:$16 sm:%s285]
    %s287 = scalar_lea.vmem [#allocation0], 2
    %s288 = smov 12
    %v289 = vld [vmem:[%s287] ss:$16 sm:%s288]
    %vm290 = vcmask 1043458
    %v291 = vsel %vm290, %v289, %v286
    %s292 = scalar_lea.vmem [#allocation0], 4294967242
    %s293 = smov 48
    %v294 = vld [vmem:[%s292] ss:$16 sm:%s293]
    %vm295 = vcmask 1045508
    %v296 = vsel %vm295, %v294, %v291
    %s297 = scalar_lea.vmem [#allocation0], 4294967242
    %s298 = smov 192
    %v299 = vld [vmem:[%s297] ss:$16 sm:%s298]
    %vm300 = vcmask 1047558
    %v301 = vsel %vm300, %v299, %v296
    %302 = vrot.lane.b32.xlu0 %v301, 32
    %v303 = vpop.permute.xlu0 %302
    %vm304 = vcmask 392448
    %305 = vst.msk [vmem:[#allocation2] sm:$0xf] %vm304, %v303
    %s306 = scalar_lea.vmem [#allocation2], 4
    %307 = vst.msk [vmem:[%s306] sm:$0xf0] %vm304, %v303
    %s308 = scalar_lea.vmem [#allocation0], 66
    %s309 = smov 3
    %v310 = vld [vmem:[%s308] ss:$16 sm:%s309]
    %s311 = scalar_lea.vmem [#allocation0], 66
    %s312 = smov 12
    %v313 = vld [vmem:[%s311] ss:$16 sm:%s312]
    %vm314 = vcmask 1043458
    %v315 = vsel %vm314, %v313, %v310
    %s316 = scalar_lea.vmem [#allocation0], 10
    %s317 = smov 48
    %v318 = vld [vmem:[%s316] ss:$16 sm:%s317]
    %vm319 = vcmask 1045508
    %v320 = vsel %vm319, %v318, %v315
    %s321 = scalar_lea.vmem [#allocation0], 10
    %s322 = smov 192
    %v323 = vld [vmem:[%s321] ss:$16 sm:%s322]
    %vm324 = vcmask 1047558
    %v325 = vsel %vm324, %v323, %v320
    %326 = vrot.lane.b32.xlu0 %v325, 32
    %v327 = vpop.permute.xlu0 %326
    %vm328 = vcmask 392448
    %s329 = scalar_lea.vmem [#allocation2], 16
    %330 = vst.msk [vmem:[%s329] sm:$0xf] %vm328, %v327
    %s331 = scalar_lea.vmem [#allocation2], 20
    %332 = vst.msk [vmem:[%s331] sm:$0xf0] %vm328, %v327
    %s333 = scalar_lea.vmem [#allocation0], 1
    %s334 = smov 3
    %v335 = vld [vmem:[%s333] ss:$16 sm:%s334]
    %s336 = scalar_lea.vmem [#allocation0], 1
    %s337 = smov 12
    %v338 = vld [vmem:[%s336] ss:$16 sm:%s337]
    %vm339 = vcmask 1043458
    %v340 = vsel %vm339, %v338, %v335
    %s341 = scalar_lea.vmem [#allocation0], 4294967241
    %s342 = smov 48
    %v343 = vld [vmem:[%s341] ss:$16 sm:%s342]
    %vm344 = vcmask 1045508
    %v345 = vsel %vm344, %v343, %v340
    %s346 = scalar_lea.vmem [#allocation0], 4294967241
    %s347 = smov 192
    %v348 = vld [vmem:[%s346] ss:$16 sm:%s347]
    %vm349 = vcmask 1047558
    %v350 = vsel %vm349, %v348, %v345
    %351 = vrot.lane.b32.xlu0 %v350, 16
    %v352 = vpop.permute.xlu0 %351
    %vm353 = vcmask 261248
    %354 = vst.msk [vmem:[#allocation2] sm:$0xf] %vm353, %v352
    %s355 = scalar_lea.vmem [#allocation2], 4
    %356 = vst.msk [vmem:[%s355] sm:$0xf0] %vm353, %v352
    %s357 = scalar_lea.vmem [#allocation0], 65
    %s358 = smov 3
    %v359 = vld [vmem:[%s357] ss:$16 sm:%s358]
    %s360 = scalar_lea.vmem [#allocation0], 65
    %s361 = smov 12
    %v362 = vld [vmem:[%s360] ss:$16 sm:%s361]
    %vm363 = vcmask 1043458
    %v364 = vsel %vm363, %v362, %v359
    %s365 = scalar_lea.vmem [#allocation0], 9
    %s366 = smov 48
    %v367 = vld [vmem:[%s365] ss:$16 sm:%s366]
    %vm368 = vcmask 1045508
    %v369 = vsel %vm368, %v367, %v364
    %s370 = scalar_lea.vmem [#allocation0], 9
    %s371 = smov 192
    %v372 = vld [vmem:[%s370] ss:$16 sm:%s371]
    %vm373 = vcmask 1047558
    %v374 = vsel %vm373, %v372, %v369
    %375 = vrot.lane.b32.xlu0 %v374, 16
    %v376 = vpop.permute.xlu0 %375
    %vm377 = vcmask 261248
    %s378 = scalar_lea.vmem [#allocation2], 16
    %379 = vst.msk [vmem:[%s378] sm:$0xf] %vm377, %v376
    %s380 = scalar_lea.vmem [#allocation2], 20
    %381 = vst.msk [vmem:[%s380] sm:$0xf0] %vm377, %v376
    %s383 = sshllo.u32 0, 4
    %v385 = vld [vmem:[#allocation2] sm:%s383]
    %s386 = sshllo.u32 0, 4
    %387 = vst [vmem:[%s1] sm:%s386] %v385
    %s388 = scalar_lea.vmem [#allocation2], 8
    %v389 = vld [vmem:[%s388] sm:%s383]
    %s390 = sshllo.u32 0, 4
    %s391 = scalar_lea.vmem %s1, 4
    %392 = vst [vmem:[%s391] sm:%s390] %v389
    %s393 = scalar_lea.vmem [#allocation2], 16
    %v394 = vld [vmem:[%s393] sm:%s383]
    %s395 = sshllo.u32 0, 4
    %s396 = smul.addr 4, 2
    %s397 = scalar_lea.vmem %s1, %s396
    %398 = vst [vmem:[%s397] sm:%s395] %v394
    %s399 = scalar_lea.vmem [#allocation2], 24
    %v400 = vld [vmem:[%s399] sm:%s383]
    %s401 = sshllo.u32 0, 4
    %s402 = smul.addr 4, 3
    %s403 = scalar_lea.vmem %s1, %s402
    %404 = vst [vmem:[%s403] sm:%s401] %v400
    %405 = vsyncpa [#allocation1], 1

// kernel: latent_dynamics_forward.1
$region0: #{latent_dynamics_forward.1}
  #allocation0 [shape = 'u32[]', space=smem, size = 0x4, offset = 0x4, fixed_abs, tag = 'smem constant byte address 0x4 - core index']
  #allocation1 [shape = 'u32[144,128]{1,0:T(1,128)}', space=vmem, size = 0x12000, scoped, tag = 'internal scratch']
  #allocation2 [shape = 'f32[4,256]{1,0:T(4,128)}', space=vmem, size = 0x1000, scoped, tag = 'scratch operand']
  %s0 = inlined_call_operand.vmem [shape: f32[2,4,256], index: 0, kind: input, shape index: {}]
  %s1 = inlined_call_operand.vmem [shape: f32[2,3,4,256], index: 1, kind: input, shape index: {}]
  %s2 = inlined_call_operand.vmem [shape: s32[1,256], index: 2, kind: input, shape index: {}]
  %s3 = inlined_call_operand.vmem [shape: bf16[32,4], index: 3, kind: input, shape index: {}]
  %s4 = inlined_call_operand.vmem [shape: f32[32,1], index: 4, kind: input, shape index: {}]
  %s5 = inlined_call_operand.vmem [shape: f32[2,32,1], index: 5, kind: input, shape index: {}]
  %s6 = inlined_call_operand.vmem [shape: f32[2,32,1], index: 6, kind: input, shape index: {}]
  %s7 = inlined_call_operand.vmem [shape: bf16[2,32,288], index: 7, kind: input, shape index: {}]
  %s8 = inlined_call_operand.vmem [shape: f32[2,32,1], index: 8, kind: input, shape index: {}]
  %s9 = inlined_call_operand.vmem [shape: bf16[2,32,288], index: 9, kind: input, shape index: {}]
  %s10 = inlined_call_operand.vmem [shape: f32[2,32,1], index: 10, kind: input, shape index: {}]
  %s11 = inlined_call_operand.vmem [shape: bf16[2,32,288], index: 11, kind: input, shape index: {}]
  %s12 = inlined_call_operand.vmem [shape: f32[2,32,1], index: 12, kind: input, shape index: {}]
  %s13 = inlined_call_operand.vmem [shape: f32[2,32,1], index: 13, kind: input, shape index: {}]
  %s14 = inlined_call_operand.vmem [shape: f32[2,32,1], index: 14, kind: input, shape index: {}]
  %s15 = inlined_call_operand.vmem [shape: bf16[2,32,32], index: 15, kind: input, shape index: {}]
  %s16 = inlined_call_operand.vmem [shape: bf16[2,32,32], index: 16, kind: input, shape index: {}]
  %s17 = inlined_call_operand.vmem [shape: f32[32,1], index: 17, kind: input, shape index: {}]
  %s18 = inlined_call_operand.vmem [shape: f32[32,1], index: 18, kind: input, shape index: {}]
  %s19 = inlined_call_operand.vmem [shape: bf16[4,32], index: 19, kind: input, shape index: {}]
  %s20 = inlined_call_operand.vmem [shape: f32[4,1], index: 20, kind: input, shape index: {}]
  %s21 = inlined_call_operand.vmem [shape: f32[2,1,1], index: 21, kind: output, shape index: {}]
  %s22 = sld [smem:[#allocation0]]
  $region121: #{latent_dynamics_forward.1} parent=0
    _
  %s24 = ssub.s32 1, %s22
  %s25 = scalar_select 0, %s24, %s22
  loop: start=0, step=1, limit=8
  $region2: #{latent_dynamics_forward.1} parent=0 // loop_pre_header
    _
  $region3: #{latent_dynamics_forward.1} parent=0 // loop_header
    %s27 = sphi 0, %s31
    %p28 = scmp.ge.s32.totalorder %s27, 8
    %s34 = sphi 0, %s46
    %s35 = sphi 0, %s42
    %s36 = sphi 0, %s34
    %s37 = sphi 0, %s35
    %s38 = sphi 0, %s36
    %s39 = sphi 0, %s37
    %s49 = sphi 0, %s51
    %s52 = sphi 0, %s49
    %s53 = sphi 0, %s52
    %s69 = sphi 0, %s53
    %s77 = sphi 0, %s79
    %s80 = sphi 0, %s77
    %s81 = sphi 0, %s80
    %s97 = sphi 0, %s81
    %s101 = sphi 0, %s101
    %s103 = sphi 0, %s101
    %s104 = sphi 0, %s103
    %s118 = sphi 0, %s104
    %s122 = sphi 0, %s122
    %s124 = sphi 0, %s122
    %s125 = sphi 0, %s124
    %s139 = sphi 0, %s125
    %s143 = sphi 0, %s143
    %s145 = sphi 0, %s143
    %s146 = sphi 0, %s145
    %s160 = sphi 0, %s146
    %s164 = sphi 0, %s164
    %s166 = sphi 0, %s164
    %s167 = sphi 0, %s166
    %s181 = sphi 0, %s167
    %s185 = sphi 0, %s185
    %s187 = sphi 0, %s185
    %s188 = sphi 0, %s187
    %s202 = sphi 0, %s188
    %s206 = sphi 0, %s206
    %s208 = sphi 0, %s206
    %s209 = sphi 0, %s208
    %s223 = sphi 0, %s209
    %s227 = sphi 0, %s227
    %s229 = sphi 0, %s227
    %s230 = sphi 0, %s229
    %s244 = sphi 0, %s230
    %s248 = sphi 0, %s248
    %s250 = sphi 0, %s248
    %s251 = sphi 0, %s250
    %s265 = sphi 0, %s251
    %s269 = sphi 0, %s269
    %s271 = sphi 0, %s269
    %s272 = sphi 0, %s271
    %s286 = sphi 0, %s272
    %s290 = sphi 0, %s290
    %s292 = sphi 0, %s290
    %s293 = sphi 0, %s292
    %s307 = sphi 0, %s293
    %s311 = sphi 0, %s311
    %s313 = sphi 0, %s311
    %s314 = sphi 0, %s313
    %s328 = sphi 0, %s314
    %s332 = sphi 0, %s332
    %s334 = sphi 0, %s332
    %s335 = sphi 0, %s334
    %s349 = sphi 0, %s335
    %s353 = sphi 0, %s353
    %s355 = sphi 0, %s353
    %s356 = sphi 0, %s355
    %s370 = sphi 0, %s356
    %s374 = sphi 0, %s374
    %s376 = sphi 0, %s374
    %s377 = sphi 0, %s376
    %s391 = sphi 0, %s377
    %s395 = sphi 0, %s395
    %s397 = sphi 0, %s395
    %s398 = sphi 0, %s397
    %s412 = sphi 0, %s398
    %s416 = sphi 0, %s416
    %s418 = sphi 0, %s416
    %s419 = sphi 0, %s418
    %s433 = sphi 0, %s419
    %s437 = sphi 0, %s437
    %s439 = sphi 0, %s437
    %s440 = sphi 0, %s439
    %s454 = sphi 0, %s440
    %s458 = sphi 0, %s458
    %s460 = sphi 0, %s458
    %s461 = sphi 0, %s460
    %s475 = sphi 0, %s461
    %s479 = sphi 0, %s479
    %s481 = sphi 0, %s479
    %s482 = sphi 0, %s481
    %s496 = sphi 0, %s482
    %s502 = sphi 0, %s504
    %s505 = sphi 0, %s502
    %s506 = sphi 0, %s505
    %s522 = sphi 0, %s506
  $region4: #{latent_dynamics_forward.1} parent=0 // loop_header_branch
    %30 = sbr.rel (%p28) target = $region8
  $region5: #{latent_dynamics_forward.1} parent=0 // loop_body
    %s32 = ssub.s32 %s27, 1
    %s33 = ssub.s32 %s27, 2
    %s40 = sadd.s32 1, %s35
    %p41 = scmp.ge.s32.totalorder %s40, 3
    %s42 = scalar_select %p41, 0, %s40
    %s43 = sadd.s32 1, %s34
    %s44 = scalar_select %p41, %s43, %s34
    %p45 = scmp.ge.s32.totalorder %s44, 2
    %s46 = scalar_select %p45, 0, %s44
    %s47 = ssub.s32 %s34, %s46
    %p48 = scmp.eq.s32.totalorder %s47, 0
    %s50 = sadd.s32 %s49, 1
    %s51 = scalar_select %p48, %s49, %s50
    %p54 = pneg %p48
    %p55 = scmp.eq.s32.totalorder %s27, 5
    %p56 = por %p54, %p55
    %p57 = scmp.ne.s32.totalorder %s49, %s52
    %p58 = scmp.eq.s32.totalorder %s27, 0
    %p59 = por %p57, %p58
    %p60 = scmp.ne.s32.totalorder %s49, %s52
    %p61 = scmp.eq.s32.totalorder %s32, 5
    %p62 = por %p60, %p61
    %p63 = scmp.ne.s32.totalorder %s52, %s53
    %p64 = scmp.eq.s32.totalorder %s32, 0
    %p65 = por %p63, %p64
    %p66 = scmp.ne.s32.totalorder %s52, %s53
    %p67 = scmp.eq.s32.totalorder %s33, 5
    %p68 = por %p66, %p67
    %p70 = scmp.ne.s32.totalorder %s53, %s69
    %p71 = scmp.eq.s32.totalorder %s33, 0
    %p72 = por %p70, %p71
    %s73 = ssub.s32 %s34, %s46
    %s74 = ssub.s32 %s35, %s42
    %s75 = sor.u32 %s73, %s74
    %p76 = scmp.eq.s32.totalorder %s75, 0
    %s78 = sadd.s32 %s77, 1
    %s79 = scalar_select %p76, %s77, %s78
    %p82 = pneg %p76
    %p83 = scmp.eq.s32.totalorder %s27, 5
    %p84 = por %p82, %p83
    %p85 = scmp.ne.s32.totalorder %s77, %s80
    %p86 = scmp.eq.s32.totalorder %s27, 0
    %p87 = por %p85, %p86
    %p88 = scmp.ne.s32.totalorder %s77, %s80
    %p89 = scmp.eq.s32.totalorder %s32, 5
    %p90 = por %p88, %p89
    %p91 = scmp.ne.s32.totalorder %s80, %s81
    %p92 = scmp.eq.s32.totalorder %s32, 0
    %p93 = por %p91, %p92
    %p94 = scmp.ne.s32.totalorder %s80, %s81
    %p95 = scmp.eq.s32.totalorder %s33, 5
    %p96 = por %p94, %p95
    %p98 = scmp.ne.s32.totalorder %s81, %s97
    %p99 = scmp.eq.s32.totalorder %s33, 0
    %p100 = por %p98, %p99
    %s102 = sadd.s32 %s101, 1
    %p105 = scmp.eq.s32.totalorder %s27, 5
    %p106 = scmp.ne.s32.totalorder %s101, %s103
    %p107 = scmp.eq.s32.totalorder %s27, 0
    %p108 = por %p106, %p107
    %p109 = scmp.ne.s32.totalorder %s101, %s103
    %p110 = scmp.eq.s32.totalorder %s32, 5
    %p111 = por %p109, %p110
    %p112 = scmp.ne.s32.totalorder %s103, %s104
    %p113 = scmp.eq.s32.totalorder %s32, 0
    %p114 = por %p112, %p113
    %p115 = scmp.ne.s32.totalorder %s103, %s104
    %p116 = scmp.eq.s32.totalorder %s33, 5
    %p117 = por %p115, %p116
    %p119 = scmp.ne.s32.totalorder %s104, %s118
    %p120 = scmp.eq.s32.totalorder %s33, 0
    %p121 = por %p119, %p120
    %s123 = sadd.s32 %s122, 1
    %p126 = scmp.eq.s32.totalorder %s27, 5
    %p127 = scmp.ne.s32.totalorder %s122, %s124
    %p128 = scmp.eq.s32.totalorder %s27, 0
    %p129 = por %p127, %p128
    %p130 = scmp.ne.s32.totalorder %s122, %s124
    %p131 = scmp.eq.s32.totalorder %s32, 5
    %p132 = por %p130, %p131
    %p133 = scmp.ne.s32.totalorder %s124, %s125
    %p134 = scmp.eq.s32.totalorder %s32, 0
    %p135 = por %p133, %p134
    %p136 = scmp.ne.s32.totalorder %s124, %s125
    %p137 = scmp.eq.s32.totalorder %s33, 5
    %p138 = por %p136, %p137
    %p140 = scmp.ne.s32.totalorder %s125, %s139
    %p141 = scmp.eq.s32.totalorder %s33, 0
    %p142 = por %p140, %p141
    %s144 = sadd.s32 %s143, 1
    %p147 = scmp.eq.s32.totalorder %s27, 5
    %p148 = scmp.ne.s32.totalorder %s143, %s145
    %p149 = scmp.eq.s32.totalorder %s27, 0
    %p150 = por %p148, %p149
    %p151 = scmp.ne.s32.totalorder %s143, %s145
    %p152 = scmp.eq.s32.totalorder %s32, 5
    %p153 = por %p151, %p152
    %p154 = scmp.ne.s32.totalorder %s145, %s146
    %p155 = scmp.eq.s32.totalorder %s32, 0
    %p156 = por %p154, %p155
    %p157 = scmp.ne.s32.totalorder %s145, %s146
    %p158 = scmp.eq.s32.totalorder %s33, 5
    %p159 = por %p157, %p158
    %p161 = scmp.ne.s32.totalorder %s146, %s160
    %p162 = scmp.eq.s32.totalorder %s33, 0
    %p163 = por %p161, %p162
    %s165 = sadd.s32 %s164, 1
    %p168 = scmp.eq.s32.totalorder %s27, 5
    %p169 = scmp.ne.s32.totalorder %s164, %s166
    %p170 = scmp.eq.s32.totalorder %s27, 0
    %p171 = por %p169, %p170
    %p172 = scmp.ne.s32.totalorder %s164, %s166
    %p173 = scmp.eq.s32.totalorder %s32, 5
    %p174 = por %p172, %p173
    %p175 = scmp.ne.s32.totalorder %s166, %s167
    %p176 = scmp.eq.s32.totalorder %s32, 0
    %p177 = por %p175, %p176
    %p178 = scmp.ne.s32.totalorder %s166, %s167
    %p179 = scmp.eq.s32.totalorder %s33, 5
    %p180 = por %p178, %p179
    %p182 = scmp.ne.s32.totalorder %s167, %s181
    %p183 = scmp.eq.s32.totalorder %s33, 0
    %p184 = por %p182, %p183
    %s186 = sadd.s32 %s185, 1
    %p189 = scmp.eq.s32.totalorder %s27, 5
    %p190 = scmp.ne.s32.totalorder %s185, %s187
    %p191 = scmp.eq.s32.totalorder %s27, 0
    %p192 = por %p190, %p191
    %p193 = scmp.ne.s32.totalorder %s185, %s187
    %p194 = scmp.eq.s32.totalorder %s32, 5
    %p195 = por %p193, %p194
    %p196 = scmp.ne.s32.totalorder %s187, %s188
    %p197 = scmp.eq.s32.totalorder %s32, 0
    %p198 = por %p196, %p197
    %p199 = scmp.ne.s32.totalorder %s187, %s188
    %p200 = scmp.eq.s32.totalorder %s33, 5
    %p201 = por %p199, %p200
    %p203 = scmp.ne.s32.totalorder %s188, %s202
    %p204 = scmp.eq.s32.totalorder %s33, 0
    %p205 = por %p203, %p204
    %s207 = sadd.s32 %s206, 1
    %p210 = scmp.eq.s32.totalorder %s27, 5
    %p211 = scmp.ne.s32.totalorder %s206, %s208
    %p212 = scmp.eq.s32.totalorder %s27, 0
    %p213 = por %p211, %p212
    %p214 = scmp.ne.s32.totalorder %s206, %s208
    %p215 = scmp.eq.s32.totalorder %s32, 5
    %p216 = por %p214, %p215
    %p217 = scmp.ne.s32.totalorder %s208, %s209
    %p218 = scmp.eq.s32.totalorder %s32, 0
    %p219 = por %p217, %p218
    %p220 = scmp.ne.s32.totalorder %s208, %s209
    %p221 = scmp.eq.s32.totalorder %s33, 5
    %p222 = por %p220, %p221
    %p224 = scmp.ne.s32.totalorder %s209, %s223
    %p225 = scmp.eq.s32.totalorder %s33, 0
    %p226 = por %p224, %p225
    %s228 = sadd.s32 %s227, 1
    %p231 = scmp.eq.s32.totalorder %s27, 5
    %p232 = scmp.ne.s32.totalorder %s227, %s229
    %p233 = scmp.eq.s32.totalorder %s27, 0
    %p234 = por %p232, %p233
    %p235 = scmp.ne.s32.totalorder %s227, %s229
    %p236 = scmp.eq.s32.totalorder %s32, 5
    %p237 = por %p235, %p236
    %p238 = scmp.ne.s32.totalorder %s229, %s230
    %p239 = scmp.eq.s32.totalorder %s32, 0
    %p240 = por %p238, %p239
    %p241 = scmp.ne.s32.totalorder %s229, %s230
    %p242 = scmp.eq.s32.totalorder %s33, 5
    %p243 = por %p241, %p242
    %p245 = scmp.ne.s32.totalorder %s230, %s244
    %p246 = scmp.eq.s32.totalorder %s33, 0
    %p247 = por %p245, %p246
    %s249 = sadd.s32 %s248, 1
    %p252 = scmp.eq.s32.totalorder %s27, 5
    %p253 = scmp.ne.s32.totalorder %s248, %s250
    %p254 = scmp.eq.s32.totalorder %s27, 0
    %p255 = por %p253, %p254
    %p256 = scmp.ne.s32.totalorder %s248, %s250
    %p257 = scmp.eq.s32.totalorder %s32, 5
    %p258 = por %p256, %p257
    %p259 = scmp.ne.s32.totalorder %s250, %s251
    %p260 = scmp.eq.s32.totalorder %s32, 0
    %p261 = por %p259, %p260
    %p262 = scmp.ne.s32.totalorder %s250, %s251
    %p263 = scmp.eq.s32.totalorder %s33, 5
    %p264 = por %p262, %p263
    %p266 = scmp.ne.s32.totalorder %s251, %s265
    %p267 = scmp.eq.s32.totalorder %s33, 0
    %p268 = por %p266, %p267
    %s270 = sadd.s32 %s269, 1
    %p273 = scmp.eq.s32.totalorder %s27, 5
    %p274 = scmp.ne.s32.totalorder %s269, %s271
    %p275 = scmp.eq.s32.totalorder %s27, 0
    %p276 = por %p274, %p275
    %p277 = scmp.ne.s32.totalorder %s269, %s271
    %p278 = scmp.eq.s32.totalorder %s32, 5
    %p279 = por %p277, %p278
    %p280 = scmp.ne.s32.totalorder %s271, %s272
    %p281 = scmp.eq.s32.totalorder %s32, 0
    %p282 = por %p280, %p281
    %p283 = scmp.ne.s32.totalorder %s271, %s272
    %p284 = scmp.eq.s32.totalorder %s33, 5
    %p285 = por %p283, %p284
    %p287 = scmp.ne.s32.totalorder %s272, %s286
    %p288 = scmp.eq.s32.totalorder %s33, 0
    %p289 = por %p287, %p288
    %s291 = sadd.s32 %s290, 1
    %p294 = scmp.eq.s32.totalorder %s27, 5
    %p295 = scmp.ne.s32.totalorder %s290, %s292
    %p296 = scmp.eq.s32.totalorder %s27, 0
    %p297 = por %p295, %p296
    %p298 = scmp.ne.s32.totalorder %s290, %s292
    %p299 = scmp.eq.s32.totalorder %s32, 5
    %p300 = por %p298, %p299
    %p301 = scmp.ne.s32.totalorder %s292, %s293
    %p302 = scmp.eq.s32.totalorder %s32, 0
    %p303 = por %p301, %p302
    %p304 = scmp.ne.s32.totalorder %s292, %s293
    %p305 = scmp.eq.s32.totalorder %s33, 5
    %p306 = por %p304, %p305
    %p308 = scmp.ne.s32.totalorder %s293, %s307
    %p309 = scmp.eq.s32.totalorder %s33, 0
    %p310 = por %p308, %p309
    %s312 = sadd.s32 %s311, 1
    %p315 = scmp.eq.s32.totalorder %s27, 5
    %p316 = scmp.ne.s32.totalorder %s311, %s313
    %p317 = scmp.eq.s32.totalorder %s27, 0
    %p318 = por %p316, %p317
    %p319 = scmp.ne.s32.totalorder %s311, %s313
    %p320 = scmp.eq.s32.totalorder %s32, 5
    %p321 = por %p319, %p320
    %p322 = scmp.ne.s32.totalorder %s313, %s314
    %p323 = scmp.eq.s32.totalorder %s32, 0
    %p324 = por %p322, %p323
    %p325 = scmp.ne.s32.totalorder %s313, %s314
    %p326 = scmp.eq.s32.totalorder %s33, 5
    %p327 = por %p325, %p326
    %p329 = scmp.ne.s32.totalorder %s314, %s328
    %p330 = scmp.eq.s32.totalorder %s33, 0
    %p331 = por %p329, %p330
    %s333 = sadd.s32 %s332, 1
    %p336 = scmp.eq.s32.totalorder %s27, 5
    %p337 = scmp.ne.s32.totalorder %s332, %s334
    %p338 = scmp.eq.s32.totalorder %s27, 0
    %p339 = por %p337, %p338
    %p340 = scmp.ne.s32.totalorder %s332, %s334
    %p341 = scmp.eq.s32.totalorder %s32, 5
    %p342 = por %p340, %p341
    %p343 = scmp.ne.s32.totalorder %s334, %s335
    %p344 = scmp.eq.s32.totalorder %s32, 0
    %p345 = por %p343, %p344
    %p346 = scmp.ne.s32.totalorder %s334, %s335
    %p347 = scmp.eq.s32.totalorder %s33, 5
    %p348 = por %p346, %p347
    %p350 = scmp.ne.s32.totalorder %s335, %s349
    %p351 = scmp.eq.s32.totalorder %s33, 0
    %p352 = por %p350, %p351
    %s354 = sadd.s32 %s353, 1
    %p357 = scmp.eq.s32.totalorder %s27, 5
    %p358 = scmp.ne.s32.totalorder %s353, %s355
    %p359 = scmp.eq.s32.totalorder %s27, 0
    %p360 = por %p358, %p359
    %p361 = scmp.ne.s32.totalorder %s353, %s355
    %p362 = scmp.eq.s32.totalorder %s32, 5
    %p363 = por %p361, %p362
    %p364 = scmp.ne.s32.totalorder %s355, %s356
    %p365 = scmp.eq.s32.totalorder %s32, 0
    %p366 = por %p364, %p365
    %p367 = scmp.ne.s32.totalorder %s355, %s356
    %p368 = scmp.eq.s32.totalorder %s33, 5
    %p369 = por %p367, %p368
    %p371 = scmp.ne.s32.totalorder %s356, %s370
    %p372 = scmp.eq.s32.totalorder %s33, 0
    %p373 = por %p371, %p372
    %s375 = sadd.s32 %s374, 1
    %p378 = scmp.eq.s32.totalorder %s27, 5
    %p379 = scmp.ne.s32.totalorder %s374, %s376
    %p380 = scmp.eq.s32.totalorder %s27, 0
    %p381 = por %p379, %p380
    %p382 = scmp.ne.s32.totalorder %s374, %s376
    %p383 = scmp.eq.s32.totalorder %s32, 5
    %p384 = por %p382, %p383
    %p385 = scmp.ne.s32.totalorder %s376, %s377
    %p386 = scmp.eq.s32.totalorder %s32, 0
    %p387 = por %p385, %p386
    %p388 = scmp.ne.s32.totalorder %s376, %s377
    %p389 = scmp.eq.s32.totalorder %s33, 5
    %p390 = por %p388, %p389
    %p392 = scmp.ne.s32.totalorder %s377, %s391
    %p393 = scmp.eq.s32.totalorder %s33, 0
    %p394 = por %p392, %p393
    %s396 = sadd.s32 %s395, 1
    %p399 = scmp.eq.s32.totalorder %s27, 5
    %p400 = scmp.ne.s32.totalorder %s395, %s397
    %p401 = scmp.eq.s32.totalorder %s27, 0
    %p402 = por %p400, %p401
    %p403 = scmp.ne.s32.totalorder %s395, %s397
    %p404 = scmp.eq.s32.totalorder %s32, 5
    %p405 = por %p403, %p404
    %p406 = scmp.ne.s32.totalorder %s397, %s398
    %p407 = scmp.eq.s32.totalorder %s32, 0
    %p408 = por %p406, %p407
    %p409 = scmp.ne.s32.totalorder %s397, %s398
    %p410 = scmp.eq.s32.totalorder %s33, 5
    %p411 = por %p409, %p410
    %p413 = scmp.ne.s32.totalorder %s398, %s412
    %p414 = scmp.eq.s32.totalorder %s33, 0
    %p415 = por %p413, %p414
    %s417 = sadd.s32 %s416, 1
    %p420 = scmp.eq.s32.totalorder %s27, 5
    %p421 = scmp.ne.s32.totalorder %s416, %s418
    %p422 = scmp.eq.s32.totalorder %s27, 0
    %p423 = por %p421, %p422
    %p424 = scmp.ne.s32.totalorder %s416, %s418
    %p425 = scmp.eq.s32.totalorder %s32, 5
    %p426 = por %p424, %p425
    %p427 = scmp.ne.s32.totalorder %s418, %s419
    %p428 = scmp.eq.s32.totalorder %s32, 0
    %p429 = por %p427, %p428
    %p430 = scmp.ne.s32.totalorder %s418, %s419
    %p431 = scmp.eq.s32.totalorder %s33, 5
    %p432 = por %p430, %p431
    %p434 = scmp.ne.s32.totalorder %s419, %s433
    %p435 = scmp.eq.s32.totalorder %s33, 0
    %p436 = por %p434, %p435
    %s438 = sadd.s32 %s437, 1
    %p441 = scmp.eq.s32.totalorder %s27, 5
    %p442 = scmp.ne.s32.totalorder %s437, %s439
    %p443 = scmp.eq.s32.totalorder %s27, 0
    %p444 = por %p442, %p443
    %p445 = scmp.ne.s32.totalorder %s437, %s439
    %p446 = scmp.eq.s32.totalorder %s32, 5
    %p447 = por %p445, %p446
    %p448 = scmp.ne.s32.totalorder %s439, %s440
    %p449 = scmp.eq.s32.totalorder %s32, 0
    %p450 = por %p448, %p449
    %p451 = scmp.ne.s32.totalorder %s439, %s440
    %p452 = scmp.eq.s32.totalorder %s33, 5
    %p453 = por %p451, %p452
    %p455 = scmp.ne.s32.totalorder %s440, %s454
    %p456 = scmp.eq.s32.totalorder %s33, 0
    %p457 = por %p455, %p456
    %s459 = sadd.s32 %s458, 1
    %p462 = scmp.eq.s32.totalorder %s27, 5
    %p463 = scmp.ne.s32.totalorder %s458, %s460
    %p464 = scmp.eq.s32.totalorder %s27, 0
    %p465 = por %p463, %p464
    %p466 = scmp.ne.s32.totalorder %s458, %s460
    %p467 = scmp.eq.s32.totalorder %s32, 5
    %p468 = por %p466, %p467
    %p469 = scmp.ne.s32.totalorder %s460, %s461
    %p470 = scmp.eq.s32.totalorder %s32, 0
    %p471 = por %p469, %p470
    %p472 = scmp.ne.s32.totalorder %s460, %s461
    %p473 = scmp.eq.s32.totalorder %s33, 5
    %p474 = por %p472, %p473
    %p476 = scmp.ne.s32.totalorder %s461, %s475
    %p477 = scmp.eq.s32.totalorder %s33, 0
    %p478 = por %p476, %p477
    %s480 = sadd.s32 %s479, 1
    %p483 = scmp.eq.s32.totalorder %s27, 5
    %p484 = scmp.ne.s32.totalorder %s479, %s481
    %p485 = scmp.eq.s32.totalorder %s27, 0
    %p486 = por %p484, %p485
    %p487 = scmp.ne.s32.totalorder %s479, %s481
    %p488 = scmp.eq.s32.totalorder %s32, 5
    %p489 = por %p487, %p488
    %p490 = scmp.ne.s32.totalorder %s481, %s482
    %p491 = scmp.eq.s32.totalorder %s32, 0
    %p492 = por %p490, %p491
    %p493 = scmp.ne.s32.totalorder %s481, %s482
    %p494 = scmp.eq.s32.totalorder %s33, 5
    %p495 = por %p493, %p494
    %p497 = scmp.ne.s32.totalorder %s482, %s496
    %p498 = scmp.eq.s32.totalorder %s33, 0
    %p499 = por %p497, %p498
    %s500 = ssub.s32 %s34, %s46
    %p501 = scmp.eq.s32.totalorder %s500, 0
    %s503 = sadd.s32 %s502, 1
    %s504 = scalar_select %p501, %s502, %s503
    %p507 = pneg %p501
    %p508 = scmp.eq.s32.totalorder %s27, 5
    %p509 = por %p507, %p508
    %p510 = scmp.ne.s32.totalorder %s502, %s505
    %p511 = scmp.eq.s32.totalorder %s27, 0
    %p512 = por %p510, %p511
    %p513 = scmp.ne.s32.totalorder %s502, %s505
    %p514 = scmp.eq.s32.totalorder %s32, 5
    %p515 = por %p513, %p514
    %p516 = scmp.ne.s32.totalorder %s505, %s506
    %p517 = scmp.eq.s32.totalorder %s32, 0
    %p518 = por %p516, %p517
    %p519 = scmp.ne.s32.totalorder %s505, %s506
    %p520 = scmp.eq.s32.totalorder %s33, 5
    %p521 = por %p519, %p520
    %p523 = scmp.ne.s32.totalorder %s506, %s522
    %p524 = scmp.eq.s32.totalorder %s33, 0
    %p525 = por %p523, %p524
    %p526 = scmp.le.s32.totalorder 1, %s27
    %p527 = scmp.lt.s32.totalorder %s27, 7
    %p528 = pnand %p526, %p527
    %p529 = pneg %p528
    // Predicated region
    $region9: #{latent_dynamics_forward.1} parent=5 // pred_check
      _
    $region10: #{latent_dynamics_forward.1} parent=5 // pred_check_branch
      %531 = sbr.rel (%p528) target = $region12
    $region11: #{latent_dynamics_forward.1} parent=5 // pred_region
      %s532 = ssub.s32 %s27, 1
      // Predicated region
      $region13: #{latent_dynamics_forward.1} parent=11 // pred_check
        %p533 = pneg %p114
      $region14: #{latent_dynamics_forward.1} parent=11 // pred_check_branch
        %535 = sbr.rel (%p533) target = $region16
      $region15: #{latent_dynamics_forward.1} parent=11 // pred_region
        _
      $region16: #{latent_dynamics_forward.1} parent=11 // pred_fallthru
        _
      // Predicated region
      $region17: #{latent_dynamics_forward.1} parent=11 // pred_check
        %p536 = pneg %p135
      $region18: #{latent_dynamics_forward.1} parent=11 // pred_check_branch
        %538 = sbr.rel (%p536) target = $region20
      $region19: #{latent_dynamics_forward.1} parent=11 // pred_region
        _
      $region20: #{latent_dynamics_forward.1} parent=11 // pred_fallthru
        _
      // Predicated region
      $region21: #{latent_dynamics_forward.1} parent=11 // pred_check
        %p539 = pneg %p156
      $region22: #{latent_dynamics_forward.1} parent=11 // pred_check_branch
        %541 = sbr.rel (%p539) target = $region24
      $region23: #{latent_dynamics_forward.1} parent=11 // pred_region
        _
      $region24: #{latent_dynamics_forward.1} parent=11 // pred_fallthru
        _
      // Predicated region
      $region25: #{latent_dynamics_forward.1} parent=11 // pred_check
        %p542 = pneg %p177
      $region26: #{latent_dynamics_forward.1} parent=11 // pred_check_branch
        %544 = sbr.rel (%p542) target = $region28
      $region27: #{latent_dynamics_forward.1} parent=11 // pred_region
        _
      $region28: #{latent_dynamics_forward.1} parent=11 // pred_fallthru
        _
      // Predicated region
      $region29: #{latent_dynamics_forward.1} parent=11 // pred_check
        %p545 = pneg %p198
      $region30: #{latent_dynamics_forward.1} parent=11 // pred_check_branch
        %547 = sbr.rel (%p545) target = $region32
      $region31: #{latent_dynamics_forward.1} parent=11 // pred_region
        _
      $region32: #{latent_dynamics_forward.1} parent=11 // pred_fallthru
        _
      // Predicated region
      $region33: #{latent_dynamics_forward.1} parent=11 // pred_check
        %p548 = pneg %p219
      $region34: #{latent_dynamics_forward.1} parent=11 // pred_check_branch
        %550 = sbr.rel (%p548) target = $region36
      $region35: #{latent_dynamics_forward.1} parent=11 // pred_region
        _
      $region36: #{latent_dynamics_forward.1} parent=11 // pred_fallthru
        _
      // Predicated region
      $region37: #{latent_dynamics_forward.1} parent=11 // pred_check
        %p551 = pneg %p240
      $region38: #{latent_dynamics_forward.1} parent=11 // pred_check_branch
        %553 = sbr.rel (%p551) target = $region40
      $region39: #{latent_dynamics_forward.1} parent=11 // pred_region
        _
      $region40: #{latent_dynamics_forward.1} parent=11 // pred_fallthru
        _
      // Predicated region
      $region41: #{latent_dynamics_forward.1} parent=11 // pred_check
        %p554 = pneg %p261
      $region42: #{latent_dynamics_forward.1} parent=11 // pred_check_branch
        %556 = sbr.rel (%p554) target = $region44
      $region43: #{latent_dynamics_forward.1} parent=11 // pred_region
        _
      $region44: #{latent_dynamics_forward.1} parent=11 // pred_fallthru
        _
      // Predicated region
      $region45: #{latent_dynamics_forward.1} parent=11 // pred_check
        %p557 = pneg %p282
      $region46: #{latent_dynamics_forward.1} parent=11 // pred_check_branch
        %559 = sbr.rel (%p557) target = $region48
      $region47: #{latent_dynamics_forward.1} parent=11 // pred_region
        _
      $region48: #{latent_dynamics_forward.1} parent=11 // pred_fallthru
        _
      // Predicated region
      $region49: #{latent_dynamics_forward.1} parent=11 // pred_check
        %p560 = pneg %p303
      $region50: #{latent_dynamics_forward.1} parent=11 // pred_check_branch
        %562 = sbr.rel (%p560) target = $region52
      $region51: #{latent_dynamics_forward.1} parent=11 // pred_region
        _
      $region52: #{latent_dynamics_forward.1} parent=11 // pred_fallthru
        _
      // Predicated region
      $region53: #{latent_dynamics_forward.1} parent=11 // pred_check
        %p563 = pneg %p324
      $region54: #{latent_dynamics_forward.1} parent=11 // pred_check_branch
        %565 = sbr.rel (%p563) target = $region56
      $region55: #{latent_dynamics_forward.1} parent=11 // pred_region
        _
      $region56: #{latent_dynamics_forward.1} parent=11 // pred_fallthru
        _
      // Predicated region
      $region57: #{latent_dynamics_forward.1} parent=11 // pred_check
        %p566 = pneg %p345
      $region58: #{latent_dynamics_forward.1} parent=11 // pred_check_branch
        %568 = sbr.rel (%p566) target = $region60
      $region59: #{latent_dynamics_forward.1} parent=11 // pred_region
        _
      $region60: #{latent_dynamics_forward.1} parent=11 // pred_fallthru
        _
      // Predicated region
      $region61: #{latent_dynamics_forward.1} parent=11 // pred_check
        %p569 = pneg %p366
      $region62: #{latent_dynamics_forward.1} parent=11 // pred_check_branch
        %571 = sbr.rel (%p569) target = $region64
      $region63: #{latent_dynamics_forward.1} parent=11 // pred_region
        _
      $region64: #{latent_dynamics_forward.1} parent=11 // pred_fallthru
        _
      // Predicated region
      $region65: #{latent_dynamics_forward.1} parent=11 // pred_check
        %p572 = pneg %p387
      $region66: #{latent_dynamics_forward.1} parent=11 // pred_check_branch
        %574 = sbr.rel (%p572) target = $region68
      $region67: #{latent_dynamics_forward.1} parent=11 // pred_region
        _
      $region68: #{latent_dynamics_forward.1} parent=11 // pred_fallthru
        _
      // Predicated region
      $region69: #{latent_dynamics_forward.1} parent=11 // pred_check
        %p575 = pneg %p408
      $region70: #{latent_dynamics_forward.1} parent=11 // pred_check_branch
        %577 = sbr.rel (%p575) target = $region72
      $region71: #{latent_dynamics_forward.1} parent=11 // pred_region
        _
      $region72: #{latent_dynamics_forward.1} parent=11 // pred_fallthru
        _
      // Predicated region
      $region73: #{latent_dynamics_forward.1} parent=11 // pred_check
        %p578 = pneg %p429
      $region74: #{latent_dynamics_forward.1} parent=11 // pred_check_branch
        %580 = sbr.rel (%p578) target = $region76
      $region75: #{latent_dynamics_forward.1} parent=11 // pred_region
        _
      $region76: #{latent_dynamics_forward.1} parent=11 // pred_fallthru
        _
      // Predicated region
      $region77: #{latent_dynamics_forward.1} parent=11 // pred_check
        %p581 = pneg %p450
      $region78: #{latent_dynamics_forward.1} parent=11 // pred_check_branch
        %583 = sbr.rel (%p581) target = $region80
      $region79: #{latent_dynamics_forward.1} parent=11 // pred_region
        _
      $region80: #{latent_dynamics_forward.1} parent=11 // pred_fallthru
        _
      // Predicated region
      $region81: #{latent_dynamics_forward.1} parent=11 // pred_check
        %p584 = pneg %p471
      $region82: #{latent_dynamics_forward.1} parent=11 // pred_check_branch
        %586 = sbr.rel (%p584) target = $region84
      $region83: #{latent_dynamics_forward.1} parent=11 // pred_region
        _
      $region84: #{latent_dynamics_forward.1} parent=11 // pred_fallthru
        _
      // Predicated region
      $region85: #{latent_dynamics_forward.1} parent=11 // pred_check
        %p587 = pneg %p492
      $region86: #{latent_dynamics_forward.1} parent=11 // pred_check_branch
        %589 = sbr.rel (%p587) target = $region88
      $region87: #{latent_dynamics_forward.1} parent=11 // pred_region
        _
      $region88: #{latent_dynamics_forward.1} parent=11 // pred_fallthru
        _
    $region12: #{latent_dynamics_forward.1} parent=5 // pred_fallthru
      _
    %p590 = scmp.lt.s32.totalorder %s27, 6
    // Predicated region
    $region89: #{latent_dynamics_forward.1} parent=5 // pred_check
      %p591 = pneg %p590
    $region90: #{latent_dynamics_forward.1} parent=5 // pred_check_branch
      %593 = sbr.rel (%p591) target = $region92
    $region91: #{latent_dynamics_forward.1} parent=5 // pred_region
      // Predicated region
      $region93: #{latent_dynamics_forward.1} parent=91 // pred_check
        %p594 = pneg %p59
      $region94: #{latent_dynamics_forward.1} parent=91 // pred_check_branch
        %596 = sbr.rel (%p594) target = $region96
      $region95: #{latent_dynamics_forward.1} parent=91 // pred_region
        %p597 = scmp.lt.s32.totalorder %s34, 1
        %s598 = scalar_select %p597, %s34, 1
        %s599 = smul.addr %s598, 2
        %s600 = smul.addr %s599, 4
        %s601 = scalar_lea.vmem %s0, %s600
      $region96: #{latent_dynamics_forward.1} parent=91 // pred_fallthru
        _
      // Predicated region
      $region97: #{latent_dynamics_forward.1} parent=91 // pred_check
        %p602 = pneg %p87
      $region98: #{latent_dynamics_forward.1} parent=91 // pred_check_branch
        %604 = sbr.rel (%p602) target = $region100
      $region99: #{latent_dynamics_forward.1} parent=91 // pred_region
        %p605 = scmp.lt.s32.totalorder %s34, 1
        %s606 = scalar_select %p605, %s34, 1
        %p607 = scmp.lt.s32.totalorder %s35, 2
        %s608 = scalar_select %p607, %s35, 2
        %s609 = smul.addr %s608, 2
        %s610 = smul.addr %s606, 6
        %s611 = sadd.s32 %s609, %s610
        %s612 = smul.addr %s611, 4
        %s613 = scalar_lea.vmem %s1, %s612
      $region100: #{latent_dynamics_forward.1} parent=91 // pred_fallthru
        _
    $region92: #{latent_dynamics_forward.1} parent=5 // pred_fallthru
      _
    %p614 = scmp.le.s32.totalorder 1, %s27
    %p615 = scmp.lt.s32.totalorder %s27, 7
    %p616 = pnand %p614, %p615
    %p617 = pneg %p616
    // Predicated region
    $region101: #{latent_dynamics_forward.1} parent=5 // pred_check
      _
    $region102: #{latent_dynamics_forward.1} parent=5 // pred_check_branch
      %619 = sbr.rel (%p616) target = $region104
    $region103: #{latent_dynamics_forward.1} parent=5 // pred_region
      %s620 = ssub.s32 %s27, 1
      %p621 = scmp.lt.s32.totalorder %s36, 1
      %s622 = scalar_select %p621, %s36, 1
      %s623 = smul.addr %s622, 2
      %s624 = smul.addr %s623, 4
      %s625 = scalar_lea.vmem %s0, %s624
      %p626 = pneg %p65
      %p627 = pneg %p62
      %p628 = scmp.lt.s32.totalorder %s36, 1
      %s629 = scalar_select %p628, %s36, 1
      %p630 = scmp.lt.s32.totalorder %s37, 2
      %s631 = scalar_select %p630, %s37, 2
      %s632 = smul.addr %s631, 2
      %s633 = smul.addr %s629, 6
      %s634 = sadd.s32 %s632, %s633
      %s635 = smul.addr %s634, 4
      %s636 = scalar_lea.vmem %s1, %s635
      %p637 = pneg %p93
      %p638 = pneg %p90
      %p639 = pneg %p114
      %p640 = pneg %p111
      %p641 = pneg %p135
      %p642 = pneg %p132
      %p643 = pneg %p156
      %p644 = pneg %p153
      %p645 = pneg %p177
      %p646 = pneg %p174
      %p647 = pneg %p198
      %p648 = pneg %p195
      %p649 = pneg %p219
      %p650 = pneg %p216
      %p651 = pneg %p240
      %p652 = pneg %p237
      %p653 = pneg %p261
      %p654 = pneg %p258
      %p655 = pneg %p282
      %p656 = pneg %p279
      %p657 = pneg %p303
      %p658 = pneg %p300
      %p659 = pneg %p324
      %p660 = pneg %p321
      %p661 = pneg %p345
      %p662 = pneg %p342
      %p663 = pneg %p366
      %p664 = pneg %p363
      %p665 = pneg %p387
      %p666 = pneg %p384
      %p667 = pneg %p408
      %p668 = pneg %p405
      %p669 = pneg %p429
      %p670 = pneg %p426
      %p671 = pneg %p450
      %p672 = pneg %p447
      %p673 = pneg %p471
      %p674 = pneg %p468
      %p675 = pneg %p492
      %p676 = pneg %p489
      %p677 = pneg %p518
      %p678 = pneg %p515
      %p679 = scmp.lt.s32.totalorder %s36, 1
      %s680 = scalar_select %p679, %s36, 1
      %s681 = scalar_lea.vmem %s21, %s680
      %p682 = scmp.lt.s32.totalorder %s36, 1
      %s683 = scalar_select %p682, %s36, 1
      %s684 = smul.addr %s683, 2
      %s685 = smul.addr %s684, 4
      %s686 = scalar_lea.vmem %s0, %s685
      %p687 = scmp.lt.s32.totalorder %s36, 1
      %s688 = scalar_select %p687, %s36, 1
      %p689 = scmp.lt.s32.totalorder %s37, 2
      %s690 = scalar_select %p689, %s37, 2
      %s691 = smul.addr %s690, 2
      %s692 = smul.addr %s688, 6
      %s693 = sadd.s32 %s691, %s692
      %s694 = smul.addr %s693, 4
      %s695 = scalar_lea.vmem %s1, %s694
      %p696 = scmp.lt.s32.totalorder %s36, 1
      %s697 = scalar_select %p696, %s36, 1
      %s698 = scalar_lea.vmem %s21, %s697
      %p700 = scmp.eq.s32.totalorder %s37, 0
      // Predicated region
      $region105: #{latent_dynamics_forward.1} parent=103 // pred_check
        %p701 = pneg %p700
      $region106: #{latent_dynamics_forward.1} parent=103 // pred_check_branch
        %703 = sbr.rel (%p701) target = $region108
      $region107: #{latent_dynamics_forward.1} parent=103 // pred_region
        %v704 = vld [vmem:[%s686] sm:$0xff]
        %705 = vst [vmem:[#allocation2] sm:$0xff] %v704
        %vm706 = vcmask 0
        %707 = vst.msk [vmem:[%s698] sm:$0x1] %vm706, 0.0
      $region108: #{latent_dynamics_forward.1} parent=103 // pred_fallthru
        _
      %v708 = vld [vmem:[%s2] sm:$0x3]
      %v709 = vlaneseq
      %v710 = vshrl.u32 %v709, 7
      %v711 = vsub.s32 0, %v710
      %v712 = vrot.slane %v708, %v711
      %v713 = vlaneseq
      %v714 = vshrl.u32 %v713, 7
      %v715 = vsub.s32 1, %v714
      %v716 = vrot.slane %v708, %v715
      %v717 = vld [vmem:[#allocation2] sm:$0xff]
      %v718 = vld [vmem:[%s3] sm:$0xf]
      %v719 = vld [vmem:[%s3 + $0x4] sm:$0xf]
      %v720 = vld [vmem:[%s3 + $0x8] sm:$0xf]
      %v721 = vld [vmem:[%s3 + $0xc] sm:$0xf]
      %v723 = vcombine.high %v717, %v717
      %v725 = vpack.c.bf16 %v717, %v717
      %v726 = vpack.c.bf16 %v723, %v723
      %v727 = vld [vmem:[%s4] sm:$0xff]
      %v728 = vld [vmem:[%s4 + $0x8] sm:$0xff]
      %v729 = vld [vmem:[%s4 + $0x10] sm:$0xff]
      %v730 = vld [vmem:[%s4 + $0x18] sm:$0xff]
      %732 = vset.pattern.permute.xlu0 0
      %733 = vperm.xlu0 %732, %v727
      %v734 = vpop.permute.xlu0 %733
      %737 = vset.pattern.permute.xlu0 0
      %738 = vperm.xlu0 %737, %v728
      %v739 = vpop.permute.xlu0 %738
      %742 = vset.pattern.permute.xlu0 0
      %743 = vperm.xlu0 %742, %v729
      %v744 = vpop.permute.xlu0 %743
      %747 = vset.pattern.permute.xlu0 0
      %748 = vperm.xlu0 %747, %v730
      %v749 = vpop.permute.xlu0 %748
      %v755 = vunpack.c.l.b16 %v718
      %v756 = vunpack.c.l.b16 %v719
      %v757 = vunpack.c.l.b16 %v720
      %v758 = vunpack.c.l.b16 %v721
      %v759 = vpack.c.b16 %v756, %v755
      %v760 = vpack.c.b16 %v758, %v757
      %vm761 = vcmask 31744
      %v763 = vsel %vm761, %v759, 0
      %v766 = vsel %vm761, %v760, 0
      %vm768 = vcmask 1041408
      %v770 = vsel %vm768, %v725, 0
      %v773 = vsel %vm768, %v726, 0
      %775 = vmatprep.subr.bf16.mxu0 %v773
      %776 = vmatpush1.bf16.msra.mxu0 %v770
      %777 = vmatprep.subr.bf16.mxu0 0
      %778 = vmatpush1.bf16.msra.mxu0 0
      %779 = vmatprep.subr.bf16.mxu0 0
      %780 = vmatpush1.bf16.msra.mxu0 0
      %781 = vmatprep.subr.bf16.mxu0 0
      %782 = vmatpush1.bf16.msra.mxu0 0
      %783 = vmatprep.subr.bf16.mxu0 0
      %784 = vmatpush1.bf16.msra.mxu0 0
      %785 = vmatprep.subr.bf16.mxu0 0
      %786 = vmatpush1.bf16.msra.mxu0 0
      %787 = vmatprep.subr.bf16.mxu0 0
      %788 = vmatpush1.bf16.msra.mxu0 0
      %789 = vmatprep.subr.bf16.mxu0 0
      %790 = vmatpush1.bf16.msra.mxu0 0
      %791 = vmatprep.subr.bf16.mxu0 0
      %792 = vmatpush1.bf16.msra.mxu0 0
      %793 = vmatprep.subr.bf16.mxu0 0
      %794 = vmatpush1.bf16.msra.mxu0 0
      %795 = vmatprep.subr.bf16.mxu0 0
      %796 = vmatpush1.bf16.msra.mxu0 0
      %797 = vmatprep.subr.bf16.mxu0 0
      %798 = vmatpush1.bf16.msra.mxu0 0
      %799 = vmatprep.subr.bf16.mxu0 0
      %800 = vmatpush1.bf16.msra.mxu0 0
      %801 = vmatprep.subr.bf16.mxu0 0
      %802 = vmatpush1.bf16.msra.mxu0 0
      %803 = vmatprep.subr.bf16.mxu0 0
      %804 = vmatpush1.bf16.msra.mxu0 0
      %805 = vmatprep.subr.bf16.mxu0 0
      %806 = vmatpush1.bf16.msra.mxu0 0
      %807 = vmatprep.mubr.bf16.mxu0 0
      %808 = vmatmul.mubr.bf16.gmra.mrb[0].mxu0 %v763
      %v809 = vpop.f32.mrb[0].mxu0
      %v810 = vadd.f32 %v734, %v809
      %v811 = vpop.f32.mrb[0].mxu0
      %v812 = vadd.f32 %v734, %v811
      %v813 = vpop.f32.mrb[0].mxu0
      %v814 = vadd.f32 %v739, %v813
      %v815 = vpop.f32.mrb[0].mxu0
      %v816 = vadd.f32 %v739, %v815
      %817 = vmatprep.mubr.bf16.mxu0 0
      %818 = vmatmul.mubr.bf16.gmra.mrb[0].mxu0 %v766
      %v819 = vpop.f32.mrb[0].mxu0
      %v820 = vadd.f32 %v744, %v819
      %v821 = vpop.f32.mrb[0].mxu0
      %v822 = vadd.f32 %v744, %v821
      %v823 = vpop.f32.mrb[0].mxu0
      %v824 = vadd.f32 %v749, %v823
      %v825 = vpop.f32.mrb[0].mxu0
      %v826 = vadd.f32 %v749, %v825
      %827 = vdwg.mxu0
      %v828 = vld [vmem:[%s5] sm:$0xff]
      %v829 = vld [vmem:[%s5 + $0x8] sm:$0xff]
      %v830 = vld [vmem:[%s5 + $0x10] sm:$0xff]
      %v831 = vld [vmem:[%s5 + $0x18] sm:$0xff]
      %v832 = vld [vmem:[%s6] sm:$0xff]
      %v833 = vld [vmem:[%s6 + $0x8] sm:$0xff]
      %v834 = vld [vmem:[%s6 + $0x10] sm:$0xff]
      %v835 = vld [vmem:[%s6 + $0x18] sm:$0xff]
      %v836 = vadd.f32 %v810, %v812
      %v837 = vadd.f32 %v836, %v814
      %v838 = vadd.f32 %v837, %v816
      %v839 = vadd.f32 %v838, %v820
      %v840 = vadd.f32 %v839, %v822
      %v841 = vadd.f32 %v840, %v824
      %v842 = vadd.f32 %v841, %v826
      %843 = vadd.xlane.f32.xlu0 %v842
      %v844 = vpop.xlane.xlu0 %843
      %v845 = vrot.slane %v844, 4
      %v846 = vadd.f32 %v844, %v845
      %v847 = vrot.slane %v846, 2
      %v848 = vadd.f32 %v846, %v847
      %v849 = vrot.slane %v848, 1
      %v850 = vadd.f32 %v848, %v849
      %s851 = vtos %v850
      %v852 = vmul.f32 %v810, %v810
      %v853 = vmul.f32 %v812, %v812
      %v854 = vmul.f32 %v814, %v814
      %v855 = vmul.f32 %v816, %v816
      %v856 = vmul.f32 %v820, %v820
      %v857 = vmul.f32 %v822, %v822
      %v858 = vmul.f32 %v824, %v824
      %v859 = vmul.f32 %v826, %v826
      %v860 = vadd.f32 %v852, %v853
      %v861 = vadd.f32 %v860, %v854
      %v862 = vadd.f32 %v861, %v855
      %v863 = vadd.f32 %v862, %v856
      %v864 = vadd.f32 %v863, %v857
      %v865 = vadd.f32 %v864, %v858
      %v866 = vadd.f32 %v865, %v859
      %867 = vadd.xlane.f32.xlu0 %v866
      %v868 = vpop.xlane.xlu0 %867
      %v869 = vrot.slane %v868, 4
      %v870 = vadd.f32 %v868, %v869
      %v871 = vrot.slane %v870, 2
      %v872 = vadd.f32 %v870, %v871
      %v873 = vrot.slane %v872, 1
      %v874 = vadd.f32 %v872, %v873
      %s875 = vtos %v874
      %v876 = vrcp.pop 8192.0
      %s877 = vtos %v876
      %s878 = smul.f32 %s851, %s877
      %v879 = vrcp.pop 8192.0
      %s880 = vtos %v879
      %s881 = smul.f32 %s875, %s880
      %s882 = smul.f32 %s878, %s878
      %s883 = ssub.f32 %s881, %s882
      %s884 = sadd.f32 %s883, 1e-05
      %v885 = vstv %s884
      %v886 = vrsqrt.pop %v885
      %s887 = vtos %v886
      %v888 = vstv %s878
      %v889 = vsub.f32 %v810, %v888
      %v890 = vsub.f32 %v812, %v888
      %v891 = vsub.f32 %v814, %v888
      %v892 = vsub.f32 %v816, %v888
      %v893 = vsub.f32 %v820, %v888
      %v894 = vsub.f32 %v822, %v888
      %v895 = vsub.f32 %v824, %v888
      %v896 = vsub.f32 %v826, %v888
      %v897 = vstv %s887
      %v898 = vmul.f32 %v889, %v897
      %v899 = vmul.f32 %v890, %v897
      %v900 = vmul.f32 %v891, %v897
      %v901 = vmul.f32 %v892, %v897
      %v902 = vmul.f32 %v893, %v897
      %v903 = vmul.f32 %v894, %v897
      %v904 = vmul.f32 %v895, %v897
      %v905 = vmul.f32 %v896, %v897
      %907 = vset.pattern.permute.xlu0 0
      %908 = vperm.xlu0 %907, %v828
      %v909 = vpop.permute.xlu0 %908
      %912 = vset.pattern.permute.xlu0 0
      %913 = vperm.xlu0 %912, %v829
      %v914 = vpop.permute.xlu0 %913
      %917 = vset.pattern.permute.xlu0 0
      %918 = vperm.xlu0 %917, %v830
      %v919 = vpop.permute.xlu0 %918
      %922 = vset.pattern.permute.xlu0 0
      %923 = vperm.xlu0 %922, %v831
      %v924 = vpop.permute.xlu0 %923
      %v926 = vmul.f32 %v898, %v909
      %v927 = vmul.f32 %v899, %v909
      %v928 = vmul.f32 %v900, %v914
      %v929 = vmul.f32 %v901, %v914
      %v930 = vmul.f32 %v902, %v919
      %v931 = vmul.f32 %v903, %v919
      %v932 = vmul.f32 %v904, %v924
      %v933 = vmul.f32 %v905, %v924
      %935 = vset.pattern.permute.xlu0 0
      %936 = vperm.xlu0 %935, %v832
      %v937 = vpop.permute.xlu0 %936
      %940 = vset.pattern.permute.xlu0 0
      %941 = vperm.xlu0 %940, %v833
      %v942 = vpop.permute.xlu0 %941
      %945 = vset.pattern.permute.xlu0 0
      %946 = vperm.xlu0 %945, %v834
      %v947 = vpop.permute.xlu0 %946
      %950 = vset.pattern.permute.xlu0 0
      %951 = vperm.xlu0 %950, %v835
      %v952 = vpop.permute.xlu0 %951
      %v954 = vadd.f32 %v926, %v937
      %v955 = vadd.f32 %v927, %v937
      %v956 = vadd.f32 %v928, %v942
      %v957 = vadd.f32 %v929, %v942
      %v958 = vadd.f32 %v930, %v947
      %v959 = vadd.f32 %v931, %v947
      %v960 = vadd.f32 %v932, %v952
      %v961 = vadd.f32 %v933, %v952
      %v962 = vld [vmem:[%s7] sm:$0xff]
      %v963 = vld [vmem:[%s7 + $0x8] sm:$0xf]
      %v964 = vld [vmem:[%s7 + $0xc] sm:$0xff]
      %v965 = vld [vmem:[%s7 + $0x14] sm:$0xf]
      %v966 = vld [vmem:[%s7 + $0x18] sm:$0xff]
      %v967 = vld [vmem:[%s7 + $0x20] sm:$0xf]
      %v968 = vld [vmem:[%s7 + $0x24] sm:$0xff]
      %v969 = vld [vmem:[%s7 + $0x2c] sm:$0xf]
      %v970 = vld [vmem:[%s8] sm:$0xff]
      %v971 = vld [vmem:[%s8 + $0x8] sm:$0xff]
      %v972 = vld [vmem:[%s8 + $0x10] sm:$0xff]
      %v973 = vld [vmem:[%s8 + $0x18] sm:$0xff]
      %974 = vrot.lane.b32.xlu0 %v954, 1
      %v975 = vpop.permute.xlu0 %974
      %976 = vrot.lane.b32.xlu0 %v956, 1
      %v977 = vpop.permute.xlu0 %976
      %978 = vrot.lane.b32.xlu0 %v958, 1
      %v979 = vpop.permute.xlu0 %978
      %980 = vrot.lane.b32.xlu0 %v960, 1
      %v981 = vpop.permute.xlu0 %980
      %982 = vrot.lane.b32.xlu0 %v955, 1
      %v983 = vpop.permute.xlu0 %982
      %984 = vrot.lane.b32.xlu0 %v957, 1
      %v985 = vpop.permute.xlu0 %984
      %986 = vrot.lane.b32.xlu0 %v959, 1
      %v987 = vpop.permute.xlu0 %986
      %988 = vrot.lane.b32.xlu0 %v961, 1
      %v989 = vpop.permute.xlu0 %988
      %v990 = vlaneseq
      %v991 = vand.u32 %v990, 127
      %vm992 = vcmp.lt.s32.totalorder %v991, 1
      %v993 = vsel %vm992, %v975, %v983
      %v994 = vsel %vm992, %v977, %v985
      %v995 = vsel %vm992, %v979, %v987
      %v996 = vsel %vm992, %v981, %v989
      %v997 = vsel %vm992, %v983, %v975
      %v998 = vsel %vm992, %v985, %v977
      %v999 = vsel %vm992, %v987, %v979
      %v1000 = vsel %vm992, %v989, %v981
      %1001 = vrot.lane.b32.xlu0 %v954, 113
      %v1002 = vpop.permute.xlu0 %1001
      %1003 = vrot.lane.b32.xlu0 %v956, 113
      %v1004 = vpop.permute.xlu0 %1003
      %1005 = vrot.lane.b32.xlu0 %v958, 113
      %v1006 = vpop.permute.xlu0 %1005
      %1007 = vrot.lane.b32.xlu0 %v960, 113
      %v1008 = vpop.permute.xlu0 %1007
      %1009 = vrot.lane.b32.xlu0 %v955, 113
      %v1010 = vpop.permute.xlu0 %1009
      %1011 = vrot.lane.b32.xlu0 %v957, 113
      %v1012 = vpop.permute.xlu0 %1011
      %1013 = vrot.lane.b32.xlu0 %v959, 113
      %v1014 = vpop.permute.xlu0 %1013
      %1015 = vrot.lane.b32.xlu0 %v961, 113
      %v1016 = vpop.permute.xlu0 %1015
      %vm1017 = vcmp.lt.s32.totalorder %v991, 113
      %v1018 = vsel %vm1017, %v1002, %v1010
      %v1019 = vsel %vm1017, %v1004, %v1012
      %v1020 = vsel %vm1017, %v1006, %v1014
      %v1021 = vsel %vm1017, %v1008, %v1016
      %v1022 = vsel %vm1017, %v1010, %v1002
      %v1023 = vsel %vm1017, %v1012, %v1004
      %v1024 = vsel %vm1017, %v1014, %v1006
      %v1025 = vsel %vm1017, %v1016, %v1008
      %vm1026 = vcmp.lt.s32.totalorder %v712, 1
      %vm1027 = vcmp.lt.s32.totalorder %v716, 1
      %v1028 = vsel %vm1026, %v1018, %v997
      %v1029 = vsel %vm1027, %v1022, %v993
      %v1030 = vsel %vm1026, %v1019, %v998
      %v1031 = vsel %vm1027, %v1023, %v994
      %v1032 = vsel %vm1026, %v1020, %v999
      %v1033 = vsel %vm1027, %v1024, %v995
      %v1034 = vsel %vm1026, %v1021, %v1000
      %v1035 = vsel %vm1027, %v1025, %v996
      %1036 = vrot.lane.b32.xlu0 %v954, 127
      %v1037 = vpop.permute.xlu0 %1036
      %1038 = vrot.lane.b32.xlu0 %v956, 127
      %v1039 = vpop.permute.xlu0 %1038
      %1040 = vrot.lane.b32.xlu0 %v958, 127
      %v1041 = vpop.permute.xlu0 %1040
      %1042 = vrot.lane.b32.xlu0 %v960, 127
      %v1043 = vpop.permute.xlu0 %1042
      %1044 = vrot.lane.b32.xlu0 %v955, 127
      %v1045 = vpop.permute.xlu0 %1044
      %1046 = vrot.lane.b32.xlu0 %v957, 127
      %v1047 = vpop.permute.xlu0 %1046
      %1048 = vrot.lane.b32.xlu0 %v959, 127
      %v1049 = vpop.permute.xlu0 %1048
      %1050 = vrot.lane.b32.xlu0 %v961, 127
      %v1051 = vpop.permute.xlu0 %1050
      %vm1052 = vcmp.lt.s32.totalorder %v991, 127
      %v1053 = vsel %vm1052, %v1037, %v1045
      %v1054 = vsel %vm1052, %v1039, %v1047
      %v1055 = vsel %vm1052, %v1041, %v1049
      %v1056 = vsel %vm1052, %v1043, %v1051
      %v1057 = vsel %vm1052, %v1045, %v1037
      %v1058 = vsel %vm1052, %v1047, %v1039
      %v1059 = vsel %vm1052, %v1049, %v1041
      %v1060 = vsel %vm1052, %v1051, %v1043
      %1061 = vrot.lane.b32.xlu0 %v954, 15
      %v1062 = vpop.permute.xlu0 %1061
      %1063 = vrot.lane.b32.xlu0 %v956, 15
      %v1064 = vpop.permute.xlu0 %1063
      %1065 = vrot.lane.b32.xlu0 %v958, 15
      %v1066 = vpop.permute.xlu0 %1065
      %1067 = vrot.lane.b32.xlu0 %v960, 15
      %v1068 = vpop.permute.xlu0 %1067
      %1069 = vrot.lane.b32.xlu0 %v955, 15
      %v1070 = vpop.permute.xlu0 %1069
      %1071 = vrot.lane.b32.xlu0 %v957, 15
      %v1072 = vpop.permute.xlu0 %1071
      %1073 = vrot.lane.b32.xlu0 %v959, 15
      %v1074 = vpop.permute.xlu0 %1073
      %1075 = vrot.lane.b32.xlu0 %v961, 15
      %v1076 = vpop.permute.xlu0 %1075
      %vm1077 = vcmp.lt.s32.totalorder %v991, 15
      %v1078 = vsel %vm1077, %v1062, %v1070
      %v1079 = vsel %vm1077, %v1064, %v1072
      %v1080 = vsel %vm1077, %v1066, %v1074
      %v1081 = vsel %vm1077, %v1068, %v1076
      %v1082 = vsel %vm1077, %v1070, %v1062
      %v1083 = vsel %vm1077, %v1072, %v1064
      %v1084 = vsel %vm1077, %v1074, %v1066
      %v1085 = vsel %vm1077, %v1076, %v1068
      %vm1086 = vcmp.ge.s32.totalorder %v712, 15
      %vm1087 = vcmp.ge.s32.totalorder %v716, 15
      %v1088 = vsel %vm1086, %v1082, %v1053
      %v1089 = vsel %vm1087, %v1078, %v1057
      %v1090 = vsel %vm1086, %v1083, %v1054
      %v1091 = vsel %vm1087, %v1079, %v1058
      %v1092 = vsel %vm1086, %v1084, %v1055
      %v1093 = vsel %vm1087, %v1080, %v1059
      %v1094 = vsel %vm1086, %v1085, %v1056
      %v1095 = vsel %vm1087, %v1081, %v1060
      %1096 = vrot.lane.b32.xlu0 %v1028, 16
      %v1097 = vpop.permute.xlu0 %1096
      %1098 = vrot.lane.b32.xlu0 %v1030, 16
      %v1099 = vpop.permute.xlu0 %1098
      %1100 = vrot.lane.b32.xlu0 %v1032, 16
      %v1101 = vpop.permute.xlu0 %1100
      %1102 = vrot.lane.b32.xlu0 %v1034, 16
      %v1103 = vpop.permute.xlu0 %1102
      %1104 = vrot.lane.b32.xlu0 %v954, 16
      %v1105 = vpop.permute.xlu0 %1104
      %1106 = vrot.lane.b32.xlu0 %v956, 16
      %v1107 = vpop.permute.xlu0 %1106
      %1108 = vrot.lane.b32.xlu0 %v958, 16
      %v1109 = vpop.permute.xlu0 %1108
      %1110 = vrot.lane.b32.xlu0 %v960, 16
      %v1111 = vpop.permute.xlu0 %1110
      %1112 = vrot.lane.b32.xlu0 %v1088, 16
      %v1113 = vpop.permute.xlu0 %1112
      %1114 = vrot.lane.b32.xlu0 %v1090, 16
      %v1115 = vpop.permute.xlu0 %1114
      %1116 = vrot.lane.b32.xlu0 %v1092, 16
      %v1117 = vpop.permute.xlu0 %1116
      %1118 = vrot.lane.b32.xlu0 %v1094, 16
      %v1119 = vpop.permute.xlu0 %1118
      %1120 = vrot.lane.b32.xlu0 %v1029, 16
      %v1121 = vpop.permute.xlu0 %1120
      %1122 = vrot.lane.b32.xlu0 %v1031, 16
      %v1123 = vpop.permute.xlu0 %1122
      %1124 = vrot.lane.b32.xlu0 %v1033, 16
      %v1125 = vpop.permute.xlu0 %1124
      %1126 = vrot.lane.b32.xlu0 %v1035, 16
      %v1127 = vpop.permute.xlu0 %1126
      %1128 = vrot.lane.b32.xlu0 %v955, 16
      %v1129 = vpop.permute.xlu0 %1128
      %1130 = vrot.lane.b32.xlu0 %v957, 16
      %v1131 = vpop.permute.xlu0 %1130
      %1132 = vrot.lane.b32.xlu0 %v959, 16
      %v1133 = vpop.permute.xlu0 %1132
      %1134 = vrot.lane.b32.xlu0 %v961, 16
      %v1135 = vpop.permute.xlu0 %1134
      %1136 = vrot.lane.b32.xlu0 %v1089, 16
      %v1137 = vpop.permute.xlu0 %1136
      %1138 = vrot.lane.b32.xlu0 %v1091, 16
      %v1139 = vpop.permute.xlu0 %1138
      %1140 = vrot.lane.b32.xlu0 %v1093, 16
      %v1141 = vpop.permute.xlu0 %1140
      %1142 = vrot.lane.b32.xlu0 %v1095, 16
      %v1143 = vpop.permute.xlu0 %1142
      %vm1144 = vcmp.lt.s32.totalorder %v991, 16
      %v1145 = vsel %vm1144, %v1097, %v1121
      %v1146 = vsel %vm1144, %v1099, %v1123
      %v1147 = vsel %vm1144, %v1101, %v1125
      %v1148 = vsel %vm1144, %v1103, %v1127
      %v1149 = vsel %vm1144, %v1105, %v1129
      %v1150 = vsel %vm1144, %v1107, %v1131
      %v1151 = vsel %vm1144, %v1109, %v1133
      %v1152 = vsel %vm1144, %v1111, %v1135
      %v1153 = vsel %vm1144, %v1113, %v1137
      %v1154 = vsel %vm1144, %v1115, %v1139
      %v1155 = vsel %vm1144, %v1117, %v1141
      %v1156 = vsel %vm1144, %v1119, %v1143
      %v1157 = vsel %vm1144, %v1121, %v1097
      %v1158 = vsel %vm1144, %v1123, %v1099
      %v1159 = vsel %vm1144, %v1125, %v1101
      %v1160 = vsel %vm1144, %v1127, %v1103
      %v1161 = vsel %vm1144, %v1129, %v1105
      %v1162 = vsel %vm1144, %v1131, %v1107
      %v1163 = vsel %vm1144, %v1133, %v1109
      %v1164 = vsel %vm1144, %v1135, %v1111
      %v1165 = vsel %vm1144, %v1137, %v1113
      %v1166 = vsel %vm1144, %v1139, %v1115
      %v1167 = vsel %vm1144, %v1141, %v1117
      %v1168 = vsel %vm1144, %v1143, %v1119
      %1169 = vrot.lane.b32.xlu0 %v1028, 112
      %v1170 = vpop.permute.xlu0 %1169
      %1171 = vrot.lane.b32.xlu0 %v1030, 112
      %v1172 = vpop.permute.xlu0 %1171
      %1173 = vrot.lane.b32.xlu0 %v1032, 112
      %v1174 = vpop.permute.xlu0 %1173
      %1175 = vrot.lane.b32.xlu0 %v1034, 112
      %v1176 = vpop.permute.xlu0 %1175
      %1177 = vrot.lane.b32.xlu0 %v954, 112
      %v1178 = vpop.permute.xlu0 %1177
      %1179 = vrot.lane.b32.xlu0 %v956, 112
      %v1180 = vpop.permute.xlu0 %1179
      %1181 = vrot.lane.b32.xlu0 %v958, 112
      %v1182 = vpop.permute.xlu0 %1181
      %1183 = vrot.lane.b32.xlu0 %v960, 112
      %v1184 = vpop.permute.xlu0 %1183
      %1185 = vrot.lane.b32.xlu0 %v1088, 112
      %v1186 = vpop.permute.xlu0 %1185
      %1187 = vrot.lane.b32.xlu0 %v1090, 112
      %v1188 = vpop.permute.xlu0 %1187
      %1189 = vrot.lane.b32.xlu0 %v1092, 112
      %v1190 = vpop.permute.xlu0 %1189
      %1191 = vrot.lane.b32.xlu0 %v1094, 112
      %v1192 = vpop.permute.xlu0 %1191
      %1193 = vrot.lane.b32.xlu0 %v1029, 112
      %v1194 = vpop.permute.xlu0 %1193
      %1195 = vrot.lane.b32.xlu0 %v1031, 112
      %v1196 = vpop.permute.xlu0 %1195
      %1197 = vrot.lane.b32.xlu0 %v1033, 112
      %v1198 = vpop.permute.xlu0 %1197
      %1199 = vrot.lane.b32.xlu0 %v1035, 112
      %v1200 = vpop.permute.xlu0 %1199
      %1201 = vrot.lane.b32.xlu0 %v955, 112
      %v1202 = vpop.permute.xlu0 %1201
      %1203 = vrot.lane.b32.xlu0 %v957, 112
      %v1204 = vpop.permute.xlu0 %1203
      %1205 = vrot.lane.b32.xlu0 %v959, 112
      %v1206 = vpop.permute.xlu0 %1205
      %1207 = vrot.lane.b32.xlu0 %v961, 112
      %v1208 = vpop.permute.xlu0 %1207
      %1209 = vrot.lane.b32.xlu0 %v1089, 112
      %v1210 = vpop.permute.xlu0 %1209
      %1211 = vrot.lane.b32.xlu0 %v1091, 112
      %v1212 = vpop.permute.xlu0 %1211
      %1213 = vrot.lane.b32.xlu0 %v1093, 112
      %v1214 = vpop.permute.xlu0 %1213
      %1215 = vrot.lane.b32.xlu0 %v1095, 112
      %v1216 = vpop.permute.xlu0 %1215
      %vm1217 = vcmp.lt.s32.totalorder %v991, 112
      %v1218 = vsel %vm1217, %v1170, %v1194
      %v1219 = vsel %vm1217, %v1172, %v1196
      %v1220 = vsel %vm1217, %v1174, %v1198
      %v1221 = vsel %vm1217, %v1176, %v1200
      %v1222 = vsel %vm1217, %v1178, %v1202
      %v1223 = vsel %vm1217, %v1180, %v1204
      %v1224 = vsel %vm1217, %v1182, %v1206
      %v1225 = vsel %vm1217, %v1184, %v1208
      %v1226 = vsel %vm1217, %v1186, %v1210
      %v1227 = vsel %vm1217, %v1188, %v1212
      %v1228 = vsel %vm1217, %v1190, %v1214
      %v1229 = vsel %vm1217, %v1192, %v1216
      %v1230 = vsel %vm1217, %v1194, %v1170
      %v1231 = vsel %vm1217, %v1196, %v1172
      %v1232 = vsel %vm1217, %v1198, %v1174
      %v1233 = vsel %vm1217, %v1200, %v1176
      %v1234 = vsel %vm1217, %v1202, %v1178
      %v1235 = vsel %vm1217, %v1204, %v1180
      %v1236 = vsel %vm1217, %v1206, %v1182
      %v1237 = vsel %vm1217, %v1208, %v1184
      %v1238 = vsel %vm1217, %v1210, %v1186
      %v1239 = vsel %vm1217, %v1212, %v1188
      %v1240 = vsel %vm1217, %v1214, %v1190
      %v1241 = vsel %vm1217, %v1216, %v1192
      %v1242 = vpack.c.bf16 %v1158, %v1157
      %v1243 = vpack.c.bf16 %v1146, %v1145
      %v1244 = vpack.c.bf16 %v1160, %v1159
      %v1245 = vpack.c.bf16 %v1148, %v1147
      %v1246 = vpack.c.bf16 %v1162, %v1161
      %v1247 = vpack.c.bf16 %v1150, %v1149
      %v1248 = vpack.c.bf16 %v1164, %v1163
      %v1249 = vpack.c.bf16 %v1152, %v1151
      %v1250 = vpack.c.bf16 %v1166, %v1165
      %v1251 = vpack.c.bf16 %v1154, %v1153
      %v1252 = vpack.c.bf16 %v1168, %v1167
      %v1253 = vpack.c.bf16 %v1156, %v1155
      %v1254 = vpack.c.bf16 %v1030, %v1028
      %v1255 = vpack.c.bf16 %v1031, %v1029
      %v1256 = vpack.c.bf16 %v1034, %v1032
      %v1257 = vpack.c.bf16 %v1035, %v1033
      %v1258 = vpack.c.bf16 %v956, %v954
      %v1259 = vpack.c.bf16 %v957, %v955
      %v1260 = vpack.c.bf16 %v960, %v958
      %v1261 = vpack.c.bf16 %v961, %v959
      %v1262 = vpack.c.bf16 %v1090, %v1088
      %v1263 = vpack.c.bf16 %v1091, %v1089
      %v1264 = vpack.c.bf16 %v1094, %v1092
      %v1265 = vpack.c.bf16 %v1095, %v1093
      %v1266 = vpack.c.bf16 %v1219, %v1218
      %v1267 = vpack.c.bf16 %v1231, %v1230
      %v1268 = vpack.c.bf16 %v1221, %v1220
      %v1269 = vpack.c.bf16 %v1233, %v1232
      %v1270 = vpack.c.bf16 %v1223, %v1222
      %v1271 = vpack.c.bf16 %v1235, %v1234
      %v1272 = vpack.c.bf16 %v1225, %v1224
      %v1273 = vpack.c.bf16 %v1237, %v1236
      %v1274 = vpack.c.bf16 %v1227, %v1226
      %v1275 = vpack.c.bf16 %v1239, %v1238
      %v1276 = vpack.c.bf16 %v1229, %v1228
      %v1277 = vpack.c.bf16 %v1241, %v1240
      %1279 = vset.pattern.permute.xlu0 0
      %1280 = vperm.xlu0 %1279, %v970
      %v1281 = vpop.permute.xlu0 %1280
      %1284 = vset.pattern.permute.xlu0 0
      %1285 = vperm.xlu0 %1284, %v971
      %v1286 = vpop.permute.xlu0 %1285
      %1289 = vset.pattern.permute.xlu0 0
      %1290 = vperm.xlu0 %1289, %v972
      %v1291 = vpop.permute.xlu0 %1290
      %1294 = vset.pattern.permute.xlu0 0
      %1295 = vperm.xlu0 %1294, %v973
      %v1296 = vpop.permute.xlu0 %1295
      %v1306 = vunpack.c.l.b16 %v962
      %v1307 = vunpack.c.h.b16 %v962
      %v1308 = vunpack.c.l.b16 %v963
      %v1309 = vunpack.c.l.b16 %v964
      %v1310 = vunpack.c.h.b16 %v964
      %v1311 = vunpack.c.l.b16 %v965
      %v1312 = vunpack.c.l.b16 %v966
      %v1313 = vunpack.c.h.b16 %v966
      %v1314 = vunpack.c.l.b16 %v967
      %v1315 = vunpack.c.l.b16 %v968
      %v1316 = vunpack.c.h.b16 %v968
      %v1317 = vunpack.c.l.b16 %v969
      %v1318 = vpack.c.b16 %v1309, %v1306
      %v1319 = vpack.c.b16 %v1310, %v1307
      %v1320 = vpack.c.b16 %v1311, %v1308
      %v1321 = vpack.c.b16 %v1315, %v1312
      %v1322 = vpack.c.b16 %v1316, %v1313
      %v1323 = vpack.c.b16 %v1317, %v1314
      %vm1328 = vcmask 261120
      %v1330 = vsel %vm1328, %v1320, 0
      %v1333 = vsel %vm1328, %v1323, 0
      %1335 = vmatprep.subr.bf16.mxu0 %v1243
      %1336 = vmatpush1.bf16.msra.mxu0 %v1242
      %1337 = vmatprep.subr.bf16.mxu0 %v1245
      %1338 = vmatpush1.bf16.msra.mxu0 %v1244
      %1339 = vmatprep.subr.bf16.mxu0 %v1247
      %1340 = vmatpush1.bf16.msra.mxu0 %v1246
      %1341 = vmatprep.subr.bf16.mxu0 %v1249
      %1342 = vmatpush1.bf16.msra.mxu0 %v1248
      %1343 = vmatprep.subr.bf16.mxu0 %v1251
      %1344 = vmatpush1.bf16.msra.mxu0 %v1250
      %1345 = vmatprep.subr.bf16.mxu0 %v1253
      %1346 = vmatpush1.bf16.msra.mxu0 %v1252
      %1347 = vmatprep.subr.bf16.mxu0 %v1255
      %1348 = vmatpush1.bf16.msra.mxu0 %v1254
      %1349 = vmatprep.subr.bf16.mxu0 %v1257
      %1350 = vmatpush1.bf16.msra.mxu0 %v1256
      %1351 = vmatprep.subr.bf16.mxu0 %v1259
      %1352 = vmatpush1.bf16.msra.mxu0 %v1258
      %1353 = vmatprep.subr.bf16.mxu0 %v1261
      %1354 = vmatpush1.bf16.msra.mxu0 %v1260
      %1355 = vmatprep.subr.bf16.mxu0 %v1263
      %1356 = vmatpush1.bf16.msra.mxu0 %v1262
      %1357 = vmatprep.subr.bf16.mxu0 %v1265
      %1358 = vmatpush1.bf16.msra.mxu0 %v1264
      %1359 = vmatprep.subr.bf16.mxu0 %v1267
      %1360 = vmatpush1.bf16.msra.mxu0 %v1266
      %1361 = vmatprep.subr.bf16.mxu0 %v1269
      %1362 = vmatpush1.bf16.msra.mxu0 %v1268
      %1363 = vmatprep.subr.bf16.mxu0 %v1271
      %1364 = vmatpush1.bf16.msra.mxu0 %v1270
      %1365 = vmatprep.subr.bf16.mxu0 %v1273
      %1366 = vmatpush1.bf16.msra.mxu0 %v1272
      %1367 = vmatprep.mubr.bf16.mxu0 %v1319
      %1368 = vmatmul.mubr.bf16.gmra.mrb[0].mxu0 %v1318
      %v1369 = vpop.f32.mrb[0].mxu0
      %v1370 = vadd.f32 %v1281, %v1369
      %v1371 = vpop.f32.mrb[0].mxu0
      %v1372 = vadd.f32 %v1281, %v1371
      %v1373 = vpop.f32.mrb[0].mxu0
      %v1374 = vadd.f32 %v1286, %v1373
      %v1375 = vpop.f32.mrb[0].mxu0
      %v1376 = vadd.f32 %v1286, %v1375
      %1377 = vmatprep.mubr.bf16.mxu0 %v1322
      %1378 = vmatmul.mubr.bf16.gmra.mrb[0].mxu0 %v1321
      %v1379 = vpop.f32.mrb[0].mxu0
      %v1380 = vadd.f32 %v1291, %v1379
      %v1381 = vpop.f32.mrb[0].mxu0
      %v1382 = vadd.f32 %v1291, %v1381
      %v1383 = vpop.f32.mrb[0].mxu0
      %v1384 = vadd.f32 %v1296, %v1383
      %v1385 = vpop.f32.mrb[0].mxu0
      %v1386 = vadd.f32 %v1296, %v1385
      %1387 = vdwg.mxu0
      %1388 = vmatprep.subr.bf16.mxu0 %v1275
      %1389 = vmatpush1.bf16.msra.mxu0 %v1274
      %1390 = vmatprep.subr.bf16.mxu0 %v1277
      %1391 = vmatpush1.bf16.msra.mxu0 %v1276
      %1392 = vmatprep.subr.bf16.mxu0 0
      %1393 = vmatpush1.bf16.msra.mxu0 0
      %1394 = vmatprep.subr.bf16.mxu0 0
      %1395 = vmatpush1.bf16.msra.mxu0 0
      %1396 = vmatprep.subr.bf16.mxu0 0
      %1397 = vmatpush1.bf16.msra.mxu0 0
      %1398 = vmatprep.subr.bf16.mxu0 0
      %1399 = vmatpush1.bf16.msra.mxu0 0
      %1400 = vmatprep.subr.bf16.mxu0 0
      %1401 = vmatpush1.bf16.msra.mxu0 0
      %1402 = vmatprep.subr.bf16.mxu0 0
      %1403 = vmatpush1.bf16.msra.mxu0 0
      %1404 = vmatprep.subr.bf16.mxu0 0
      %1405 = vmatpush1.bf16.msra.mxu0 0
      %1406 = vmatprep.subr.bf16.mxu0 0
      %1407 = vmatpush1.bf16.msra.mxu0 0
      %1408 = vmatprep.subr.bf16.mxu0 0
      %1409 = vmatpush1.bf16.msra.mxu0 0
      %1410 = vmatprep.subr.bf16.mxu0 0
      %1411 = vmatpush1.bf16.msra.mxu0 0
      %1412 = vmatprep.subr.bf16.mxu0 0
      %1413 = vmatpush1.bf16.msra.mxu0 0
      %1414 = vmatprep.subr.bf16.mxu0 0
      %1415 = vmatpush1.bf16.msra.mxu0 0
      %1416 = vmatprep.subr.bf16.mxu0 0
      %1417 = vmatpush1.bf16.msra.mxu0 0
      %1418 = vmatprep.subr.bf16.mxu0 0
      %1419 = vmatpush1.bf16.msra.mxu0 0
      %1420 = vmatprep.mubr.bf16.mxu0 0
      %1421 = vmatmul.mubr.bf16.gmra.mrb[0].mxu0 %v1330
      %v1422 = vpop.f32.mrb[0].mxu0
      %v1423 = vadd.f32 %v1370, %v1422
      %v1424 = vpop.f32.mrb[0].mxu0
      %v1425 = vadd.f32 %v1372, %v1424
      %v1426 = vpop.f32.mrb[0].mxu0
      %v1427 = vadd.f32 %v1374, %v1426
      %v1428 = vpop.f32.mrb[0].mxu0
      %v1429 = vadd.f32 %v1376, %v1428
      %1430 = vmatprep.mubr.bf16.mxu0 0
      %1431 = vmatmul.mubr.bf16.gmra.mrb[0].mxu0 %v1333
      %v1432 = vpop.f32.mrb[0].mxu0
      %v1433 = vadd.f32 %v1380, %v1432
      %v1434 = vpop.f32.mrb[0].mxu0
      %v1435 = vadd.f32 %v1382, %v1434
      %v1436 = vpop.f32.mrb[0].mxu0
      %v1437 = vadd.f32 %v1384, %v1436
      %v1438 = vpop.f32.mrb[0].mxu0
      %v1439 = vadd.f32 %v1386, %v1438
      %1440 = vdwg.mxu0
      %v1441 = vmul.f32 %v1423, 0.5
      %v1442 = vmul.f32 %v1425, 0.5
      %v1443 = vmul.f32 %v1427, 0.5
      %v1444 = vmul.f32 %v1429, 0.5
      %v1445 = vmul.f32 %v1433, 0.5
      %v1446 = vmul.f32 %v1435, 0.5
      %v1447 = vmul.f32 %v1437, 0.5
      %v1448 = vmul.f32 %v1439, 0.5
      %v1449 = vmul.f32 %v1423, 0.044715
      %v1450 = vmul.f32 %v1425, 0.044715
      %v1451 = vmul.f32 %v1427, 0.044715
      %v1452 = vmul.f32 %v1429, 0.044715
      %v1453 = vmul.f32 %v1433, 0.044715
      %v1454 = vmul.f32 %v1435, 0.044715
      %v1455 = vmul.f32 %v1437, 0.044715
      %v1456 = vmul.f32 %v1439, 0.044715
      %v1457 = vmul.f32 %v1449, %v1423
      %v1458 = vmul.f32 %v1450, %v1425
      %v1459 = vmul.f32 %v1451, %v1427
      %v1460 = vmul.f32 %v1452, %v1429
      %v1461 = vmul.f32 %v1453, %v1433
      %v1462 = vmul.f32 %v1454, %v1435
      %v1463 = vmul.f32 %v1455, %v1437
      %v1464 = vmul.f32 %v1456, %v1439
      %v1465 = vmul.f32 %v1457, %v1423
      %v1466 = vmul.f32 %v1458, %v1425
      %v1467 = vmul.f32 %v1459, %v1427
      %v1468 = vmul.f32 %v1460, %v1429
      %v1469 = vmul.f32 %v1461, %v1433
      %v1470 = vmul.f32 %v1462, %v1435
      %v1471 = vmul.f32 %v1463, %v1437
      %v1472 = vmul.f32 %v1464, %v1439
      %v1473 = vadd.f32 %v1423, %v1465
      %v1474 = vadd.f32 %v1425, %v1466
      %v1475 = vadd.f32 %v1427, %v1467
      %v1476 = vadd.f32 %v1429, %v1468
      %v1477 = vadd.f32 %v1433, %v1469
      %v1478 = vadd.f32 %v1435, %v1470
      %v1479 = vadd.f32 %v1437, %v1471
      %v1480 = vadd.f32 %v1439, %v1472
      %v1481 = vmul.f32 %v1473, 0.7978846
      %v1482 = vmul.f32 %v1474, 0.7978846
      %v1483 = vmul.f32 %v1475, 0.7978846
      %v1484 = vmul.f32 %v1476, 0.7978846
      %v1485 = vmul.f32 %v1477, 0.7978846
      %v1486 = vmul.f32 %v1478, 0.7978846
      %v1487 = vmul.f32 %v1479, 0.7978846
      %v1488 = vmul.f32 %v1480, 0.7978846
      %v1489 = vtanh.pop %v1481
      %v1490 = vtanh.pop %v1482
      %v1491 = vtanh.pop %v1483
      %v1492 = vtanh.pop %v1484
      %v1493 = vtanh.pop %v1485
      %v1494 = vtanh.pop %v1486
      %v1495 = vtanh.pop %v1487
      %v1496 = vtanh.pop %v1488
      %v1497 = vadd.f32 %v1489, 1.0
      %v1498 = vadd.f32 %v1490, 1.0
      %v1499 = vadd.f32 %v1491, 1.0
      %v1500 = vadd.f32 %v1492, 1.0
      %v1501 = vadd.f32 %v1493, 1.0
      %v1502 = vadd.f32 %v1494, 1.0
      %v1503 = vadd.f32 %v1495, 1.0
      %v1504 = vadd.f32 %v1496, 1.0
      %v1505 = vmul.f32 %v1441, %v1497
      %v1506 = vmul.f32 %v1442, %v1498
      %v1507 = vmul.f32 %v1443, %v1499
      %v1508 = vmul.f32 %v1444, %v1500
      %v1509 = vmul.f32 %v1445, %v1501
      %v1510 = vmul.f32 %v1446, %v1502
      %v1511 = vmul.f32 %v1447, %v1503
      %v1512 = vmul.f32 %v1448, %v1504
      %v1513 = vld [vmem:[%s9] sm:$0xff]
      %v1514 = vld [vmem:[%s9 + $0x8] sm:$0xf]
      %v1515 = vld [vmem:[%s9 + $0xc] sm:$0xff]
      %v1516 = vld [vmem:[%s9 + $0x14] sm:$0xf]
      %v1517 = vld [vmem:[%s9 + $0x18] sm:$0xff]
      %v1518 = vld [vmem:[%s9 + $0x20] sm:$0xf]
      %v1519 = vld [vmem:[%s9 + $0x24] sm:$0xff]
      %v1520 = vld [vmem:[%s9 + $0x2c] sm:$0xf]
      %v1521 = vld [vmem:[%s10] sm:$0xff]
      %v1522 = vld [vmem:[%s10 + $0x8] sm:$0xff]
      %v1523 = vld [vmem:[%s10 + $0x10] sm:$0xff]
      %v1524 = vld [vmem:[%s10 + $0x18] sm:$0xff]
      %1525 = vrot.lane.b32.xlu0 %v1505, 2
      %v1526 = vpop.permute.xlu0 %1525
      %1527 = vrot.lane.b32.xlu0 %v1507, 2
      %v1528 = vpop.permute.xlu0 %1527
      %1529 = vrot.lane.b32.xlu0 %v1509, 2
      %v1530 = vpop.permute.xlu0 %1529
      %1531 = vrot.lane.b32.xlu0 %v1511, 2
      %v1532 = vpop.permute.xlu0 %1531
      %1533 = vrot.lane.b32.xlu0 %v1506, 2
      %v1534 = vpop.permute.xlu0 %1533
      %1535 = vrot.lane.b32.xlu0 %v1508, 2
      %v1536 = vpop.permute.xlu0 %1535
      %1537 = vrot.lane.b32.xlu0 %v1510, 2
      %v1538 = vpop.permute.xlu0 %1537
      %1539 = vrot.lane.b32.xlu0 %v1512, 2
      %v1540 = vpop.permute.xlu0 %1539
      %vm1541 = vcmp.lt.s32.totalorder %v991, 2
      %v1542 = vsel %vm1541, %v1526, %v1534
      %v1543 = vsel %vm1541, %v1528, %v1536
      %v1544 = vsel %vm1541, %v1530, %v1538
      %v1545 = vsel %vm1541, %v1532, %v1540
      %v1546 = vsel %vm1541, %v1534, %v1526
      %v1547 = vsel %vm1541, %v1536, %v1528
      %v1548 = vsel %vm1541, %v1538, %v1530
      %v1549 = vsel %vm1541, %v1540, %v1532
      %1550 = vrot.lane.b32.xlu0 %v1505, 114
      %v1551 = vpop.permute.xlu0 %1550
      %1552 = vrot.lane.b32.xlu0 %v1507, 114
      %v1553 = vpop.permute.xlu0 %1552
      %1554 = vrot.lane.b32.xlu0 %v1509, 114
      %v1555 = vpop.permute.xlu0 %1554
      %1556 = vrot.lane.b32.xlu0 %v1511, 114
      %v1557 = vpop.permute.xlu0 %1556
      %1558 = vrot.lane.b32.xlu0 %v1506, 114
      %v1559 = vpop.permute.xlu0 %1558
      %1560 = vrot.lane.b32.xlu0 %v1508, 114
      %v1561 = vpop.permute.xlu0 %1560
      %1562 = vrot.lane.b32.xlu0 %v1510, 114
      %v1563 = vpop.permute.xlu0 %1562
      %1564 = vrot.lane.b32.xlu0 %v1512, 114
      %v1565 = vpop.permute.xlu0 %1564
      %vm1566 = vcmp.lt.s32.totalorder %v991, 114
      %v1567 = vsel %vm1566, %v1551, %v1559
      %v1568 = vsel %vm1566, %v1553, %v1561
      %v1569 = vsel %vm1566, %v1555, %v1563
      %v1570 = vsel %vm1566, %v1557, %v1565
      %v1571 = vsel %vm1566, %v1559, %v1551
      %v1572 = vsel %vm1566, %v1561, %v1553
      %v1573 = vsel %vm1566, %v1563, %v1555
      %v1574 = vsel %vm1566, %v1565, %v1557
      %vm1575 = vcmp.lt.s32.totalorder %v712, 2
      %vm1576 = vcmp.lt.s32.totalorder %v716, 2
      %v1577 = vsel %vm1575, %v1567, %v1546
      %v1578 = vsel %vm1576, %v1571, %v1542
      %v1579 = vsel %vm1575, %v1568, %v1547
      %v1580 = vsel %vm1576, %v1572, %v1543
      %v1581 = vsel %vm1575, %v1569, %v1548
      %v1582 = vsel %vm1576, %v1573, %v1544
      %v1583 = vsel %vm1575, %v1570, %v1549
      %v1584 = vsel %vm1576, %v1574, %v1545
      %1585 = vrot.lane.b32.xlu0 %v1505, 126
      %v1586 = vpop.permute.xlu0 %1585
      %1587 = vrot.lane.b32.xlu0 %v1507, 126
      %v1588 = vpop.permute.xlu0 %1587
      %1589 = vrot.lane.b32.xlu0 %v1509, 126
      %v1590 = vpop.permute.xlu0 %1589
      %1591 = vrot.lane.b32.xlu0 %v1511, 126
      %v1592 = vpop.permute.xlu0 %1591
      %1593 = vrot.lane.b32.xlu0 %v1506, 126
      %v1594 = vpop.permute.xlu0 %1593
      %1595 = vrot.lane.b32.xlu0 %v1508, 126
      %v1596 = vpop.permute.xlu0 %1595
      %1597 = vrot.lane.b32.xlu0 %v1510, 126
      %v1598 = vpop.permute.xlu0 %1597
      %1599 = vrot.lane.b32.xlu0 %v1512, 126
      %v1600 = vpop.permute.xlu0 %1599
      %vm1601 = vcmp.lt.s32.totalorder %v991, 126
      %v1602 = vsel %vm1601, %v1586, %v1594
      %v1603 = vsel %vm1601, %v1588, %v1596
      %v1604 = vsel %vm1601, %v1590, %v1598
      %v1605 = vsel %vm1601, %v1592, %v1600
      %v1606 = vsel %vm1601, %v1594, %v1586
      %v1607 = vsel %vm1601, %v1596, %v1588
      %v1608 = vsel %vm1601, %v1598, %v1590
      %v1609 = vsel %vm1601, %v1600, %v1592
      %1610 = vrot.lane.b32.xlu0 %v1505, 14
      %v1611 = vpop.permute.xlu0 %1610
      %1612 = vrot.lane.b32.xlu0 %v1507, 14
      %v1613 = vpop.permute.xlu0 %1612
      %1614 = vrot.lane.b32.xlu0 %v1509, 14
      %v1615 = vpop.permute.xlu0 %1614
      %1616 = vrot.lane.b32.xlu0 %v1511, 14
      %v1617 = vpop.permute.xlu0 %1616
      %1618 = vrot.lane.b32.xlu0 %v1506, 14
      %v1619 = vpop.permute.xlu0 %1618
      %1620 = vrot.lane.b32.xlu0 %v1508, 14
      %v1621 = vpop.permute.xlu0 %1620
      %1622 = vrot.lane.b32.xlu0 %v1510, 14
      %v1623 = vpop.permute.xlu0 %1622
      %1624 = vrot.lane.b32.xlu0 %v1512, 14
      %v1625 = vpop.permute.xlu0 %1624
      %vm1626 = vcmp.lt.s32.totalorder %v991, 14
      %v1627 = vsel %vm1626, %v1611, %v1619
      %v1628 = vsel %vm1626, %v1613, %v1621
      %v1629 = vsel %vm1626, %v1615, %v1623
      %v1630 = vsel %vm1626, %v1617, %v1625
      %v1631 = vsel %vm1626, %v1619, %v1611
      %v1632 = vsel %vm1626, %v1621, %v1613
      %v1633 = vsel %vm1626, %v1623, %v1615
      %v1634 = vsel %vm1626, %v1625, %v1617
      %vm1635 = vcmp.ge.s32.totalorder %v712, 14
      %vm1636 = vcmp.ge.s32.totalorder %v716, 14
      %v1637 = vsel %vm1635, %v1631, %v1602
      %v1638 = vsel %vm1636, %v1627, %v1606
      %v1639 = vsel %vm1635, %v1632, %v1603
      %v1640 = vsel %vm1636, %v1628, %v1607
      %v1641 = vsel %vm1635, %v1633, %v1604
      %v1642 = vsel %vm1636, %v1629, %v1608
      %v1643 = vsel %vm1635, %v1634, %v1605
      %v1644 = vsel %vm1636, %v1630, %v1609
      %1645 = vrot.lane.b32.xlu0 %v1577, 32
      %v1646 = vpop.permute.xlu0 %1645
      %1647 = vrot.lane.b32.xlu0 %v1579, 32
      %v1648 = vpop.permute.xlu0 %1647
      %1649 = vrot.lane.b32.xlu0 %v1581, 32
      %v1650 = vpop.permute.xlu0 %1649
      %1651 = vrot.lane.b32.xlu0 %v1583, 32
      %v1652 = vpop.permute.xlu0 %1651
      %1653 = vrot.lane.b32.xlu0 %v1505, 32
      %v1654 = vpop.permute.xlu0 %1653
      %1655 = vrot.lane.b32.xlu0 %v1507, 32
      %v1656 = vpop.permute.xlu0 %1655
      %1657 = vrot.lane.b32.xlu0 %v1509, 32
      %v1658 = vpop.permute.xlu0 %1657
      %1659 = vrot.lane.b32.xlu0 %v1511, 32
      %v1660 = vpop.permute.xlu0 %1659
      %1661 = vrot.lane.b32.xlu0 %v1637, 32
      %v1662 = vpop.permute.xlu0 %1661
      %1663 = vrot.lane.b32.xlu0 %v1639, 32
      %v1664 = vpop.permute.xlu0 %1663
      %1665 = vrot.lane.b32.xlu0 %v1641, 32
      %v1666 = vpop.permute.xlu0 %1665
      %1667 = vrot.lane.b32.xlu0 %v1643, 32
      %v1668 = vpop.permute.xlu0 %1667
      %1669 = vrot.lane.b32.xlu0 %v1578, 32
      %v1670 = vpop.permute.xlu0 %1669
      %1671 = vrot.lane.b32.xlu0 %v1580, 32
      %v1672 = vpop.permute.xlu0 %1671
      %1673 = vrot.lane.b32.xlu0 %v1582, 32
      %v1674 = vpop.permute.xlu0 %1673
      %1675 = vrot.lane.b32.xlu0 %v1584, 32
      %v1676 = vpop.permute.xlu0 %1675
      %1677 = vrot.lane.b32.xlu0 %v1506, 32
      %v1678 = vpop.permute.xlu0 %1677
      %1679 = vrot.lane.b32.xlu0 %v1508, 32
      %v1680 = vpop.permute.xlu0 %1679
      %1681 = vrot.lane.b32.xlu0 %v1510, 32
      %v1682 = vpop.permute.xlu0 %1681
      %1683 = vrot.lane.b32.xlu0 %v1512, 32
      %v1684 = vpop.permute.xlu0 %1683
      %1685 = vrot.lane.b32.xlu0 %v1638, 32
      %v1686 = vpop.permute.xlu0 %1685
      %1687 = vrot.lane.b32.xlu0 %v1640, 32
      %v1688 = vpop.permute.xlu0 %1687
      %1689 = vrot.lane.b32.xlu0 %v1642, 32
      %v1690 = vpop.permute.xlu0 %1689
      %1691 = vrot.lane.b32.xlu0 %v1644, 32
      %v1692 = vpop.permute.xlu0 %1691
      %vm1693 = vcmp.lt.s32.totalorder %v991, 32
      %v1694 = vsel %vm1693, %v1646, %v1670
      %v1695 = vsel %vm1693, %v1648, %v1672
      %v1696 = vsel %vm1693, %v1650, %v1674
      %v1697 = vsel %vm1693, %v1652, %v1676
      %v1698 = vsel %vm1693, %v1654, %v1678
      %v1699 = vsel %vm1693, %v1656, %v1680
      %v1700 = vsel %vm1693, %v1658, %v1682
      %v1701 = vsel %vm1693, %v1660, %v1684
      %v1702 = vsel %vm1693, %v1662, %v1686
      %v1703 = vsel %vm1693, %v1664, %v1688
      %v1704 = vsel %vm1693, %v1666, %v1690
      %v1705 = vsel %vm1693, %v1668, %v1692
      %v1706 = vsel %vm1693, %v1670, %v1646
      %v1707 = vsel %vm1693, %v1672, %v1648
      %v1708 = vsel %vm1693, %v1674, %v1650
      %v1709 = vsel %vm1693, %v1676, %v1652
      %v1710 = vsel %vm1693, %v1678, %v1654
      %v1711 = vsel %vm1693, %v1680, %v1656
      %v1712 = vsel %vm1693, %v1682, %v1658
      %v1713 = vsel %vm1693, %v1684, %v1660
      %v1714 = vsel %vm1693, %v1686, %v1662
      %v1715 = vsel %vm1693, %v1688, %v1664
      %v1716 = vsel %vm1693, %v1690, %v1666
      %v1717 = vsel %vm1693, %v1692, %v1668
      %1718 = vrot.lane.b32.xlu0 %v1577, 96
      %v1719 = vpop.permute.xlu0 %1718
      %1720 = vrot.lane.b32.xlu0 %v1579, 96
      %v1721 = vpop.permute.xlu0 %1720
      %1722 = vrot.lane.b32.xlu0 %v1581, 96
      %v1723 = vpop.permute.xlu0 %1722
      %1724 = vrot.lane.b32.xlu0 %v1583, 96
      %v1725 = vpop.permute.xlu0 %1724
      %1726 = vrot.lane.b32.xlu0 %v1505, 96
      %v1727 = vpop.permute.xlu0 %1726
      %1728 = vrot.lane.b32.xlu0 %v1507, 96
      %v1729 = vpop.permute.xlu0 %1728
      %1730 = vrot.lane.b32.xlu0 %v1509, 96
      %v1731 = vpop.permute.xlu0 %1730
      %1732 = vrot.lane.b32.xlu0 %v1511, 96
      %v1733 = vpop.permute.xlu0 %1732
      %1734 = vrot.lane.b32.xlu0 %v1637, 96
      %v1735 = vpop.permute.xlu0 %1734
      %1736 = vrot.lane.b32.xlu0 %v1639, 96
      %v1737 = vpop.permute.xlu0 %1736
      %1738 = vrot.lane.b32.xlu0 %v1641, 96
      %v1739 = vpop.permute.xlu0 %1738
      %1740 = vrot.lane.b32.xlu0 %v1643, 96
      %v1741 = vpop.permute.xlu0 %1740
      %1742 = vrot.lane.b32.xlu0 %v1578, 96
      %v1743 = vpop.permute.xlu0 %1742
      %1744 = vrot.lane.b32.xlu0 %v1580, 96
      %v1745 = vpop.permute.xlu0 %1744
      %1746 = vrot.lane.b32.xlu0 %v1582, 96
      %v1747 = vpop.permute.xlu0 %1746
      %1748 = vrot.lane.b32.xlu0 %v1584, 96
      %v1749 = vpop.permute.xlu0 %1748
      %1750 = vrot.lane.b32.xlu0 %v1506, 96
      %v1751 = vpop.permute.xlu0 %1750
      %1752 = vrot.lane.b32.xlu0 %v1508, 96
      %v1753 = vpop.permute.xlu0 %1752
      %1754 = vrot.lane.b32.xlu0 %v1510, 96
      %v1755 = vpop.permute.xlu0 %1754
      %1756 = vrot.lane.b32.xlu0 %v1512, 96
      %v1757 = vpop.permute.xlu0 %1756
      %1758 = vrot.lane.b32.xlu0 %v1638, 96
      %v1759 = vpop.permute.xlu0 %1758
      %1760 = vrot.lane.b32.xlu0 %v1640, 96
      %v1761 = vpop.permute.xlu0 %1760
      %1762 = vrot.lane.b32.xlu0 %v1642, 96
      %v1763 = vpop.permute.xlu0 %1762
      %1764 = vrot.lane.b32.xlu0 %v1644, 96
      %v1765 = vpop.permute.xlu0 %1764
      %vm1766 = vcmp.lt.s32.totalorder %v991, 96
      %v1767 = vsel %vm1766, %v1719, %v1743
      %v1768 = vsel %vm1766, %v1721, %v1745
      %v1769 = vsel %vm1766, %v1723, %v1747
      %v1770 = vsel %vm1766, %v1725, %v1749
      %v1771 = vsel %vm1766, %v1727, %v1751
      %v1772 = vsel %vm1766, %v1729, %v1753
      %v1773 = vsel %vm1766, %v1731, %v1755
      %v1774 = vsel %vm1766, %v1733, %v1757
      %v1775 = vsel %vm1766, %v1735, %v1759
      %v1776 = vsel %vm1766, %v1737, %v1761
      %v1777 = vsel %vm1766, %v1739, %v1763
      %v1778 = vsel %vm1766, %v1741, %v1765
      %v1779 = vsel %vm1766, %v1743, %v1719
      %v1780 = vsel %vm1766, %v1745, %v1721
      %v1781 = vsel %vm1766, %v1747, %v1723
      %v1782 = vsel %vm1766, %v1749, %v1725
      %v1783 = vsel %vm1766, %v1751, %v1727
      %v1784 = vsel %vm1766, %v1753, %v1729
      %v1785 = vsel %vm1766, %v1755, %v1731
      %v1786 = vsel %vm1766, %v1757, %v1733
      %v1787 = vsel %vm1766, %v1759, %v1735
      %v1788 = vsel %vm1766, %v1761, %v1737
      %v1789 = vsel %vm1766, %v1763, %v1739
      %v1790 = vsel %vm1766, %v1765, %v1741
      %v1791 = vpack.c.bf16 %v1707, %v1706
      %v1792 = vpack.c.bf16 %v1695, %v1694
      %v1793 = vpack.c.bf16 %v1709, %v1708
      %v1794 = vpack.c.bf16 %v1697, %v1696
      %v1795 = vpack.c.bf16 %v1711, %v1710
      %v1796 = vpack.c.bf16 %v1699, %v1698
      %v1797 = vpack.c.bf16 %v1713, %v1712
      %v1798 = vpack.c.bf16 %v1701, %v1700
      %v1799 = vpack.c.bf16 %v1715, %v1714
      %v1800 = vpack.c.bf16 %v1703, %v1702
      %v1801 = vpack.c.bf16 %v1717, %v1716
      %v1802 = vpack.c.bf16 %v1705, %v1704
      %v1803 = vpack.c.bf16 %v1579, %v1577
      %v1804 = vpack.c.bf16 %v1580, %v1578
      %v1805 = vpack.c.bf16 %v1583, %v1581
      %v1806 = vpack.c.bf16 %v1584, %v1582
      %v1807 = vpack.c.bf16 %v1507, %v1505
      %v1808 = vpack.c.bf16 %v1508, %v1506
      %v1809 = vpack.c.bf16 %v1511, %v1509
      %v1810 = vpack.c.bf16 %v1512, %v1510
      %v1811 = vpack.c.bf16 %v1639, %v1637
      %v1812 = vpack.c.bf16 %v1640, %v1638
      %v1813 = vpack.c.bf16 %v1643, %v1641
      %v1814 = vpack.c.bf16 %v1644, %v1642
      %v1815 = vpack.c.bf16 %v1768, %v1767
      %v1816 = vpack.c.bf16 %v1780, %v1779
      %v1817 = vpack.c.bf16 %v1770, %v1769
      %v1818 = vpack.c.bf16 %v1782, %v1781
      %v1819 = vpack.c.bf16 %v1772, %v1771
      %v1820 = vpack.c.bf16 %v1784, %v1783
      %v1821 = vpack.c.bf16 %v1774, %v1773
      %v1822 = vpack.c.bf16 %v1786, %v1785
      %v1823 = vpack.c.bf16 %v1776, %v1775
      %v1824 = vpack.c.bf16 %v1788, %v1787
      %v1825 = vpack.c.bf16 %v1778, %v1777
      %v1826 = vpack.c.bf16 %v1790, %v1789
      %1828 = vset.pattern.permute.xlu0 0
      %1829 = vperm.xlu0 %1828, %v1521
      %v1830 = vpop.permute.xlu0 %1829
      %1833 = vset.pattern.permute.xlu0 0
      %1834 = vperm.xlu0 %1833, %v1522
      %v1835 = vpop.permute.xlu0 %1834
      %1838 = vset.pattern.permute.xlu0 0
      %1839 = vperm.xlu0 %1838, %v1523
      %v1840 = vpop.permute.xlu0 %1839
      %1843 = vset.pattern.permute.xlu0 0
      %1844 = vperm.xlu0 %1843, %v1524
      %v1845 = vpop.permute.xlu0 %1844
      %v1855 = vunpack.c.l.b16 %v1513
      %v1856 = vunpack.c.h.b16 %v1513
      %v1857 = vunpack.c.l.b16 %v1514
      %v1858 = vunpack.c.l.b16 %v1515
      %v1859 = vunpack.c.h.b16 %v1515
      %v1860 = vunpack.c.l.b16 %v1516
      %v1861 = vunpack.c.l.b16 %v1517
      %v1862 = vunpack.c.h.b16 %v1517
      %v1863 = vunpack.c.l.b16 %v1518
      %v1864 = vunpack.c.l.b16 %v1519
      %v1865 = vunpack.c.h.b16 %v1519
      %v1866 = vunpack.c.l.b16 %v1520
      %v1867 = vpack.c.b16 %v1858, %v1855
      %v1868 = vpack.c.b16 %v1859, %v1856
      %v1869 = vpack.c.b16 %v1860, %v1857
      %v1870 = vpack.c.b16 %v1864, %v1861
      %v1871 = vpack.c.b16 %v1865, %v1862
      %v1872 = vpack.c.b16 %v1866, %v1863
      %v1878 = vsel %vm1328, %v1869, 0
      %v1881 = vsel %vm1328, %v1872, 0
      %1883 = vmatprep.subr.bf16.mxu0 %v1792
      %1884 = vmatpush1.bf16.msra.mxu0 %v1791
      %1885 = vmatprep.subr.bf16.mxu0 %v1794
      %1886 = vmatpush1.bf16.msra.mxu0 %v1793
      %1887 = vmatprep.subr.bf16.mxu0 %v1796
      %1888 = vmatpush1.bf16.msra.mxu0 %v1795
      %1889 = vmatprep.subr.bf16.mxu0 %v1798
      %1890 = vmatpush1.bf16.msra.mxu0 %v1797
      %1891 = vmatprep.subr.bf16.mxu0 %v1800
      %1892 = vmatpush1.bf16.msra.mxu0 %v1799
      %1893 = vmatprep.subr.bf16.mxu0 %v1802
      %1894 = vmatpush1.bf16.msra.mxu0 %v1801
      %1895 = vmatprep.subr.bf16.mxu0 %v1804
      %1896 = vmatpush1.bf16.msra.mxu0 %v1803
      %1897 = vmatprep.subr.bf16.mxu0 %v1806
      %1898 = vmatpush1.bf16.msra.mxu0 %v1805
      %1899 = vmatprep.subr.bf16.mxu0 %v1808
      %1900 = vmatpush1.bf16.msra.mxu0 %v1807
      %1901 = vmatprep.subr.bf16.mxu0 %v1810
      %1902 = vmatpush1.bf16.msra.mxu0 %v1809
      %1903 = vmatprep.subr.bf16.mxu0 %v1812
      %1904 = vmatpush1.bf16.msra.mxu0 %v1811
      %1905 = vmatprep.subr.bf16.mxu0 %v1814
      %1906 = vmatpush1.bf16.msra.mxu0 %v1813
      %1907 = vmatprep.subr.bf16.mxu0 %v1816
      %1908 = vmatpush1.bf16.msra.mxu0 %v1815
      %1909 = vmatprep.subr.bf16.mxu0 %v1818
      %1910 = vmatpush1.bf16.msra.mxu0 %v1817
      %1911 = vmatprep.subr.bf16.mxu0 %v1820
      %1912 = vmatpush1.bf16.msra.mxu0 %v1819
      %1913 = vmatprep.subr.bf16.mxu0 %v1822
      %1914 = vmatpush1.bf16.msra.mxu0 %v1821
      %1915 = vmatprep.mubr.bf16.mxu0 %v1868
      %1916 = vmatmul.mubr.bf16.gmra.mrb[0].mxu0 %v1867
      %v1917 = vpop.f32.mrb[0].mxu0
      %v1918 = vadd.f32 %v1830, %v1917
      %v1919 = vpop.f32.mrb[0].mxu0
      %v1920 = vadd.f32 %v1830, %v1919
      %v1921 = vpop.f32.mrb[0].mxu0
      %v1922 = vadd.f32 %v1835, %v1921
      %v1923 = vpop.f32.mrb[0].mxu0
      %v1924 = vadd.f32 %v1835, %v1923
      %1925 = vmatprep.mubr.bf16.mxu0 %v1871
      %1926 = vmatmul.mubr.bf16.gmra.mrb[0].mxu0 %v1870
      %v1927 = vpop.f32.mrb[0].mxu0
      %v1928 = vadd.f32 %v1840, %v1927
      %v1929 = vpop.f32.mrb[0].mxu0
      %v1930 = vadd.f32 %v1840, %v1929
      %v1931 = vpop.f32.mrb[0].mxu0
      %v1932 = vadd.f32 %v1845, %v1931
      %v1933 = vpop.f32.mrb[0].mxu0
      %v1934 = vadd.f32 %v1845, %v1933
      %1935 = vdwg.mxu0
      %1936 = vmatprep.subr.bf16.mxu0 %v1824
      %1937 = vmatpush1.bf16.msra.mxu0 %v1823
      %1938 = vmatprep.subr.bf16.mxu0 %v1826
      %1939 = vmatpush1.bf16.msra.mxu0 %v1825
      %1940 = vmatprep.subr.bf16.mxu0 0
      %1941 = vmatpush1.bf16.msra.mxu0 0
      %1942 = vmatprep.subr.bf16.mxu0 0
      %1943 = vmatpush1.bf16.msra.mxu0 0
      %1944 = vmatprep.subr.bf16.mxu0 0
      %1945 = vmatpush1.bf16.msra.mxu0 0
      %1946 = vmatprep.subr.bf16.mxu0 0
      %1947 = vmatpush1.bf16.msra.mxu0 0
      %1948 = vmatprep.subr.bf16.mxu0 0
      %1949 = vmatpush1.bf16.msra.mxu0 0
      %1950 = vmatprep.subr.bf16.mxu0 0
      %1951 = vmatpush1.bf16.msra.mxu0 0
      %1952 = vmatprep.subr.bf16.mxu0 0
      %1953 = vmatpush1.bf16.msra.mxu0 0
      %1954 = vmatprep.subr.bf16.mxu0 0
      %1955 = vmatpush1.bf16.msra.mxu0 0
      %1956 = vmatprep.subr.bf16.mxu0 0
      %1957 = vmatpush1.bf16.msra.mxu0 0
      %1958 = vmatprep.subr.bf16.mxu0 0
      %1959 = vmatpush1.bf16.msra.mxu0 0
      %1960 = vmatprep.subr.bf16.mxu0 0
      %1961 = vmatpush1.bf16.msra.mxu0 0
      %1962 = vmatprep.subr.bf16.mxu0 0
      %1963 = vmatpush1.bf16.msra.mxu0 0
      %1964 = vmatprep.subr.bf16.mxu0 0
      %1965 = vmatpush1.bf16.msra.mxu0 0
      %1966 = vmatprep.subr.bf16.mxu0 0
      %1967 = vmatpush1.bf16.msra.mxu0 0
      %1968 = vmatprep.mubr.bf16.mxu0 0
      %1969 = vmatmul.mubr.bf16.gmra.mrb[0].mxu0 %v1878
      %v1970 = vpop.f32.mrb[0].mxu0
      %v1971 = vadd.f32 %v1918, %v1970
      %v1972 = vpop.f32.mrb[0].mxu0
      %v1973 = vadd.f32 %v1920, %v1972
      %v1974 = vpop.f32.mrb[0].mxu0
      %v1975 = vadd.f32 %v1922, %v1974
      %v1976 = vpop.f32.mrb[0].mxu0
      %v1977 = vadd.f32 %v1924, %v1976
      %1978 = vmatprep.mubr.bf16.mxu0 0
      %1979 = vmatmul.mubr.bf16.gmra.mrb[0].mxu0 %v1881
      %v1980 = vpop.f32.mrb[0].mxu0
      %v1981 = vadd.f32 %v1928, %v1980
      %v1982 = vpop.f32.mrb[0].mxu0
      %v1983 = vadd.f32 %v1930, %v1982
      %v1984 = vpop.f32.mrb[0].mxu0
      %v1985 = vadd.f32 %v1932, %v1984
      %v1986 = vpop.f32.mrb[0].mxu0
      %v1987 = vadd.f32 %v1934, %v1986
      %1988 = vdwg.mxu0
      %v1989 = vmul.f32 %v1971, 0.5
      %v1990 = vmul.f32 %v1973, 0.5
      %v1991 = vmul.f32 %v1975, 0.5
      %v1992 = vmul.f32 %v1977, 0.5
      %v1993 = vmul.f32 %v1981, 0.5
      %v1994 = vmul.f32 %v1983, 0.5
      %v1995 = vmul.f32 %v1985, 0.5
      %v1996 = vmul.f32 %v1987, 0.5
      %v1997 = vmul.f32 %v1971, 0.044715
      %v1998 = vmul.f32 %v1973, 0.044715
      %v1999 = vmul.f32 %v1975, 0.044715
      %v2000 = vmul.f32 %v1977, 0.044715
      %v2001 = vmul.f32 %v1981, 0.044715
      %v2002 = vmul.f32 %v1983, 0.044715
      %v2003 = vmul.f32 %v1985, 0.044715
      %v2004 = vmul.f32 %v1987, 0.044715
      %v2005 = vmul.f32 %v1997, %v1971
      %v2006 = vmul.f32 %v1998, %v1973
      %v2007 = vmul.f32 %v1999, %v1975
      %v2008 = vmul.f32 %v2000, %v1977
      %v2009 = vmul.f32 %v2001, %v1981
      %v2010 = vmul.f32 %v2002, %v1983
      %v2011 = vmul.f32 %v2003, %v1985
      %v2012 = vmul.f32 %v2004, %v1987
      %v2013 = vmul.f32 %v2005, %v1971
      %v2014 = vmul.f32 %v2006, %v1973
      %v2015 = vmul.f32 %v2007, %v1975
      %v2016 = vmul.f32 %v2008, %v1977
      %v2017 = vmul.f32 %v2009, %v1981
      %v2018 = vmul.f32 %v2010, %v1983
      %v2019 = vmul.f32 %v2011, %v1985
      %v2020 = vmul.f32 %v2012, %v1987
      %v2021 = vadd.f32 %v1971, %v2013
      %v2022 = vadd.f32 %v1973, %v2014
      %v2023 = vadd.f32 %v1975, %v2015
      %v2024 = vadd.f32 %v1977, %v2016
      %v2025 = vadd.f32 %v1981, %v2017
      %v2026 = vadd.f32 %v1983, %v2018
      %v2027 = vadd.f32 %v1985, %v2019
      %v2028 = vadd.f32 %v1987, %v2020
      %v2029 = vmul.f32 %v2021, 0.7978846
      %v2030 = vmul.f32 %v2022, 0.7978846
      %v2031 = vmul.f32 %v2023, 0.7978846
      %v2032 = vmul.f32 %v2024, 0.7978846
      %v2033 = vmul.f32 %v2025, 0.7978846
      %v2034 = vmul.f32 %v2026, 0.7978846
      %v2035 = vmul.f32 %v2027, 0.7978846
      %v2036 = vmul.f32 %v2028, 0.7978846
      %v2037 = vtanh.pop %v2029
      %v2038 = vtanh.pop %v2030
      %v2039 = vtanh.pop %v2031
      %v2040 = vtanh.pop %v2032
      %v2041 = vtanh.pop %v2033
      %v2042 = vtanh.pop %v2034
      %v2043 = vtanh.pop %v2035
      %v2044 = vtanh.pop %v2036
      %v2045 = vadd.f32 %v2037, 1.0
      %v2046 = vadd.f32 %v2038, 1.0
      %v2047 = vadd.f32 %v2039, 1.0
      %v2048 = vadd.f32 %v2040, 1.0
      %v2049 = vadd.f32 %v2041, 1.0
      %v2050 = vadd.f32 %v2042, 1.0
      %v2051 = vadd.f32 %v2043, 1.0
      %v2052 = vadd.f32 %v2044, 1.0
      %v2053 = vmul.f32 %v1989, %v2045
      %v2054 = vmul.f32 %v1990, %v2046
      %v2055 = vmul.f32 %v1991, %v2047
      %v2056 = vmul.f32 %v1992, %v2048
      %v2057 = vmul.f32 %v1993, %v2049
      %v2058 = vmul.f32 %v1994, %v2050
      %v2059 = vmul.f32 %v1995, %v2051
      %v2060 = vmul.f32 %v1996, %v2052
      %v2061 = vld [vmem:[%s11] sm:$0xff]
      %v2062 = vld [vmem:[%s11 + $0x8] sm:$0xf]
      %v2063 = vld [vmem:[%s11 + $0xc] sm:$0xff]
      %v2064 = vld [vmem:[%s11 + $0x14] sm:$0xf]
      %v2065 = vld [vmem:[%s11 + $0x18] sm:$0xff]
      %v2066 = vld [vmem:[%s11 + $0x20] sm:$0xf]
      %v2067 = vld [vmem:[%s11 + $0x24] sm:$0xff]
      %v2068 = vld [vmem:[%s11 + $0x2c] sm:$0xf]
      %v2069 = vld [vmem:[%s12] sm:$0xff]
      %v2070 = vld [vmem:[%s12 + $0x8] sm:$0xff]
      %v2071 = vld [vmem:[%s12 + $0x10] sm:$0xff]
      %v2072 = vld [vmem:[%s12 + $0x18] sm:$0xff]
      %2073 = vrot.lane.b32.xlu0 %v2053, 1
      %v2074 = vpop.permute.xlu0 %2073
      %2075 = vrot.lane.b32.xlu0 %v2055, 1
      %v2076 = vpop.permute.xlu0 %2075
      %2077 = vrot.lane.b32.xlu0 %v2057, 1
      %v2078 = vpop.permute.xlu0 %2077
      %2079 = vrot.lane.b32.xlu0 %v2059, 1
      %v2080 = vpop.permute.xlu0 %2079
      %2081 = vrot.lane.b32.xlu0 %v2054, 1
      %v2082 = vpop.permute.xlu0 %2081
      %2083 = vrot.lane.b32.xlu0 %v2056, 1
      %v2084 = vpop.permute.xlu0 %2083
      %2085 = vrot.lane.b32.xlu0 %v2058, 1
      %v2086 = vpop.permute.xlu0 %2085
      %2087 = vrot.lane.b32.xlu0 %v2060, 1
      %v2088 = vpop.permute.xlu0 %2087
      %v2089 = vsel %vm992, %v2074, %v2082
      %v2090 = vsel %vm992, %v2076, %v2084
      %v2091 = vsel %vm992, %v2078, %v2086
      %v2092 = vsel %vm992, %v2080, %v2088
      %v2093 = vsel %vm992, %v2082, %v2074
      %v2094 = vsel %vm992, %v2084, %v2076
      %v2095 = vsel %vm992, %v2086, %v2078
      %v2096 = vsel %vm992, %v2088, %v2080
      %2097 = vrot.lane.b32.xlu0 %v2053, 113
      %v2098 = vpop.permute.xlu0 %2097
      %2099 = vrot.lane.b32.xlu0 %v2055, 113
      %v2100 = vpop.permute.xlu0 %2099
      %2101 = vrot.lane.b32.xlu0 %v2057, 113
      %v2102 = vpop.permute.xlu0 %2101
      %2103 = vrot.lane.b32.xlu0 %v2059, 113
      %v2104 = vpop.permute.xlu0 %2103
      %2105 = vrot.lane.b32.xlu0 %v2054, 113
      %v2106 = vpop.permute.xlu0 %2105
      %2107 = vrot.lane.b32.xlu0 %v2056, 113
      %v2108 = vpop.permute.xlu0 %2107
      %2109 = vrot.lane.b32.xlu0 %v2058, 113
      %v2110 = vpop.permute.xlu0 %2109
      %2111 = vrot.lane.b32.xlu0 %v2060, 113
      %v2112 = vpop.permute.xlu0 %2111
      %v2113 = vsel %vm1017, %v2098, %v2106
      %v2114 = vsel %vm1017, %v2100, %v2108
      %v2115 = vsel %vm1017, %v2102, %v2110
      %v2116 = vsel %vm1017, %v2104, %v2112
      %v2117 = vsel %vm1017, %v2106, %v2098
      %v2118 = vsel %vm1017, %v2108, %v2100
      %v2119 = vsel %vm1017, %v2110, %v2102
      %v2120 = vsel %vm1017, %v2112, %v2104
      %v2121 = vsel %vm1026, %v2113, %v2093
      %v2122 = vsel %vm1027, %v2117, %v2089
      %v2123 = vsel %vm1026, %v2114, %v2094
      %v2124 = vsel %vm1027, %v2118, %v2090
      %v2125 = vsel %vm1026, %v2115, %v2095
      %v2126 = vsel %vm1027, %v2119, %v2091
      %v2127 = vsel %vm1026, %v2116, %v2096
      %v2128 = vsel %vm1027, %v2120, %v2092
      %2129 = vrot.lane.b32.xlu0 %v2053, 127
      %v2130 = vpop.permute.xlu0 %2129
      %2131 = vrot.lane.b32.xlu0 %v2055, 127
      %v2132 = vpop.permute.xlu0 %2131
      %2133 = vrot.lane.b32.xlu0 %v2057, 127
      %v2134 = vpop.permute.xlu0 %2133
      %2135 = vrot.lane.b32.xlu0 %v2059, 127
      %v2136 = vpop.permute.xlu0 %2135
      %2137 = vrot.lane.b32.xlu0 %v2054, 127
      %v2138 = vpop.permute.xlu0 %2137
      %2139 = vrot.lane.b32.xlu0 %v2056, 127
      %v2140 = vpop.permute.xlu0 %2139
      %2141 = vrot.lane.b32.xlu0 %v2058, 127
      %v2142 = vpop.permute.xlu0 %2141
      %2143 = vrot.lane.b32.xlu0 %v2060, 127
      %v2144 = vpop.permute.xlu0 %2143
      %v2145 = vsel %vm1052, %v2130, %v2138
      %v2146 = vsel %vm1052, %v2132, %v2140
      %v2147 = vsel %vm1052, %v2134, %v2142
      %v2148 = vsel %vm1052, %v2136, %v2144
      %v2149 = vsel %vm1052, %v2138, %v2130
      %v2150 = vsel %vm1052, %v2140, %v2132
      %v2151 = vsel %vm1052, %v2142, %v2134
      %v2152 = vsel %vm1052, %v2144, %v2136
      %2153 = vrot.lane.b32.xlu0 %v2053, 15
      %v2154 = vpop.permute.xlu0 %2153
      %2155 = vrot.lane.b32.xlu0 %v2055, 15
      %v2156 = vpop.permute.xlu0 %2155
      %2157 = vrot.lane.b32.xlu0 %v2057, 15
      %v2158 = vpop.permute.xlu0 %2157
      %2159 = vrot.lane.b32.xlu0 %v2059, 15
      %v2160 = vpop.permute.xlu0 %2159
      %2161 = vrot.lane.b32.xlu0 %v2054, 15
      %v2162 = vpop.permute.xlu0 %2161
      %2163 = vrot.lane.b32.xlu0 %v2056, 15
      %v2164 = vpop.permute.xlu0 %2163
      %2165 = vrot.lane.b32.xlu0 %v2058, 15
      %v2166 = vpop.permute.xlu0 %2165
      %2167 = vrot.lane.b32.xlu0 %v2060, 15
      %v2168 = vpop.permute.xlu0 %2167
      %v2169 = vsel %vm1077, %v2154, %v2162
      %v2170 = vsel %vm1077, %v2156, %v2164
      %v2171 = vsel %vm1077, %v2158, %v2166
      %v2172 = vsel %vm1077, %v2160, %v2168
      %v2173 = vsel %vm1077, %v2162, %v2154
      %v2174 = vsel %vm1077, %v2164, %v2156
      %v2175 = vsel %vm1077, %v2166, %v2158
      %v2176 = vsel %vm1077, %v2168, %v2160
      %v2177 = vsel %vm1086, %v2173, %v2145
      %v2178 = vsel %vm1087, %v2169, %v2149
      %v2179 = vsel %vm1086, %v2174, %v2146
      %v2180 = vsel %vm1087, %v2170, %v2150
      %v2181 = vsel %vm1086, %v2175, %v2147
      %v2182 = vsel %vm1087, %v2171, %v2151
      %v2183 = vsel %vm1086, %v2176, %v2148
      %v2184 = vsel %vm1087, %v2172, %v2152
      %2185 = vrot.lane.b32.xlu0 %v2121, 16
      %v2186 = vpop.permute.xlu0 %2185
      %2187 = vrot.lane.b32.xlu0 %v2123, 16
      %v2188 = vpop.permute.xlu0 %2187
      %2189 = vrot.lane.b32.xlu0 %v2125, 16
      %v2190 = vpop.permute.xlu0 %2189
      %2191 = vrot.lane.b32.xlu0 %v2127, 16
      %v2192 = vpop.permute.xlu0 %2191
      %2193 = vrot.lane.b32.xlu0 %v2053, 16
      %v2194 = vpop.permute.xlu0 %2193
      %2195 = vrot.lane.b32.xlu0 %v2055, 16
      %v2196 = vpop.permute.xlu0 %2195
      %2197 = vrot.lane.b32.xlu0 %v2057, 16
      %v2198 = vpop.permute.xlu0 %2197
      %2199 = vrot.lane.b32.xlu0 %v2059, 16
      %v2200 = vpop.permute.xlu0 %2199
      %2201 = vrot.lane.b32.xlu0 %v2177, 16
      %v2202 = vpop.permute.xlu0 %2201
      %2203 = vrot.lane.b32.xlu0 %v2179, 16
      %v2204 = vpop.permute.xlu0 %2203
      %2205 = vrot.lane.b32.xlu0 %v2181, 16
      %v2206 = vpop.permute.xlu0 %2205
      %2207 = vrot.lane.b32.xlu0 %v2183, 16
      %v2208 = vpop.permute.xlu0 %2207
      %2209 = vrot.lane.b32.xlu0 %v2122, 16
      %v2210 = vpop.permute.xlu0 %2209
      %2211 = vrot.lane.b32.xlu0 %v2124, 16
      %v2212 = vpop.permute.xlu0 %2211
      %2213 = vrot.lane.b32.xlu0 %v2126, 16
      %v2214 = vpop.permute.xlu0 %2213
      %2215 = vrot.lane.b32.xlu0 %v2128, 16
      %v2216 = vpop.permute.xlu0 %2215
      %2217 = vrot.lane.b32.xlu0 %v2054, 16
      %v2218 = vpop.permute.xlu0 %2217
      %2219 = vrot.lane.b32.xlu0 %v2056, 16
      %v2220 = vpop.permute.xlu0 %2219
      %2221 = vrot.lane.b32.xlu0 %v2058, 16
      %v2222 = vpop.permute.xlu0 %2221
      %2223 = vrot.lane.b32.xlu0 %v2060, 16
      %v2224 = vpop.permute.xlu0 %2223
      %2225 = vrot.lane.b32.xlu0 %v2178, 16
      %v2226 = vpop.permute.xlu0 %2225
      %2227 = vrot.lane.b32.xlu0 %v2180, 16
      %v2228 = vpop.permute.xlu0 %2227
      %2229 = vrot.lane.b32.xlu0 %v2182, 16
      %v2230 = vpop.permute.xlu0 %2229
      %2231 = vrot.lane.b32.xlu0 %v2184, 16
      %v2232 = vpop.permute.xlu0 %2231
      %v2233 = vsel %vm1144, %v2186, %v2210
      %v2234 = vsel %vm1144, %v2188, %v2212
      %v2235 = vsel %vm1144, %v2190, %v2214
      %v2236 = vsel %vm1144, %v2192, %v2216
      %v2237 = vsel %vm1144, %v2194, %v2218
      %v2238 = vsel %vm1144, %v2196, %v2220
      %v2239 = vsel %vm1144, %v2198, %v2222
      %v2240 = vsel %vm1144, %v2200, %v2224
      %v2241 = vsel %vm1144, %v2202, %v2226
      %v2242 = vsel %vm1144, %v2204, %v2228
      %v2243 = vsel %vm1144, %v2206, %v2230
      %v2244 = vsel %vm1144, %v2208, %v2232
      %v2245 = vsel %vm1144, %v2210, %v2186
      %v2246 = vsel %vm1144, %v2212, %v2188
      %v2247 = vsel %vm1144, %v2214, %v2190
      %v2248 = vsel %vm1144, %v2216, %v2192
      %v2249 = vsel %vm1144, %v2218, %v2194
      %v2250 = vsel %vm1144, %v2220, %v2196
      %v2251 = vsel %vm1144, %v2222, %v2198
      %v2252 = vsel %vm1144, %v2224, %v2200
      %v2253 = vsel %vm1144, %v2226, %v2202
      %v2254 = vsel %vm1144, %v2228, %v2204
      %v2255 = vsel %vm1144, %v2230, %v2206
      %v2256 = vsel %vm1144, %v2232, %v2208
      %2257 = vrot.lane.b32.xlu0 %v2121, 112
      %v2258 = vpop.permute.xlu0 %2257
      %2259 = vrot.lane.b32.xlu0 %v2123, 112
      %v2260 = vpop.permute.xlu0 %2259
      %2261 = vrot.lane.b32.xlu0 %v2125, 112
      %v2262 = vpop.permute.xlu0 %2261
      %2263 = vrot.lane.b32.xlu0 %v2127, 112
      %v2264 = vpop.permute.xlu0 %2263
      %2265 = vrot.lane.b32.xlu0 %v2053, 112
      %v2266 = vpop.permute.xlu0 %2265
      %2267 = vrot.lane.b32.xlu0 %v2055, 112
      %v2268 = vpop.permute.xlu0 %2267
      %2269 = vrot.lane.b32.xlu0 %v2057, 112
      %v2270 = vpop.permute.xlu0 %2269
      %2271 = vrot.lane.b32.xlu0 %v2059, 112
      %v2272 = vpop.permute.xlu0 %2271
      %2273 = vrot.lane.b32.xlu0 %v2177, 112
      %v2274 = vpop.permute.xlu0 %2273
      %2275 = vrot.lane.b32.xlu0 %v2179, 112
      %v2276 = vpop.permute.xlu0 %2275
      %2277 = vrot.lane.b32.xlu0 %v2181, 112
      %v2278 = vpop.permute.xlu0 %2277
      %2279 = vrot.lane.b32.xlu0 %v2183, 112
      %v2280 = vpop.permute.xlu0 %2279
      %2281 = vrot.lane.b32.xlu0 %v2122, 112
      %v2282 = vpop.permute.xlu0 %2281
      %2283 = vrot.lane.b32.xlu0 %v2124, 112
      %v2284 = vpop.permute.xlu0 %2283
      %2285 = vrot.lane.b32.xlu0 %v2126, 112
      %v2286 = vpop.permute.xlu0 %2285
      %2287 = vrot.lane.b32.xlu0 %v2128, 112
      %v2288 = vpop.permute.xlu0 %2287
      %2289 = vrot.lane.b32.xlu0 %v2054, 112
      %v2290 = vpop.permute.xlu0 %2289
      %2291 = vrot.lane.b32.xlu0 %v2056, 112
      %v2292 = vpop.permute.xlu0 %2291
      %2293 = vrot.lane.b32.xlu0 %v2058, 112
      %v2294 = vpop.permute.xlu0 %2293
      %2295 = vrot.lane.b32.xlu0 %v2060, 112
      %v2296 = vpop.permute.xlu0 %2295
      %2297 = vrot.lane.b32.xlu0 %v2178, 112
      %v2298 = vpop.permute.xlu0 %2297
      %2299 = vrot.lane.b32.xlu0 %v2180, 112
      %v2300 = vpop.permute.xlu0 %2299
      %2301 = vrot.lane.b32.xlu0 %v2182, 112
      %v2302 = vpop.permute.xlu0 %2301
      %2303 = vrot.lane.b32.xlu0 %v2184, 112
      %v2304 = vpop.permute.xlu0 %2303
      %v2305 = vsel %vm1217, %v2258, %v2282
      %v2306 = vsel %vm1217, %v2260, %v2284
      %v2307 = vsel %vm1217, %v2262, %v2286
      %v2308 = vsel %vm1217, %v2264, %v2288
      %v2309 = vsel %vm1217, %v2266, %v2290
      %v2310 = vsel %vm1217, %v2268, %v2292
      %v2311 = vsel %vm1217, %v2270, %v2294
      %v2312 = vsel %vm1217, %v2272, %v2296
      %v2313 = vsel %vm1217, %v2274, %v2298
      %v2314 = vsel %vm1217, %v2276, %v2300
      %v2315 = vsel %vm1217, %v2278, %v2302
      %v2316 = vsel %vm1217, %v2280, %v2304
      %v2317 = vsel %vm1217, %v2282, %v2258
      %v2318 = vsel %vm1217, %v2284, %v2260
      %v2319 = vsel %vm1217, %v2286, %v2262
      %v2320 = vsel %vm1217, %v2288, %v2264
      %v2321 = vsel %vm1217, %v2290, %v2266
      %v2322 = vsel %vm1217, %v2292, %v2268
      %v2323 = vsel %vm1217, %v2294, %v2270
      %v2324 = vsel %vm1217, %v2296, %v2272
      %v2325 = vsel %vm1217, %v2298, %v2274
      %v2326 = vsel %vm1217, %v2300, %v2276
      %v2327 = vsel %vm1217, %v2302, %v2278
      %v2328 = vsel %vm1217, %v2304, %v2280
      %v2329 = vpack.c.bf16 %v2246, %v2245
      %v2330 = vpack.c.bf16 %v2234, %v2233
      %v2331 = vpack.c.bf16 %v2248, %v2247
      %v2332 = vpack.c.bf16 %v2236, %v2235
      %v2333 = vpack.c.bf16 %v2250, %v2249
      %v2334 = vpack.c.bf16 %v2238, %v2237
      %v2335 = vpack.c.bf16 %v2252, %v2251
      %v2336 = vpack.c.bf16 %v2240, %v2239
      %v2337 = vpack.c.bf16 %v2254, %v2253
      %v2338 = vpack.c.bf16 %v2242, %v2241
      %v2339 = vpack.c.bf16 %v2256, %v2255
      %v2340 = vpack.c.bf16 %v2244, %v2243
      %v2341 = vpack.c.bf16 %v2123, %v2121
      %v2342 = vpack.c.bf16 %v2124, %v2122
      %v2343 = vpack.c.bf16 %v2127, %v2125
      %v2344 = vpack.c.bf16 %v2128, %v2126
      %v2345 = vpack.c.bf16 %v2055, %v2053
      %v2346 = vpack.c.bf16 %v2056, %v2054
      %v2347 = vpack.c.bf16 %v2059, %v2057
      %v2348 = vpack.c.bf16 %v2060, %v2058
      %v2349 = vpack.c.bf16 %v2179, %v2177
      %v2350 = vpack.c.bf16 %v2180, %v2178
      %v2351 = vpack.c.bf16 %v2183, %v2181
      %v2352 = vpack.c.bf16 %v2184, %v2182
      %v2353 = vpack.c.bf16 %v2306, %v2305
      %v2354 = vpack.c.bf16 %v2318, %v2317
      %v2355 = vpack.c.bf16 %v2308, %v2307
      %v2356 = vpack.c.bf16 %v2320, %v2319
      %v2357 = vpack.c.bf16 %v2310, %v2309
      %v2358 = vpack.c.bf16 %v2322, %v2321
      %v2359 = vpack.c.bf16 %v2312, %v2311
      %v2360 = vpack.c.bf16 %v2324, %v2323
      %v2361 = vpack.c.bf16 %v2314, %v2313
      %v2362 = vpack.c.bf16 %v2326, %v2325
      %v2363 = vpack.c.bf16 %v2316, %v2315
      %v2364 = vpack.c.bf16 %v2328, %v2327
      %2366 = vset.pattern.permute.xlu0 0
      %2367 = vperm.xlu0 %2366, %v2069
      %v2368 = vpop.permute.xlu0 %2367
      %2371 = vset.pattern.permute.xlu0 0
      %2372 = vperm.xlu0 %2371, %v2070
      %v2373 = vpop.permute.xlu0 %2372
      %2376 = vset.pattern.permute.xlu0 0
      %2377 = vperm.xlu0 %2376, %v2071
      %v2378 = vpop.permute.xlu0 %2377
      %2381 = vset.pattern.permute.xlu0 0
      %2382 = vperm.xlu0 %2381, %v2072
      %v2383 = vpop.permute.xlu0 %2382
      %v2393 = vunpack.c.l.b16 %v2061
      %v2394 = vunpack.c.h.b16 %v2061
      %v2395 = vunpack.c.l.b16 %v2062
      %v2396 = vunpack.c.l.b16 %v2063
      %v2397 = vunpack.c.h.b16 %v2063
      %v2398 = vunpack.c.l.b16 %v2064
      %v2399 = vunpack.c.l.b16 %v2065
      %v2400 = vunpack.c.h.b16 %v2065
      %v2401 = vunpack.c.l.b16 %v2066
      %v2402 = vunpack.c.l.b16 %v2067
      %v2403 = vunpack.c.h.b16 %v2067
      %v2404 = vunpack.c.l.b16 %v2068
      %v2405 = vpack.c.b16 %v2396, %v2393
      %v2406 = vpack.c.b16 %v2397, %v2394
      %v2407 = vpack.c.b16 %v2398, %v2395
      %v2408 = vpack.c.b16 %v2402, %v2399
      %v2409 = vpack.c.b16 %v2403, %v2400
      %v2410 = vpack.c.b16 %v2404, %v2401
      %v2416 = vsel %vm1328, %v2407, 0
      %v2419 = vsel %vm1328, %v2410, 0
      %2421 = vmatprep.subr.bf16.mxu0 %v2330
      %2422 = vmatpush1.bf16.msra.mxu0 %v2329
      %2423 = vmatprep.subr.bf16.mxu0 %v2332
      %2424 = vmatpush1.bf16.msra.mxu0 %v2331
      %2425 = vmatprep.subr.bf16.mxu0 %v2334
      %2426 = vmatpush1.bf16.msra.mxu0 %v2333
      %2427 = vmatprep.subr.bf16.mxu0 %v2336
      %2428 = vmatpush1.bf16.msra.mxu0 %v2335
      %2429 = vmatprep.subr.bf16.mxu0 %v2338
      %2430 = vmatpush1.bf16.msra.mxu0 %v2337
      %2431 = vmatprep.subr.bf16.mxu0 %v2340
      %2432 = vmatpush1.bf16.msra.mxu0 %v2339
      %2433 = vmatprep.subr.bf16.mxu0 %v2342
      %2434 = vmatpush1.bf16.msra.mxu0 %v2341
      %2435 = vmatprep.subr.bf16.mxu0 %v2344
      %2436 = vmatpush1.bf16.msra.mxu0 %v2343
      %2437 = vmatprep.subr.bf16.mxu0 %v2346
      %2438 = vmatpush1.bf16.msra.mxu0 %v2345
      %2439 = vmatprep.subr.bf16.mxu0 %v2348
      %2440 = vmatpush1.bf16.msra.mxu0 %v2347
      %2441 = vmatprep.subr.bf16.mxu0 %v2350
      %2442 = vmatpush1.bf16.msra.mxu0 %v2349
      %2443 = vmatprep.subr.bf16.mxu0 %v2352
      %2444 = vmatpush1.bf16.msra.mxu0 %v2351
      %2445 = vmatprep.subr.bf16.mxu0 %v2354
      %2446 = vmatpush1.bf16.msra.mxu0 %v2353
      %2447 = vmatprep.subr.bf16.mxu0 %v2356
      %2448 = vmatpush1.bf16.msra.mxu0 %v2355
      %2449 = vmatprep.subr.bf16.mxu0 %v2358
      %2450 = vmatpush1.bf16.msra.mxu0 %v2357
      %2451 = vmatprep.subr.bf16.mxu0 %v2360
      %2452 = vmatpush1.bf16.msra.mxu0 %v2359
      %2453 = vmatprep.mubr.bf16.mxu0 %v2406
      %2454 = vmatmul.mubr.bf16.gmra.mrb[0].mxu0 %v2405
      %v2455 = vpop.f32.mrb[0].mxu0
      %v2456 = vadd.f32 %v2368, %v2455
      %v2457 = vpop.f32.mrb[0].mxu0
      %v2458 = vadd.f32 %v2368, %v2457
      %v2459 = vpop.f32.mrb[0].mxu0
      %v2460 = vadd.f32 %v2373, %v2459
      %v2461 = vpop.f32.mrb[0].mxu0
      %v2462 = vadd.f32 %v2373, %v2461
      %2463 = vmatprep.mubr.bf16.mxu0 %v2409
      %2464 = vmatmul.mubr.bf16.gmra.mrb[0].mxu0 %v2408
      %v2465 = vpop.f32.mrb[0].mxu0
      %v2466 = vadd.f32 %v2378, %v2465
      %v2467 = vpop.f32.mrb[0].mxu0
      %v2468 = vadd.f32 %v2378, %v2467
      %v2469 = vpop.f32.mrb[0].mxu0
      %v2470 = vadd.f32 %v2383, %v2469
      %v2471 = vpop.f32.mrb[0].mxu0
      %v2472 = vadd.f32 %v2383, %v2471
      %2473 = vdwg.mxu0
      %2474 = vmatprep.subr.bf16.mxu0 %v2362
      %2475 = vmatpush1.bf16.msra.mxu0 %v2361
      %2476 = vmatprep.subr.bf16.mxu0 %v2364
      %2477 = vmatpush1.bf16.msra.mxu0 %v2363
      %2478 = vmatprep.subr.bf16.mxu0 0
      %2479 = vmatpush1.bf16.msra.mxu0 0
      %2480 = vmatprep.subr.bf16.mxu0 0
      %2481 = vmatpush1.bf16.msra.mxu0 0
      %2482 = vmatprep.subr.bf16.mxu0 0
      %2483 = vmatpush1.bf16.msra.mxu0 0
      %2484 = vmatprep.subr.bf16.mxu0 0
      %2485 = vmatpush1.bf16.msra.mxu0 0
      %2486 = vmatprep.subr.bf16.mxu0 0
      %2487 = vmatpush1.bf16.msra.mxu0 0
      %2488 = vmatprep.subr.bf16.mxu0 0
      %2489 = vmatpush1.bf16.msra.mxu0 0
      %2490 = vmatprep.subr.bf16.mxu0 0
      %2491 = vmatpush1.bf16.msra.mxu0 0
      %2492 = vmatprep.subr.bf16.mxu0 0
      %2493 = vmatpush1.bf16.msra.mxu0 0
      %2494 = vmatprep.subr.bf16.mxu0 0
      %2495 = vmatpush1.bf16.msra.mxu0 0
      %2496 = vmatprep.subr.bf16.mxu0 0
      %2497 = vmatpush1.bf16.msra.mxu0 0
      %2498 = vmatprep.subr.bf16.mxu0 0
      %2499 = vmatpush1.bf16.msra.mxu0 0
      %2500 = vmatprep.subr.bf16.mxu0 0
      %2501 = vmatpush1.bf16.msra.mxu0 0
      %2502 = vmatprep.subr.bf16.mxu0 0
      %2503 = vmatpush1.bf16.msra.mxu0 0
      %2504 = vmatprep.subr.bf16.mxu0 0
      %2505 = vmatpush1.bf16.msra.mxu0 0
      %2506 = vmatprep.mubr.bf16.mxu0 0
      %2507 = vmatmul.mubr.bf16.gmra.mrb[0].mxu0 %v2416
      %v2508 = vpop.f32.mrb[0].mxu0
      %v2509 = vadd.f32 %v2456, %v2508
      %v2510 = vpop.f32.mrb[0].mxu0
      %v2511 = vadd.f32 %v2458, %v2510
      %v2512 = vpop.f32.mrb[0].mxu0
      %v2513 = vadd.f32 %v2460, %v2512
      %v2514 = vpop.f32.mrb[0].mxu0
      %v2515 = vadd.f32 %v2462, %v2514
      %2516 = vmatprep.mubr.bf16.mxu0 0
      %2517 = vmatmul.mubr.bf16.gmra.mrb[0].mxu0 %v2419
      %v2518 = vpop.f32.mrb[0].mxu0
      %v2519 = vadd.f32 %v2466, %v2518
      %v2520 = vpop.f32.mrb[0].mxu0
      %v2521 = vadd.f32 %v2468, %v2520
      %v2522 = vpop.f32.mrb[0].mxu0
      %v2523 = vadd.f32 %v2470, %v2522
      %v2524 = vpop.f32.mrb[0].mxu0
      %v2525 = vadd.f32 %v2472, %v2524
      %2526 = vdwg.mxu0
      %v2527 = vadd.f32 %v810, %v2509
      %v2528 = vadd.f32 %v812, %v2511
      %v2529 = vadd.f32 %v814, %v2513
      %v2530 = vadd.f32 %v816, %v2515
      %v2531 = vadd.f32 %v820, %v2519
      %v2532 = vadd.f32 %v822, %v2521
      %v2533 = vadd.f32 %v824, %v2523
      %v2534 = vadd.f32 %v826, %v2525
      %v2535 = vld [vmem:[%s13] sm:$0xff]
      %v2536 = vld [vmem:[%s13 + $0x8] sm:$0xff]
      %v2537 = vld [vmem:[%s13 + $0x10] sm:$0xff]
      %v2538 = vld [vmem:[%s13 + $0x18] sm:$0xff]
      %v2539 = vld [vmem:[%s14] sm:$0xff]
      %v2540 = vld [vmem:[%s14 + $0x8] sm:$0xff]
      %v2541 = vld [vmem:[%s14 + $0x10] sm:$0xff]
      %v2542 = vld [vmem:[%s14 + $0x18] sm:$0xff]
      %v2543 = vadd.f32 %v2527, %v2528
      %v2544 = vadd.f32 %v2543, %v2529
      %v2545 = vadd.f32 %v2544, %v2530
      %v2546 = vadd.f32 %v2545, %v2531
      %v2547 = vadd.f32 %v2546, %v2532
      %v2548 = vadd.f32 %v2547, %v2533
      %v2549 = vadd.f32 %v2548, %v2534
      %2550 = vadd.xlane.f32.xlu0 %v2549
      %v2551 = vpop.xlane.xlu0 %2550
      %v2552 = vrot.slane %v2551, 4
      %v2553 = vadd.f32 %v2551, %v2552
      %v2554 = vrot.slane %v2553, 2
      %v2555 = vadd.f32 %v2553, %v2554
      %v2556 = vrot.slane %v2555, 1
      %v2557 = vadd.f32 %v2555, %v2556
      %s2558 = vtos %v2557
      %v2559 = vmul.f32 %v2527, %v2527
      %v2560 = vmul.f32 %v2528, %v2528
      %v2561 = vmul.f32 %v2529, %v2529
      %v2562 = vmul.f32 %v2530, %v2530
      %v2563 = vmul.f32 %v2531, %v2531
      %v2564 = vmul.f32 %v2532, %v2532
      %v2565 = vmul.f32 %v2533, %v2533
      %v2566 = vmul.f32 %v2534, %v2534
      %v2567 = vadd.f32 %v2559, %v2560
      %v2568 = vadd.f32 %v2567, %v2561
      %v2569 = vadd.f32 %v2568, %v2562
      %v2570 = vadd.f32 %v2569, %v2563
      %v2571 = vadd.f32 %v2570, %v2564
      %v2572 = vadd.f32 %v2571, %v2565
      %v2573 = vadd.f32 %v2572, %v2566
      %2574 = vadd.xlane.f32.xlu0 %v2573
      %v2575 = vpop.xlane.xlu0 %2574
      %v2576 = vrot.slane %v2575, 4
      %v2577 = vadd.f32 %v2575, %v2576
      %v2578 = vrot.slane %v2577, 2
      %v2579 = vadd.f32 %v2577, %v2578
      %v2580 = vrot.slane %v2579, 1
      %v2581 = vadd.f32 %v2579, %v2580
      %s2582 = vtos %v2581
      %v2583 = vrcp.pop 8192.0
      %s2584 = vtos %v2583
      %s2585 = smul.f32 %s2558, %s2584
      %v2586 = vrcp.pop 8192.0
      %s2587 = vtos %v2586
      %s2588 = smul.f32 %s2582, %s2587
      %s2589 = smul.f32 %s2585, %s2585
      %s2590 = ssub.f32 %s2588, %s2589
      %s2591 = sadd.f32 %s2590, 1e-05
      %v2592 = vstv %s2591
      %v2593 = vrsqrt.pop %v2592
      %s2594 = vtos %v2593
      %v2595 = vstv %s2585
      %v2596 = vsub.f32 %v2527, %v2595
      %v2597 = vsub.f32 %v2528, %v2595
      %v2598 = vsub.f32 %v2529, %v2595
      %v2599 = vsub.f32 %v2530, %v2595
      %v2600 = vsub.f32 %v2531, %v2595
      %v2601 = vsub.f32 %v2532, %v2595
      %v2602 = vsub.f32 %v2533, %v2595
      %v2603 = vsub.f32 %v2534, %v2595
      %v2604 = vstv %s2594
      %v2605 = vmul.f32 %v2596, %v2604
      %v2606 = vmul.f32 %v2597, %v2604
      %v2607 = vmul.f32 %v2598, %v2604
      %v2608 = vmul.f32 %v2599, %v2604
      %v2609 = vmul.f32 %v2600, %v2604
      %v2610 = vmul.f32 %v2601, %v2604
      %v2611 = vmul.f32 %v2602, %v2604
      %v2612 = vmul.f32 %v2603, %v2604
      %2614 = vset.pattern.permute.xlu0 0
      %2615 = vperm.xlu0 %2614, %v2535
      %v2616 = vpop.permute.xlu0 %2615
      %2619 = vset.pattern.permute.xlu0 0
      %2620 = vperm.xlu0 %2619, %v2536
      %v2621 = vpop.permute.xlu0 %2620
      %2624 = vset.pattern.permute.xlu0 0
      %2625 = vperm.xlu0 %2624, %v2537
      %v2626 = vpop.permute.xlu0 %2625
      %2629 = vset.pattern.permute.xlu0 0
      %2630 = vperm.xlu0 %2629, %v2538
      %v2631 = vpop.permute.xlu0 %2630
      %v2633 = vmul.f32 %v2605, %v2616
      %v2634 = vmul.f32 %v2606, %v2616
      %v2635 = vmul.f32 %v2607, %v2621
      %v2636 = vmul.f32 %v2608, %v2621
      %v2637 = vmul.f32 %v2609, %v2626
      %v2638 = vmul.f32 %v2610, %v2626
      %v2639 = vmul.f32 %v2611, %v2631
      %v2640 = vmul.f32 %v2612, %v2631
      %2642 = vset.pattern.permute.xlu0 0
      %2643 = vperm.xlu0 %2642, %v2539
      %v2644 = vpop.permute.xlu0 %2643
      %2647 = vset.pattern.permute.xlu0 0
      %2648 = vperm.xlu0 %2647, %v2540
      %v2649 = vpop.permute.xlu0 %2648
      %2652 = vset.pattern.permute.xlu0 0
      %2653 = vperm.xlu0 %2652, %v2541
      %v2654 = vpop.permute.xlu0 %2653
      %2657 = vset.pattern.permute.xlu0 0
      %2658 = vperm.xlu0 %2657, %v2542
      %v2659 = vpop.permute.xlu0 %2658
      %v2661 = vadd.f32 %v2633, %v2644
      %v2662 = vadd.f32 %v2634, %v2644
      %v2663 = vadd.f32 %v2635, %v2649
      %v2664 = vadd.f32 %v2636, %v2649
      %v2665 = vadd.f32 %v2637, %v2654
      %v2666 = vadd.f32 %v2638, %v2654
      %v2667 = vadd.f32 %v2639, %v2659
      %v2668 = vadd.f32 %v2640, %v2659
      %v2669 = vld [vmem:[%s16] sm:$0xf]
      %v2670 = vld [vmem:[%s16 + $0x4] sm:$0xf]
      %v2671 = vld [vmem:[%s16 + $0x8] sm:$0xf]
      %v2672 = vld [vmem:[%s16 + $0xc] sm:$0xf]
      %v2673 = vld [vmem:[%s15] sm:$0xf]
      %v2674 = vld [vmem:[%s15 + $0x4] sm:$0xf]
      %v2675 = vld [vmem:[%s15 + $0x8] sm:$0xf]
      %v2676 = vld [vmem:[%s15 + $0xc] sm:$0xf]
      %v2677 = vpack.c.bf16 %v2663, %v2661
      %v2678 = vpack.c.bf16 %v2664, %v2662
      %v2679 = vpack.c.bf16 %v2667, %v2665
      %v2680 = vpack.c.bf16 %v2668, %v2666
      %v2685 = vunpack.c.l.b16 %v2673
      %v2686 = vunpack.c.l.b16 %v2674
      %v2687 = vunpack.c.l.b16 %v2675
      %v2688 = vunpack.c.l.b16 %v2676
      %v2689 = vpack.c.b16 %v2686, %v2685
      %v2690 = vpack.c.b16 %v2688, %v2687
      %v2692 = vsel %vm1328, %v2689, 0
      %v2695 = vsel %vm1328, %v2690, 0
      %2697 = vmatprep.subr.bf16.mxu0 %v2678
      %2698 = vmatpush1.bf16.msra.mxu0 %v2677
      %2699 = vmatprep.subr.bf16.mxu0 %v2680
      %2700 = vmatpush1.bf16.msra.mxu0 %v2679
      %2701 = vmatprep.subr.bf16.mxu0 0
      %2702 = vmatpush1.bf16.msra.mxu0 0
      %2703 = vmatprep.subr.bf16.mxu0 0
      %2704 = vmatpush1.bf16.msra.mxu0 0
      %2705 = vmatprep.subr.bf16.mxu0 0
      %2706 = vmatpush1.bf16.msra.mxu0 0
      %2707 = vmatprep.subr.bf16.mxu0 0
      %2708 = vmatpush1.bf16.msra.mxu0 0
      %2709 = vmatprep.subr.bf16.mxu0 0
      %2710 = vmatpush1.bf16.msra.mxu0 0
      %2711 = vmatprep.subr.bf16.mxu0 0
      %2712 = vmatpush1.bf16.msra.mxu0 0
      %2713 = vmatprep.subr.bf16.mxu0 0
      %2714 = vmatpush1.bf16.msra.mxu0 0
      %2715 = vmatprep.subr.bf16.mxu0 0
      %2716 = vmatpush1.bf16.msra.mxu0 0
      %2717 = vmatprep.subr.bf16.mxu0 0
      %2718 = vmatpush1.bf16.msra.mxu0 0
      %2719 = vmatprep.subr.bf16.mxu0 0
      %2720 = vmatpush1.bf16.msra.mxu0 0
      %2721 = vmatprep.subr.bf16.mxu0 0
      %2722 = vmatpush1.bf16.msra.mxu0 0
      %2723 = vmatprep.subr.bf16.mxu0 0
      %2724 = vmatpush1.bf16.msra.mxu0 0
      %2725 = vmatprep.subr.bf16.mxu0 0
      %2726 = vmatpush1.bf16.msra.mxu0 0
      %2727 = vmatprep.subr.bf16.mxu0 0
      %2728 = vmatpush1.bf16.msra.mxu0 0
      %2729 = vmatprep.mubr.bf16.mxu0 0
      %2730 = vmatmul.mubr.bf16.gmra.mrb[0].mxu0 %v2692
      %v2731 = vpop.f32.mrb[0].mxu0
      %v2732 = vadd.f32 0.0, %v2731
      %v2733 = vpop.f32.mrb[0].mxu0
      %v2734 = vadd.f32 0.0, %v2733
      %v2735 = vpop.f32.mrb[0].mxu0
      %v2736 = vadd.f32 0.0, %v2735
      %v2737 = vpop.f32.mrb[0].mxu0
      %v2738 = vadd.f32 0.0, %v2737
      %2739 = vmatprep.mubr.bf16.mxu0 0
      %2740 = vmatmul.mubr.bf16.gmra.mrb[0].mxu0 %v2695
      %v2741 = vpop.f32.mrb[0].mxu0
      %v2742 = vadd.f32 0.0, %v2741
      %v2743 = vpop.f32.mrb[0].mxu0
      %v2744 = vadd.f32 0.0, %v2743
      %v2745 = vpop.f32.mrb[0].mxu0
      %v2746 = vadd.f32 0.0, %v2745
      %v2747 = vpop.f32.mrb[0].mxu0
      %v2748 = vadd.f32 0.0, %v2747
      %2749 = vdwg.mxu0
      %v2750 = vmul.f32 %v2732, 0.5
      %v2751 = vmul.f32 %v2734, 0.5
      %v2752 = vmul.f32 %v2736, 0.5
      %v2753 = vmul.f32 %v2738, 0.5
      %v2754 = vmul.f32 %v2742, 0.5
      %v2755 = vmul.f32 %v2744, 0.5
      %v2756 = vmul.f32 %v2746, 0.5
      %v2757 = vmul.f32 %v2748, 0.5
      %v2758 = vmul.f32 %v2732, 0.044715
      %v2759 = vmul.f32 %v2734, 0.044715
      %v2760 = vmul.f32 %v2736, 0.044715
      %v2761 = vmul.f32 %v2738, 0.044715
      %v2762 = vmul.f32 %v2742, 0.044715
      %v2763 = vmul.f32 %v2744, 0.044715
      %v2764 = vmul.f32 %v2746, 0.044715
      %v2765 = vmul.f32 %v2748, 0.044715
      %v2766 = vmul.f32 %v2758, %v2732
      %v2767 = vmul.f32 %v2759, %v2734
      %v2768 = vmul.f32 %v2760, %v2736
      %v2769 = vmul.f32 %v2761, %v2738
      %v2770 = vmul.f32 %v2762, %v2742
      %v2771 = vmul.f32 %v2763, %v2744
      %v2772 = vmul.f32 %v2764, %v2746
      %v2773 = vmul.f32 %v2765, %v2748
      %v2774 = vmul.f32 %v2766, %v2732
      %v2775 = vmul.f32 %v2767, %v2734
      %v2776 = vmul.f32 %v2768, %v2736
      %v2777 = vmul.f32 %v2769, %v2738
      %v2778 = vmul.f32 %v2770, %v2742
      %v2779 = vmul.f32 %v2771, %v2744
      %v2780 = vmul.f32 %v2772, %v2746
      %v2781 = vmul.f32 %v2773, %v2748
      %v2782 = vadd.f32 %v2732, %v2774
      %v2783 = vadd.f32 %v2734, %v2775
      %v2784 = vadd.f32 %v2736, %v2776
      %v2785 = vadd.f32 %v2738, %v2777
      %v2786 = vadd.f32 %v2742, %v2778
      %v2787 = vadd.f32 %v2744, %v2779
      %v2788 = vadd.f32 %v2746, %v2780
      %v2789 = vadd.f32 %v2748, %v2781
      %v2790 = vmul.f32 %v2782, 0.7978846
      %v2791 = vmul.f32 %v2783, 0.7978846
      %v2792 = vmul.f32 %v2784, 0.7978846
      %v2793 = vmul.f32 %v2785, 0.7978846
      %v2794 = vmul.f32 %v2786, 0.7978846
      %v2795 = vmul.f32 %v2787, 0.7978846
      %v2796 = vmul.f32 %v2788, 0.7978846
      %v2797 = vmul.f32 %v2789, 0.7978846
      %v2798 = vtanh.pop %v2790
      %v2799 = vtanh.pop %v2791
      %v2800 = vtanh.pop %v2792
      %v2801 = vtanh.pop %v2793
      %v2802 = vtanh.pop %v2794
      %v2803 = vtanh.pop %v2795
      %v2804 = vtanh.pop %v2796
      %v2805 = vtanh.pop %v2797
      %v2806 = vadd.f32 %v2798, 1.0
      %v2807 = vadd.f32 %v2799, 1.0
      %v2808 = vadd.f32 %v2800, 1.0
      %v2809 = vadd.f32 %v2801, 1.0
      %v2810 = vadd.f32 %v2802, 1.0
      %v2811 = vadd.f32 %v2803, 1.0
      %v2812 = vadd.f32 %v2804, 1.0
      %v2813 = vadd.f32 %v2805, 1.0
      %v2814 = vmul.f32 %v2750, %v2806
      %v2815 = vmul.f32 %v2751, %v2807
      %v2816 = vmul.f32 %v2752, %v2808
      %v2817 = vmul.f32 %v2753, %v2809
      %v2818 = vmul.f32 %v2754, %v2810
      %v2819 = vmul.f32 %v2755, %v2811
      %v2820 = vmul.f32 %v2756, %v2812
      %v2821 = vmul.f32 %v2757, %v2813
      %v2822 = vpack.c.bf16 %v2816, %v2814
      %v2823 = vpack.c.bf16 %v2817, %v2815
      %v2824 = vpack.c.bf16 %v2820, %v2818
      %v2825 = vpack.c.bf16 %v2821, %v2819
      %v2830 = vunpack.c.l.b16 %v2669
      %v2831 = vunpack.c.l.b16 %v2670
      %v2832 = vunpack.c.l.b16 %v2671
      %v2833 = vunpack.c.l.b16 %v2672
      %v2834 = vpack.c.b16 %v2831, %v2830
      %v2835 = vpack.c.b16 %v2833, %v2832
      %v2837 = vsel %vm1328, %v2834, 0
      %v2840 = vsel %vm1328, %v2835, 0
      %2842 = vmatprep.subr.bf16.mxu0 %v2823
      %2843 = vmatpush1.bf16.msra.mxu0 %v2822
      %2844 = vmatprep.subr.bf16.mxu0 %v2825
      %2845 = vmatpush1.bf16.msra.mxu0 %v2824
      %2846 = vmatprep.subr.bf16.mxu0 0
      %2847 = vmatpush1.bf16.msra.mxu0 0
      %2848 = vmatprep.subr.bf16.mxu0 0
      %2849 = vmatpush1.bf16.msra.mxu0 0
      %2850 = vmatprep.subr.bf16.mxu0 0
      %2851 = vmatpush1.bf16.msra.mxu0 0
      %2852 = vmatprep.subr.bf16.mxu0 0
      %2853 = vmatpush1.bf16.msra.mxu0 0
      %2854 = vmatprep.subr.bf16.mxu0 0
      %2855 = vmatpush1.bf16.msra.mxu0 0
      %2856 = vmatprep.subr.bf16.mxu0 0
      %2857 = vmatpush1.bf16.msra.mxu0 0
      %2858 = vmatprep.subr.bf16.mxu0 0
      %2859 = vmatpush1.bf16.msra.mxu0 0
      %2860 = vmatprep.subr.bf16.mxu0 0
      %2861 = vmatpush1.bf16.msra.mxu0 0
      %2862 = vmatprep.subr.bf16.mxu0 0
      %2863 = vmatpush1.bf16.msra.mxu0 0
      %2864 = vmatprep.subr.bf16.mxu0 0
      %2865 = vmatpush1.bf16.msra.mxu0 0
      %2866 = vmatprep.subr.bf16.mxu0 0
      %2867 = vmatpush1.bf16.msra.mxu0 0
      %2868 = vmatprep.subr.bf16.mxu0 0
      %2869 = vmatpush1.bf16.msra.mxu0 0
      %2870 = vmatprep.subr.bf16.mxu0 0
      %2871 = vmatpush1.bf16.msra.mxu0 0
      %2872 = vmatprep.subr.bf16.mxu0 0
      %2873 = vmatpush1.bf16.msra.mxu0 0
      %2874 = vmatprep.mubr.bf16.mxu0 0
      %2875 = vmatmul.mubr.bf16.gmra.mrb[0].mxu0 %v2837
      %v2876 = vpop.f32.mrb[0].mxu0
      %v2877 = vadd.f32 0.0, %v2876
      %v2878 = vpop.f32.mrb[0].mxu0
      %v2879 = vadd.f32 0.0, %v2878
      %v2880 = vpop.f32.mrb[0].mxu0
      %v2881 = vadd.f32 0.0, %v2880
      %v2882 = vpop.f32.mrb[0].mxu0
      %v2883 = vadd.f32 0.0, %v2882
      %2884 = vmatprep.mubr.bf16.mxu0 0
      %2885 = vmatmul.mubr.bf16.gmra.mrb[0].mxu0 %v2840
      %v2886 = vpop.f32.mrb[0].mxu0
      %v2887 = vadd.f32 0.0, %v2886
      %v2888 = vpop.f32.mrb[0].mxu0
      %v2889 = vadd.f32 0.0, %v2888
      %v2890 = vpop.f32.mrb[0].mxu0
      %v2891 = vadd.f32 0.0, %v2890
      %v2892 = vpop.f32.mrb[0].mxu0
      %v2893 = vadd.f32 0.0, %v2892
      %2894 = vdwg.mxu0
      %v2895 = vadd.f32 %v2527, %v2877
      %v2896 = vadd.f32 %v2528, %v2879
      %v2897 = vadd.f32 %v2529, %v2881
      %v2898 = vadd.f32 %v2530, %v2883
      %v2899 = vadd.f32 %v2531, %v2887
      %v2900 = vadd.f32 %v2532, %v2889
      %v2901 = vadd.f32 %v2533, %v2891
      %v2902 = vadd.f32 %v2534, %v2893
      %s2903 = scalar_lea.vmem %s5, 32
      %v2904 = vld [vmem:[%s2903] sm:$0xff]
      %v2905 = vld [vmem:[%s2903 + $0x8] sm:$0xff]
      %v2906 = vld [vmem:[%s2903 + $0x10] sm:$0xff]
      %v2907 = vld [vmem:[%s2903 + $0x18] sm:$0xff]
      %s2908 = scalar_lea.vmem %s6, 32
      %v2909 = vld [vmem:[%s2908] sm:$0xff]
      %v2910 = vld [vmem:[%s2908 + $0x8] sm:$0xff]
      %v2911 = vld [vmem:[%s2908 + $0x10] sm:$0xff]
      %v2912 = vld [vmem:[%s2908 + $0x18] sm:$0xff]
      %v2913 = vadd.f32 %v2895, %v2896
      %v2914 = vadd.f32 %v2913, %v2897
      %v2915 = vadd.f32 %v2914, %v2898
      %v2916 = vadd.f32 %v2915, %v2899
      %v2917 = vadd.f32 %v2916, %v2900
      %v2918 = vadd.f32 %v2917, %v2901
      %v2919 = vadd.f32 %v2918, %v2902
      %2920 = vadd.xlane.f32.xlu0 %v2919
      %v2921 = vpop.xlane.xlu0 %2920
      %v2922 = vrot.slane %v2921, 4
      %v2923 = vadd.f32 %v2921, %v2922
      %v2924 = vrot.slane %v2923, 2
      %v2925 = vadd.f32 %v2923, %v2924
      %v2926 = vrot.slane %v2925, 1
      %v2927 = vadd.f32 %v2925, %v2926
      %s2928 = vtos %v2927
      %v2929 = vmul.f32 %v2895, %v2895
      %v2930 = vmul.f32 %v2896, %v2896
      %v2931 = vmul.f32 %v2897, %v2897
      %v2932 = vmul.f32 %v2898, %v2898
      %v2933 = vmul.f32 %v2899, %v2899
      %v2934 = vmul.f32 %v2900, %v2900
      %v2935 = vmul.f32 %v2901, %v2901
      %v2936 = vmul.f32 %v2902, %v2902
      %v2937 = vadd.f32 %v2929, %v2930
      %v2938 = vadd.f32 %v2937, %v2931
      %v2939 = vadd.f32 %v2938, %v2932
      %v2940 = vadd.f32 %v2939, %v2933
      %v2941 = vadd.f32 %v2940, %v2934
      %v2942 = vadd.f32 %v2941, %v2935
      %v2943 = vadd.f32 %v2942, %v2936
      %2944 = vadd.xlane.f32.xlu0 %v2943
      %v2945 = vpop.xlane.xlu0 %2944
      %v2946 = vrot.slane %v2945, 4
      %v2947 = vadd.f32 %v2945, %v2946
      %v2948 = vrot.slane %v2947, 2
      %v2949 = vadd.f32 %v2947, %v2948
      %v2950 = vrot.slane %v2949, 1
      %v2951 = vadd.f32 %v2949, %v2950
      %s2952 = vtos %v2951
      %v2953 = vrcp.pop 8192.0
      %s2954 = vtos %v2953
      %s2955 = smul.f32 %s2928, %s2954
      %v2956 = vrcp.pop 8192.0
      %s2957 = vtos %v2956
      %s2958 = smul.f32 %s2952, %s2957
      %s2959 = smul.f32 %s2955, %s2955
      %s2960 = ssub.f32 %s2958, %s2959
      %s2961 = sadd.f32 %s2960, 1e-05
      %v2962 = vstv %s2961
      %v2963 = vrsqrt.pop %v2962
      %s2964 = vtos %v2963
      %v2965 = vstv %s2955
      %v2966 = vsub.f32 %v2895, %v2965
      %v2967 = vsub.f32 %v2896, %v2965
      %v2968 = vsub.f32 %v2897, %v2965
      %v2969 = vsub.f32 %v2898, %v2965
      %v2970 = vsub.f32 %v2899, %v2965
      %v2971 = vsub.f32 %v2900, %v2965
      %v2972 = vsub.f32 %v2901, %v2965
      %v2973 = vsub.f32 %v2902, %v2965
      %v2974 = vstv %s2964
      %v2975 = vmul.f32 %v2966, %v2974
      %v2976 = vmul.f32 %v2967, %v2974
      %v2977 = vmul.f32 %v2968, %v2974
      %v2978 = vmul.f32 %v2969, %v2974
      %v2979 = vmul.f32 %v2970, %v2974
      %v2980 = vmul.f32 %v2971, %v2974
      %v2981 = vmul.f32 %v2972, %v2974
      %v2982 = vmul.f32 %v2973, %v2974
      %2984 = vset.pattern.permute.xlu0 0
      %2985 = vperm.xlu0 %2984, %v2904
      %v2986 = vpop.permute.xlu0 %2985
      %2989 = vset.pattern.permute.xlu0 0
      %2990 = vperm.xlu0 %2989, %v2905
      %v2991 = vpop.permute.xlu0 %2990
      %2994 = vset.pattern.permute.xlu0 0
      %2995 = vperm.xlu0 %2994, %v2906
      %v2996 = vpop.permute.xlu0 %2995
      %2999 = vset.pattern.permute.xlu0 0
      %3000 = vperm.xlu0 %2999, %v2907
      %v3001 = vpop.permute.xlu0 %3000
      %v3003 = vmul.f32 %v2975, %v2986
      %v3004 = vmul.f32 %v2976, %v2986
      %v3005 = vmul.f32 %v2977, %v2991
      %v3006 = vmul.f32 %v2978, %v2991
      %v3007 = vmul.f32 %v2979, %v2996
      %v3008 = vmul.f32 %v2980, %v2996
      %v3009 = vmul.f32 %v2981, %v3001
      %v3010 = vmul.f32 %v2982, %v3001
      %3012 = vset.pattern.permute.xlu0 0
      %3013 = vperm.xlu0 %3012, %v2909
      %v3014 = vpop.permute.xlu0 %3013
      %3017 = vset.pattern.permute.xlu0 0
      %3018 = vperm.xlu0 %3017, %v2910
      %v3019 = vpop.permute.xlu0 %3018
      %3022 = vset.pattern.permute.xlu0 0
      %3023 = vperm.xlu0 %3022, %v2911
      %v3024 = vpop.permute.xlu0 %3023
      %3027 = vset.pattern.permute.xlu0 0
      %3028 = vperm.xlu0 %3027, %v2912
      %v3029 = vpop.permute.xlu0 %3028
      %v3031 = vadd.f32 %v3003, %v3014
      %v3032 = vadd.f32 %v3004, %v3014
      %v3033 = vadd.f32 %v3005, %v3019
      %v3034 = vadd.f32 %v3006, %v3019
      %v3035 = vadd.f32 %v3007, %v3024
      %v3036 = vadd.f32 %v3008, %v3024
      %v3037 = vadd.f32 %v3009, %v3029
      %v3038 = vadd.f32 %v3010, %v3029
      %s3039 = scalar_lea.vmem %s7, 48
      %v3040 = vld [vmem:[%s3039] sm:$0xff]
      %v3041 = vld [vmem:[%s3039 + $0x8] sm:$0xf]
      %v3042 = vld [vmem:[%s3039 + $0xc] sm:$0xff]
      %v3043 = vld [vmem:[%s3039 + $0x14] sm:$0xf]
      %v3044 = vld [vmem:[%s3039 + $0x18] sm:$0xff]
      %v3045 = vld [vmem:[%s3039 + $0x20] sm:$0xf]
      %v3046 = vld [vmem:[%s3039 + $0x24] sm:$0xff]
      %v3047 = vld [vmem:[%s3039 + $0x2c] sm:$0xf]
      %s3048 = scalar_lea.vmem %s8, 32
      %v3049 = vld [vmem:[%s3048] sm:$0xff]
      %v3050 = vld [vmem:[%s3048 + $0x8] sm:$0xff]
      %v3051 = vld [vmem:[%s3048 + $0x10] sm:$0xff]
      %v3052 = vld [vmem:[%s3048 + $0x18] sm:$0xff]
      %3053 = vrot.lane.b32.xlu0 %v3031, 1
      %v3054 = vpop.permute.xlu0 %3053
      %3055 = vrot.lane.b32.xlu0 %v3033, 1
      %v3056 = vpop.permute.xlu0 %3055
      %3057 = vrot.lane.b32.xlu0 %v3035, 1
      %v3058 = vpop.permute.xlu0 %3057
      %3059 = vrot.lane.b32.xlu0 %v3037, 1
      %v3060 = vpop.permute.xlu0 %3059
      %3061 = vrot.lane.b32.xlu0 %v3032, 1
      %v3062 = vpop.permute.xlu0 %3061
      %3063 = vrot.lane.b32.xlu0 %v3034, 1
      %v3064 = vpop.permute.xlu0 %3063
      %3065 = vrot.lane.b32.xlu0 %v3036, 1
      %v3066 = vpop.permute.xlu0 %3065
      %3067 = vrot.lane.b32.xlu0 %v3038, 1
      %v3068 = vpop.permute.xlu0 %3067
      %v3069 = vsel %vm992, %v3054, %v3062
      %v3070 = vsel %vm992, %v3056, %v3064
      %v3071 = vsel %vm992, %v3058, %v3066
      %v3072 = vsel %vm992, %v3060, %v3068
      %v3073 = vsel %vm992, %v3062, %v3054
      %v3074 = vsel %vm992, %v3064, %v3056
      %v3075 = vsel %vm992, %v3066, %v3058
      %v3076 = vsel %vm992, %v3068, %v3060
      %3077 = vrot.lane.b32.xlu0 %v3031, 113
      %v3078 = vpop.permute.xlu0 %3077
      %3079 = vrot.lane.b32.xlu0 %v3033, 113
      %v3080 = vpop.permute.xlu0 %3079
      %3081 = vrot.lane.b32.xlu0 %v3035, 113
      %v3082 = vpop.permute.xlu0 %3081
      %3083 = vrot.lane.b32.xlu0 %v3037, 113
      %v3084 = vpop.permute.xlu0 %3083
      %3085 = vrot.lane.b32.xlu0 %v3032, 113
      %v3086 = vpop.permute.xlu0 %3085
      %3087 = vrot.lane.b32.xlu0 %v3034, 113
      %v3088 = vpop.permute.xlu0 %3087
      %3089 = vrot.lane.b32.xlu0 %v3036, 113
      %v3090 = vpop.permute.xlu0 %3089
      %3091 = vrot.lane.b32.xlu0 %v3038, 113
      %v3092 = vpop.permute.xlu0 %3091
      %v3093 = vsel %vm1017, %v3078, %v3086
      %v3094 = vsel %vm1017, %v3080, %v3088
      %v3095 = vsel %vm1017, %v3082, %v3090
      %v3096 = vsel %vm1017, %v3084, %v3092
      %v3097 = vsel %vm1017, %v3086, %v3078
      %v3098 = vsel %vm1017, %v3088, %v3080
      %v3099 = vsel %vm1017, %v3090, %v3082
      %v3100 = vsel %vm1017, %v3092, %v3084
      %v3101 = vsel %vm1026, %v3093, %v3073
      %v3102 = vsel %vm1027, %v3097, %v3069
      %v3103 = vsel %vm1026, %v3094, %v3074
      %v3104 = vsel %vm1027, %v3098, %v3070
      %v3105 = vsel %vm1026, %v3095, %v3075
      %v3106 = vsel %vm1027, %v3099, %v3071
      %v3107 = vsel %vm1026, %v3096, %v3076
      %v3108 = vsel %vm1027, %v3100, %v3072
      %3109 = vrot.lane.b32.xlu0 %v3031, 127
      %v3110 = vpop.permute.xlu0 %3109
      %3111 = vrot.lane.b32.xlu0 %v3033, 127
      %v3112 = vpop.permute.xlu0 %3111
      %3113 = vrot.lane.b32.xlu0 %v3035, 127
      %v3114 = vpop.permute.xlu0 %3113
      %3115 = vrot.lane.b32.xlu0 %v3037, 127
      %v3116 = vpop.permute.xlu0 %3115
      %3117 = vrot.lane.b32.xlu0 %v3032, 127
      %v3118 = vpop.permute.xlu0 %3117
      %3119 = vrot.lane.b32.xlu0 %v3034, 127
      %v3120 = vpop.permute.xlu0 %3119
      %3121 = vrot.lane.b32.xlu0 %v3036, 127
      %v3122 = vpop.permute.xlu0 %3121
      %3123 = vrot.lane.b32.xlu0 %v3038, 127
      %v3124 = vpop.permute.xlu0 %3123
      %v3125 = vsel %vm1052, %v3110, %v3118
      %v3126 = vsel %vm1052, %v3112, %v3120
      %v3127 = vsel %vm1052, %v3114, %v3122
      %v3128 = vsel %vm1052, %v3116, %v3124
      %v3129 = vsel %vm1052, %v3118, %v3110
      %v3130 = vsel %vm1052, %v3120, %v3112
      %v3131 = vsel %vm1052, %v3122, %v3114
      %v3132 = vsel %vm1052, %v3124, %v3116
      %3133 = vrot.lane.b32.xlu0 %v3031, 15
      %v3134 = vpop.permute.xlu0 %3133
      %3135 = vrot.lane.b32.xlu0 %v3033, 15
      %v3136 = vpop.permute.xlu0 %3135
      %3137 = vrot.lane.b32.xlu0 %v3035, 15
      %v3138 = vpop.permute.xlu0 %3137
      %3139 = vrot.lane.b32.xlu0 %v3037, 15
      %v3140 = vpop.permute.xlu0 %3139
      %3141 = vrot.lane.b32.xlu0 %v3032, 15
      %v3142 = vpop.permute.xlu0 %3141
      %3143 = vrot.lane.b32.xlu0 %v3034, 15
      %v3144 = vpop.permute.xlu0 %3143
      %3145 = vrot.lane.b32.xlu0 %v3036, 15
      %v3146 = vpop.permute.xlu0 %3145
      %3147 = vrot.lane.b32.xlu0 %v3038, 15
      %v3148 = vpop.permute.xlu0 %3147
      %v3149 = vsel %vm1077, %v3134, %v3142
      %v3150 = vsel %vm1077, %v3136, %v3144
      %v3151 = vsel %vm1077, %v3138, %v3146
      %v3152 = vsel %vm1077, %v3140, %v3148
      %v3153 = vsel %vm1077, %v3142, %v3134
      %v3154 = vsel %vm1077, %v3144, %v3136
      %v3155 = vsel %vm1077, %v3146, %v3138
      %v3156 = vsel %vm1077, %v3148, %v3140
      %v3157 = vsel %vm1086, %v3153, %v3125
      %v3158 = vsel %vm1087, %v3149, %v3129
      %v3159 = vsel %vm1086, %v3154, %v3126
      %v3160 = vsel %vm1087, %v3150, %v3130
      %v3161 = vsel %vm1086, %v3155, %v3127
      %v3162 = vsel %vm1087, %v3151, %v3131
      %v3163 = vsel %vm1086, %v3156, %v3128
      %v3164 = vsel %vm1087, %v3152, %v3132
      %3165 = vrot.lane.b32.xlu0 %v3101, 16
      %v3166 = vpop.permute.xlu0 %3165
      %3167 = vrot.lane.b32.xlu0 %v3103, 16
      %v3168 = vpop.permute.xlu0 %3167
      %3169 = vrot.lane.b32.xlu0 %v3105, 16
      %v3170 = vpop.permute.xlu0 %3169
      %3171 = vrot.lane.b32.xlu0 %v3107, 16
      %v3172 = vpop.permute.xlu0 %3171
      %3173 = vrot.lane.b32.xlu0 %v3031, 16
      %v3174 = vpop.permute.xlu0 %3173
      %3175 = vrot.lane.b32.xlu0 %v3033, 16
      %v3176 = vpop.permute.xlu0 %3175
      %3177 = vrot.lane.b32.xlu0 %v3035, 16
      %v3178 = vpop.permute.xlu0 %3177
      %3179 = vrot.lane.b32.xlu0 %v3037, 16
      %v3180 = vpop.permute.xlu0 %3179
      %3181 = vrot.lane.b32.xlu0 %v3157, 16
      %v3182 = vpop.permute.xlu0 %3181
      %3183 = vrot.lane.b32.xlu0 %v3159, 16
      %v3184 = vpop.permute.xlu0 %3183
      %3185 = vrot.lane.b32.xlu0 %v3161, 16
      %v3186 = vpop.permute.xlu0 %3185
      %3187 = vrot.lane.b32.xlu0 %v3163, 16
      %v3188 = vpop.permute.xlu0 %3187
      %3189 = vrot.lane.b32.xlu0 %v3102, 16
      %v3190 = vpop.permute.xlu0 %3189
      %3191 = vrot.lane.b32.xlu0 %v3104, 16
      %v3192 = vpop.permute.xlu0 %3191
      %3193 = vrot.lane.b32.xlu0 %v3106, 16
      %v3194 = vpop.permute.xlu0 %3193
      %3195 = vrot.lane.b32.xlu0 %v3108, 16
      %v3196 = vpop.permute.xlu0 %3195
      %3197 = vrot.lane.b32.xlu0 %v3032, 16
      %v3198 = vpop.permute.xlu0 %3197
      %3199 = vrot.lane.b32.xlu0 %v3034, 16
      %v3200 = vpop.permute.xlu0 %3199
      %3201 = vrot.lane.b32.xlu0 %v3036, 16
      %v3202 = vpop.permute.xlu0 %3201
      %3203 = vrot.lane.b32.xlu0 %v3038, 16
      %v3204 = vpop.permute.xlu0 %3203
      %3205 = vrot.lane.b32.xlu0 %v3158, 16
      %v3206 = vpop.permute.xlu0 %3205
      %3207 = vrot.lane.b32.xlu0 %v3160, 16
      %v3208 = vpop.permute.xlu0 %3207
      %3209 = vrot.lane.b32.xlu0 %v3162, 16
      %v3210 = vpop.permute.xlu0 %3209
      %3211 = vrot.lane.b32.xlu0 %v3164, 16
      %v3212 = vpop.permute.xlu0 %3211
      %v3213 = vsel %vm1144, %v3166, %v3190
      %v3214 = vsel %vm1144, %v3168, %v3192
      %v3215 = vsel %vm1144, %v3170, %v3194
      %v3216 = vsel %vm1144, %v3172, %v3196
      %v3217 = vsel %vm1144, %v3174, %v3198
      %v3218 = vsel %vm1144, %v3176, %v3200
      %v3219 = vsel %vm1144, %v3178, %v3202
      %v3220 = vsel %vm1144, %v3180, %v3204
      %v3221 = vsel %vm1144, %v3182, %v3206
      %v3222 = vsel %vm1144, %v3184, %v3208
      %v3223 = vsel %vm1144, %v3186, %v3210
      %v3224 = vsel %vm1144, %v3188, %v3212
      %v3225 = vsel %vm1144, %v3190, %v3166
      %v3226 = vsel %vm1144, %v3192, %v3168
      %v3227 = vsel %vm1144, %v3194, %v3170
      %v3228 = vsel %vm1144, %v3196, %v3172
      %v3229 = vsel %vm1144, %v3198, %v3174
      %v3230 = vsel %vm1144, %v3200, %v3176
      %v3231 = vsel %vm1144, %v3202, %v3178
      %v3232 = vsel %vm1144, %v3204, %v3180
      %v3233 = vsel %vm1144, %v3206, %v3182
      %v3234 = vsel %vm1144, %v3208, %v3184
      %v3235 = vsel %vm1144, %v3210, %v3186
      %v3236 = vsel %vm1144, %v3212, %v3188
      %3237 = vrot.lane.b32.xlu0 %v3101, 112
      %v3238 = vpop.permute.xlu0 %3237
      %3239 = vrot.lane.b32.xlu0 %v3103, 112
      %v3240 = vpop.permute.xlu0 %3239
      %3241 = vrot.lane.b32.xlu0 %v3105, 112
      %v3242 = vpop.permute.xlu0 %3241
      %3243 = vrot.lane.b32.xlu0 %v3107, 112
      %v3244 = vpop.permute.xlu0 %3243
      %3245 = vrot.lane.b32.xlu0 %v3031, 112
      %v3246 = vpop.permute.xlu0 %3245
      %3247 = vrot.lane.b32.xlu0 %v3033, 112
      %v3248 = vpop.permute.xlu0 %3247
      %3249 = vrot.lane.b32.xlu0 %v3035, 112
      %v3250 = vpop.permute.xlu0 %3249
      %3251 = vrot.lane.b32.xlu0 %v3037, 112
      %v3252 = vpop.permute.xlu0 %3251
      %3253 = vrot.lane.b32.xlu0 %v3157, 112
      %v3254 = vpop.permute.xlu0 %3253
      %3255 = vrot.lane.b32.xlu0 %v3159, 112
      %v3256 = vpop.permute.xlu0 %3255
      %3257 = vrot.lane.b32.xlu0 %v3161, 112
      %v3258 = vpop.permute.xlu0 %3257
      %3259 = vrot.lane.b32.xlu0 %v3163, 112
      %v3260 = vpop.permute.xlu0 %3259
      %3261 = vrot.lane.b32.xlu0 %v3102, 112
      %v3262 = vpop.permute.xlu0 %3261
      %3263 = vrot.lane.b32.xlu0 %v3104, 112
      %v3264 = vpop.permute.xlu0 %3263
      %3265 = vrot.lane.b32.xlu0 %v3106, 112
      %v3266 = vpop.permute.xlu0 %3265
      %3267 = vrot.lane.b32.xlu0 %v3108, 112
      %v3268 = vpop.permute.xlu0 %3267
      %3269 = vrot.lane.b32.xlu0 %v3032, 112
      %v3270 = vpop.permute.xlu0 %3269
      %3271 = vrot.lane.b32.xlu0 %v3034, 112
      %v3272 = vpop.permute.xlu0 %3271
      %3273 = vrot.lane.b32.xlu0 %v3036, 112
      %v3274 = vpop.permute.xlu0 %3273
      %3275 = vrot.lane.b32.xlu0 %v3038, 112
      %v3276 = vpop.permute.xlu0 %3275
      %3277 = vrot.lane.b32.xlu0 %v3158, 112
      %v3278 = vpop.permute.xlu0 %3277
      %3279 = vrot.lane.b32.xlu0 %v3160, 112
      %v3280 = vpop.permute.xlu0 %3279
      %3281 = vrot.lane.b32.xlu0 %v3162, 112
      %v3282 = vpop.permute.xlu0 %3281
      %3283 = vrot.lane.b32.xlu0 %v3164, 112
      %v3284 = vpop.permute.xlu0 %3283
      %v3285 = vsel %vm1217, %v3238, %v3262
      %v3286 = vsel %vm1217, %v3240, %v3264
      %v3287 = vsel %vm1217, %v3242, %v3266
      %v3288 = vsel %vm1217, %v3244, %v3268
      %v3289 = vsel %vm1217, %v3246, %v3270
      %v3290 = vsel %vm1217, %v3248, %v3272
      %v3291 = vsel %vm1217, %v3250, %v3274
      %v3292 = vsel %vm1217, %v3252, %v3276
      %v3293 = vsel %vm1217, %v3254, %v3278
      %v3294 = vsel %vm1217, %v3256, %v3280
      %v3295 = vsel %vm1217, %v3258, %v3282
      %v3296 = vsel %vm1217, %v3260, %v3284
      %v3297 = vsel %vm1217, %v3262, %v3238
      %v3298 = vsel %vm1217, %v3264, %v3240
      %v3299 = vsel %vm1217, %v3266, %v3242
      %v3300 = vsel %vm1217, %v3268, %v3244
      %v3301 = vsel %vm1217, %v3270, %v3246
      %v3302 = vsel %vm1217, %v3272, %v3248
      %v3303 = vsel %vm1217, %v3274, %v3250
      %v3304 = vsel %vm1217, %v3276, %v3252
      %v3305 = vsel %vm1217, %v3278, %v3254
      %v3306 = vsel %vm1217, %v3280, %v3256
      %v3307 = vsel %vm1217, %v3282, %v3258
      %v3308 = vsel %vm1217, %v3284, %v3260
      %v3309 = vpack.c.bf16 %v3226, %v3225
      %v3310 = vpack.c.bf16 %v3214, %v3213
      %v3311 = vpack.c.bf16 %v3228, %v3227
      %v3312 = vpack.c.bf16 %v3216, %v3215
      %v3313 = vpack.c.bf16 %v3230, %v3229
      %v3314 = vpack.c.bf16 %v3218, %v3217
      %v3315 = vpack.c.bf16 %v3232, %v3231
      %v3316 = vpack.c.bf16 %v3220, %v3219
      %v3317 = vpack.c.bf16 %v3234, %v3233
      %v3318 = vpack.c.bf16 %v3222, %v3221
      %v3319 = vpack.c.bf16 %v3236, %v3235
      %v3320 = vpack.c.bf16 %v3224, %v3223
      %v3321 = vpack.c.bf16 %v3103, %v3101
      %v3322 = vpack.c.bf16 %v3104, %v3102
      %v3323 = vpack.c.bf16 %v3107, %v3105
      %v3324 = vpack.c.bf16 %v3108, %v3106
      %v3325 = vpack.c.bf16 %v3033, %v3031
      %v3326 = vpack.c.bf16 %v3034, %v3032
      %v3327 = vpack.c.bf16 %v3037, %v3035
      %v3328 = vpack.c.bf16 %v3038, %v3036
      %v3329 = vpack.c.bf16 %v3159, %v3157
      %v3330 = vpack.c.bf16 %v3160, %v3158
      %v3331 = vpack.c.bf16 %v3163, %v3161
      %v3332 = vpack.c.bf16 %v3164, %v3162
      %v3333 = vpack.c.bf16 %v3286, %v3285
      %v3334 = vpack.c.bf16 %v3298, %v3297
      %v3335 = vpack.c.bf16 %v3288, %v3287
      %v3336 = vpack.c.bf16 %v3300, %v3299
      %v3337 = vpack.c.bf16 %v3290, %v3289
      %v3338 = vpack.c.bf16 %v3302, %v3301
      %v3339 = vpack.c.bf16 %v3292, %v3291
      %v3340 = vpack.c.bf16 %v3304, %v3303
      %v3341 = vpack.c.bf16 %v3294, %v3293
      %v3342 = vpack.c.bf16 %v3306, %v3305
      %v3343 = vpack.c.bf16 %v3296, %v3295
      %v3344 = vpack.c.bf16 %v3308, %v3307
      %3346 = vset.pattern.permute.xlu0 0
      %3347 = vperm.xlu0 %3346, %v3049
      %v3348 = vpop.permute.xlu0 %3347
      %3351 = vset.pattern.permute.xlu0 0
      %3352 = vperm.xlu0 %3351, %v3050
      %v3353 = vpop.permute.xlu0 %3352
      %3356 = vset.pattern.permute.xlu0 0
      %3357 = vperm.xlu0 %3356, %v3051
      %v3358 = vpop.permute.xlu0 %3357
      %3361 = vset.pattern.permute.xlu0 0
      %3362 = vperm.xlu0 %3361, %v3052
      %v3363 = vpop.permute.xlu0 %3362
      %v3373 = vunpack.c.l.b16 %v3040
      %v3374 = vunpack.c.h.b16 %v3040
      %v3375 = vunpack.c.l.b16 %v3041
      %v3376 = vunpack.c.l.b16 %v3042
      %v3377 = vunpack.c.h.b16 %v3042
      %v3378 = vunpack.c.l.b16 %v3043
      %v3379 = vunpack.c.l.b16 %v3044
      %v3380 = vunpack.c.h.b16 %v3044
      %v3381 = vunpack.c.l.b16 %v3045
      %v3382 = vunpack.c.l.b16 %v3046
      %v3383 = vunpack.c.h.b16 %v3046
      %v3384 = vunpack.c.l.b16 %v3047
      %v3385 = vpack.c.b16 %v3376, %v3373
      %v3386 = vpack.c.b16 %v3377, %v3374
      %v3387 = vpack.c.b16 %v3378, %v3375
      %v3388 = vpack.c.b16 %v3382, %v3379
      %v3389 = vpack.c.b16 %v3383, %v3380
      %v3390 = vpack.c.b16 %v3384, %v3381
      %v3396 = vsel %vm1328, %v3387, 0
      %v3399 = vsel %vm1328, %v3390, 0
      %3401 = vmatprep.subr.bf16.mxu0 %v3310
      %3402 = vmatpush1.bf16.msra.mxu0 %v3309
      %3403 = vmatprep.subr.bf16.mxu0 %v3312
      %3404 = vmatpush1.bf16.msra.mxu0 %v3311
      %3405 = vmatprep.subr.bf16.mxu0 %v3314
      %3406 = vmatpush1.bf16.msra.mxu0 %v3313
      %3407 = vmatprep.subr.bf16.mxu0 %v3316
      %3408 = vmatpush1.bf16.msra.mxu0 %v3315
      %3409 = vmatprep.subr.bf16.mxu0 %v3318
      %3410 = vmatpush1.bf16.msra.mxu0 %v3317
      %3411 = vmatprep.subr.bf16.mxu0 %v3320
      %3412 = vmatpush1.bf16.msra.mxu0 %v3319
      %3413 = vmatprep.subr.bf16.mxu0 %v3322
      %3414 = vmatpush1.bf16.msra.mxu0 %v3321
      %3415 = vmatprep.subr.bf16.mxu0 %v3324
      %3416 = vmatpush1.bf16.msra.mxu0 %v3323
      %3417 = vmatprep.subr.bf16.mxu0 %v3326
      %3418 = vmatpush1.bf16.msra.mxu0 %v3325
      %3419 = vmatprep.subr.bf16.mxu0 %v3328
      %3420 = vmatpush1.bf16.msra.mxu0 %v3327
      %3421 = vmatprep.subr.bf16.mxu0 %v3330
      %3422 = vmatpush1.bf16.msra.mxu0 %v3329
      %3423 = vmatprep.subr.bf16.mxu0 %v3332
      %3424 = vmatpush1.bf16.msra.mxu0 %v3331
      %3425 = vmatprep.subr.bf16.mxu0 %v3334
      %3426 = vmatpush1.bf16.msra.mxu0 %v3333
      %3427 = vmatprep.subr.bf16.mxu0 %v3336
      %3428 = vmatpush1.bf16.msra.mxu0 %v3335
      %3429 = vmatprep.subr.bf16.mxu0 %v3338
      %3430 = vmatpush1.bf16.msra.mxu0 %v3337
      %3431 = vmatprep.subr.bf16.mxu0 %v3340
      %3432 = vmatpush1.bf16.msra.mxu0 %v3339
      %3433 = vmatprep.mubr.bf16.mxu0 %v3386
      %3434 = vmatmul.mubr.bf16.gmra.mrb[0].mxu0 %v3385
      %v3435 = vpop.f32.mrb[0].mxu0
      %v3436 = vadd.f32 %v3348, %v3435
      %v3437 = vpop.f32.mrb[0].mxu0
      %v3438 = vadd.f32 %v3348, %v3437
      %v3439 = vpop.f32.mrb[0].mxu0
      %v3440 = vadd.f32 %v3353, %v3439
      %v3441 = vpop.f32.mrb[0].mxu0
      %v3442 = vadd.f32 %v3353, %v3441
      %3443 = vmatprep.mubr.bf16.mxu0 %v3389
      %3444 = vmatmul.mubr.bf16.gmra.mrb[0].mxu0 %v3388
      %v3445 = vpop.f32.mrb[0].mxu0
      %v3446 = vadd.f32 %v3358, %v3445
      %v3447 = vpop.f32.mrb[0].mxu0
      %v3448 = vadd.f32 %v3358, %v3447
      %v3449 = vpop.f32.mrb[0].mxu0
      %v3450 = vadd.f32 %v3363, %v3449
      %v3451 = vpop.f32.mrb[0].mxu0
      %v3452 = vadd.f32 %v3363, %v3451
      %3453 = vdwg.mxu0
      %3454 = vmatprep.subr.bf16.mxu0 %v3342
      %3455 = vmatpush1.bf16.msra.mxu0 %v3341
      %3456 = vmatprep.subr.bf16.mxu0 %v3344
      %3457 = vmatpush1.bf16.msra.mxu0 %v3343
      %3458 = vmatprep.subr.bf16.mxu0 0
      %3459 = vmatpush1.bf16.msra.mxu0 0
      %3460 = vmatprep.subr.bf16.mxu0 0
      %3461 = vmatpush1.bf16.msra.mxu0 0
      %3462 = vmatprep.subr.bf16.mxu0 0
      %3463 = vmatpush1.bf16.msra.mxu0 0
      %3464 = vmatprep.subr.bf16.mxu0 0
      %3465 = vmatpush1.bf16.msra.mxu0 0
      %3466 = vmatprep.subr.bf16.mxu0 0
      %3467 = vmatpush1.bf16.msra.mxu0 0
      %3468 = vmatprep.subr.bf16.mxu0 0
      %3469 = vmatpush1.bf16.msra.mxu0 0
      %3470 = vmatprep.subr.bf16.mxu0 0
      %3471 = vmatpush1.bf16.msra.mxu0 0
      %3472 = vmatprep.subr.bf16.mxu0 0
      %3473 = vmatpush1.bf16.msra.mxu0 0
      %3474 = vmatprep.subr.bf16.mxu0 0
      %3475 = vmatpush1.bf16.msra.mxu0 0
      %3476 = vmatprep.subr.bf16.mxu0 0
      %3477 = vmatpush1.bf16.msra.mxu0 0
      %3478 = vmatprep.subr.bf16.mxu0 0
      %3479 = vmatpush1.bf16.msra.mxu0 0
      %3480 = vmatprep.subr.bf16.mxu0 0
      %3481 = vmatpush1.bf16.msra.mxu0 0
      %3482 = vmatprep.subr.bf16.mxu0 0
      %3483 = vmatpush1.bf16.msra.mxu0 0
      %3484 = vmatprep.subr.bf16.mxu0 0
      %3485 = vmatpush1.bf16.msra.mxu0 0
      %3486 = vmatprep.mubr.bf16.mxu0 0
      %3487 = vmatmul.mubr.bf16.gmra.mrb[0].mxu0 %v3396
      %v3488 = vpop.f32.mrb[0].mxu0
      %v3489 = vadd.f32 %v3436, %v3488
      %v3490 = vpop.f32.mrb[0].mxu0
      %v3491 = vadd.f32 %v3438, %v3490
      %v3492 = vpop.f32.mrb[0].mxu0
      %v3493 = vadd.f32 %v3440, %v3492
      %v3494 = vpop.f32.mrb[0].mxu0
      %v3495 = vadd.f32 %v3442, %v3494
      %3496 = vmatprep.mubr.bf16.mxu0 0
      %3497 = vmatmul.mubr.bf16.gmra.mrb[0].mxu0 %v3399
      %v3498 = vpop.f32.mrb[0].mxu0
      %v3499 = vadd.f32 %v3446, %v3498
      %v3500 = vpop.f32.mrb[0].mxu0
      %v3501 = vadd.f32 %v3448, %v3500
      %v3502 = vpop.f32.mrb[0].mxu0
      %v3503 = vadd.f32 %v3450, %v3502
      %v3504 = vpop.f32.mrb[0].mxu0
      %v3505 = vadd.f32 %v3452, %v3504
      %3506 = vdwg.mxu0
      %v3507 = vmul.f32 %v3489, 0.5
      %v3508 = vmul.f32 %v3491, 0.5
      %v3509 = vmul.f32 %v3493, 0.5
      %v3510 = vmul.f32 %v3495, 0.5
      %v3511 = vmul.f32 %v3499, 0.5
      %v3512 = vmul.f32 %v3501, 0.5
      %v3513 = vmul.f32 %v3503, 0.5
      %v3514 = vmul.f32 %v3505, 0.5
      %v3515 = vmul.f32 %v3489, 0.044715
      %v3516 = vmul.f32 %v3491, 0.044715
      %v3517 = vmul.f32 %v3493, 0.044715
      %v3518 = vmul.f32 %v3495, 0.044715
      %v3519 = vmul.f32 %v3499, 0.044715
      %v3520 = vmul.f32 %v3501, 0.044715
      %v3521 = vmul.f32 %v3503, 0.044715
      %v3522 = vmul.f32 %v3505, 0.044715
      %v3523 = vmul.f32 %v3515, %v3489
      %v3524 = vmul.f32 %v3516, %v3491
      %v3525 = vmul.f32 %v3517, %v3493
      %v3526 = vmul.f32 %v3518, %v3495
      %v3527 = vmul.f32 %v3519, %v3499
      %v3528 = vmul.f32 %v3520, %v3501
      %v3529 = vmul.f32 %v3521, %v3503
      %v3530 = vmul.f32 %v3522, %v3505
      %v3531 = vmul.f32 %v3523, %v3489
      %v3532 = vmul.f32 %v3524, %v3491
      %v3533 = vmul.f32 %v3525, %v3493
      %v3534 = vmul.f32 %v3526, %v3495
      %v3535 = vmul.f32 %v3527, %v3499
      %v3536 = vmul.f32 %v3528, %v3501
      %v3537 = vmul.f32 %v3529, %v3503
      %v3538 = vmul.f32 %v3530, %v3505
      %v3539 = vadd.f32 %v3489, %v3531
      %v3540 = vadd.f32 %v3491, %v3532
      %v3541 = vadd.f32 %v3493, %v3533
      %v3542 = vadd.f32 %v3495, %v3534
      %v3543 = vadd.f32 %v3499, %v3535
      %v3544 = vadd.f32 %v3501, %v3536
      %v3545 = vadd.f32 %v3503, %v3537
      %v3546 = vadd.f32 %v3505, %v3538
      %v3547 = vmul.f32 %v3539, 0.7978846
      %v3548 = vmul.f32 %v3540, 0.7978846
      %v3549 = vmul.f32 %v3541, 0.7978846
      %v3550 = vmul.f32 %v3542, 0.7978846
      %v3551 = vmul.f32 %v3543, 0.7978846
      %v3552 = vmul.f32 %v3544, 0.7978846
      %v3553 = vmul.f32 %v3545, 0.7978846
      %v3554 = vmul.f32 %v3546, 0.7978846
      %v3555 = vtanh.pop %v3547
      %v3556 = vtanh.pop %v3548
      %v3557 = vtanh.pop %v3549
      %v3558 = vtanh.pop %v3550
      %v3559 = vtanh.pop %v3551
      %v3560 = vtanh.pop %v3552
      %v3561 = vtanh.pop %v3553
      %v3562 = vtanh.pop %v3554
      %v3563 = vadd.f32 %v3555, 1.0
      %v3564 = vadd.f32 %v3556, 1.0
      %v3565 = vadd.f32 %v3557, 1.0
      %v3566 = vadd.f32 %v3558, 1.0
      %v3567 = vadd.f32 %v3559, 1.0
      %v3568 = vadd.f32 %v3560, 1.0
      %v3569 = vadd.f32 %v3561, 1.0
      %v3570 = vadd.f32 %v3562, 1.0
      %v3571 = vmul.f32 %v3507, %v3563
      %v3572 = vmul.f32 %v3508, %v3564
      %v3573 = vmul.f32 %v3509, %v3565
      %v3574 = vmul.f32 %v3510, %v3566
      %v3575 = vmul.f32 %v3511, %v3567
      %v3576 = vmul.f32 %v3512, %v3568
      %v3577 = vmul.f32 %v3513, %v3569
      %v3578 = vmul.f32 %v3514, %v3570
      %s3579 = scalar_lea.vmem %s9, 48
      %v3580 = vld [vmem:[%s3579] sm:$0xff]
      %v3581 = vld [vmem:[%s3579 + $0x8] sm:$0xf]
      %v3582 = vld [vmem:[%s3579 + $0xc] sm:$0xff]
      %v3583 = vld [vmem:[%s3579 + $0x14] sm:$0xf]
      %v3584 = vld [vmem:[%s3579 + $0x18] sm:$0xff]
      %v3585 = vld [vmem:[%s3579 + $0x20] sm:$0xf]
      %v3586 = vld [vmem:[%s3579 + $0x24] sm:$0xff]
      %v3587 = vld [vmem:[%s3579 + $0x2c] sm:$0xf]
      %s3588 = scalar_lea.vmem %s10, 32
      %v3589 = vld [vmem:[%s3588] sm:$0xff]
      %v3590 = vld [vmem:[%s3588 + $0x8] sm:$0xff]
      %v3591 = vld [vmem:[%s3588 + $0x10] sm:$0xff]
      %v3592 = vld [vmem:[%s3588 + $0x18] sm:$0xff]
      %3593 = vrot.lane.b32.xlu0 %v3571, 2
      %v3594 = vpop.permute.xlu0 %3593
      %3595 = vrot.lane.b32.xlu0 %v3573, 2
      %v3596 = vpop.permute.xlu0 %3595
      %3597 = vrot.lane.b32.xlu0 %v3575, 2
      %v3598 = vpop.permute.xlu0 %3597
      %3599 = vrot.lane.b32.xlu0 %v3577, 2
      %v3600 = vpop.permute.xlu0 %3599
      %3601 = vrot.lane.b32.xlu0 %v3572, 2
      %v3602 = vpop.permute.xlu0 %3601
      %3603 = vrot.lane.b32.xlu0 %v3574, 2
      %v3604 = vpop.permute.xlu0 %3603
      %3605 = vrot.lane.b32.xlu0 %v3576, 2
      %v3606 = vpop.permute.xlu0 %3605
      %3607 = vrot.lane.b32.xlu0 %v3578, 2
      %v3608 = vpop.permute.xlu0 %3607
      %v3609 = vsel %vm1541, %v3594, %v3602
      %v3610 = vsel %vm1541, %v3596, %v3604
      %v3611 = vsel %vm1541, %v3598, %v3606
      %v3612 = vsel %vm1541, %v3600, %v3608
      %v3613 = vsel %vm1541, %v3602, %v3594
      %v3614 = vsel %vm1541, %v3604, %v3596
      %v3615 = vsel %vm1541, %v3606, %v3598
      %v3616 = vsel %vm1541, %v3608, %v3600
      %3617 = vrot.lane.b32.xlu0 %v3571, 114
      %v3618 = vpop.permute.xlu0 %3617
      %3619 = vrot.lane.b32.xlu0 %v3573, 114
      %v3620 = vpop.permute.xlu0 %3619
      %3621 = vrot.lane.b32.xlu0 %v3575, 114
      %v3622 = vpop.permute.xlu0 %3621
      %3623 = vrot.lane.b32.xlu0 %v3577, 114
      %v3624 = vpop.permute.xlu0 %3623
      %3625 = vrot.lane.b32.xlu0 %v3572, 114
      %v3626 = vpop.permute.xlu0 %3625
      %3627 = vrot.lane.b32.xlu0 %v3574, 114
      %v3628 = vpop.permute.xlu0 %3627
      %3629 = vrot.lane.b32.xlu0 %v3576, 114
      %v3630 = vpop.permute.xlu0 %3629
      %3631 = vrot.lane.b32.xlu0 %v3578, 114
      %v3632 = vpop.permute.xlu0 %3631
      %v3633 = vsel %vm1566, %v3618, %v3626
      %v3634 = vsel %vm1566, %v3620, %v3628
      %v3635 = vsel %vm1566, %v3622, %v3630
      %v3636 = vsel %vm1566, %v3624, %v3632
      %v3637 = vsel %vm1566, %v3626, %v3618
      %v3638 = vsel %vm1566, %v3628, %v3620
      %v3639 = vsel %vm1566, %v3630, %v3622
      %v3640 = vsel %vm1566, %v3632, %v3624
      %v3641 = vsel %vm1575, %v3633, %v3613
      %v3642 = vsel %vm1576, %v3637, %v3609
      %v3643 = vsel %vm1575, %v3634, %v3614
      %v3644 = vsel %vm1576, %v3638, %v3610
      %v3645 = vsel %vm1575, %v3635, %v3615
      %v3646 = vsel %vm1576, %v3639, %v3611
      %v3647 = vsel %vm1575, %v3636, %v3616
      %v3648 = vsel %vm1576, %v3640, %v3612
      %3649 = vrot.lane.b32.xlu0 %v3571, 126
      %v3650 = vpop.permute.xlu0 %3649
      %3651 = vrot.lane.b32.xlu0 %v3573, 126
      %v3652 = vpop.permute.xlu0 %3651
      %3653 = vrot.lane.b32.xlu0 %v3575, 126
      %v3654 = vpop.permute.xlu0 %3653
      %3655 = vrot.lane.b32.xlu0 %v3577, 126
      %v3656 = vpop.permute.xlu0 %3655
      %3657 = vrot.lane.b32.xlu0 %v3572, 126
      %v3658 = vpop.permute.xlu0 %3657
      %3659 = vrot.lane.b32.xlu0 %v3574, 126
      %v3660 = vpop.permute.xlu0 %3659
      %3661 = vrot.lane.b32.xlu0 %v3576, 126
      %v3662 = vpop.permute.xlu0 %3661
      %3663 = vrot.lane.b32.xlu0 %v3578, 126
      %v3664 = vpop.permute.xlu0 %3663
      %v3665 = vsel %vm1601, %v3650, %v3658
      %v3666 = vsel %vm1601, %v3652, %v3660
      %v3667 = vsel %vm1601, %v3654, %v3662
      %v3668 = vsel %vm1601, %v3656, %v3664
      %v3669 = vsel %vm1601, %v3658, %v3650
      %v3670 = vsel %vm1601, %v3660, %v3652
      %v3671 = vsel %vm1601, %v3662, %v3654
      %v3672 = vsel %vm1601, %v3664, %v3656
      %3673 = vrot.lane.b32.xlu0 %v3571, 14
      %v3674 = vpop.permute.xlu0 %3673
      %3675 = vrot.lane.b32.xlu0 %v3573, 14
      %v3676 = vpop.permute.xlu0 %3675
      %3677 = vrot.lane.b32.xlu0 %v3575, 14
      %v3678 = vpop.permute.xlu0 %3677
      %3679 = vrot.lane.b32.xlu0 %v3577, 14
      %v3680 = vpop.permute.xlu0 %3679
      %3681 = vrot.lane.b32.xlu0 %v3572, 14
      %v3682 = vpop.permute.xlu0 %3681
      %3683 = vrot.lane.b32.xlu0 %v3574, 14
      %v3684 = vpop.permute.xlu0 %3683
      %3685 = vrot.lane.b32.xlu0 %v3576, 14
      %v3686 = vpop.permute.xlu0 %3685
      %3687 = vrot.lane.b32.xlu0 %v3578, 14
      %v3688 = vpop.permute.xlu0 %3687
      %v3689 = vsel %vm1626, %v3674, %v3682
      %v3690 = vsel %vm1626, %v3676, %v3684
      %v3691 = vsel %vm1626, %v3678, %v3686
      %v3692 = vsel %vm1626, %v3680, %v3688
      %v3693 = vsel %vm1626, %v3682, %v3674
      %v3694 = vsel %vm1626, %v3684, %v3676
      %v3695 = vsel %vm1626, %v3686, %v3678
      %v3696 = vsel %vm1626, %v3688, %v3680
      %v3697 = vsel %vm1635, %v3693, %v3665
      %v3698 = vsel %vm1636, %v3689, %v3669
      %v3699 = vsel %vm1635, %v3694, %v3666
      %v3700 = vsel %vm1636, %v3690, %v3670
      %v3701 = vsel %vm1635, %v3695, %v3667
      %v3702 = vsel %vm1636, %v3691, %v3671
      %v3703 = vsel %vm1635, %v3696, %v3668
      %v3704 = vsel %vm1636, %v3692, %v3672
      %3705 = vrot.lane.b32.xlu0 %v3641, 32
      %v3706 = vpop.permute.xlu0 %3705
      %3707 = vrot.lane.b32.xlu0 %v3643, 32
      %v3708 = vpop.permute.xlu0 %3707
      %3709 = vrot.lane.b32.xlu0 %v3645, 32
      %v3710 = vpop.permute.xlu0 %3709
      %3711 = vrot.lane.b32.xlu0 %v3647, 32
      %v3712 = vpop.permute.xlu0 %3711
      %3713 = vrot.lane.b32.xlu0 %v3571, 32
      %v3714 = vpop.permute.xlu0 %3713
      %3715 = vrot.lane.b32.xlu0 %v3573, 32
      %v3716 = vpop.permute.xlu0 %3715
      %3717 = vrot.lane.b32.xlu0 %v3575, 32
      %v3718 = vpop.permute.xlu0 %3717
      %3719 = vrot.lane.b32.xlu0 %v3577, 32
      %v3720 = vpop.permute.xlu0 %3719
      %3721 = vrot.lane.b32.xlu0 %v3697, 32
      %v3722 = vpop.permute.xlu0 %3721
      %3723 = vrot.lane.b32.xlu0 %v3699, 32
      %v3724 = vpop.permute.xlu0 %3723
      %3725 = vrot.lane.b32.xlu0 %v3701, 32
      %v3726 = vpop.permute.xlu0 %3725
      %3727 = vrot.lane.b32.xlu0 %v3703, 32
      %v3728 = vpop.permute.xlu0 %3727
      %3729 = vrot.lane.b32.xlu0 %v3642, 32
      %v3730 = vpop.permute.xlu0 %3729
      %3731 = vrot.lane.b32.xlu0 %v3644, 32
      %v3732 = vpop.permute.xlu0 %3731
      %3733 = vrot.lane.b32.xlu0 %v3646, 32
      %v3734 = vpop.permute.xlu0 %3733
      %3735 = vrot.lane.b32.xlu0 %v3648, 32
      %v3736 = vpop.permute.xlu0 %3735
      %3737 = vrot.lane.b32.xlu0 %v3572, 32
      %v3738 = vpop.permute.xlu0 %3737
      %3739 = vrot.lane.b32.xlu0 %v3574, 32
      %v3740 = vpop.permute.xlu0 %3739
      %3741 = vrot.lane.b32.xlu0 %v3576, 32
      %v3742 = vpop.permute.xlu0 %3741
      %3743 = vrot.lane.b32.xlu0 %v3578, 32
      %v3744 = vpop.permute.xlu0 %3743
      %3745 = vrot.lane.b32.xlu0 %v3698, 32
      %v3746 = vpop.permute.xlu0 %3745
      %3747 = vrot.lane.b32.xlu0 %v3700, 32
      %v3748 = vpop.permute.xlu0 %3747
      %3749 = vrot.lane.b32.xlu0 %v3702, 32
      %v3750 = vpop.permute.xlu0 %3749
      %3751 = vrot.lane.b32.xlu0 %v3704, 32
      %v3752 = vpop.permute.xlu0 %3751
      %v3753 = vsel %vm1693, %v3706, %v3730
      %v3754 = vsel %vm1693, %v3708, %v3732
      %v3755 = vsel %vm1693, %v3710, %v3734
      %v3756 = vsel %vm1693, %v3712, %v3736
      %v3757 = vsel %vm1693, %v3714, %v3738
      %v3758 = vsel %vm1693, %v3716, %v3740
      %v3759 = vsel %vm1693, %v3718, %v3742
      %v3760 = vsel %vm1693, %v3720, %v3744
      %v3761 = vsel %vm1693, %v3722, %v3746
      %v3762 = vsel %vm1693, %v3724, %v3748
      %v3763 = vsel %vm1693, %v3726, %v3750
      %v3764 = vsel %vm1693, %v3728, %v3752
      %v3765 = vsel %vm1693, %v3730, %v3706
      %v3766 = vsel %vm1693, %v3732, %v3708
      %v3767 = vsel %vm1693, %v3734, %v3710
      %v3768 = vsel %vm1693, %v3736, %v3712
      %v3769 = vsel %vm1693, %v3738, %v3714
      %v3770 = vsel %vm1693, %v3740, %v3716
      %v3771 = vsel %vm1693, %v3742, %v3718
      %v3772 = vsel %vm1693, %v3744, %v3720
      %v3773 = vsel %vm1693, %v3746, %v3722
      %v3774 = vsel %vm1693, %v3748, %v3724
      %v3775 = vsel %vm1693, %v3750, %v3726
      %v3776 = vsel %vm1693, %v3752, %v3728
      %3777 = vrot.lane.b32.xlu0 %v3641, 96
      %v3778 = vpop.permute.xlu0 %3777
      %3779 = vrot.lane.b32.xlu0 %v3643, 96
      %v3780 = vpop.permute.xlu0 %3779
      %3781 = vrot.lane.b32.xlu0 %v3645, 96
      %v3782 = vpop.permute.xlu0 %3781
      %3783 = vrot.lane.b32.xlu0 %v3647, 96
      %v3784 = vpop.permute.xlu0 %3783
      %3785 = vrot.lane.b32.xlu0 %v3571, 96
      %v3786 = vpop.permute.xlu0 %3785
      %3787 = vrot.lane.b32.xlu0 %v3573, 96
      %v3788 = vpop.permute.xlu0 %3787
      %3789 = vrot.lane.b32.xlu0 %v3575, 96
      %v3790 = vpop.permute.xlu0 %3789
      %3791 = vrot.lane.b32.xlu0 %v3577, 96
      %v3792 = vpop.permute.xlu0 %3791
      %3793 = vrot.lane.b32.xlu0 %v3697, 96
      %v3794 = vpop.permute.xlu0 %3793
      %3795 = vrot.lane.b32.xlu0 %v3699, 96
      %v3796 = vpop.permute.xlu0 %3795
      %3797 = vrot.lane.b32.xlu0 %v3701, 96
      %v3798 = vpop.permute.xlu0 %3797
      %3799 = vrot.lane.b32.xlu0 %v3703, 96
      %v3800 = vpop.permute.xlu0 %3799
      %3801 = vrot.lane.b32.xlu0 %v3642, 96
      %v3802 = vpop.permute.xlu0 %3801
      %3803 = vrot.lane.b32.xlu0 %v3644, 96
      %v3804 = vpop.permute.xlu0 %3803
      %3805 = vrot.lane.b32.xlu0 %v3646, 96
      %v3806 = vpop.permute.xlu0 %3805
      %3807 = vrot.lane.b32.xlu0 %v3648, 96
      %v3808 = vpop.permute.xlu0 %3807
      %3809 = vrot.lane.b32.xlu0 %v3572, 96
      %v3810 = vpop.permute.xlu0 %3809
      %3811 = vrot.lane.b32.xlu0 %v3574, 96
      %v3812 = vpop.permute.xlu0 %3811
      %3813 = vrot.lane.b32.xlu0 %v3576, 96
      %v3814 = vpop.permute.xlu0 %3813
      %3815 = vrot.lane.b32.xlu0 %v3578, 96
      %v3816 = vpop.permute.xlu0 %3815
      %3817 = vrot.lane.b32.xlu0 %v3698, 96
      %v3818 = vpop.permute.xlu0 %3817
      %3819 = vrot.lane.b32.xlu0 %v3700, 96
      %v3820 = vpop.permute.xlu0 %3819
      %3821 = vrot.lane.b32.xlu0 %v3702, 96
      %v3822 = vpop.permute.xlu0 %3821
      %3823 = vrot.lane.b32.xlu0 %v3704, 96
      %v3824 = vpop.permute.xlu0 %3823
      %v3825 = vsel %vm1766, %v3778, %v3802
      %v3826 = vsel %vm1766, %v3780, %v3804
      %v3827 = vsel %vm1766, %v3782, %v3806
      %v3828 = vsel %vm1766, %v3784, %v3808
      %v3829 = vsel %vm1766, %v3786, %v3810
      %v3830 = vsel %vm1766, %v3788, %v3812
      %v3831 = vsel %vm1766, %v3790, %v3814
      %v3832 = vsel %vm1766, %v3792, %v3816
      %v3833 = vsel %vm1766, %v3794, %v3818
      %v3834 = vsel %vm1766, %v3796, %v3820
      %v3835 = vsel %vm1766, %v3798, %v3822
      %v3836 = vsel %vm1766, %v3800, %v3824
      %v3837 = vsel %vm1766, %v3802, %v3778
      %v3838 = vsel %vm1766, %v3804, %v3780
      %v3839 = vsel %vm1766, %v3806, %v3782
      %v3840 = vsel %vm1766, %v3808, %v3784
      %v3841 = vsel %vm1766, %v3810, %v3786
      %v3842 = vsel %vm1766, %v3812, %v3788
      %v3843 = vsel %vm1766, %v3814, %v3790
      %v3844 = vsel %vm1766, %v3816, %v3792
      %v3845 = vsel %vm1766, %v3818, %v3794
      %v3846 = vsel %vm1766, %v3820, %v3796
      %v3847 = vsel %vm1766, %v3822, %v3798
      %v3848 = vsel %vm1766, %v3824, %v3800
      %v3849 = vpack.c.bf16 %v3766, %v3765
      %v3850 = vpack.c.bf16 %v3754, %v3753
      %v3851 = vpack.c.bf16 %v3768, %v3767
      %v3852 = vpack.c.bf16 %v3756, %v3755
      %v3853 = vpack.c.bf16 %v3770, %v3769
      %v3854 = vpack.c.bf16 %v3758, %v3757
      %v3855 = vpack.c.bf16 %v3772, %v3771
      %v3856 = vpack.c.bf16 %v3760, %v3759
      %v3857 = vpack.c.bf16 %v3774, %v3773
      %v3858 = vpack.c.bf16 %v3762, %v3761
      %v3859 = vpack.c.bf16 %v3776, %v3775
      %v3860 = vpack.c.bf16 %v3764, %v3763
      %v3861 = vpack.c.bf16 %v3643, %v3641
      %v3862 = vpack.c.bf16 %v3644, %v3642
      %v3863 = vpack.c.bf16 %v3647, %v3645
      %v3864 = vpack.c.bf16 %v3648, %v3646
      %v3865 = vpack.c.bf16 %v3573, %v3571
      %v3866 = vpack.c.bf16 %v3574, %v3572
      %v3867 = vpack.c.bf16 %v3577, %v3575
      %v3868 = vpack.c.bf16 %v3578, %v3576
      %v3869 = vpack.c.bf16 %v3699, %v3697
      %v3870 = vpack.c.bf16 %v3700, %v3698
      %v3871 = vpack.c.bf16 %v3703, %v3701
      %v3872 = vpack.c.bf16 %v3704, %v3702
      %v3873 = vpack.c.bf16 %v3826, %v3825
      %v3874 = vpack.c.bf16 %v3838, %v3837
      %v3875 = vpack.c.bf16 %v3828, %v3827
      %v3876 = vpack.c.bf16 %v3840, %v3839
      %v3877 = vpack.c.bf16 %v3830, %v3829
      %v3878 = vpack.c.bf16 %v3842, %v3841
      %v3879 = vpack.c.bf16 %v3832, %v3831
      %v3880 = vpack.c.bf16 %v3844, %v3843
      %v3881 = vpack.c.bf16 %v3834, %v3833
      %v3882 = vpack.c.bf16 %v3846, %v3845
      %v3883 = vpack.c.bf16 %v3836, %v3835
      %v3884 = vpack.c.bf16 %v3848, %v3847
      %3886 = vset.pattern.permute.xlu0 0
      %3887 = vperm.xlu0 %3886, %v3589
      %v3888 = vpop.permute.xlu0 %3887
      %3891 = vset.pattern.permute.xlu0 0
      %3892 = vperm.xlu0 %3891, %v3590
      %v3893 = vpop.permute.xlu0 %3892
      %3896 = vset.pattern.permute.xlu0 0
      %3897 = vperm.xlu0 %3896, %v3591
      %v3898 = vpop.permute.xlu0 %3897
      %3901 = vset.pattern.permute.xlu0 0
      %3902 = vperm.xlu0 %3901, %v3592
      %v3903 = vpop.permute.xlu0 %3902
      %v3913 = vunpack.c.l.b16 %v3580
      %v3914 = vunpack.c.h.b16 %v3580
      %v3915 = vunpack.c.l.b16 %v3581
      %v3916 = vunpack.c.l.b16 %v3582
      %v3917 = vunpack.c.h.b16 %v3582
      %v3918 = vunpack.c.l.b16 %v3583
      %v3919 = vunpack.c.l.b16 %v3584
      %v3920 = vunpack.c.h.b16 %v3584
      %v3921 = vunpack.c.l.b16 %v3585
      %v3922 = vunpack.c.l.b16 %v3586
      %v3923 = vunpack.c.h.b16 %v3586
      %v3924 = vunpack.c.l.b16 %v3587
      %v3925 = vpack.c.b16 %v3916, %v3913
      %v3926 = vpack.c.b16 %v3917, %v3914
      %v3927 = vpack.c.b16 %v3918, %v3915
      %v3928 = vpack.c.b16 %v3922, %v3919
      %v3929 = vpack.c.b16 %v3923, %v3920
      %v3930 = vpack.c.b16 %v3924, %v3921
      %v3936 = vsel %vm1328, %v3927, 0
      %v3939 = vsel %vm1328, %v3930, 0
      %3941 = vmatprep.subr.bf16.mxu0 %v3850
      %3942 = vmatpush1.bf16.msra.mxu0 %v3849
      %3943 = vmatprep.subr.bf16.mxu0 %v3852
      %3944 = vmatpush1.bf16.msra.mxu0 %v3851
      %3945 = vmatprep.subr.bf16.mxu0 %v3854
      %3946 = vmatpush1.bf16.msra.mxu0 %v3853
      %3947 = vmatprep.subr.bf16.mxu0 %v3856
      %3948 = vmatpush1.bf16.msra.mxu0 %v3855
      %3949 = vmatprep.subr.bf16.mxu0 %v3858
      %3950 = vmatpush1.bf16.msra.mxu0 %v3857
      %3951 = vmatprep.subr.bf16.mxu0 %v3860
      %3952 = vmatpush1.bf16.msra.mxu0 %v3859
      %3953 = vmatprep.subr.bf16.mxu0 %v3862
      %3954 = vmatpush1.bf16.msra.mxu0 %v3861
      %3955 = vmatprep.subr.bf16.mxu0 %v3864
      %3956 = vmatpush1.bf16.msra.mxu0 %v3863
      %3957 = vmatprep.subr.bf16.mxu0 %v3866
      %3958 = vmatpush1.bf16.msra.mxu0 %v3865
      %3959 = vmatprep.subr.bf16.mxu0 %v3868
      %3960 = vmatpush1.bf16.msra.mxu0 %v3867
      %3961 = vmatprep.subr.bf16.mxu0 %v3870
      %3962 = vmatpush1.bf16.msra.mxu0 %v3869
      %3963 = vmatprep.subr.bf16.mxu0 %v3872
      %3964 = vmatpush1.bf16.msra.mxu0 %v3871
      %3965 = vmatprep.subr.bf16.mxu0 %v3874
      %3966 = vmatpush1.bf16.msra.mxu0 %v3873
      %3967 = vmatprep.subr.bf16.mxu0 %v3876
      %3968 = vmatpush1.bf16.msra.mxu0 %v3875
      %3969 = vmatprep.subr.bf16.mxu0 %v3878
      %3970 = vmatpush1.bf16.msra.mxu0 %v3877
      %3971 = vmatprep.subr.bf16.mxu0 %v3880
      %3972 = vmatpush1.bf16.msra.mxu0 %v3879
      %3973 = vmatprep.mubr.bf16.mxu0 %v3926
      %3974 = vmatmul.mubr.bf16.gmra.mrb[0].mxu0 %v3925
      %v3975 = vpop.f32.mrb[0].mxu0
      %v3976 = vadd.f32 %v3888, %v3975
      %v3977 = vpop.f32.mrb[0].mxu0
      %v3978 = vadd.f32 %v3888, %v3977
      %v3979 = vpop.f32.mrb[0].mxu0
      %v3980 = vadd.f32 %v3893, %v3979
      %v3981 = vpop.f32.mrb[0].mxu0
      %v3982 = vadd.f32 %v3893, %v3981
      %3983 = vmatprep.mubr.bf16.mxu0 %v3929
      %3984 = vmatmul.mubr.bf16.gmra.mrb[0].mxu0 %v3928
      %v3985 = vpop.f32.mrb[0].mxu0
      %v3986 = vadd.f32 %v3898, %v3985
      %v3987 = vpop.f32.mrb[0].mxu0
      %v3988 = vadd.f32 %v3898, %v3987
      %v3989 = vpop.f32.mrb[0].mxu0
      %v3990 = vadd.f32 %v3903, %v3989
      %v3991 = vpop.f32.mrb[0].mxu0
      %v3992 = vadd.f32 %v3903, %v3991
      %3993 = vdwg.mxu0
      %3994 = vmatprep.subr.bf16.mxu0 %v3882
      %3995 = vmatpush1.bf16.msra.mxu0 %v3881
      %3996 = vmatprep.subr.bf16.mxu0 %v3884
      %3997 = vmatpush1.bf16.msra.mxu0 %v3883
      %3998 = vmatprep.subr.bf16.mxu0 0
      %3999 = vmatpush1.bf16.msra.mxu0 0
      %4000 = vmatprep.subr.bf16.mxu0 0
      %4001 = vmatpush1.bf16.msra.mxu0 0
      %4002 = vmatprep.subr.bf16.mxu0 0
      %4003 = vmatpush1.bf16.msra.mxu0 0
      %4004 = vmatprep.subr.bf16.mxu0 0
      %4005 = vmatpush1.bf16.msra.mxu0 0
      %4006 = vmatprep.subr.bf16.mxu0 0
      %4007 = vmatpush1.bf16.msra.mxu0 0
      %4008 = vmatprep.subr.bf16.mxu0 0
      %4009 = vmatpush1.bf16.msra.mxu0 0
      %4010 = vmatprep.subr.bf16.mxu0 0
      %4011 = vmatpush1.bf16.msra.mxu0 0
      %4012 = vmatprep.subr.bf16.mxu0 0
      %4013 = vmatpush1.bf16.msra.mxu0 0
      %4014 = vmatprep.subr.bf16.mxu0 0
      %4015 = vmatpush1.bf16.msra.mxu0 0
      %4016 = vmatprep.subr.bf16.mxu0 0
      %4017 = vmatpush1.bf16.msra.mxu0 0
      %4018 = vmatprep.subr.bf16.mxu0 0
      %4019 = vmatpush1.bf16.msra.mxu0 0
      %4020 = vmatprep.subr.bf16.mxu0 0
      %4021 = vmatpush1.bf16.msra.mxu0 0
      %4022 = vmatprep.subr.bf16.mxu0 0
      %4023 = vmatpush1.bf16.msra.mxu0 0
      %4024 = vmatprep.subr.bf16.mxu0 0
      %4025 = vmatpush1.bf16.msra.mxu0 0
      %4026 = vmatprep.mubr.bf16.mxu0 0
      %4027 = vmatmul.mubr.bf16.gmra.mrb[0].mxu0 %v3936
      %v4028 = vpop.f32.mrb[0].mxu0
      %v4029 = vadd.f32 %v3976, %v4028
      %v4030 = vpop.f32.mrb[0].mxu0
      %v4031 = vadd.f32 %v3978, %v4030
      %v4032 = vpop.f32.mrb[0].mxu0
      %v4033 = vadd.f32 %v3980, %v4032
      %v4034 = vpop.f32.mrb[0].mxu0
      %v4035 = vadd.f32 %v3982, %v4034
      %4036 = vmatprep.mubr.bf16.mxu0 0
      %4037 = vmatmul.mubr.bf16.gmra.mrb[0].mxu0 %v3939
      %v4038 = vpop.f32.mrb[0].mxu0
      %v4039 = vadd.f32 %v3986, %v4038
      %v4040 = vpop.f32.mrb[0].mxu0
      %v4041 = vadd.f32 %v3988, %v4040
      %v4042 = vpop.f32.mrb[0].mxu0
      %v4043 = vadd.f32 %v3990, %v4042
      %v4044 = vpop.f32.mrb[0].mxu0
      %v4045 = vadd.f32 %v3992, %v4044
      %4046 = vdwg.mxu0
      %v4047 = vmul.f32 %v4029, 0.5
      %v4048 = vmul.f32 %v4031, 0.5
      %v4049 = vmul.f32 %v4033, 0.5
      %v4050 = vmul.f32 %v4035, 0.5
      %v4051 = vmul.f32 %v4039, 0.5
      %v4052 = vmul.f32 %v4041, 0.5
      %v4053 = vmul.f32 %v4043, 0.5
      %v4054 = vmul.f32 %v4045, 0.5
      %v4055 = vmul.f32 %v4029, 0.044715
      %v4056 = vmul.f32 %v4031, 0.044715
      %v4057 = vmul.f32 %v4033, 0.044715
      %v4058 = vmul.f32 %v4035, 0.044715
      %v4059 = vmul.f32 %v4039, 0.044715
      %v4060 = vmul.f32 %v4041, 0.044715
      %v4061 = vmul.f32 %v4043, 0.044715
      %v4062 = vmul.f32 %v4045, 0.044715
      %v4063 = vmul.f32 %v4055, %v4029
      %v4064 = vmul.f32 %v4056, %v4031
      %v4065 = vmul.f32 %v4057, %v4033
      %v4066 = vmul.f32 %v4058, %v4035
      %v4067 = vmul.f32 %v4059, %v4039
      %v4068 = vmul.f32 %v4060, %v4041
      %v4069 = vmul.f32 %v4061, %v4043
      %v4070 = vmul.f32 %v4062, %v4045
      %v4071 = vmul.f32 %v4063, %v4029
      %v4072 = vmul.f32 %v4064, %v4031
      %v4073 = vmul.f32 %v4065, %v4033
      %v4074 = vmul.f32 %v4066, %v4035
      %v4075 = vmul.f32 %v4067, %v4039
      %v4076 = vmul.f32 %v4068, %v4041
      %v4077 = vmul.f32 %v4069, %v4043
      %v4078 = vmul.f32 %v4070, %v4045
      %v4079 = vadd.f32 %v4029, %v4071
      %v4080 = vadd.f32 %v4031, %v4072
      %v4081 = vadd.f32 %v4033, %v4073
      %v4082 = vadd.f32 %v4035, %v4074
      %v4083 = vadd.f32 %v4039, %v4075
      %v4084 = vadd.f32 %v4041, %v4076
      %v4085 = vadd.f32 %v4043, %v4077
      %v4086 = vadd.f32 %v4045, %v4078
      %v4087 = vmul.f32 %v4079, 0.7978846
      %v4088 = vmul.f32 %v4080, 0.7978846
      %v4089 = vmul.f32 %v4081, 0.7978846
      %v4090 = vmul.f32 %v4082, 0.7978846
      %v4091 = vmul.f32 %v4083, 0.7978846
      %v4092 = vmul.f32 %v4084, 0.7978846
      %v4093 = vmul.f32 %v4085, 0.7978846
      %v4094 = vmul.f32 %v4086, 0.7978846
      %v4095 = vtanh.pop %v4087
      %v4096 = vtanh.pop %v4088
      %v4097 = vtanh.pop %v4089
      %v4098 = vtanh.pop %v4090
      %v4099 = vtanh.pop %v4091
      %v4100 = vtanh.pop %v4092
      %v4101 = vtanh.pop %v4093
      %v4102 = vtanh.pop %v4094
      %v4103 = vadd.f32 %v4095, 1.0
      %v4104 = vadd.f32 %v4096, 1.0
      %v4105 = vadd.f32 %v4097, 1.0
      %v4106 = vadd.f32 %v4098, 1.0
      %v4107 = vadd.f32 %v4099, 1.0
      %v4108 = vadd.f32 %v4100, 1.0
      %v4109 = vadd.f32 %v4101, 1.0
      %v4110 = vadd.f32 %v4102, 1.0
      %v4111 = vmul.f32 %v4047, %v4103
      %v4112 = vmul.f32 %v4048, %v4104
      %v4113 = vmul.f32 %v4049, %v4105
      %v4114 = vmul.f32 %v4050, %v4106
      %v4115 = vmul.f32 %v4051, %v4107
      %v4116 = vmul.f32 %v4052, %v4108
      %v4117 = vmul.f32 %v4053, %v4109
      %v4118 = vmul.f32 %v4054, %v4110
      %s4119 = scalar_lea.vmem %s11, 48
      %v4120 = vld [vmem:[%s4119] sm:$0xff]
      %v4121 = vld [vmem:[%s4119 + $0x8] sm:$0xf]
      %v4122 = vld [vmem:[%s4119 + $0xc] sm:$0xff]
      %v4123 = vld [vmem:[%s4119 + $0x14] sm:$0xf]
      %v4124 = vld [vmem:[%s4119 + $0x18] sm:$0xff]
      %v4125 = vld [vmem:[%s4119 + $0x20] sm:$0xf]
      %v4126 = vld [vmem:[%s4119 + $0x24] sm:$0xff]
      %v4127 = vld [vmem:[%s4119 + $0x2c] sm:$0xf]
      %s4128 = scalar_lea.vmem %s12, 32
      %v4129 = vld [vmem:[%s4128] sm:$0xff]
      %v4130 = vld [vmem:[%s4128 + $0x8] sm:$0xff]
      %v4131 = vld [vmem:[%s4128 + $0x10] sm:$0xff]
      %v4132 = vld [vmem:[%s4128 + $0x18] sm:$0xff]
      %4133 = vrot.lane.b32.xlu0 %v4111, 1
      %v4134 = vpop.permute.xlu0 %4133
      %4135 = vrot.lane.b32.xlu0 %v4113, 1
      %v4136 = vpop.permute.xlu0 %4135
      %4137 = vrot.lane.b32.xlu0 %v4115, 1
      %v4138 = vpop.permute.xlu0 %4137
      %4139 = vrot.lane.b32.xlu0 %v4117, 1
      %v4140 = vpop.permute.xlu0 %4139
      %4141 = vrot.lane.b32.xlu0 %v4112, 1
      %v4142 = vpop.permute.xlu0 %4141
      %4143 = vrot.lane.b32.xlu0 %v4114, 1
      %v4144 = vpop.permute.xlu0 %4143
      %4145 = vrot.lane.b32.xlu0 %v4116, 1
      %v4146 = vpop.permute.xlu0 %4145
      %4147 = vrot.lane.b32.xlu0 %v4118, 1
      %v4148 = vpop.permute.xlu0 %4147
      %v4149 = vsel %vm992, %v4134, %v4142
      %v4150 = vsel %vm992, %v4136, %v4144
      %v4151 = vsel %vm992, %v4138, %v4146
      %v4152 = vsel %vm992, %v4140, %v4148
      %v4153 = vsel %vm992, %v4142, %v4134
      %v4154 = vsel %vm992, %v4144, %v4136
      %v4155 = vsel %vm992, %v4146, %v4138
      %v4156 = vsel %vm992, %v4148, %v4140
      %4157 = vrot.lane.b32.xlu0 %v4111, 113
      %v4158 = vpop.permute.xlu0 %4157
      %4159 = vrot.lane.b32.xlu0 %v4113, 113
      %v4160 = vpop.permute.xlu0 %4159
      %4161 = vrot.lane.b32.xlu0 %v4115, 113
      %v4162 = vpop.permute.xlu0 %4161
      %4163 = vrot.lane.b32.xlu0 %v4117, 113
      %v4164 = vpop.permute.xlu0 %4163
      %4165 = vrot.lane.b32.xlu0 %v4112, 113
      %v4166 = vpop.permute.xlu0 %4165
      %4167 = vrot.lane.b32.xlu0 %v4114, 113
      %v4168 = vpop.permute.xlu0 %4167
      %4169 = vrot.lane.b32.xlu0 %v4116, 113
      %v4170 = vpop.permute.xlu0 %4169
      %4171 = vrot.lane.b32.xlu0 %v4118, 113
      %v4172 = vpop.permute.xlu0 %4171
      %v4173 = vsel %vm1017, %v4158, %v4166
      %v4174 = vsel %vm1017, %v4160, %v4168
      %v4175 = vsel %vm1017, %v4162, %v4170
      %v4176 = vsel %vm1017, %v4164, %v4172
      %v4177 = vsel %vm1017, %v4166, %v4158
      %v4178 = vsel %vm1017, %v4168, %v4160
      %v4179 = vsel %vm1017, %v4170, %v4162
      %v4180 = vsel %vm1017, %v4172, %v4164
      %v4181 = vsel %vm1026, %v4173, %v4153
      %v4182 = vsel %vm1027, %v4177, %v4149
      %v4183 = vsel %vm1026, %v4174, %v4154
      %v4184 = vsel %vm1027, %v4178, %v4150
      %v4185 = vsel %vm1026, %v4175, %v4155
      %v4186 = vsel %vm1027, %v4179, %v4151
      %v4187 = vsel %vm1026, %v4176, %v4156
      %v4188 = vsel %vm1027, %v4180, %v4152
      %4189 = vrot.lane.b32.xlu0 %v4111, 127
      %v4190 = vpop.permute.xlu0 %4189
      %4191 = vrot.lane.b32.xlu0 %v4113, 127
      %v4192 = vpop.permute.xlu0 %4191
      %4193 = vrot.lane.b32.xlu0 %v4115, 127
      %v4194 = vpop.permute.xlu0 %4193
      %4195 = vrot.lane.b32.xlu0 %v4117, 127
      %v4196 = vpop.permute.xlu0 %4195
      %4197 = vrot.lane.b32.xlu0 %v4112, 127
      %v4198 = vpop.permute.xlu0 %4197
      %4199 = vrot.lane.b32.xlu0 %v4114, 127
      %v4200 = vpop.permute.xlu0 %4199
      %4201 = vrot.lane.b32.xlu0 %v4116, 127
      %v4202 = vpop.permute.xlu0 %4201
      %4203 = vrot.lane.b32.xlu0 %v4118, 127
      %v4204 = vpop.permute.xlu0 %4203
      %v4205 = vsel %vm1052, %v4190, %v4198
      %v4206 = vsel %vm1052, %v4192, %v4200
      %v4207 = vsel %vm1052, %v4194, %v4202
      %v4208 = vsel %vm1052, %v4196, %v4204
      %v4209 = vsel %vm1052, %v4198, %v4190
      %v4210 = vsel %vm1052, %v4200, %v4192
      %v4211 = vsel %vm1052, %v4202, %v4194
      %v4212 = vsel %vm1052, %v4204, %v4196
      %4213 = vrot.lane.b32.xlu0 %v4111, 15
      %v4214 = vpop.permute.xlu0 %4213
      %4215 = vrot.lane.b32.xlu0 %v4113, 15
      %v4216 = vpop.permute.xlu0 %4215
      %4217 = vrot.lane.b32.xlu0 %v4115, 15
      %v4218 = vpop.permute.xlu0 %4217
      %4219 = vrot.lane.b32.xlu0 %v4117, 15
      %v4220 = vpop.permute.xlu0 %4219
      %4221 = vrot.lane.b32.xlu0 %v4112, 15
      %v4222 = vpop.permute.xlu0 %4221
      %4223 = vrot.lane.b32.xlu0 %v4114, 15
      %v4224 = vpop.permute.xlu0 %4223
      %4225 = vrot.lane.b32.xlu0 %v4116, 15
      %v4226 = vpop.permute.xlu0 %4225
      %4227 = vrot.lane.b32.xlu0 %v4118, 15
      %v4228 = vpop.permute.xlu0 %4227
      %v4229 = vsel %vm1077, %v4214, %v4222
      %v4230 = vsel %vm1077, %v4216, %v4224
      %v4231 = vsel %vm1077, %v4218, %v4226
      %v4232 = vsel %vm1077, %v4220, %v4228
      %v4233 = vsel %vm1077, %v4222, %v4214
      %v4234 = vsel %vm1077, %v4224, %v4216
      %v4235 = vsel %vm1077, %v4226, %v4218
      %v4236 = vsel %vm1077, %v4228, %v4220
      %v4237 = vsel %vm1086, %v4233, %v4205
      %v4238 = vsel %vm1087, %v4229, %v4209
      %v4239 = vsel %vm1086, %v4234, %v4206
      %v4240 = vsel %vm1087, %v4230, %v4210
      %v4241 = vsel %vm1086, %v4235, %v4207
      %v4242 = vsel %vm1087, %v4231, %v4211
      %v4243 = vsel %vm1086, %v4236, %v4208
      %v4244 = vsel %vm1087, %v4232, %v4212
      %4245 = vrot.lane.b32.xlu0 %v4181, 16
      %v4246 = vpop.permute.xlu0 %4245
      %4247 = vrot.lane.b32.xlu0 %v4183, 16
      %v4248 = vpop.permute.xlu0 %4247
      %4249 = vrot.lane.b32.xlu0 %v4185, 16
      %v4250 = vpop.permute.xlu0 %4249
      %4251 = vrot.lane.b32.xlu0 %v4187, 16
      %v4252 = vpop.permute.xlu0 %4251
      %4253 = vrot.lane.b32.xlu0 %v4111, 16
      %v4254 = vpop.permute.xlu0 %4253
      %4255 = vrot.lane.b32.xlu0 %v4113, 16
      %v4256 = vpop.permute.xlu0 %4255
      %4257 = vrot.lane.b32.xlu0 %v4115, 16
      %v4258 = vpop.permute.xlu0 %4257
      %4259 = vrot.lane.b32.xlu0 %v4117, 16
      %v4260 = vpop.permute.xlu0 %4259
      %4261 = vrot.lane.b32.xlu0 %v4237, 16
      %v4262 = vpop.permute.xlu0 %4261
      %4263 = vrot.lane.b32.xlu0 %v4239, 16
      %v4264 = vpop.permute.xlu0 %4263
      %4265 = vrot.lane.b32.xlu0 %v4241, 16
      %v4266 = vpop.permute.xlu0 %4265
      %4267 = vrot.lane.b32.xlu0 %v4243, 16
      %v4268 = vpop.permute.xlu0 %4267
      %4269 = vrot.lane.b32.xlu0 %v4182, 16
      %v4270 = vpop.permute.xlu0 %4269
      %4271 = vrot.lane.b32.xlu0 %v4184, 16
      %v4272 = vpop.permute.xlu0 %4271
      %4273 = vrot.lane.b32.xlu0 %v4186, 16
      %v4274 = vpop.permute.xlu0 %4273
      %4275 = vrot.lane.b32.xlu0 %v4188, 16
      %v4276 = vpop.permute.xlu0 %4275
      %4277 = vrot.lane.b32.xlu0 %v4112, 16
      %v4278 = vpop.permute.xlu0 %4277
      %4279 = vrot.lane.b32.xlu0 %v4114, 16
      %v4280 = vpop.permute.xlu0 %4279
      %4281 = vrot.lane.b32.xlu0 %v4116, 16
      %v4282 = vpop.permute.xlu0 %4281
      %4283 = vrot.lane.b32.xlu0 %v4118, 16
      %v4284 = vpop.permute.xlu0 %4283
      %4285 = vrot.lane.b32.xlu0 %v4238, 16
      %v4286 = vpop.permute.xlu0 %4285
      %4287 = vrot.lane.b32.xlu0 %v4240, 16
      %v4288 = vpop.permute.xlu0 %4287
      %4289 = vrot.lane.b32.xlu0 %v4242, 16
      %v4290 = vpop.permute.xlu0 %4289
      %4291 = vrot.lane.b32.xlu0 %v4244, 16
      %v4292 = vpop.permute.xlu0 %4291
      %v4293 = vsel %vm1144, %v4246, %v4270
      %v4294 = vsel %vm1144, %v4248, %v4272
      %v4295 = vsel %vm1144, %v4250, %v4274
      %v4296 = vsel %vm1144, %v4252, %v4276
      %v4297 = vsel %vm1144, %v4254, %v4278
      %v4298 = vsel %vm1144, %v4256, %v4280
      %v4299 = vsel %vm1144, %v4258, %v4282
      %v4300 = vsel %vm1144, %v4260, %v4284
      %v4301 = vsel %vm1144, %v4262, %v4286
      %v4302 = vsel %vm1144, %v4264, %v4288
      %v4303 = vsel %vm1144, %v4266, %v4290
      %v4304 = vsel %vm1144, %v4268, %v4292
      %v4305 = vsel %vm1144, %v4270, %v4246
      %v4306 = vsel %vm1144, %v4272, %v4248
      %v4307 = vsel %vm1144, %v4274, %v4250
      %v4308 = vsel %vm1144, %v4276, %v4252
      %v4309 = vsel %vm1144, %v4278, %v4254
      %v4310 = vsel %vm1144, %v4280, %v4256
      %v4311 = vsel %vm1144, %v4282, %v4258
      %v4312 = vsel %vm1144, %v4284, %v4260
      %v4313 = vsel %vm1144, %v4286, %v4262
      %v4314 = vsel %vm1144, %v4288, %v4264
      %v4315 = vsel %vm1144, %v4290, %v4266
      %v4316 = vsel %vm1144, %v4292, %v4268
      %4317 = vrot.lane.b32.xlu0 %v4181, 112
      %v4318 = vpop.permute.xlu0 %4317
      %4319 = vrot.lane.b32.xlu0 %v4183, 112
      %v4320 = vpop.permute.xlu0 %4319
      %4321 = vrot.lane.b32.xlu0 %v4185, 112
      %v4322 = vpop.permute.xlu0 %4321
      %4323 = vrot.lane.b32.xlu0 %v4187, 112
      %v4324 = vpop.permute.xlu0 %4323
      %4325 = vrot.lane.b32.xlu0 %v4111, 112
      %v4326 = vpop.permute.xlu0 %4325
      %4327 = vrot.lane.b32.xlu0 %v4113, 112
      %v4328 = vpop.permute.xlu0 %4327
      %4329 = vrot.lane.b32.xlu0 %v4115, 112
      %v4330 = vpop.permute.xlu0 %4329
      %4331 = vrot.lane.b32.xlu0 %v4117, 112
      %v4332 = vpop.permute.xlu0 %4331
      %4333 = vrot.lane.b32.xlu0 %v4237, 112
      %v4334 = vpop.permute.xlu0 %4333
      %4335 = vrot.lane.b32.xlu0 %v4239, 112
      %v4336 = vpop.permute.xlu0 %4335
      %4337 = vrot.lane.b32.xlu0 %v4241, 112
      %v4338 = vpop.permute.xlu0 %4337
      %4339 = vrot.lane.b32.xlu0 %v4243, 112
      %v4340 = vpop.permute.xlu0 %4339
      %4341 = vrot.lane.b32.xlu0 %v4182, 112
      %v4342 = vpop.permute.xlu0 %4341
      %4343 = vrot.lane.b32.xlu0 %v4184, 112
      %v4344 = vpop.permute.xlu0 %4343
      %4345 = vrot.lane.b32.xlu0 %v4186, 112
      %v4346 = vpop.permute.xlu0 %4345
      %4347 = vrot.lane.b32.xlu0 %v4188, 112
      %v4348 = vpop.permute.xlu0 %4347
      %4349 = vrot.lane.b32.xlu0 %v4112, 112
      %v4350 = vpop.permute.xlu0 %4349
      %4351 = vrot.lane.b32.xlu0 %v4114, 112
      %v4352 = vpop.permute.xlu0 %4351
      %4353 = vrot.lane.b32.xlu0 %v4116, 112
      %v4354 = vpop.permute.xlu0 %4353
      %4355 = vrot.lane.b32.xlu0 %v4118, 112
      %v4356 = vpop.permute.xlu0 %4355
      %4357 = vrot.lane.b32.xlu0 %v4238, 112
      %v4358 = vpop.permute.xlu0 %4357
      %4359 = vrot.lane.b32.xlu0 %v4240, 112
      %v4360 = vpop.permute.xlu0 %4359
      %4361 = vrot.lane.b32.xlu0 %v4242, 112
      %v4362 = vpop.permute.xlu0 %4361
      %4363 = vrot.lane.b32.xlu0 %v4244, 112
      %v4364 = vpop.permute.xlu0 %4363
      %v4365 = vsel %vm1217, %v4318, %v4342
      %v4366 = vsel %vm1217, %v4320, %v4344
      %v4367 = vsel %vm1217, %v4322, %v4346
      %v4368 = vsel %vm1217, %v4324, %v4348
      %v4369 = vsel %vm1217, %v4326, %v4350
      %v4370 = vsel %vm1217, %v4328, %v4352
      %v4371 = vsel %vm1217, %v4330, %v4354
      %v4372 = vsel %vm1217, %v4332, %v4356
      %v4373 = vsel %vm1217, %v4334, %v4358
      %v4374 = vsel %vm1217, %v4336, %v4360
      %v4375 = vsel %vm1217, %v4338, %v4362
      %v4376 = vsel %vm1217, %v4340, %v4364
      %v4377 = vsel %vm1217, %v4342, %v4318
      %v4378 = vsel %vm1217, %v4344, %v4320
      %v4379 = vsel %vm1217, %v4346, %v4322
      %v4380 = vsel %vm1217, %v4348, %v4324
      %v4381 = vsel %vm1217, %v4350, %v4326
      %v4382 = vsel %vm1217, %v4352, %v4328
      %v4383 = vsel %vm1217, %v4354, %v4330
      %v4384 = vsel %vm1217, %v4356, %v4332
      %v4385 = vsel %vm1217, %v4358, %v4334
      %v4386 = vsel %vm1217, %v4360, %v4336
      %v4387 = vsel %vm1217, %v4362, %v4338
      %v4388 = vsel %vm1217, %v4364, %v4340
      %v4389 = vpack.c.bf16 %v4306, %v4305
      %v4390 = vpack.c.bf16 %v4294, %v4293
      %v4391 = vpack.c.bf16 %v4308, %v4307
      %v4392 = vpack.c.bf16 %v4296, %v4295
      %v4393 = vpack.c.bf16 %v4310, %v4309
      %v4394 = vpack.c.bf16 %v4298, %v4297
      %v4395 = vpack.c.bf16 %v4312, %v4311
      %v4396 = vpack.c.bf16 %v4300, %v4299
      %v4397 = vpack.c.bf16 %v4314, %v4313
      %v4398 = vpack.c.bf16 %v4302, %v4301
      %v4399 = vpack.c.bf16 %v4316, %v4315
      %v4400 = vpack.c.bf16 %v4304, %v4303
      %v4401 = vpack.c.bf16 %v4183, %v4181
      %v4402 = vpack.c.bf16 %v4184, %v4182
      %v4403 = vpack.c.bf16 %v4187, %v4185
      %v4404 = vpack.c.bf16 %v4188, %v4186
      %v4405 = vpack.c.bf16 %v4113, %v4111
      %v4406 = vpack.c.bf16 %v4114, %v4112
      %v4407 = vpack.c.bf16 %v4117, %v4115
      %v4408 = vpack.c.bf16 %v4118, %v4116
      %v4409 = vpack.c.bf16 %v4239, %v4237
      %v4410 = vpack.c.bf16 %v4240, %v4238
      %v4411 = vpack.c.bf16 %v4243, %v4241
      %v4412 = vpack.c.bf16 %v4244, %v4242
      %v4413 = vpack.c.bf16 %v4366, %v4365
      %v4414 = vpack.c.bf16 %v4378, %v4377
      %v4415 = vpack.c.bf16 %v4368, %v4367
      %v4416 = vpack.c.bf16 %v4380, %v4379
      %v4417 = vpack.c.bf16 %v4370, %v4369
      %v4418 = vpack.c.bf16 %v4382, %v4381
      %v4419 = vpack.c.bf16 %v4372, %v4371
      %v4420 = vpack.c.bf16 %v4384, %v4383
      %v4421 = vpack.c.bf16 %v4374, %v4373
      %v4422 = vpack.c.bf16 %v4386, %v4385
      %v4423 = vpack.c.bf16 %v4376, %v4375
      %v4424 = vpack.c.bf16 %v4388, %v4387
      %4426 = vset.pattern.permute.xlu0 0
      %4427 = vperm.xlu0 %4426, %v4129
      %v4428 = vpop.permute.xlu0 %4427
      %4431 = vset.pattern.permute.xlu0 0
      %4432 = vperm.xlu0 %4431, %v4130
      %v4433 = vpop.permute.xlu0 %4432
      %4436 = vset.pattern.permute.xlu0 0
      %4437 = vperm.xlu0 %4436, %v4131
      %v4438 = vpop.permute.xlu0 %4437
      %4441 = vset.pattern.permute.xlu0 0
      %4442 = vperm.xlu0 %4441, %v4132
      %v4443 = vpop.permute.xlu0 %4442
      %v4453 = vunpack.c.l.b16 %v4120
      %v4454 = vunpack.c.h.b16 %v4120
      %v4455 = vunpack.c.l.b16 %v4121
      %v4456 = vunpack.c.l.b16 %v4122
      %v4457 = vunpack.c.h.b16 %v4122
      %v4458 = vunpack.c.l.b16 %v4123
      %v4459 = vunpack.c.l.b16 %v4124
      %v4460 = vunpack.c.h.b16 %v4124
      %v4461 = vunpack.c.l.b16 %v4125
      %v4462 = vunpack.c.l.b16 %v4126
      %v4463 = vunpack.c.h.b16 %v4126
      %v4464 = vunpack.c.l.b16 %v4127
      %v4465 = vpack.c.b16 %v4456, %v4453
      %v4466 = vpack.c.b16 %v4457, %v4454
      %v4467 = vpack.c.b16 %v4458, %v4455
      %v4468 = vpack.c.b16 %v4462, %v4459
      %v4469 = vpack.c.b16 %v4463, %v4460
      %v4470 = vpack.c.b16 %v4464, %v4461
      %v4476 = vsel %vm1328, %v4467, 0
      %v4479 = vsel %vm1328, %v4470, 0
      %4481 = vmatprep.subr.bf16.mxu0 %v4390
      %4482 = vmatpush1.bf16.msra.mxu0 %v4389
      %4483 = vmatprep.subr.bf16.mxu0 %v4392
      %4484 = vmatpush1.bf16.msra.mxu0 %v4391
      %4485 = vmatprep.subr.bf16.mxu0 %v4394
      %4486 = vmatpush1.bf16.msra.mxu0 %v4393
      %4487 = vmatprep.subr.bf16.mxu0 %v4396
      %4488 = vmatpush1.bf16.msra.mxu0 %v4395
      %4489 = vmatprep.subr.bf16.mxu0 %v4398
      %4490 = vmatpush1.bf16.msra.mxu0 %v4397
      %4491 = vmatprep.subr.bf16.mxu0 %v4400
      %4492 = vmatpush1.bf16.msra.mxu0 %v4399
      %4493 = vmatprep.subr.bf16.mxu0 %v4402
      %4494 = vmatpush1.bf16.msra.mxu0 %v4401
      %4495 = vmatprep.subr.bf16.mxu0 %v4404
      %4496 = vmatpush1.bf16.msra.mxu0 %v4403
      %4497 = vmatprep.subr.bf16.mxu0 %v4406
      %4498 = vmatpush1.bf16.msra.mxu0 %v4405
      %4499 = vmatprep.subr.bf16.mxu0 %v4408
      %4500 = vmatpush1.bf16.msra.mxu0 %v4407
      %4501 = vmatprep.subr.bf16.mxu0 %v4410
      %4502 = vmatpush1.bf16.msra.mxu0 %v4409
      %4503 = vmatprep.subr.bf16.mxu0 %v4412
      %4504 = vmatpush1.bf16.msra.mxu0 %v4411
      %4505 = vmatprep.subr.bf16.mxu0 %v4414
      %4506 = vmatpush1.bf16.msra.mxu0 %v4413
      %4507 = vmatprep.subr.bf16.mxu0 %v4416
      %4508 = vmatpush1.bf16.msra.mxu0 %v4415
      %4509 = vmatprep.subr.bf16.mxu0 %v4418
      %4510 = vmatpush1.bf16.msra.mxu0 %v4417
      %4511 = vmatprep.subr.bf16.mxu0 %v4420
      %4512 = vmatpush1.bf16.msra.mxu0 %v4419
      %4513 = vmatprep.mubr.bf16.mxu0 %v4466
      %4514 = vmatmul.mubr.bf16.gmra.mrb[0].mxu0 %v4465
      %v4515 = vpop.f32.mrb[0].mxu0
      %v4516 = vadd.f32 %v4428, %v4515
      %v4517 = vpop.f32.mrb[0].mxu0
      %v4518 = vadd.f32 %v4428, %v4517
      %v4519 = vpop.f32.mrb[0].mxu0
      %v4520 = vadd.f32 %v4433, %v4519
      %v4521 = vpop.f32.mrb[0].mxu0
      %v4522 = vadd.f32 %v4433, %v4521
      %4523 = vmatprep.mubr.bf16.mxu0 %v4469
      %4524 = vmatmul.mubr.bf16.gmra.mrb[0].mxu0 %v4468
      %v4525 = vpop.f32.mrb[0].mxu0
      %v4526 = vadd.f32 %v4438, %v4525
      %v4527 = vpop.f32.mrb[0].mxu0
      %v4528 = vadd.f32 %v4438, %v4527
      %v4529 = vpop.f32.mrb[0].mxu0
      %v4530 = vadd.f32 %v4443, %v4529
      %v4531 = vpop.f32.mrb[0].mxu0
      %v4532 = vadd.f32 %v4443, %v4531
      %4533 = vdwg.mxu0
      %4534 = vmatprep.subr.bf16.mxu0 %v4422
      %4535 = vmatpush1.bf16.msra.mxu0 %v4421
      %4536 = vmatprep.subr.bf16.mxu0 %v4424
      %4537 = vmatpush1.bf16.msra.mxu0 %v4423
      %4538 = vmatprep.subr.bf16.mxu0 0
      %4539 = vmatpush1.bf16.msra.mxu0 0
      %4540 = vmatprep.subr.bf16.mxu0 0
      %4541 = vmatpush1.bf16.msra.mxu0 0
      %4542 = vmatprep.subr.bf16.mxu0 0
      %4543 = vmatpush1.bf16.msra.mxu0 0
      %4544 = vmatprep.subr.bf16.mxu0 0
      %4545 = vmatpush1.bf16.msra.mxu0 0
      %4546 = vmatprep.subr.bf16.mxu0 0
      %4547 = vmatpush1.bf16.msra.mxu0 0
      %4548 = vmatprep.subr.bf16.mxu0 0
      %4549 = vmatpush1.bf16.msra.mxu0 0
      %4550 = vmatprep.subr.bf16.mxu0 0
      %4551 = vmatpush1.bf16.msra.mxu0 0
      %4552 = vmatprep.subr.bf16.mxu0 0
      %4553 = vmatpush1.bf16.msra.mxu0 0
      %4554 = vmatprep.subr.bf16.mxu0 0
      %4555 = vmatpush1.bf16.msra.mxu0 0
      %4556 = vmatprep.subr.bf16.mxu0 0
      %4557 = vmatpush1.bf16.msra.mxu0 0
      %4558 = vmatprep.subr.bf16.mxu0 0
      %4559 = vmatpush1.bf16.msra.mxu0 0
      %4560 = vmatprep.subr.bf16.mxu0 0
      %4561 = vmatpush1.bf16.msra.mxu0 0
      %4562 = vmatprep.subr.bf16.mxu0 0
      %4563 = vmatpush1.bf16.msra.mxu0 0
      %4564 = vmatprep.subr.bf16.mxu0 0
      %4565 = vmatpush1.bf16.msra.mxu0 0
      %4566 = vmatprep.mubr.bf16.mxu0 0
      %4567 = vmatmul.mubr.bf16.gmra.mrb[0].mxu0 %v4476
      %v4568 = vpop.f32.mrb[0].mxu0
      %v4569 = vadd.f32 %v4516, %v4568
      %v4570 = vpop.f32.mrb[0].mxu0
      %v4571 = vadd.f32 %v4518, %v4570
      %v4572 = vpop.f32.mrb[0].mxu0
      %v4573 = vadd.f32 %v4520, %v4572
      %v4574 = vpop.f32.mrb[0].mxu0
      %v4575 = vadd.f32 %v4522, %v4574
      %4576 = vmatprep.mubr.bf16.mxu0 0
      %4577 = vmatmul.mubr.bf16.gmra.mrb[0].mxu0 %v4479
      %v4578 = vpop.f32.mrb[0].mxu0
      %v4579 = vadd.f32 %v4526, %v4578
      %v4580 = vpop.f32.mrb[0].mxu0
      %v4581 = vadd.f32 %v4528, %v4580
      %v4582 = vpop.f32.mrb[0].mxu0
      %v4583 = vadd.f32 %v4530, %v4582
      %v4584 = vpop.f32.mrb[0].mxu0
      %v4585 = vadd.f32 %v4532, %v4584
      %4586 = vdwg.mxu0
      %v4587 = vadd.f32 %v2895, %v4569
      %v4588 = vadd.f32 %v2896, %v4571
      %v4589 = vadd.f32 %v2897, %v4573
      %v4590 = vadd.f32 %v2898, %v4575
      %v4591 = vadd.f32 %v2899, %v4579
      %v4592 = vadd.f32 %v2900, %v4581
      %v4593 = vadd.f32 %v2901, %v4583
      %v4594 = vadd.f32 %v2902, %v4585
      %s4595 = scalar_lea.vmem %s13, 32
      %v4596 = vld [vmem:[%s4595] sm:$0xff]
      %v4597 = vld [vmem:[%s4595 + $0x8] sm:$0xff]
      %v4598 = vld [vmem:[%s4595 + $0x10] sm:$0xff]
      %v4599 = vld [vmem:[%s4595 + $0x18] sm:$0xff]
      %s4600 = scalar_lea.vmem %s14, 32
      %v4601 = vld [vmem:[%s4600] sm:$0xff]
      %v4602 = vld [vmem:[%s4600 + $0x8] sm:$0xff]
      %v4603 = vld [vmem:[%s4600 + $0x10] sm:$0xff]
      %v4604 = vld [vmem:[%s4600 + $0x18] sm:$0xff]
      %v4605 = vadd.f32 %v4587, %v4588
      %v4606 = vadd.f32 %v4605, %v4589
      %v4607 = vadd.f32 %v4606, %v4590
      %v4608 = vadd.f32 %v4607, %v4591
      %v4609 = vadd.f32 %v4608, %v4592
      %v4610 = vadd.f32 %v4609, %v4593
      %v4611 = vadd.f32 %v4610, %v4594
      %4612 = vadd.xlane.f32.xlu0 %v4611
      %v4613 = vpop.xlane.xlu0 %4612
      %v4614 = vrot.slane %v4613, 4
      %v4615 = vadd.f32 %v4613, %v4614
      %v4616 = vrot.slane %v4615, 2
      %v4617 = vadd.f32 %v4615, %v4616
      %v4618 = vrot.slane %v4617, 1
      %v4619 = vadd.f32 %v4617, %v4618
      %s4620 = vtos %v4619
      %v4621 = vmul.f32 %v4587, %v4587
      %v4622 = vmul.f32 %v4588, %v4588
      %v4623 = vmul.f32 %v4589, %v4589
      %v4624 = vmul.f32 %v4590, %v4590
      %v4625 = vmul.f32 %v4591, %v4591
      %v4626 = vmul.f32 %v4592, %v4592
      %v4627 = vmul.f32 %v4593, %v4593
      %v4628 = vmul.f32 %v4594, %v4594
      %v4629 = vadd.f32 %v4621, %v4622
      %v4630 = vadd.f32 %v4629, %v4623
      %v4631 = vadd.f32 %v4630, %v4624
      %v4632 = vadd.f32 %v4631, %v4625
      %v4633 = vadd.f32 %v4632, %v4626
      %v4634 = vadd.f32 %v4633, %v4627
      %v4635 = vadd.f32 %v4634, %v4628
      %4636 = vadd.xlane.f32.xlu0 %v4635
      %v4637 = vpop.xlane.xlu0 %4636
      %v4638 = vrot.slane %v4637, 4
      %v4639 = vadd.f32 %v4637, %v4638
      %v4640 = vrot.slane %v4639, 2
      %v4641 = vadd.f32 %v4639, %v4640
      %v4642 = vrot.slane %v4641, 1
      %v4643 = vadd.f32 %v4641, %v4642
      %s4644 = vtos %v4643
      %v4645 = vrcp.pop 8192.0
      %s4646 = vtos %v4645
      %s4647 = smul.f32 %s4620, %s4646
      %v4648 = vrcp.pop 8192.0
      %s4649 = vtos %v4648
      %s4650 = smul.f32 %s4644, %s4649
      %s4651 = smul.f32 %s4647, %s4647
      %s4652 = ssub.f32 %s4650, %s4651
      %s4653 = sadd.f32 %s4652, 1e-05
      %v4654 = vstv %s4653
      %v4655 = vrsqrt.pop %v4654
      %s4656 = vtos %v4655
      %v4657 = vstv %s4647
      %v4658 = vsub.f32 %v4587, %v4657
      %v4659 = vsub.f32 %v4588, %v4657
      %v4660 = vsub.f32 %v4589, %v4657
      %v4661 = vsub.f32 %v4590, %v4657
      %v4662 = vsub.f32 %v4591, %v4657
      %v4663 = vsub.f32 %v4592, %v4657
      %v4664 = vsub.f32 %v4593, %v4657
      %v4665 = vsub.f32 %v4594, %v4657
      %v4666 = vstv %s4656
      %v4667 = vmul.f32 %v4658, %v4666
      %v4668 = vmul.f32 %v4659, %v4666
      %v4669 = vmul.f32 %v4660, %v4666
      %v4670 = vmul.f32 %v4661, %v4666
      %v4671 = vmul.f32 %v4662, %v4666
      %v4672 = vmul.f32 %v4663, %v4666
      %v4673 = vmul.f32 %v4664, %v4666
      %v4674 = vmul.f32 %v4665, %v4666
      %4676 = vset.pattern.permute.xlu0 0
      %4677 = vperm.xlu0 %4676, %v4596
      %v4678 = vpop.permute.xlu0 %4677
      %4681 = vset.pattern.permute.xlu0 0
      %4682 = vperm.xlu0 %4681, %v4597
      %v4683 = vpop.permute.xlu0 %4682
      %4686 = vset.pattern.permute.xlu0 0
      %4687 = vperm.xlu0 %4686, %v4598
      %v4688 = vpop.permute.xlu0 %4687
      %4691 = vset.pattern.permute.xlu0 0
      %4692 = vperm.xlu0 %4691, %v4599
      %v4693 = vpop.permute.xlu0 %4692
      %v4695 = vmul.f32 %v4667, %v4678
      %v4696 = vmul.f32 %v4668, %v4678
      %v4697 = vmul.f32 %v4669, %v4683
      %v4698 = vmul.f32 %v4670, %v4683
      %v4699 = vmul.f32 %v4671, %v4688
      %v4700 = vmul.f32 %v4672, %v4688
      %v4701 = vmul.f32 %v4673, %v4693
      %v4702 = vmul.f32 %v4674, %v4693
      %4704 = vset.pattern.permute.xlu0 0
      %4705 = vperm.xlu0 %4704, %v4601
      %v4706 = vpop.permute.xlu0 %4705
      %4709 = vset.pattern.permute.xlu0 0
      %4710 = vperm.xlu0 %4709, %v4602
      %v4711 = vpop.permute.xlu0 %4710
      %4714 = vset.pattern.permute.xlu0 0
      %4715 = vperm.xlu0 %4714, %v4603
      %v4716 = vpop.permute.xlu0 %4715
      %4719 = vset.pattern.permute.xlu0 0
      %4720 = vperm.xlu0 %4719, %v4604
      %v4721 = vpop.permute.xlu0 %4720
      %v4723 = vadd.f32 %v4695, %v4706
      %v4724 = vadd.f32 %v4696, %v4706
      %v4725 = vadd.f32 %v4697, %v4711
      %v4726 = vadd.f32 %v4698, %v4711
      %v4727 = vadd.f32 %v4699, %v4716
      %v4728 = vadd.f32 %v4700, %v4716
      %v4729 = vadd.f32 %v4701, %v4721
      %v4730 = vadd.f32 %v4702, %v4721
      %s4731 = scalar_lea.vmem %s16, 16
      %v4732 = vld [vmem:[%s4731] sm:$0xf]
      %v4733 = vld [vmem:[%s4731 + $0x4] sm:$0xf]
      %v4734 = vld [vmem:[%s4731 + $0x8] sm:$0xf]
      %v4735 = vld [vmem:[%s4731 + $0xc] sm:$0xf]
      %s4736 = scalar_lea.vmem %s15, 16
      %v4737 = vld [vmem:[%s4736] sm:$0xf]
      %v4738 = vld [vmem:[%s4736 + $0x4] sm:$0xf]
      %v4739 = vld [vmem:[%s4736 + $0x8] sm:$0xf]
      %v4740 = vld [vmem:[%s4736 + $0xc] sm:$0xf]
      %v4741 = vpack.c.bf16 %v4725, %v4723
      %v4742 = vpack.c.bf16 %v4726, %v4724
      %v4743 = vpack.c.bf16 %v4729, %v4727
      %v4744 = vpack.c.bf16 %v4730, %v4728
      %v4749 = vunpack.c.l.b16 %v4737
      %v4750 = vunpack.c.l.b16 %v4738
      %v4751 = vunpack.c.l.b16 %v4739
      %v4752 = vunpack.c.l.b16 %v4740
      %v4753 = vpack.c.b16 %v4750, %v4749
      %v4754 = vpack.c.b16 %v4752, %v4751
      %v4756 = vsel %vm1328, %v4753, 0
      %v4759 = vsel %vm1328, %v4754, 0
      %4761 = vmatprep.subr.bf16.mxu0 %v4742
      %4762 = vmatpush1.bf16.msra.mxu0 %v4741
      %4763 = vmatprep.subr.bf16.mxu0 %v4744
      %4764 = vmatpush1.bf16.msra.mxu0 %v4743
      %4765 = vmatprep.subr.bf16.mxu0 0
      %4766 = vmatpush1.bf16.msra.mxu0 0
      %4767 = vmatprep.subr.bf16.mxu0 0
      %4768 = vmatpush1.bf16.msra.mxu0 0
      %4769 = vmatprep.subr.bf16.mxu0 0
      %4770 = vmatpush1.bf16.msra.mxu0 0
      %4771 = vmatprep.subr.bf16.mxu0 0
      %4772 = vmatpush1.bf16.msra.mxu0 0
      %4773 = vmatprep.subr.bf16.mxu0 0
      %4774 = vmatpush1.bf16.msra.mxu0 0
      %4775 = vmatprep.subr.bf16.mxu0 0
      %4776 = vmatpush1.bf16.msra.mxu0 0
      %4777 = vmatprep.subr.bf16.mxu0 0
      %4778 = vmatpush1.bf16.msra.mxu0 0
      %4779 = vmatprep.subr.bf16.mxu0 0
      %4780 = vmatpush1.bf16.msra.mxu0 0
      %4781 = vmatprep.subr.bf16.mxu0 0
      %4782 = vmatpush1.bf16.msra.mxu0 0
      %4783 = vmatprep.subr.bf16.mxu0 0
      %4784 = vmatpush1.bf16.msra.mxu0 0
      %4785 = vmatprep.subr.bf16.mxu0 0
      %4786 = vmatpush1.bf16.msra.mxu0 0
      %4787 = vmatprep.subr.bf16.mxu0 0
      %4788 = vmatpush1.bf16.msra.mxu0 0
      %4789 = vmatprep.subr.bf16.mxu0 0
      %4790 = vmatpush1.bf16.msra.mxu0 0
      %4791 = vmatprep.subr.bf16.mxu0 0
      %4792 = vmatpush1.bf16.msra.mxu0 0
      %4793 = vmatprep.mubr.bf16.mxu0 0
      %4794 = vmatmul.mubr.bf16.gmra.mrb[0].mxu0 %v4756
      %v4795 = vpop.f32.mrb[0].mxu0
      %v4796 = vadd.f32 0.0, %v4795
      %v4797 = vpop.f32.mrb[0].mxu0
      %v4798 = vadd.f32 0.0, %v4797
      %v4799 = vpop.f32.mrb[0].mxu0
      %v4800 = vadd.f32 0.0, %v4799
      %v4801 = vpop.f32.mrb[0].mxu0
      %v4802 = vadd.f32 0.0, %v4801
      %4803 = vmatprep.mubr.bf16.mxu0 0
      %4804 = vmatmul.mubr.bf16.gmra.mrb[0].mxu0 %v4759
      %v4805 = vpop.f32.mrb[0].mxu0
      %v4806 = vadd.f32 0.0, %v4805
      %v4807 = vpop.f32.mrb[0].mxu0
      %v4808 = vadd.f32 0.0, %v4807
      %v4809 = vpop.f32.mrb[0].mxu0
      %v4810 = vadd.f32 0.0, %v4809
      %v4811 = vpop.f32.mrb[0].mxu0
      %v4812 = vadd.f32 0.0, %v4811
      %4813 = vdwg.mxu0
      %v4814 = vmul.f32 %v4796, 0.5
      %v4815 = vmul.f32 %v4798, 0.5
      %v4816 = vmul.f32 %v4800, 0.5
      %v4817 = vmul.f32 %v4802, 0.5
      %v4818 = vmul.f32 %v4806, 0.5
      %v4819 = vmul.f32 %v4808, 0.5
      %v4820 = vmul.f32 %v4810, 0.5
      %v4821 = vmul.f32 %v4812, 0.5
      %v4822 = vmul.f32 %v4796, 0.044715
      %v4823 = vmul.f32 %v4798, 0.044715
      %v4824 = vmul.f32 %v4800, 0.044715
      %v4825 = vmul.f32 %v4802, 0.044715
      %v4826 = vmul.f32 %v4806, 0.044715
      %v4827 = vmul.f32 %v4808, 0.044715
      %v4828 = vmul.f32 %v4810, 0.044715
      %v4829 = vmul.f32 %v4812, 0.044715
      %v4830 = vmul.f32 %v4822, %v4796
      %v4831 = vmul.f32 %v4823, %v4798
      %v4832 = vmul.f32 %v4824, %v4800
      %v4833 = vmul.f32 %v4825, %v4802
      %v4834 = vmul.f32 %v4826, %v4806
      %v4835 = vmul.f32 %v4827, %v4808
      %v4836 = vmul.f32 %v4828, %v4810
      %v4837 = vmul.f32 %v4829, %v4812
      %v4838 = vmul.f32 %v4830, %v4796
      %v4839 = vmul.f32 %v4831, %v4798
      %v4840 = vmul.f32 %v4832, %v4800
      %v4841 = vmul.f32 %v4833, %v4802
      %v4842 = vmul.f32 %v4834, %v4806
      %v4843 = vmul.f32 %v4835, %v4808
      %v4844 = vmul.f32 %v4836, %v4810
      %v4845 = vmul.f32 %v4837, %v4812
      %v4846 = vadd.f32 %v4796, %v4838
      %v4847 = vadd.f32 %v4798, %v4839
      %v4848 = vadd.f32 %v4800, %v4840
      %v4849 = vadd.f32 %v4802, %v4841
      %v4850 = vadd.f32 %v4806, %v4842
      %v4851 = vadd.f32 %v4808, %v4843
      %v4852 = vadd.f32 %v4810, %v4844
      %v4853 = vadd.f32 %v4812, %v4845
      %v4854 = vmul.f32 %v4846, 0.7978846
      %v4855 = vmul.f32 %v4847, 0.7978846
      %v4856 = vmul.f32 %v4848, 0.7978846
      %v4857 = vmul.f32 %v4849, 0.7978846
      %v4858 = vmul.f32 %v4850, 0.7978846
      %v4859 = vmul.f32 %v4851, 0.7978846
      %v4860 = vmul.f32 %v4852, 0.7978846
      %v4861 = vmul.f32 %v4853, 0.7978846
      %v4862 = vtanh.pop %v4854
      %v4863 = vtanh.pop %v4855
      %v4864 = vtanh.pop %v4856
      %v4865 = vtanh.pop %v4857
      %v4866 = vtanh.pop %v4858
      %v4867 = vtanh.pop %v4859
      %v4868 = vtanh.pop %v4860
      %v4869 = vtanh.pop %v4861
      %v4870 = vadd.f32 %v4862, 1.0
      %v4871 = vadd.f32 %v4863, 1.0
      %v4872 = vadd.f32 %v4864, 1.0
      %v4873 = vadd.f32 %v4865, 1.0
      %v4874 = vadd.f32 %v4866, 1.0
      %v4875 = vadd.f32 %v4867, 1.0
      %v4876 = vadd.f32 %v4868, 1.0
      %v4877 = vadd.f32 %v4869, 1.0
      %v4878 = vmul.f32 %v4814, %v4870
      %v4879 = vmul.f32 %v4815, %v4871
      %v4880 = vmul.f32 %v4816, %v4872
      %v4881 = vmul.f32 %v4817, %v4873
      %v4882 = vmul.f32 %v4818, %v4874
      %v4883 = vmul.f32 %v4819, %v4875
      %v4884 = vmul.f32 %v4820, %v4876
      %v4885 = vmul.f32 %v4821, %v4877
      %v4886 = vpack.c.bf16 %v4880, %v4878
      %v4887 = vpack.c.bf16 %v4881, %v4879
      %v4888 = vpack.c.bf16 %v4884, %v4882
      %v4889 = vpack.c.bf16 %v4885, %v4883
      %v4894 = vunpack.c.l.b16 %v4732
      %v4895 = vunpack.c.l.b16 %v4733
      %v4896 = vunpack.c.l.b16 %v4734
      %v4897 = vunpack.c.l.b16 %v4735
      %v4898 = vpack.c.b16 %v4895, %v4894
      %v4899 = vpack.c.b16 %v4897, %v4896
      %v4901 = vsel %vm1328, %v4898, 0
      %v4904 = vsel %vm1328, %v4899, 0
      %4906 = vmatprep.subr.bf16.mxu0 %v4887
      %4907 = vmatpush1.bf16.msra.mxu0 %v4886
      %4908 = vmatprep.subr.bf16.mxu0 %v4889
      %4909 = vmatpush1.bf16.msra.mxu0 %v4888
      %4910 = vmatprep.subr.bf16.mxu0 0
      %4911 = vmatpush1.bf16.msra.mxu0 0
      %4912 = vmatprep.subr.bf16.mxu0 0
      %4913 = vmatpush1.bf16.msra.mxu0 0
      %4914 = vmatprep.subr.bf16.mxu0 0
      %4915 = vmatpush1.bf16.msra.mxu0 0
      %4916 = vmatprep.subr.bf16.mxu0 0
      %4917 = vmatpush1.bf16.msra.mxu0 0
      %4918 = vmatprep.subr.bf16.mxu0 0
      %4919 = vmatpush1.bf16.msra.mxu0 0
      %4920 = vmatprep.subr.bf16.mxu0 0
      %4921 = vmatpush1.bf16.msra.mxu0 0
      %4922 = vmatprep.subr.bf16.mxu0 0
      %4923 = vmatpush1.bf16.msra.mxu0 0
      %4924 = vmatprep.subr.bf16.mxu0 0
      %4925 = vmatpush1.bf16.msra.mxu0 0
      %4926 = vmatprep.subr.bf16.mxu0 0
      %4927 = vmatpush1.bf16.msra.mxu0 0
      %4928 = vmatprep.subr.bf16.mxu0 0
      %4929 = vmatpush1.bf16.msra.mxu0 0
      %4930 = vmatprep.subr.bf16.mxu0 0
      %4931 = vmatpush1.bf16.msra.mxu0 0
      %4932 = vmatprep.subr.bf16.mxu0 0
      %4933 = vmatpush1.bf16.msra.mxu0 0
      %4934 = vmatprep.subr.bf16.mxu0 0
      %4935 = vmatpush1.bf16.msra.mxu0 0
      %4936 = vmatprep.subr.bf16.mxu0 0
      %4937 = vmatpush1.bf16.msra.mxu0 0
      %4938 = vmatprep.mubr.bf16.mxu0 0
      %4939 = vmatmul.mubr.bf16.gmra.mrb[0].mxu0 %v4901
      %v4940 = vpop.f32.mrb[0].mxu0
      %v4941 = vadd.f32 0.0, %v4940
      %v4942 = vpop.f32.mrb[0].mxu0
      %v4943 = vadd.f32 0.0, %v4942
      %v4944 = vpop.f32.mrb[0].mxu0
      %v4945 = vadd.f32 0.0, %v4944
      %v4946 = vpop.f32.mrb[0].mxu0
      %v4947 = vadd.f32 0.0, %v4946
      %4948 = vmatprep.mubr.bf16.mxu0 0
      %4949 = vmatmul.mubr.bf16.gmra.mrb[0].mxu0 %v4904
      %v4950 = vpop.f32.mrb[0].mxu0
      %v4951 = vadd.f32 0.0, %v4950
      %v4952 = vpop.f32.mrb[0].mxu0
      %v4953 = vadd.f32 0.0, %v4952
      %v4954 = vpop.f32.mrb[0].mxu0
      %v4955 = vadd.f32 0.0, %v4954
      %v4956 = vpop.f32.mrb[0].mxu0
      %v4957 = vadd.f32 0.0, %v4956
      %4958 = vdwg.mxu0
      %v4959 = vadd.f32 %v4587, %v4941
      %v4960 = vadd.f32 %v4588, %v4943
      %v4961 = vadd.f32 %v4589, %v4945
      %v4962 = vadd.f32 %v4590, %v4947
      %v4963 = vadd.f32 %v4591, %v4951
      %v4964 = vadd.f32 %v4592, %v4953
      %v4965 = vadd.f32 %v4593, %v4955
      %v4966 = vadd.f32 %v4594, %v4957
      %v4967 = vld [vmem:[%s17] sm:$0xff]
      %v4968 = vld [vmem:[%s17 + $0x8] sm:$0xff]
      %v4969 = vld [vmem:[%s17 + $0x10] sm:$0xff]
      %v4970 = vld [vmem:[%s17 + $0x18] sm:$0xff]
      %v4971 = vld [vmem:[%s18] sm:$0xff]
      %v4972 = vld [vmem:[%s18 + $0x8] sm:$0xff]
      %v4973 = vld [vmem:[%s18 + $0x10] sm:$0xff]
      %v4974 = vld [vmem:[%s18 + $0x18] sm:$0xff]
      %v4975 = vadd.f32 %v4959, %v4960
      %v4976 = vadd.f32 %v4975, %v4961
      %v4977 = vadd.f32 %v4976, %v4962
      %v4978 = vadd.f32 %v4977, %v4963
      %v4979 = vadd.f32 %v4978, %v4964
      %v4980 = vadd.f32 %v4979, %v4965
      %v4981 = vadd.f32 %v4980, %v4966
      %4982 = vadd.xlane.f32.xlu0 %v4981
      %v4983 = vpop.xlane.xlu0 %4982
      %v4984 = vrot.slane %v4983, 4
      %v4985 = vadd.f32 %v4983, %v4984
      %v4986 = vrot.slane %v4985, 2
      %v4987 = vadd.f32 %v4985, %v4986
      %v4988 = vrot.slane %v4987, 1
      %v4989 = vadd.f32 %v4987, %v4988
      %s4990 = vtos %v4989
      %v4991 = vmul.f32 %v4959, %v4959
      %v4992 = vmul.f32 %v4960, %v4960
      %v4993 = vmul.f32 %v4961, %v4961
      %v4994 = vmul.f32 %v4962, %v4962
      %v4995 = vmul.f32 %v4963, %v4963
      %v4996 = vmul.f32 %v4964, %v4964
      %v4997 = vmul.f32 %v4965, %v4965
      %v4998 = vmul.f32 %v4966, %v4966
      %v4999 = vadd.f32 %v4991, %v4992
      %v5000 = vadd.f32 %v4999, %v4993
      %v5001 = vadd.f32 %v5000, %v4994
      %v5002 = vadd.f32 %v5001, %v4995
      %v5003 = vadd.f32 %v5002, %v4996
      %v5004 = vadd.f32 %v5003, %v4997
      %v5005 = vadd.f32 %v5004, %v4998
      %5006 = vadd.xlane.f32.xlu0 %v5005
      %v5007 = vpop.xlane.xlu0 %5006
      %v5008 = vrot.slane %v5007, 4
      %v5009 = vadd.f32 %v5007, %v5008
      %v5010 = vrot.slane %v5009, 2
      %v5011 = vadd.f32 %v5009, %v5010
      %v5012 = vrot.slane %v5011, 1
      %v5013 = vadd.f32 %v5011, %v5012
      %s5014 = vtos %v5013
      %v5015 = vrcp.pop 8192.0
      %s5016 = vtos %v5015
      %s5017 = smul.f32 %s4990, %s5016
      %v5018 = vrcp.pop 8192.0
      %s5019 = vtos %v5018
      %s5020 = smul.f32 %s5014, %s5019
      %s5021 = smul.f32 %s5017, %s5017
      %s5022 = ssub.f32 %s5020, %s5021
      %s5023 = sadd.f32 %s5022, 1e-05
      %v5024 = vstv %s5023
      %v5025 = vrsqrt.pop %v5024
      %s5026 = vtos %v5025
      %v5027 = vstv %s5017
      %v5028 = vsub.f32 %v4959, %v5027
      %v5029 = vsub.f32 %v4960, %v5027
      %v5030 = vsub.f32 %v4961, %v5027
      %v5031 = vsub.f32 %v4962, %v5027
      %v5032 = vsub.f32 %v4963, %v5027
      %v5033 = vsub.f32 %v4964, %v5027
      %v5034 = vsub.f32 %v4965, %v5027
      %v5035 = vsub.f32 %v4966, %v5027
      %v5036 = vstv %s5026
      %v5037 = vmul.f32 %v5028, %v5036
      %v5038 = vmul.f32 %v5029, %v5036
      %v5039 = vmul.f32 %v5030, %v5036
      %v5040 = vmul.f32 %v5031, %v5036
      %v5041 = vmul.f32 %v5032, %v5036
      %v5042 = vmul.f32 %v5033, %v5036
      %v5043 = vmul.f32 %v5034, %v5036
      %v5044 = vmul.f32 %v5035, %v5036
      %5046 = vset.pattern.permute.xlu0 0
      %5047 = vperm.xlu0 %5046, %v4967
      %v5048 = vpop.permute.xlu0 %5047
      %5051 = vset.pattern.permute.xlu0 0
      %5052 = vperm.xlu0 %5051, %v4968
      %v5053 = vpop.permute.xlu0 %5052
      %5056 = vset.pattern.permute.xlu0 0
      %5057 = vperm.xlu0 %5056, %v4969
      %v5058 = vpop.permute.xlu0 %5057
      %5061 = vset.pattern.permute.xlu0 0
      %5062 = vperm.xlu0 %5061, %v4970
      %v5063 = vpop.permute.xlu0 %5062
      %v5065 = vmul.f32 %v5037, %v5048
      %v5066 = vmul.f32 %v5038, %v5048
      %v5067 = vmul.f32 %v5039, %v5053
      %v5068 = vmul.f32 %v5040, %v5053
      %v5069 = vmul.f32 %v5041, %v5058
      %v5070 = vmul.f32 %v5042, %v5058
      %v5071 = vmul.f32 %v5043, %v5063
      %v5072 = vmul.f32 %v5044, %v5063
      %5074 = vset.pattern.permute.xlu0 0
      %5075 = vperm.xlu0 %5074, %v4971
      %v5076 = vpop.permute.xlu0 %5075
      %5079 = vset.pattern.permute.xlu0 0
      %5080 = vperm.xlu0 %5079, %v4972
      %v5081 = vpop.permute.xlu0 %5080
      %5084 = vset.pattern.permute.xlu0 0
      %5085 = vperm.xlu0 %5084, %v4973
      %v5086 = vpop.permute.xlu0 %5085
      %5089 = vset.pattern.permute.xlu0 0
      %5090 = vperm.xlu0 %5089, %v4974
      %v5091 = vpop.permute.xlu0 %5090
      %v5093 = vadd.f32 %v5065, %v5076
      %v5094 = vadd.f32 %v5066, %v5076
      %v5095 = vadd.f32 %v5067, %v5081
      %v5096 = vadd.f32 %v5068, %v5081
      %v5097 = vadd.f32 %v5069, %v5086
      %v5098 = vadd.f32 %v5070, %v5086
      %v5099 = vadd.f32 %v5071, %v5091
      %v5100 = vadd.f32 %v5072, %v5091
      %v5101 = vld [vmem:[%s19] sm:$0x3]
      %v5102 = vpack.c.bf16 %v5095, %v5093
      %v5103 = vpack.c.bf16 %v5096, %v5094
      %v5104 = vpack.c.bf16 %v5099, %v5097
      %v5105 = vpack.c.bf16 %v5100, %v5098
      %v5106 = vld [vmem:[%s20] sm:$0xf]
      %5108 = vset.pattern.permute.xlu0 0
      %5109 = vperm.xlu0 %5108, %v5106
      %v5110 = vpop.permute.xlu0 %5109
      %v5113 = vsel %vm1328, %v5101, 0
      %5115 = vmatprep.subr.bf16.mxu0 %v5103
      %5116 = vmatpush1.bf16.msra.mxu0 %v5102
      %5117 = vmatprep.subr.bf16.mxu0 %v5105
      %5118 = vmatpush1.bf16.msra.mxu0 %v5104
      %5119 = vmatprep.subr.bf16.mxu0 0
      %5120 = vmatpush1.bf16.msra.mxu0 0
      %5121 = vmatprep.subr.bf16.mxu0 0
      %5122 = vmatpush1.bf16.msra.mxu0 0
      %5123 = vmatprep.subr.bf16.mxu0 0
      %5124 = vmatpush1.bf16.msra.mxu0 0
      %5125 = vmatprep.subr.bf16.mxu0 0
      %5126 = vmatpush1.bf16.msra.mxu0 0
      %5127 = vmatprep.subr.bf16.mxu0 0
      %5128 = vmatpush1.bf16.msra.mxu0 0
      %5129 = vmatprep.subr.bf16.mxu0 0
      %5130 = vmatpush1.bf16.msra.mxu0 0
      %5131 = vmatprep.subr.bf16.mxu0 0
      %5132 = vmatpush1.bf16.msra.mxu0 0
      %5133 = vmatprep.subr.bf16.mxu0 0
      %5134 = vmatpush1.bf16.msra.mxu0 0
      %5135 = vmatprep.subr.bf16.mxu0 0
      %5136 = vmatpush1.bf16.msra.mxu0 0
      %5137 = vmatprep.subr.bf16.mxu0 0
      %5138 = vmatpush1.bf16.msra.mxu0 0
      %5139 = vmatprep.subr.bf16.mxu0 0
      %5140 = vmatpush1.bf16.msra.mxu0 0
      %5141 = vmatprep.subr.bf16.mxu0 0
      %5142 = vmatpush1.bf16.msra.mxu0 0
      %5143 = vmatprep.subr.bf16.mxu0 0
      %5144 = vmatpush1.bf16.msra.mxu0 0
      %5145 = vmatprep.subr.bf16.mxu0 0
      %5146 = vmatpush1.bf16.msra.mxu0 0
      %5147 = vmatprep.mubr.bf16.mxu0 0
      %5148 = vmatmul.mubr.bf16.gmra.mrb[0].mxu0 %v5113
      %v5149 = vpop.f32.mrb[0].mxu0
      %v5150 = vadd.f32 %v5110, %v5149
      %v5151 = vpop.f32.mrb[0].mxu0
      %v5152 = vadd.f32 %v5110, %v5151
      %v5153 = vpop.f32.mrb[0].mxu0
      %v5154 = vpop.f32.mrb[0].mxu0
      %5155 = vdwg.mxu0
      %v5158 = vcombine.low %v5150, %v5152
      %5160 = vst [vmem:[#allocation2] sm:$0xff] %v5158
      %v5161 = vld [vmem:[%s695] sm:$0xff]
      %v5163 = vcombine.high %v5161, %v5161
      %v5165 = vsub.f32 %v5150, %v5161
      %v5166 = vsub.f32 %v5152, %v5163
      %v5167 = vld [vmem:[%s698] sm:$0x1]
      %v5168 = vmul.f32 %v5165, %v5165
      %v5169 = vmul.f32 %v5166, %v5166
      %vm5170 = vcmask 1043456
      %v5171 = vsel %vm5170, %v5168, 0.0
      %v5172 = vsel %vm5170, %v5169, 0.0
      %v5173 = vadd.f32 %v5171, %v5172
      %5174 = vadd.xlane.f32.xlu0 %v5173
      %v5175 = vpop.xlane.xlu0 %5174
      %v5176 = vrot.slane %v5175, 4
      %v5177 = vadd.f32 %v5175, %v5176
      %v5178 = vrot.slane %v5177, 2
      %v5179 = vadd.f32 %v5177, %v5178
      %v5180 = vrot.slane %v5179, 1
      %v5181 = vadd.f32 %v5179, %v5180
      %s5182 = vtos %v5181
      %v5183 = vstv %s5182
      %v5184 = vadd.f32 %v5167, %v5183
      %vm5185 = vcmask 0
      %5186 = vst.msk [vmem:[%s698] sm:$0x1] %vm5185, %v5184
      %p5187 = scmp.lt.s32.totalorder %s36, 1
      %s5188 = scalar_select %p5187, %s36, 1
      %s5189 = scalar_lea.vmem %s21, %s5188
      // Predicated region
      $region109: #{latent_dynamics_forward.1} parent=103 // pred_check
        %p5190 = pneg %p515
      $region110: #{latent_dynamics_forward.1} parent=103 // pred_check_branch
        %5192 = sbr.rel (%p5190) target = $region112
      $region111: #{latent_dynamics_forward.1} parent=103 // pred_region
        _
      $region112: #{latent_dynamics_forward.1} parent=103 // pred_fallthru
        _
    $region104: #{latent_dynamics_forward.1} parent=5 // pred_fallthru
      _
    %p5193 = scmp.le.s32.totalorder 2, %s27
    // Predicated region
    $region113: #{latent_dynamics_forward.1} parent=5 // pred_check
      %p5194 = pneg %p5193
    $region114: #{latent_dynamics_forward.1} parent=5 // pred_check_branch
      %5196 = sbr.rel (%p5194) target = $region116
    $region115: #{latent_dynamics_forward.1} parent=5 // pred_region
      %s5197 = ssub.s32 %s27, 2
      // Predicated region
      $region117: #{latent_dynamics_forward.1} parent=115 // pred_check
        %p5198 = pneg %p521
      $region118: #{latent_dynamics_forward.1} parent=115 // pred_check_branch
        %5200 = sbr.rel (%p5198) target = $region120
      $region119: #{latent_dynamics_forward.1} parent=115 // pred_region
        %p5201 = scmp.lt.s32.totalorder %s38, 1
        %s5202 = scalar_select %p5201, %s38, 1
        %s5203 = scalar_lea.vmem %s21, %s5202
      $region120: #{latent_dynamics_forward.1} parent=115 // pred_fallthru
        _
    $region116: #{latent_dynamics_forward.1} parent=5 // pred_fallthru
      _
  $region6: #{latent_dynamics_forward.1} parent=0 // loop_footer
    %s31 = sadd.s32 1, %s27
  $region7: #{latent_dynamics_forward.1} parent=0 // loop_footer_branch
    %26 = sbr.rel target = $region3
  $region8: #{latent_dynamics_forward.1} parent=0 // loop_exit
    _

</llo_original>
